<compile_context>
chip_gen: v7x
topology: tpu7x:2x2x1
jax: 0.10.0
libtpu: 0.0.40
codegen_flags: <defaults>
</compile_context>

<pallas_src>
import functools

import jax
import jax.numpy as jnp
import numpy as np
from jax import lax
from jax.experimental import pallas as pl
from jax.experimental.pallas import tpu as pltpu

EPS = 1e-5          # BatchNorm2d eps
NEG_SLOPE = 0.2     # LeakyReLU negative slope
DROP_P = 0.5        # Dropout p (train mode)
LANE = 128

_CPARAMS = pltpu.CompilerParams(
    dimension_semantics=("parallel", "parallel"),
    vmem_limit_bytes=48 * 1024 * 1024,
)


def _rnd_lane(c):
    return ((c + LANE - 1) // LANE) * LANE


def _pick_rows(total, cap):
    cap = max(1, min(total, cap))
    for d in range(cap, 0, -1):
        if total % d == 0:
            return d
    return 1


# ---------------------------------------------------------------------------
# in-kernel helpers
# ---------------------------------------------------------------------------
def _leaky(x):
    return jnp.maximum(x, NEG_SLOPE * x)


def _pad_width(a):
    # zero columns left/right (== Conv2d padding=1 along W)
    z = jnp.zeros((a.shape[0], 1, a.shape[2]), a.dtype)
    return jnp.concatenate([z, a, z], axis=1)


def _row_window(main_ref, halo_ref):
    # main block (1, th, Wd, C) + halo block (1, 1, 2, Wd, C) -> (th+2, Wd, C)
    return jnp.concatenate(
        [halo_ref[0, 0, 0:1], main_ref[0], halo_ref[0, 0, 1:2]], axis=0)


def _zero_boundary_rows(win):
    # Halo rows that fall outside the image must be exactly zero *after* the
    # affine BN transform (they model Conv2d's zero padding along H).
    i = pl.program_id(1)
    nt = pl.num_programs(1)
    r = lax.broadcasted_iota(jnp.int32, (win.shape[0], 1, 1), 0)
    keep = ((r != 0) | (i > 0)) & ((r != win.shape[0] - 1) | (i < nt - 1))
    return jnp.where(keep, win, 0.0)


def _conv3x3_acc(win, w_ref, th, tw, acc):
    # win: (th+2, tw+2, Cin) bf16 ; w_ref: (9, Cin, Cout) bf16 ; acc: f32
    cin = win.shape[-1]
    for ky in range(3):
        for kx in range(3):
            patch = win[ky:ky + th, kx:kx + tw, :].reshape(th * tw, cin)
            acc = acc + jnp.dot(patch, w_ref[ky * 3 + kx],
                                preferred_element_type=jnp.float32)
    return acc


def _moments(y):
    # per-channel partial [sum, sum_sq] over rows -> (2, C), f32
    s = jnp.sum(y, axis=0, keepdims=True)
    ss = jnp.sum(y * y, axis=0, keepdims=True)
    return jnp.concatenate([s, ss], axis=0)


# ---------------------------------------------------------------------------
# kernels
# ---------------------------------------------------------------------------
def _upconv_kernel(x_ref, w_ref, b_ref, up_ref, st_ref):
    # ConvTranspose2d(k=2, s=2) as one matmul per output-row parity `a`, fused
    # with the 2x2 sub-pixel scatter and the BN1 partial-stat accumulation.
    _, th1, wd, cpi = x_ref.shape
    cpo2 = up_ref.shape[-1]          # = 2 * cpo  (the two column parities)
    cpo = cpo2 // 2
    x2 = x_ref[0].reshape(th1 * wd, cpi).astype(jnp.bfloat16)
    bias2 = b_ref[...]               # (1, 2*cpo), bias tiled per column parity
    s = jnp.zeros((1, cpo), jnp.float32)
    ss = jnp.zeros((1, cpo), jnp.float32)
    for a in range(2):               # output row parity
        y = jnp.dot(x2, w_ref[a], preferred_element_type=jnp.float32) + bias2
        s = s + jnp.sum(y[:, :cpo], axis=0, keepdims=True) \
              + jnp.sum(y[:, cpo:], axis=0, keepdims=True)
        y2 = y * y
        ss = ss + jnp.sum(y2[:, :cpo], axis=0, keepdims=True) \
                + jnp.sum(y2[:, cpo:], axis=0, keepdims=True)
        up_ref[0, :, a, :, :] = y.reshape(th1, wd, cpo2)
    st_ref[0, 0] = jnp.concatenate([s, ss], axis=0)


def _conv2_1_kernel(up_ref, uph_ref, u_ref, uh_ref, m_ref, mh_ref,
                    sc_ref, sh_ref, wa_ref, wu_ref, b_ref,
                    out_ref, st_ref):
    # BN1-normalize + LeakyReLU + dropout on the up branch, implicit channel
    # concat with the raw skip tensor u, 3x3 conv2_1 (+bias), BN2_1 partials.
    _, th, tw, cpo = out_ref.shape
    sc = sc_ref[...].reshape(1, 1, -1)
    sh = sh_ref[...].reshape(1, 1, -1)

    win = _row_window(up_ref, uph_ref)                           # f32
    act = _leaky(win * sc + sh)
    act = act * _row_window(m_ref, mh_ref).astype(jnp.float32)   # dropout_1
    act = _zero_boundary_rows(act)
    act = _pad_width(act.astype(jnp.bfloat16))                   # (th+2, tw+2, cpo)

    uwin = _pad_width(_row_window(u_ref, uh_ref).astype(jnp.bfloat16))

    acc = jnp.zeros((th * tw, cpo), jnp.float32)
    acc = _conv3x3_acc(act, wa_ref, th, tw, acc)                 # cat: up part
    acc = _conv3x3_acc(uwin, wu_ref, th, tw, acc)                # cat: u part
    acc = acc + b_ref[...]

    out_ref[0] = acc.reshape(th, tw, cpo)
    st_ref[0, 0] = _moments(acc)


def _conv2_2_kernel(x_ref, xh_ref, sc_ref, sh_ref, w_ref, b_ref,
                    out_ref, st_ref):
    # BN2_1-normalize + LeakyReLU, 3x3 conv2_2 (+bias), BN2_2 partials.
    _, th, tw, cpo = out_ref.shape
    sc = sc_ref[...].reshape(1, 1, -1)
    sh = sh_ref[...].reshape(1, 1, -1)

    win = _row_window(x_ref, xh_ref)
    act = _leaky(win * sc + sh)
    act = _zero_boundary_rows(act)
    act = _pad_width(act.astype(jnp.bfloat16))

    acc = jnp.zeros((th * tw, cpo), jnp.float32)
    acc = _conv3x3_acc(act, w_ref, th, tw, acc)
    acc = acc + b_ref[...]

    out_ref[0] = acc.reshape(th, tw, cpo)
    st_ref[0, 0] = _moments(acc)


def _bn_act_drop_kernel(x_ref, m_ref, sc_ref, sh_ref, o_ref):
    # final BN2_2-normalize + LeakyReLU + dropout_2 (elementwise pass)
    sc = sc_ref[...].reshape(1, 1, -1)
    sh = sh_ref[...].reshape(1, 1, -1)
    y = _leaky(x_ref[0] * sc + sh)
    o_ref[0] = y * m_ref[0].astype(jnp.float32)


# ---------------------------------------------------------------------------
# wrapper-side glue (layout plumbing, weight packing, BN affine, halos)
# ---------------------------------------------------------------------------
def _pad_last(a, cp):
    c = a.shape[-1]
    if c == cp:
        return a
    pad = [(0, 0)] * (a.ndim - 1) + [(0, cp - c)]
    return jnp.pad(a, pad)


def _nchw_to_padded_nhwc(a, cp):
    return _pad_last(jnp.transpose(a, (0, 2, 3, 1)).astype(jnp.float32), cp)


def _pack_upconv_weight(w, cpi, cpo):
    # torch ConvTranspose2d weight (Cin, Cout, 2, 2) -> (2, cpi, 2*cpo) bf16
    # index: [a, ci, b*cpo + co] = w[ci, co, a, b]
    wt = jnp.transpose(w, (2, 3, 0, 1))          # (a, b, ci, co)
    wt = jnp.transpose(wt, (0, 2, 1, 3))         # (a, ci, b, co)
    wt = jnp.pad(wt, ((0, 0), (0, cpi - w.shape[0]), (0, 0), (0, cpo - w.shape[1])))
    return wt.reshape(2, cpi, 2 * cpo).astype(jnp.bfloat16)


def _pack_conv3x3_weight(w, cpi, cpo):
    # torch Conv2d weight (Cout, Cin, 3, 3) -> (9, cpi, cpo) bf16 ; index ky*3+kx
    cout, cin = w.shape[0], w.shape[1]
    wt = jnp.transpose(w, (2, 3, 1, 0)).reshape(9, cin, cout)
    wt = jnp.pad(wt, ((0, 0), (0, cpi - cin), (0, cpo - cout)))
    return wt.astype(jnp.bfloat16)


def _pack_bias(b, cp):
    return _pad_last(b.reshape(1, -1).astype(jnp.float32), cp)


def _row_halos(a, th):
    # a: (B, R, Wd, C) -> (B, R//th, 2, Wd, C): the rows just above / below each
    # row tile (zero at the image boundary).  Tiny vs. the main tensor (2/th).
    B, R, Wd, C = a.shape
    ap = jnp.pad(a, ((0, 0), (1, 1), (0, 0), (0, 0)))
    top = ap[:, 0:R:th]
    bot = ap[:, th + 1:R + 2:th]
    return jnp.stack([top, bot], axis=2)


def _bn_affine(partial_stats, count, gamma, beta, cp):
    # reduce per-tile [sum, sum_sq] -> train-mode BN affine (scale, shift), f32
    s = jnp.sum(partial_stats, axis=(0, 1))                  # (2, cp)
    mean = s[0] / count
    var = jnp.maximum(s[1] / count - mean * mean, 0.0)       # biased variance
    inv = lax.rsqrt(var + EPS)
    g = _pad_last(gamma.reshape(1, -1).astype(jnp.float32), cp)[0]
    b = _pad_last(beta.reshape(1, -1).astype(jnp.float32), cp)[0]
    scale = g * inv
    shift = b - mean * scale
    return scale.reshape(1, cp), shift.reshape(1, cp)


def _dropout_mask(key, shape):
    keep = jax.random.bernoulli(key, 1.0 - DROP_P, shape)
    return jnp.where(keep, 1.0 / (1.0 - DROP_P), 0.0).astype(jnp.bfloat16)


# ---------------------------------------------------------------------------
# forward pass
# ---------------------------------------------------------------------------
@functools.partial(jax.jit, static_argnames=("row_tile",))
def unet_up_block(params, x, u, dropout_key, *, row_tile=None):
    B, cin, H, W = x.shape
    cout = params["w_up"].shape[1]
    cu = u.shape[1]
    assert cout + cu == cin, "concat channels must equal conv2_1 in_channels"
    T, Tw = 2 * H, 2 * W

    cpi, cpo, cpu = _rnd_lane(cin), _rnd_lane(cout), _rnd_lane(cu)

    # row-tile sizes (pixels-per-tile capped; v7x-safe with default headroom)
    th = row_tile if row_tile is not None else _pick_rows(T, max(1, 4096 // Tw))
    assert T % th == 0, "row_tile must divide the up-sampled height"
    th1 = _pick_rows(H, max(1, th // 2))
    nh, nt = H // th1, T // th

    # layout plumbing (XLA): NCHW -> lane-padded NHWC, bf16 weight packing
    xh = _nchw_to_padded_nhwc(x, cpi)
    uh = _nchw_to_padded_nhwc(u, cpu)
    w_up = _pack_upconv_weight(params["w_up"], cpi, cpo)
    b_up2 = jnp.concatenate([_pack_bias(params["b_up"], cpo)] * 2, axis=-1)
    w1_a = _pack_conv3x3_weight(params["w1"][:, :cout], cpo, cpo)
    w1_u = _pack_conv3x3_weight(params["w1"][:, cout:], cpu, cpo)
    b1 = _pack_bias(params["b1"], cpo)
    w2 = _pack_conv3x3_weight(params["w2"], cpo, cpo)
    b2 = _pack_bias(params["b2"], cpo)

    n_pix = float(B * T * Tw)

    # ---- stage 1: fused ConvTranspose2d matmul + 2x2 scatter + BN1 partials
    up_pre, st1 = pl.pallas_call(
        _upconv_kernel,
        grid=(B, nh),
        in_specs=[
            pl.BlockSpec((1, th1, W, cpi), lambda b, i: (b, i, 0, 0)),
            pl.BlockSpec((2, cpi, 2 * cpo), lambda b, i: (0, 0, 0)),
            pl.BlockSpec((1, 2 * cpo), lambda b, i: (0, 0)),
        ],
        out_specs=[
            pl.BlockSpec((1, th1, 2, W, 2 * cpo), lambda b, i: (b, i, 0, 0, 0)),
            pl.BlockSpec((1, 1, 2, cpo), lambda b, i: (b, i, 0, 0)),
        ],
        out_shape=[
            jax.ShapeDtypeStruct((B, H, 2, W, 2 * cpo), jnp.float32),
            jax.ShapeDtypeStruct((B, nh, 2, cpo), jnp.float32),
        ],
        compiler_params=_CPARAMS,
    )(xh, w_up, b_up2)
    # (B, H, 2, W, 2*cpo) is byte-identical to NHWC (B, T, Tw, cpo) -> free reshape
    up_pre = up_pre.reshape(B, T, Tw, cpo)
    sc1, sh1 = _bn_affine(st1, n_pix, params["bn1_g"], params["bn1_b"], cpo)

    # dropout masks (train mode).
    # TODO(synk): dropout uses jax.random, not PyTorch's RNG stream; semantics
    # (Bernoulli keep-prob 0.5, scale 2.0) match nn.Dropout(p=0.5).train().
    dk1, dk2 = jax.random.split(dropout_key)
    mask1 = _dropout_mask(dk1, (B, T, Tw, cpo))
    mask2 = _dropout_mask(dk2, (B, T, Tw, cpo))

    # ---- stage 2: BN1-norm + LeakyReLU + dropout + concat(u) + conv2_1 + stats
    up_halo = _row_halos(up_pre, th)
    u_halo = _row_halos(uh, th)
    m1_halo = _row_halos(mask1, th)
    c1_pre, st2 = pl.pallas_call(
        _conv2_1_kernel,
        grid=(B, nt),
        in_specs=[
            pl.BlockSpec((1, th, Tw, cpo), lambda b, i: (b, i, 0, 0)),
            pl.BlockSpec((1, 1, 2, Tw, cpo), lambda b, i: (b, i, 0, 0, 0)),
            pl.BlockSpec((1, th, Tw, cpu), lambda b, i: (b, i, 0, 0)),
            pl.BlockSpec((1, 1, 2, Tw, cpu), lambda b, i: (b, i, 0, 0, 0)),
            pl.BlockSpec((1, th, Tw, cpo), lambda b, i: (b, i, 0, 0)),
            pl.BlockSpec((1, 1, 2, Tw, cpo), lambda b, i: (b, i, 0, 0, 0)),
            pl.BlockSpec((1, cpo), lambda b, i: (0, 0)),
            pl.BlockSpec((1, cpo), lambda b, i: (0, 0)),
            pl.BlockSpec((9, cpo, cpo), lambda b, i: (0, 0, 0)),
            pl.BlockSpec((9, cpu, cpo), lambda b, i: (0, 0, 0)),
            pl.BlockSpec((1, cpo), lambda b, i: (0, 0)),
        ],
        out_specs=[
            pl.BlockSpec((1, th, Tw, cpo), lambda b, i: (b, i, 0, 0)),
            pl.BlockSpec((1, 1, 2, cpo), lambda b, i: (b, i, 0, 0)),
        ],
        out_shape=[
            jax.ShapeDtypeStruct((B, T, Tw, cpo), jnp.float32),
            jax.ShapeDtypeStruct((B, nt, 2, cpo), jnp.float32),
        ],
        compiler_params=_CPARAMS,
    )(up_pre, up_halo, uh, u_halo, mask1, m1_halo, sc1, sh1, w1_a, w1_u, b1)
    sc2, sh2 = _bn_affine(st2, n_pix, params["bn2_1_g"], params["bn2_1_b"], cpo)

    # ---- stage 3: BN2_1-norm + LeakyReLU + conv2_2 + BN2_2 partials ----------
    c1_halo = _row_halos(c1_pre, th)
    c2_pre, st3 = pl.pallas_call(
        _conv2_2_kernel,
        grid=(B, nt),
        in_specs=[
            pl.BlockSpec((1, th, Tw, cpo), lambda b, i: (b, i, 0, 0)),
            pl.BlockSpec((1, 1, 2, Tw, cpo), lambda b, i: (b, i, 0, 0, 0)),
            pl.BlockSpec((1, cpo), lambda b, i: (0, 0)),
            pl.BlockSpec((1, cpo), lambda b, i: (0, 0)),
            pl.BlockSpec((9, cpo, cpo), lambda b, i: (0, 0, 0)),
            pl.BlockSpec((1, cpo), lambda b, i: (0, 0)),
        ],
        out_specs=[
            pl.BlockSpec((1, th, Tw, cpo), lambda b, i: (b, i, 0, 0)),
            pl.BlockSpec((1, 1, 2, cpo), lambda b, i: (b, i, 0, 0)),
        ],
        out_shape=[
            jax.ShapeDtypeStruct((B, T, Tw, cpo), jnp.float32),
            jax.ShapeDtypeStruct((B, nt, 2, cpo), jnp.float32),
        ],
        compiler_params=_CPARAMS,
    )(c1_pre, c1_halo, sc2, sh2, w2, b2)
    sc3, sh3 = _bn_affine(st3, n_pix, params["bn2_2_g"], params["bn2_2_b"], cpo)

    # ---- stage 4: final BN2_2-norm + LeakyReLU + dropout (elementwise) -------
    out_pad = pl.pallas_call(
        _bn_act_drop_kernel,
        grid=(B, nt),
        in_specs=[
            pl.BlockSpec((1, th, Tw, cpo), lambda b, i: (b, i, 0, 0)),
            pl.BlockSpec((1, th, Tw, cpo), lambda b, i: (b, i, 0, 0)),
            pl.BlockSpec((1, cpo), lambda b, i: (0, 0)),
            pl.BlockSpec((1, cpo), lambda b, i: (0, 0)),
        ],
        out_specs=pl.BlockSpec((1, th, Tw, cpo), lambda b, i: (b, i, 0, 0)),
        out_shape=jax.ShapeDtypeStruct((B, T, Tw, cpo), jnp.float32),
        compiler_params=_CPARAMS,
    )(c2_pre, mask2, sc3, sh3)

    out = out_pad[:, :, :, :cout]              # strip lane padding
    return jnp.transpose(out, (0, 3, 1, 2))    # back to NCHW


# ---------------------------------------------------------------------------
# parameter init (kaiming_normal_ on conv weights, PyTorch-style defaults)
# ---------------------------------------------------------------------------
def init_params(key, in_size, out_size):
    kw1, kw2, kw3, kb1, kb2, kb3 = jax.random.split(key, 6)

    def kaiming(k, shape, fan_in):
        return jax.random.normal(k, shape, jnp.float32) * np.sqrt(2.0 / fan_in)

    def unif(k, shape, fan_in):
        bound = 1.0 / np.sqrt(fan_in)
        return jax.random.uniform(k, shape, jnp.float32, -bound, bound)

    return {
        # ConvTranspose2d(in, out, 2, stride=2): weight (in, out, 2, 2)
        "w_up": kaiming(kw1, (in_size, out_size, 2, 2), out_size * 4),
        "b_up": unif(kb1, (out_size,), out_size * 4),
        # Conv2d(in, out, 3, padding=1): weight (out, in, 3, 3)
        "w1": kaiming(kw2, (out_size, in_size, 3, 3), in_size * 9),
        "b1": unif(kb2, (out_size,), in_size * 9),
        # Conv2d(out, out, 3, padding=1)
        "w2": kaiming(kw3, (out_size, out_size, 3, 3), out_size * 9),
        "b2": unif(kb3, (out_size,), out_size * 9),
        # BatchNorm2d defaults (train mode -> batch statistics are used)
        "bn1_g": jnp.ones((out_size,), jnp.float32),
        "bn1_b": jnp.zeros((out_size,), jnp.float32),
        "bn2_1_g": jnp.ones((out_size,), jnp.float32),
        "bn2_1_b": jnp.zeros((out_size,), jnp.float32),
        "bn2_2_g": jnp.ones((out_size,), jnp.float32),
        "bn2_2_b": jnp.zeros((out_size,), jnp.float32),
    }


if __name__ == "__main__":
    in_size, out_size = 8, 4
    B, H, W = 2, 8, 8                      # x: (2, 8, 8, 8) -> out: (2, 4, 16, 16)
    key = jax.random.PRNGKey(0)
    kx, ku, kp, kd = jax.random.split(key, 4)

    x = jax.random.normal(kx, (B, in_size, H, W), jnp.float32)
    # skip tensor u carries in_size - out_size channels at the up-sampled size
    u = jax.random.normal(ku, (B, in_size - out_size, 2 * H, 2 * W), jnp.float32)
    params = init_params(kp, in_size, out_size)

    # row_tile=4 -> 4 row tiles per image, exercising the multi-tile/halo path.
    out = unet_up_block(params, x, u, kd, row_tile=4)
    out = jax.block_until_ready(out)
    assert out.shape == (B, out_size, 2 * H, 2 * W)
    assert bool(jnp.isfinite(out).all())
    print("KERNEL_OK")
</pallas_src>

<mosaic_0001>
module attributes {stable_mosaic.version = 11 : i64} {
  func.func @_upconv_kernel(%arg0: i32, %arg1: i32, %arg2: memref<1x2x8x128xf32, #tpu.memory_space<vmem>>, %arg3: memref<2x128x256xbf16, #tpu.memory_space<vmem>>, %arg4: memref<1x256xf32, #tpu.memory_space<vmem>>, %arg5: memref<1x2x2x8x256xf32, #tpu.memory_space<vmem>>, %arg6: memref<1x1x2x128xf32, #tpu.memory_space<vmem>>) attributes {dimension_semantics = [#tpu.dimension_semantics<parallel>, #tpu.dimension_semantics<parallel>], iteration_bounds = array<i64: 2, 4>, scalar_prefetch = 0 : i64, scratch_operands = 0 : i64, tpu.core_type = #tpu.core_type<tc>, window_params = [{transform_indices = @transform_0, window_bounds = array<i64: 1, 2, 8, 128>}, {pipeline_mode = #tpu.pipeline_mode<synchronous>, transform_indices = @transform_1, window_bounds = array<i64: 2, 128, 256>}, {pipeline_mode = #tpu.pipeline_mode<synchronous>, transform_indices = @transform_2, window_bounds = array<i64: 1, 256>}, {transform_indices = @transform_3, window_bounds = array<i64: 1, 2, 2, 8, 256>}, {transform_indices = @transform_4, window_bounds = array<i64: 1, 1, 2, 128>}]} {
    %c0 = arith.constant 0 : index
    %c0_0 = arith.constant 0 : index
    %c0_1 = arith.constant 0 : index
    %c0_2 = arith.constant 0 : index
    %0 = vector.load %arg2[%c0, %c0_0, %c0_1, %c0_2] : memref<1x2x8x128xf32, #tpu.memory_space<vmem>>, vector<1x2x8x128xf32>
    %1 = vector.shape_cast %0 : vector<1x2x8x128xf32> to vector<2x8x128xf32>
    %2 = vector.shape_cast %1 : vector<2x8x128xf32> to vector<16x128xf32>
    %3 = arith.truncf %2 : vector<16x128xf32> to vector<16x128xbf16>
    %c0_3 = arith.constant 0 : index
    %c0_4 = arith.constant 0 : index
    %4 = vector.load %arg4[%c0_3, %c0_4] : memref<1x256xf32, #tpu.memory_space<vmem>>, vector<1x256xf32>
    %cst = arith.constant 0.000000e+00 : f32
    %5 = vector.broadcast %cst : f32 to vector<1x128xf32>
    %cst_5 = arith.constant 0.000000e+00 : f32
    %6 = vector.broadcast %cst_5 : f32 to vector<1x128xf32>
    %c0_6 = arith.constant 0 : index
    %c0_7 = arith.constant 0 : index
    %c0_8 = arith.constant 0 : index
    %7 = vector.load %arg3[%c0_6, %c0_7, %c0_8] : memref<2x128x256xbf16, #tpu.memory_space<vmem>>, vector<1x128x256xbf16>
    %8 = vector.shape_cast %7 : vector<1x128x256xbf16> to vector<128x256xbf16>
    %cst_9 = arith.constant dense<0.000000e+00> : vector<16x256xf32>
    %9 = tpu.matmul %3, %8, %cst_9 {dimension_numbers = #tpu.dot_dimension_numbers<[1], [0], [0], [1], [0, 0, 1, 1], [], []>} : vector<16x128xbf16>, vector<128x256xbf16>, vector<16x256xf32> -> vector<16x256xf32>
    %10 = vector.broadcast %4 : vector<1x256xf32> to vector<16x256xf32>
    %11 = arith.addf %9, %10 : vector<16x256xf32>
    %12 = vector.extract_strided_slice %11 {offsets = [0, 0], sizes = [16, 128], strides = [1, 1]} : vector<16x256xf32> to vector<16x128xf32>
    %cst_10 = arith.constant dense<0.000000e+00> : vector<128xf32>
    %13 = vector.multi_reduction <add>, %12, %cst_10 [0] : vector<16x128xf32> to vector<128xf32>
    %14 = vector.shape_cast %13 : vector<128xf32> to vector<1x128xf32>
    %15 = arith.addf %5, %14 : vector<1x128xf32>
    %16 = vector.extract_strided_slice %11 {offsets = [0, 128], sizes = [16, 128], strides = [1, 1]} : vector<16x256xf32> to vector<16x128xf32>
    %cst_11 = arith.constant dense<0.000000e+00> : vector<128xf32>
    %17 = vector.multi_reduction <add>, %16, %cst_11 [0] : vector<16x128xf32> to vector<128xf32>
    %18 = vector.shape_cast %17 : vector<128xf32> to vector<1x128xf32>
    %19 = arith.addf %15, %18 : vector<1x128xf32>
    %20 = arith.mulf %11, %11 : vector<16x256xf32>
    %21 = vector.extract_strided_slice %20 {offsets = [0, 0], sizes = [16, 128], strides = [1, 1]} : vector<16x256xf32> to vector<16x128xf32>
    %cst_12 = arith.constant dense<0.000000e+00> : vector<128xf32>
    %22 = vector.multi_reduction <add>, %21, %cst_12 [0] : vector<16x128xf32> to vector<128xf32>
    %23 = vector.shape_cast %22 : vector<128xf32> to vector<1x128xf32>
    %24 = arith.addf %6, %23 : vector<1x128xf32>
    %25 = vector.extract_strided_slice %20 {offsets = [0, 128], sizes = [16, 128], strides = [1, 1]} : vector<16x256xf32> to vector<16x128xf32>
    %cst_13 = arith.constant dense<0.000000e+00> : vector<128xf32>
    %26 = vector.multi_reduction <add>, %25, %cst_13 [0] : vector<16x128xf32> to vector<128xf32>
    %27 = vector.shape_cast %26 : vector<128xf32> to vector<1x128xf32>
    %28 = arith.addf %24, %27 : vector<1x128xf32>
    %29 = vector.shape_cast %11 : vector<16x256xf32> to vector<2x8x256xf32>
    %c0_14 = arith.constant 0 : index
    %c0_15 = arith.constant 0 : index
    %c0_16 = arith.constant 0 : index
    %c0_17 = arith.constant 0 : index
    %c0_18 = arith.constant 0 : index
    %30 = vector.load %arg5[%c0_14, %c0_15, %c0_16, %c0_17, %c0_18] : memref<1x2x2x8x256xf32, #tpu.memory_space<vmem>>, vector<1x2x1x8x256xf32>
    %31 = vector.shape_cast %30 : vector<1x2x1x8x256xf32> to vector<2x8x256xf32>
    %32 = vector.shape_cast %29 : vector<2x8x256xf32> to vector<1x2x1x8x256xf32>
    tpu.vector_store %arg5[%c0_14, %c0_15, %c0_16, %c0_17, %c0_18], %32 {strides = array<i32>} : memref<1x2x2x8x256xf32, #tpu.memory_space<vmem>>, vector<1x2x1x8x256xf32>,
    %c1 = arith.constant 1 : index
    %c0_19 = arith.constant 0 : index
    %c0_20 = arith.constant 0 : index
    %33 = vector.load %arg3[%c1, %c0_19, %c0_20] : memref<2x128x256xbf16, #tpu.memory_space<vmem>>, vector<1x128x256xbf16>
    %34 = vector.shape_cast %33 : vector<1x128x256xbf16> to vector<128x256xbf16>
    %cst_21 = arith.constant dense<0.000000e+00> : vector<16x256xf32>
    %35 = tpu.matmul %3, %34, %cst_21 {dimension_numbers = #tpu.dot_dimension_numbers<[1], [0], [0], [1], [0, 0, 1, 1], [], []>} : vector<16x128xbf16>, vector<128x256xbf16>, vector<16x256xf32> -> vector<16x256xf32>
    %36 = vector.broadcast %4 : vector<1x256xf32> to vector<16x256xf32>
    %37 = arith.addf %35, %36 : vector<16x256xf32>
    %38 = vector.extract_strided_slice %37 {offsets = [0, 0], sizes = [16, 128], strides = [1, 1]} : vector<16x256xf32> to vector<16x128xf32>
    %cst_22 = arith.constant dense<0.000000e+00> : vector<128xf32>
    %39 = vector.multi_reduction <add>, %38, %cst_22 [0] : vector<16x128xf32> to vector<128xf32>
    %40 = vector.shape_cast %39 : vector<128xf32> to vector<1x128xf32>
    %41 = arith.addf %19, %40 : vector<1x128xf32>
    %42 = vector.extract_strided_slice %37 {offsets = [0, 128], sizes = [16, 128], strides = [1, 1]} : vector<16x256xf32> to vector<16x128xf32>
    %cst_23 = arith.constant dense<0.000000e+00> : vector<128xf32>
    %43 = vector.multi_reduction <add>, %42, %cst_23 [0] : vector<16x128xf32> to vector<128xf32>
    %44 = vector.shape_cast %43 : vector<128xf32> to vector<1x128xf32>
    %45 = arith.addf %41, %44 : vector<1x128xf32>
    %46 = arith.mulf %37, %37 : vector<16x256xf32>
    %47 = vector.extract_strided_slice %46 {offsets = [0, 0], sizes = [16, 128], strides = [1, 1]} : vector<16x256xf32> to vector<16x128xf32>
    %cst_24 = arith.constant dense<0.000000e+00> : vector<128xf32>
    %48 = vector.multi_reduction <add>, %47, %cst_24 [0] : vector<16x128xf32> to vector<128xf32>
    %49 = vector.shape_cast %48 : vector<128xf32> to vector<1x128xf32>
    %50 = arith.addf %28, %49 : vector<1x128xf32>
    %51 = vector.extract_strided_slice %46 {offsets = [0, 128], sizes = [16, 128], strides = [1, 1]} : vector<16x256xf32> to vector<16x128xf32>
    %cst_25 = arith.constant dense<0.000000e+00> : vector<128xf32>
    %52 = vector.multi_reduction <add>, %51, %cst_25 [0] : vector<16x128xf32> to vector<128xf32>
    %53 = vector.shape_cast %52 : vector<128xf32> to vector<1x128xf32>
    %54 = arith.addf %50, %53 : vector<1x128xf32>
    %55 = vector.shape_cast %37 : vector<16x256xf32> to vector<2x8x256xf32>
    %c0_26 = arith.constant 0 : index
    %c0_27 = arith.constant 0 : index
    %c1_28 = arith.constant 1 : index
    %c0_29 = arith.constant 0 : index
    %c0_30 = arith.constant 0 : index
    %56 = vector.load %arg5[%c0_26, %c0_27, %c1_28, %c0_29, %c0_30] : memref<1x2x2x8x256xf32, #tpu.memory_space<vmem>>, vector<1x2x1x8x256xf32>
    %57 = vector.shape_cast %56 : vector<1x2x1x8x256xf32> to vector<2x8x256xf32>
    %58 = vector.shape_cast %55 : vector<2x8x256xf32> to vector<1x2x1x8x256xf32>
    tpu.vector_store %arg5[%c0_26, %c0_27, %c1_28, %c0_29, %c0_30], %58 {strides = array<i32>} : memref<1x2x2x8x256xf32, #tpu.memory_space<vmem>>, vector<1x2x1x8x256xf32>,
    %59 = tpu.concatenate %45, %54 in 0 : vector<1x128xf32>, vector<1x128xf32> -> vector<2x128xf32>
    %c0_31 = arith.constant 0 : index
    %c0_32 = arith.constant 0 : index
    %c0_33 = arith.constant 0 : index
    %c0_34 = arith.constant 0 : index
    %60 = vector.load %arg6[%c0_31, %c0_32, %c0_33, %c0_34] : memref<1x1x2x128xf32, #tpu.memory_space<vmem>>, vector<1x1x2x128xf32>
    %61 = vector.shape_cast %60 : vector<1x1x2x128xf32> to vector<2x128xf32>
    %62 = vector.shape_cast %59 : vector<2x128xf32> to vector<1x1x2x128xf32>
    tpu.vector_store %arg6[%c0_31, %c0_32, %c0_33, %c0_34], %62 {strides = array<i32>} : memref<1x1x2x128xf32, #tpu.memory_space<vmem>>, vector<1x1x2x128xf32>,
    return
  }
  func.func @transform_0(%arg0: i32, %arg1: i32) -> (i32, i32, i32, i32) {
    %c0_i32 = arith.constant 0 : i32
    %c0_i32_0 = arith.constant 0 : i32
    %c0_i32_1 = arith.constant 0 : i32
    return %arg0, %arg1, %c0_i32, %c0_i32_0 : i32, i32, i32, i32
  }
  func.func @transform_1(%arg0: i32, %arg1: i32) -> (i32, i32, i32) {
    %c0_i32 = arith.constant 0 : i32
    %c0_i32_0 = arith.constant 0 : i32
    %c0_i32_1 = arith.constant 0 : i32
    %c0_i32_2 = arith.constant 0 : i32
    return %c0_i32, %c0_i32_0, %c0_i32_1 : i32, i32, i32
  }
  func.func @transform_2(%arg0: i32, %arg1: i32) -> (i32, i32) {
    %c0_i32 = arith.constant 0 : i32
    %c0_i32_0 = arith.constant 0 : i32
    %c0_i32_1 = arith.constant 0 : i32
    return %c0_i32, %c0_i32_0 : i32, i32
  }
  func.func @transform_3(%arg0: i32, %arg1: i32) -> (i32, i32, i32, i32, i32) {
    %c0_i32 = arith.constant 0 : i32
    %c0_i32_0 = arith.constant 0 : i32
    %c0_i32_1 = arith.constant 0 : i32
    %c0_i32_2 = arith.constant 0 : i32
    return %arg0, %arg1, %c0_i32, %c0_i32_0, %c0_i32_1 : i32, i32, i32, i32, i32
  }
  func.func @transform_4(%arg0: i32, %arg1: i32) -> (i32, i32, i32, i32) {
    %c0_i32 = arith.constant 0 : i32
    %c0_i32_0 = arith.constant 0 : i32
    %c0_i32_1 = arith.constant 0 : i32
    return %arg0, %arg1, %c0_i32, %c0_i32_0 : i32, i32, i32, i32
  }
}

module attributes {stable_mosaic.version = 11 : i64} {
  func.func @_conv2_1_kernel(%arg0: i32, %arg1: i32, %arg2: memref<1x4x16x128xf32, #tpu.memory_space<vmem>>, %arg3: memref<1x1x2x16x128xf32, #tpu.memory_space<vmem>>, %arg4: memref<1x4x16x128xf32, #tpu.memory_space<vmem>>, %arg5: memref<1x1x2x16x128xf32, #tpu.memory_space<vmem>>, %arg6: memref<1x4x16x128xbf16, #tpu.memory_space<vmem>>, %arg7: memref<1x1x2x16x128xbf16, #tpu.memory_space<vmem>>, %arg8: memref<1x128xf32, #tpu.memory_space<vmem>>, %arg9: memref<1x128xf32, #tpu.memory_space<vmem>>, %arg10: memref<9x128x128xbf16, #tpu.memory_space<vmem>>, %arg11: memref<9x128x128xbf16, #tpu.memory_space<vmem>>, %arg12: memref<1x128xf32, #tpu.memory_space<vmem>>, %arg13: memref<1x4x16x128xf32, #tpu.memory_space<vmem>>, %arg14: memref<1x1x2x128xf32, #tpu.memory_space<vmem>>) attributes {dimension_semantics = [#tpu.dimension_semantics<parallel>, #tpu.dimension_semantics<parallel>], iteration_bounds = array<i64: 2, 4>, scalar_prefetch = 0 : i64, scratch_operands = 0 : i64, tpu.core_type = #tpu.core_type<tc>, window_params = [{transform_indices = @transform_0, window_bounds = array<i64: 1, 4, 16, 128>}, {transform_indices = @transform_1, window_bounds = array<i64: 1, 1, 2, 16, 128>}, {transform_indices = @transform_2, window_bounds = array<i64: 1, 4, 16, 128>}, {transform_indices = @transform_3, window_bounds = array<i64: 1, 1, 2, 16, 128>}, {transform_indices = @transform_4, window_bounds = array<i64: 1, 4, 16, 128>}, {transform_indices = @transform_5, window_bounds = array<i64: 1, 1, 2, 16, 128>}, {pipeline_mode = #tpu.pipeline_mode<synchronous>, transform_indices = @transform_6, window_bounds = array<i64: 1, 128>}, {pipeline_mode = #tpu.pipeline_mode<synchronous>, transform_indices = @transform_7, window_bounds = array<i64: 1, 128>}, {pipeline_mode = #tpu.pipeline_mode<synchronous>, transform_indices = @transform_8, window_bounds = array<i64: 9, 128, 128>}, {pipeline_mode = #tpu.pipeline_mode<synchronous>, transform_indices = @transform_9, window_bounds = array<i64: 9, 128, 128>}, {pipeline_mode = #tpu.pipeline_mode<synchronous>, transform_indices = @transform_10, window_bounds = array<i64: 1, 128>}, {transform_indices = @transform_11, window_bounds = array<i64: 1, 4, 16, 128>}, {transform_indices = @transform_12, window_bounds = array<i64: 1, 1, 2, 128>}]} {
    %c0 = arith.constant 0 : index
    %c0_0 = arith.constant 0 : index
    %0 = vector.load %arg8[%c0, %c0_0] : memref<1x128xf32, #tpu.memory_space<vmem>>, vector<1x128xf32>
    %1 = vector.shape_cast %0 : vector<1x128xf32> to vector<1x1x128xf32>
    %c0_1 = arith.constant 0 : index
    %c0_2 = arith.constant 0 : index
    %2 = vector.load %arg9[%c0_1, %c0_2] : memref<1x128xf32, #tpu.memory_space<vmem>>, vector<1x128xf32>
    %3 = vector.shape_cast %2 : vector<1x128xf32> to vector<1x1x128xf32>
    %c0_3 = arith.constant 0 : index
    %c0_4 = arith.constant 0 : index
    %c0_5 = arith.constant 0 : index
    %c0_6 = arith.constant 0 : index
    %c0_7 = arith.constant 0 : index
    %4 = vector.load %arg3[%c0_3, %c0_4, %c0_5, %c0_6, %c0_7] : memref<1x1x2x16x128xf32, #tpu.memory_space<vmem>>, vector<1x1x1x16x128xf32>
    %5 = vector.shape_cast %4 : vector<1x1x1x16x128xf32> to vector<1x16x128xf32>
    %c0_8 = arith.constant 0 : index
    %c0_9 = arith.constant 0 : index
    %c0_10 = arith.constant 0 : index
    %c0_11 = arith.constant 0 : index
    %6 = vector.load %arg2[%c0_8, %c0_9, %c0_10, %c0_11] : memref<1x4x16x128xf32, #tpu.memory_space<vmem>>, vector<1x4x16x128xf32>
    %7 = vector.shape_cast %6 : vector<1x4x16x128xf32> to vector<4x16x128xf32>
    %c0_12 = arith.constant 0 : index
    %c0_13 = arith.constant 0 : index
    %c1 = arith.constant 1 : index
    %c0_14 = arith.constant 0 : index
    %c0_15 = arith.constant 0 : index
    %8 = vector.load %arg3[%c0_12, %c0_13, %c1, %c0_14, %c0_15] : memref<1x1x2x16x128xf32, #tpu.memory_space<vmem>>, vector<1x1x1x16x128xf32>
    %9 = vector.shape_cast %8 : vector<1x1x1x16x128xf32> to vector<1x16x128xf32>
    %10 = tpu.concatenate %5, %7, %9 in 0 : vector<1x16x128xf32>, vector<4x16x128xf32>, vector<1x16x128xf32> -> vector<6x16x128xf32>
    %11 = vector.broadcast %1 : vector<1x1x128xf32> to vector<6x16x128xf32>
    %12 = arith.mulf %10, %11 : vector<6x16x128xf32>
    %13 = vector.broadcast %3 : vector<1x1x128xf32> to vector<6x16x128xf32>
    %14 = arith.addf %12, %13 : vector<6x16x128xf32>
    %cst = arith.constant 2.000000e-01 : f32
    %15 = vector.broadcast %cst : f32 to vector<6x16x128xf32>
    %16 = arith.mulf %15, %14 : vector<6x16x128xf32>
    %17 = arith.maximumf %14, %16 : vector<6x16x128xf32>
    %c0_16 = arith.constant 0 : index
    %c0_17 = arith.constant 0 : index
    %c0_18 = arith.constant 0 : index
    %c0_19 = arith.constant 0 : index
    %c0_20 = arith.constant 0 : index
    %18 = vector.load %arg7[%c0_16, %c0_17, %c0_18, %c0_19, %c0_20] : memref<1x1x2x16x128xbf16, #tpu.memory_space<vmem>>, vector<1x1x1x16x128xbf16>
    %19 = vector.shape_cast %18 : vector<1x1x1x16x128xbf16> to vector<1x16x128xbf16>
    %c0_21 = arith.constant 0 : index
    %c0_22 = arith.constant 0 : index
    %c0_23 = arith.constant 0 : index
    %c0_24 = arith.constant 0 : index
    %20 = vector.load %arg6[%c0_21, %c0_22, %c0_23, %c0_24] : memref<1x4x16x128xbf16, #tpu.memory_space<vmem>>, vector<1x4x16x128xbf16>
    %21 = vector.shape_cast %20 : vector<1x4x16x128xbf16> to vector<4x16x128xbf16>
    %c0_25 = arith.constant 0 : index
    %c0_26 = arith.constant 0 : index
    %c1_27 = arith.constant 1 : index
    %c0_28 = arith.constant 0 : index
    %c0_29 = arith.constant 0 : index
    %22 = vector.load %arg7[%c0_25, %c0_26, %c1_27, %c0_28, %c0_29] : memref<1x1x2x16x128xbf16, #tpu.memory_space<vmem>>, vector<1x1x1x16x128xbf16>
    %23 = vector.shape_cast %22 : vector<1x1x1x16x128xbf16> to vector<1x16x128xbf16>
    %24 = tpu.concatenate %19, %21, %23 in 0 : vector<1x16x128xbf16>, vector<4x16x128xbf16>, vector<1x16x128xbf16> -> vector<6x16x128xbf16>
    %25 = arith.extf %24 : vector<6x16x128xbf16> to vector<6x16x128xf32>
    %26 = arith.mulf %17, %25 : vector<6x16x128xf32>
    %27 = tpu.iota {dimensions = array<i32: 0>} : vector<6x1x1xi32>
    %c0_i32 = arith.constant 0 : i32
    %28 = vector.broadcast %c0_i32 : i32 to vector<6x1x1xi32>
    %29 = arith.cmpi ne, %27, %28 : vector<6x1x1xi32>
    %c0_i32_30 = arith.constant 0 : i32
    %30 = arith.cmpi sgt, %arg1, %c0_i32_30 : i32
    %31 = vector.broadcast %30 : i1 to vector<6x1x1xi1>
    %32 = arith.ori %29, %31 : vector<6x1x1xi1>
    %c5_i32 = arith.constant 5 : i32
    %33 = vector.broadcast %c5_i32 : i32 to vector<6x1x1xi32>
    %34 = arith.cmpi ne, %27, %33 : vector<6x1x1xi32>
    %c3_i32 = arith.constant 3 : i32
    %35 = arith.cmpi slt, %arg1, %c3_i32 : i32
    %36 = vector.broadcast %35 : i1 to vector<6x1x1xi1>
    %37 = arith.ori %34, %36 : vector<6x1x1xi1>
    %38 = arith.andi %32, %37 : vector<6x1x1xi1>
    %cst_31 = arith.constant 0.000000e+00 : f32
    %39 = vector.shape_cast %38 : vector<6x1x1xi1> to vector<6x1x1xi1>
    %40 = vector.broadcast %39 : vector<6x1x1xi1> to vector<6x16x128xi1>
    %41 = vector.broadcast %cst_31 : f32 to vector<6x16x128xf32>
    %42 = arith.select %40, %26, %41 : vector<6x16x128xi1>, vector<6x16x128xf32>
    %43 = arith.truncf %42 : vector<6x16x128xf32> to vector<6x16x128xbf16>
    %cst_32 = arith.constant 0.000000e+00 : bf16
    %44 = vector.broadcast %cst_32 : bf16 to vector<6x1x128xbf16>
    %45 = tpu.concatenate %44, %43, %44 in 1 : vector<6x1x128xbf16>, vector<6x16x128xbf16>, vector<6x1x128xbf16> -> vector<6x18x128xbf16>
    %c0_33 = arith.constant 0 : index
    %c0_34 = arith.constant 0 : index
    %c0_35 = arith.constant 0 : index
    %c0_36 = arith.constant 0 : index
    %c0_37 = arith.constant 0 : index
    %46 = vector.load %arg5[%c0_33, %c0_34, %c0_35, %c0_36, %c0_37] : memref<1x1x2x16x128xf32, #tpu.memory_space<vmem>>, vector<1x1x1x16x128xf32>
    %47 = vector.shape_cast %46 : vector<1x1x1x16x128xf32> to vector<1x16x128xf32>
    %c0_38 = arith.constant 0 : index
    %c0_39 = arith.constant 0 : index
    %c0_40 = arith.constant 0 : index
    %c0_41 = arith.constant 0 : index
    %48 = vector.load %arg4[%c0_38, %c0_39, %c0_40, %c0_41] : memref<1x4x16x128xf32, #tpu.memory_space<vmem>>, vector<1x4x16x128xf32>
    %49 = vector.shape_cast %48 : vector<1x4x16x128xf32> to vector<4x16x128xf32>
    %c0_42 = arith.constant 0 : index
    %c0_43 = arith.constant 0 : index
    %c1_44 = arith.constant 1 : index
    %c0_45 = arith.constant 0 : index
    %c0_46 = arith.constant 0 : index
    %50 = vector.load %arg5[%c0_42, %c0_43, %c1_44, %c0_45, %c0_46] : memref<1x1x2x16x128xf32, #tpu.memory_space<vmem>>, vector<1x1x1x16x128xf32>
    %51 = vector.shape_cast %50 : vector<1x1x1x16x128xf32> to vector<1x16x128xf32>
    %52 = tpu.concatenate %47, %49, %51 in 0 : vector<1x16x128xf32>, vector<4x16x128xf32>, vector<1x16x128xf32> -> vector<6x16x128xf32>
    %53 = arith.truncf %52 : vector<6x16x128xf32> to vector<6x16x128xbf16>
    %cst_47 = arith.constant 0.000000e+00 : bf16
    %54 = vector.broadcast %cst_47 : bf16 to vector<6x1x128xbf16>
    %55 = tpu.concatenate %54, %53, %54 in 1 : vector<6x1x128xbf16>, vector<6x16x128xbf16>, vector<6x1x128xbf16> -> vector<6x18x128xbf16>
    %cst_48 = arith.constant 0.000000e+00 : f32
    %56 = vector.broadcast %cst_48 : f32 to vector<64x128xf32>
    %57 = vector.extract_strided_slice %45 {offsets = [0, 0, 0], sizes = [4, 16, 128], strides = [1, 1, 1]} : vector<6x18x128xbf16> to vector<4x16x128xbf16>
    %58 = vector.shape_cast %57 : vector<4x16x128xbf16> to vector<64x128xbf16>
    %c0_49 = arith.constant 0 : index
    %c0_50 = arith.constant 0 : index
    %c0_51 = arith.constant 0 : index
    %59 = vector.load %arg10[%c0_49, %c0_50, %c0_51] : memref<9x128x128xbf16, #tpu.memory_space<vmem>>, vector<1x128x128xbf16>
    %60 = vector.shape_cast %59 : vector<1x128x128xbf16> to vector<128x128xbf16>
    %cst_52 = arith.constant dense<0.000000e+00> : vector<64x128xf32>
    %61 = tpu.matmul %58, %60, %cst_52 {dimension_numbers = #tpu.dot_dimension_numbers<[1], [0], [0], [1], [0, 0, 1, 1], [], []>} : vector<64x128xbf16>, vector<128x128xbf16>, vector<64x128xf32> -> vector<64x128xf32>
    %62 = arith.addf %56, %61 : vector<64x128xf32>
    %63 = vector.extract_strided_slice %45 {offsets = [0, 1, 0], sizes = [4, 16, 128], strides = [1, 1, 1]} : vector<6x18x128xbf16> to vector<4x16x128xbf16>
    %64 = vector.shape_cast %63 : vector<4x16x128xbf16> to vector<64x128xbf16>
    %c1_53 = arith.constant 1 : index
    %c0_54 = arith.constant 0 : index
    %c0_55 = arith.constant 0 : index
    %65 = vector.load %arg10[%c1_53, %c0_54, %c0_55] : memref<9x128x128xbf16, #tpu.memory_space<vmem>>, vector<1x128x128xbf16>
    %66 = vector.shape_cast %65 : vector<1x128x128xbf16> to vector<128x128xbf16>
    %cst_56 = arith.constant dense<0.000000e+00> : vector<64x128xf32>
    %67 = tpu.matmul %64, %66, %cst_56 {dimension_numbers = #tpu.dot_dimension_numbers<[1], [0], [0], [1], [0, 0, 1, 1], [], []>} : vector<64x128xbf16>, vector<128x128xbf16>, vector<64x128xf32> -> vector<64x128xf32>
    %68 = arith.addf %62, %67 : vector<64x128xf32>
    %69 = vector.extract_strided_slice %45 {offsets = [0, 2, 0], sizes = [4, 16, 128], strides = [1, 1, 1]} : vector<6x18x128xbf16> to vector<4x16x128xbf16>
    %70 = vector.shape_cast %69 : vector<4x16x128xbf16> to vector<64x128xbf16>
    %c2 = arith.constant 2 : index
    %c0_57 = arith.constant 0 : index
    %c0_58 = arith.constant 0 : index
    %71 = vector.load %arg10[%c2, %c0_57, %c0_58] : memref<9x128x128xbf16, #tpu.memory_space<vmem>>, vector<1x128x128xbf16>
    %72 = vector.shape_cast %71 : vector<1x128x128xbf16> to vector<128x128xbf16>
    %cst_59 = arith.constant dense<0.000000e+00> : vector<64x128xf32>
    %73 = tpu.matmul %70, %72, %cst_59 {dimension_numbers = #tpu.dot_dimension_numbers<[1], [0], [0], [1], [0, 0, 1, 1], [], []>} : vector<64x128xbf16>, vector<128x128xbf16>, vector<64x128xf32> -> vector<64x128xf32>
    %74 = arith.addf %68, %73 : vector<64x128xf32>
    %75 = vector.extract_strided_slice %45 {offsets = [1, 0, 0], sizes = [4, 16, 128], strides = [1, 1, 1]} : vector<6x18x128xbf16> to vector<4x16x128xbf16>
    %76 = vector.shape_cast %75 : vector<4x16x128xbf16> to vector<64x128xbf16>
    %c3 = arith.constant 3 : index
    %c0_60 = arith.constant 0 : index
    %c0_61 = arith.constant 0 : index
    %77 = vector.load %arg10[%c3, %c0_60, %c0_61] : memref<9x128x128xbf16, #tpu.memory_space<vmem>>, vector<1x128x128xbf16>
    %78 = vector.shape_cast %77 : vector<1x128x128xbf16> to vector<128x128xbf16>
    %cst_62 = arith.constant dense<0.000000e+00> : vector<64x128xf32>
    %79 = tpu.matmul %76, %78, %cst_62 {dimension_numbers = #tpu.dot_dimension_numbers<[1], [0], [0], [1], [0, 0, 1, 1], [], []>} : vector<64x128xbf16>, vector<128x128xbf16>, vector<64x128xf32> -> vector<64x128xf32>
    %80 = arith.addf %74, %79 : vector<64x128xf32>
    %81 = vector.extract_strided_slice %45 {offsets = [1, 1, 0], sizes = [4, 16, 128], strides = [1, 1, 1]} : vector<6x18x128xbf16> to vector<4x16x128xbf16>
    %82 = vector.shape_cast %81 : vector<4x16x128xbf16> to vector<64x128xbf16>
    %c4 = arith.constant 4 : index
    %c0_63 = arith.constant 0 : index
    %c0_64 = arith.constant 0 : index
    %83 = vector.load %arg10[%c4, %c0_63, %c0_64] : memref<9x128x128xbf16, #tpu.memory_space<vmem>>, vector<1x128x128xbf16>
    %84 = vector.shape_cast %83 : vector<1x128x128xbf16> to vector<128x128xbf16>
    %cst_65 = arith.constant dense<0.000000e+00> : vector<64x128xf32>
    %85 = tpu.matmul %82, %84, %cst_65 {dimension_numbers = #tpu.dot_dimension_numbers<[1], [0], [0], [1], [0, 0, 1, 1], [], []>} : vector<64x128xbf16>, vector<128x128xbf16>, vector<64x128xf32> -> vector<64x128xf32>
    %86 = arith.addf %80, %85 : vector<64x128xf32>
    %87 = vector.extract_strided_slice %45 {offsets = [1, 2, 0], sizes = [4, 16, 128], strides = [1, 1, 1]} : vector<6x18x128xbf16> to vector<4x16x128xbf16>
    %88 = vector.shape_cast %87 : vector<4x16x128xbf16> to vector<64x128xbf16>
    %c5 = arith.constant 5 : index
    %c0_66 = arith.constant 0 : index
    %c0_67 = arith.constant 0 : index
    %89 = vector.load %arg10[%c5, %c0_66, %c0_67] : memref<9x128x128xbf16, #tpu.memory_space<vmem>>, vector<1x128x128xbf16>
    %90 = vector.shape_cast %89 : vector<1x128x128xbf16> to vector<128x128xbf16>
    %cst_68 = arith.constant dense<0.000000e+00> : vector<64x128xf32>
    %91 = tpu.matmul %88, %90, %cst_68 {dimension_numbers = #tpu.dot_dimension_numbers<[1], [0], [0], [1], [0, 0, 1, 1], [], []>} : vector<64x128xbf16>, vector<128x128xbf16>, vector<64x128xf32> -> vector<64x128xf32>
    %92 = arith.addf %86, %91 : vector<64x128xf32>
    %93 = vector.extract_strided_slice %45 {offsets = [2, 0, 0], sizes = [4, 16, 128], strides = [1, 1, 1]} : vector<6x18x128xbf16> to vector<4x16x128xbf16>
    %94 = vector.shape_cast %93 : vector<4x16x128xbf16> to vector<64x128xbf16>
    %c6 = arith.constant 6 : index
    %c0_69 = arith.constant 0 : index
    %c0_70 = arith.constant 0 : index
    %95 = vector.load %arg10[%c6, %c0_69, %c0_70] : memref<9x128x128xbf16, #tpu.memory_space<vmem>>, vector<1x128x128xbf16>
    %96 = vector.shape_cast %95 : vector<1x128x128xbf16> to vector<128x128xbf16>
    %cst_71 = arith.constant dense<0.000000e+00> : vector<64x128xf32>
    %97 = tpu.matmul %94, %96, %cst_71 {dimension_numbers = #tpu.dot_dimension_numbers<[1], [0], [0], [1], [0, 0, 1, 1], [], []>} : vector<64x128xbf16>, vector<128x128xbf16>, vector<64x128xf32> -> vector<64x128xf32>
    %98 = arith.addf %92, %97 : vector<64x128xf32>
    %99 = vector.extract_strided_slice %45 {offsets = [2, 1, 0], sizes = [4, 16, 128], strides = [1, 1, 1]} : vector<6x18x128xbf16> to vector<4x16x128xbf16>
    %100 = vector.shape_cast %99 : vector<4x16x128xbf16> to vector<64x128xbf16>
    %c7 = arith.constant 7 : index
    %c0_72 = arith.constant 0 : index
    %c0_73 = arith.constant 0 : index
    %101 = vector.load %arg10[%c7, %c0_72, %c0_73] : memref<9x128x128xbf16, #tpu.memory_space<vmem>>, vector<1x128x128xbf16>
    %102 = vector.shape_cast %101 : vector<1x128x128xbf16> to vector<128x128xbf16>
    %cst_74 = arith.constant dense<0.000000e+00> : vector<64x128xf32>
    %103 = tpu.matmul %100, %102, %cst_74 {dimension_numbers = #tpu.dot_dimension_numbers<[1], [0], [0], [1], [0, 0, 1, 1], [], []>} : vector<64x128xbf16>, vector<128x128xbf16>, vector<64x128xf32> -> vector<64x128xf32>
    %104 = arith.addf %98, %103 : vector<64x128xf32>
    %105 = vector.extract_strided_slice %45 {offsets = [2, 2, 0], sizes = [4, 16, 128], strides = [1, 1, 1]} : vector<6x18x128xbf16> to vector<4x16x128xbf16>
    %106 = vector.shape_cast %105 : vector<4x16x128xbf16> to vector<64x128xbf16>
    %c8 = arith.constant 8 : index
    %c0_75 = arith.constant 0 : index
    %c0_76 = arith.constant 0 : index
    %107 = vector.load %arg10[%c8, %c0_75, %c0_76] : memref<9x128x128xbf16, #tpu.memory_space<vmem>>, vector<1x128x128xbf16>
    %108 = vector.shape_cast %107 : vector<1x128x128xbf16> to vector<128x128xbf16>
    %cst_77 = arith.constant dense<0.000000e+00> : vector<64x128xf32>
    %109 = tpu.matmul %106, %108, %cst_77 {dimension_numbers = #tpu.dot_dimension_numbers<[1], [0], [0], [1], [0, 0, 1, 1], [], []>} : vector<64x128xbf16>, vector<128x128xbf16>, vector<64x128xf32> -> vector<64x128xf32>
    %110 = arith.addf %104, %109 : vector<64x128xf32>
    %111 = vector.extract_strided_slice %55 {offsets = [0, 0, 0], sizes = [4, 16, 128], strides = [1, 1, 1]} : vector<6x18x128xbf16> to vector<4x16x128xbf16>
    %112 = vector.shape_cast %111 : vector<4x16x128xbf16> to vector<64x128xbf16>
    %c0_78 = arith.constant 0 : index
    %c0_79 = arith.constant 0 : index
    %c0_80 = arith.constant 0 : index
    %113 = vector.load %arg11[%c0_78, %c0_79, %c0_80] : memref<9x128x128xbf16, #tpu.memory_space<vmem>>, vector<1x128x128xbf16>
    %114 = vector.shape_cast %113 : vector<1x128x128xbf16> to vector<128x128xbf16>
    %cst_81 = arith.constant dense<0.000000e+00> : vector<64x128xf32>
    %115 = tpu.matmul %112, %114, %cst_81 {dimension_numbers = #tpu.dot_dimension_numbers<[1], [0], [0], [1], [0, 0, 1, 1], [], []>} : vector<64x128xbf16>, vector<128x128xbf16>, vector<64x128xf32> -> vector<64x128xf32>
    %116 = arith.addf %110, %115 : vector<64x128xf32>
    %117 = vector.extract_strided_slice %55 {offsets = [0, 1, 0], sizes = [4, 16, 128], strides = [1, 1, 1]} : vector<6x18x128xbf16> to vector<4x16x128xbf16>
    %118 = vector.shape_cast %117 : vector<4x16x128xbf16> to vector<64x128xbf16>
    %c1_82 = arith.constant 1 : index
    %c0_83 = arith.constant 0 : index
    %c0_84 = arith.constant 0 : index
    %119 = vector.load %arg11[%c1_82, %c0_83, %c0_84] : memref<9x128x128xbf16, #tpu.memory_space<vmem>>, vector<1x128x128xbf16>
    %120 = vector.shape_cast %119 : vector<1x128x128xbf16> to vector<128x128xbf16>
    %cst_85 = arith.constant dense<0.000000e+00> : vector<64x128xf32>
    %121 = tpu.matmul %118, %120, %cst_85 {dimension_numbers = #tpu.dot_dimension_numbers<[1], [0], [0], [1], [0, 0, 1, 1], [], []>} : vector<64x128xbf16>, vector<128x128xbf16>, vector<64x128xf32> -> vector<64x128xf32>
    %122 = arith.addf %116, %121 : vector<64x128xf32>
    %123 = vector.extract_strided_slice %55 {offsets = [0, 2, 0], sizes = [4, 16, 128], strides = [1, 1, 1]} : vector<6x18x128xbf16> to vector<4x16x128xbf16>
    %124 = vector.shape_cast %123 : vector<4x16x128xbf16> to vector<64x128xbf16>
    %c2_86 = arith.constant 2 : index
    %c0_87 = arith.constant 0 : index
    %c0_88 = arith.constant 0 : index
    %125 = vector.load %arg11[%c2_86, %c0_87, %c0_88] : memref<9x128x128xbf16, #tpu.memory_space<vmem>>, vector<1x128x128xbf16>
    %126 = vector.shape_cast %125 : vector<1x128x128xbf16> to vector<128x128xbf16>
    %cst_89 = arith.constant dense<0.000000e+00> : vector<64x128xf32>
    %127 = tpu.matmul %124, %126, %cst_89 {dimension_numbers = #tpu.dot_dimension_numbers<[1], [0], [0], [1], [0, 0, 1, 1], [], []>} : vector<64x128xbf16>, vector<128x128xbf16>, vector<64x128xf32> -> vector<64x128xf32>
    %128 = arith.addf %122, %127 : vector<64x128xf32>
    %129 = vector.extract_strided_slice %55 {offsets = [1, 0, 0], sizes = [4, 16, 128], strides = [1, 1, 1]} : vector<6x18x128xbf16> to vector<4x16x128xbf16>
    %130 = vector.shape_cast %129 : vector<4x16x128xbf16> to vector<64x128xbf16>
    %c3_90 = arith.constant 3 : index
    %c0_91 = arith.constant 0 : index
    %c0_92 = arith.constant 0 : index
    %131 = vector.load %arg11[%c3_90, %c0_91, %c0_92] : memref<9x128x128xbf16, #tpu.memory_space<vmem>>, vector<1x128x128xbf16>
    %132 = vector.shape_cast %131 : vector<1x128x128xbf16> to vector<128x128xbf16>
    %cst_93 = arith.constant dense<0.000000e+00> : vector<64x128xf32>
    %133 = tpu.matmul %130, %132, %cst_93 {dimension_numbers = #tpu.dot_dimension_numbers<[1], [0], [0], [1], [0, 0, 1, 1], [], []>} : vector<64x128xbf16>, vector<128x128xbf16>, vector<64x128xf32> -> vector<64x128xf32>
    %134 = arith.addf %128, %133 : vector<64x128xf32>
    %135 = vector.extract_strided_slice %55 {offsets = [1, 1, 0], sizes = [4, 16, 128], strides = [1, 1, 1]} : vector<6x18x128xbf16> to vector<4x16x128xbf16>
    %136 = vector.shape_cast %135 : vector<4x16x128xbf16> to vector<64x128xbf16>
    %c4_94 = arith.constant 4 : index
    %c0_95 = arith.constant 0 : index
    %c0_96 = arith.constant 0 : index
    %137 = vector.load %arg11[%c4_94, %c0_95, %c0_96] : memref<9x128x128xbf16, #tpu.memory_space<vmem>>, vector<1x128x128xbf16>
    %138 = vector.shape_cast %137 : vector<1x128x128xbf16> to vector<128x128xbf16>
    %cst_97 = arith.constant dense<0.000000e+00> : vector<64x128xf32>
    %139 = tpu.matmul %136, %138, %cst_97 {dimension_numbers = #tpu.dot_dimension_numbers<[1], [0], [0], [1], [0, 0, 1, 1], [], []>} : vector<64x128xbf16>, vector<128x128xbf16>, vector<64x128xf32> -> vector<64x128xf32>
    %140 = arith.addf %134, %139 : vector<64x128xf32>
    %141 = vector.extract_strided_slice %55 {offsets = [1, 2, 0], sizes = [4, 16, 128], strides = [1, 1, 1]} : vector<6x18x128xbf16> to vector<4x16x128xbf16>
    %142 = vector.shape_cast %141 : vector<4x16x128xbf16> to vector<64x128xbf16>
    %c5_98 = arith.constant 5 : index
    %c0_99 = arith.constant 0 : index
    %c0_100 = arith.constant 0 : index
    %143 = vector.load %arg11[%c5_98, %c0_99, %c0_100] : memref<9x128x128xbf16, #tpu.memory_space<vmem>>, vector<1x128x128xbf16>
    %144 = vector.shape_cast %143 : vector<1x128x128xbf16> to vector<128x128xbf16>
    %cst_101 = arith.constant dense<0.000000e+00> : vector<64x128xf32>
    %145 = tpu.matmul %142, %144, %cst_101 {dimension_numbers = #tpu.dot_dimension_numbers<[1], [0], [0], [1], [0, 0, 1, 1], [], []>} : vector<64x128xbf16>, vector<128x128xbf16>, vector<64x128xf32> -> vector<64x128xf32>
    %146 = arith.addf %140, %145 : vector<64x128xf32>
    %147 = vector.extract_strided_slice %55 {offsets = [2, 0, 0], sizes = [4, 16, 128], strides = [1, 1, 1]} : vector<6x18x128xbf16> to vector<4x16x128xbf16>
    %148 = vector.shape_cast %147 : vector<4x16x128xbf16> to vector<64x128xbf16>
    %c6_102 = arith.constant 6 : index
    %c0_103 = arith.constant 0 : index
    %c0_104 = arith.constant 0 : index
    %149 = vector.load %arg11[%c6_102, %c0_103, %c0_104] : memref<9x128x128xbf16, #tpu.memory_space<vmem>>, vector<1x128x128xbf16>
    %150 = vector.shape_cast %149 : vector<1x128x128xbf16> to vector<128x128xbf16>
    %cst_105 = arith.constant dense<0.000000e+00> : vector<64x128xf32>
    %151 = tpu.matmul %148, %150, %cst_105 {dimension_numbers = #tpu.dot_dimension_numbers<[1], [0], [0], [1], [0, 0, 1, 1], [], []>} : vector<64x128xbf16>, vector<128x128xbf16>, vector<64x128xf32> -> vector<64x128xf32>
    %152 = arith.addf %146, %151 : vector<64x128xf32>
    %153 = vector.extract_strided_slice %55 {offsets = [2, 1, 0], sizes = [4, 16, 128], strides = [1, 1, 1]} : vector<6x18x128xbf16> to vector<4x16x128xbf16>
    %154 = vector.shape_cast %153 : vector<4x16x128xbf16> to vector<64x128xbf16>
    %c7_106 = arith.constant 7 : index
    %c0_107 = arith.constant 0 : index
    %c0_108 = arith.constant 0 : index
    %155 = vector.load %arg11[%c7_106, %c0_107, %c0_108] : memref<9x128x128xbf16, #tpu.memory_space<vmem>>, vector<1x128x128xbf16>
    %156 = vector.shape_cast %155 : vector<1x128x128xbf16> to vector<128x128xbf16>
    %cst_109 = arith.constant dense<0.000000e+00> : vector<64x128xf32>
    %157 = tpu.matmul %154, %156, %cst_109 {dimension_numbers = #tpu.dot_dimension_numbers<[1], [0], [0], [1], [0, 0, 1, 1], [], []>} : vector<64x128xbf16>, vector<128x128xbf16>, vector<64x128xf32> -> vector<64x128xf32>
    %158 = arith.addf %152, %157 : vector<64x128xf32>
    %159 = vector.extract_strided_slice %55 {offsets = [2, 2, 0], sizes = [4, 16, 128], strides = [1, 1, 1]} : vector<6x18x128xbf16> to vector<4x16x128xbf16>
    %160 = vector.shape_cast %159 : vector<4x16x128xbf16> to vector<64x128xbf16>
    %c8_110 = arith.constant 8 : index
    %c0_111 = arith.constant 0 : index
    %c0_112 = arith.constant 0 : index
    %161 = vector.load %arg11[%c8_110, %c0_111, %c0_112] : memref<9x128x128xbf16, #tpu.memory_space<vmem>>, vector<1x128x128xbf16>
    %162 = vector.shape_cast %161 : vector<1x128x128xbf16> to vector<128x128xbf16>
    %cst_113 = arith.constant dense<0.000000e+00> : vector<64x128xf32>
    %163 = tpu.matmul %160, %162, %cst_113 {dimension_numbers = #tpu.dot_dimension_numbers<[1], [0], [0], [1], [0, 0, 1, 1], [], []>} : vector<64x128xbf16>, vector<128x128xbf16>, vector<64x128xf32> -> vector<64x128xf32>
    %164 = arith.addf %158, %163 : vector<64x128xf32>
    %c0_114 = arith.constant 0 : index
    %c0_115 = arith.constant 0 : index
    %165 = vector.load %arg12[%c0_114, %c0_115] : memref<1x128xf32, #tpu.memory_space<vmem>>, vector<1x128xf32>
    %166 = vector.broadcast %165 : vector<1x128xf32> to vector<64x128xf32>
    %167 = arith.addf %164, %166 : vector<64x128xf32>
    %168 = vector.shape_cast %167 : vector<64x128xf32> to vector<4x16x128xf32>
    %c0_116 = arith.constant 0 : index
    %c0_117 = arith.constant 0 : index
    %c0_118 = arith.constant 0 : index
    %c0_119 = arith.constant 0 : index
    %169 = vector.load %arg13[%c0_116, %c0_117, %c0_118, %c0_119] : memref<1x4x16x128xf32, #tpu.memory_space<vmem>>, vector<1x4x16x128xf32>
    %170 = vector.shape_cast %169 : vector<1x4x16x128xf32> to vector<4x16x128xf32>
    %171 = vector.shape_cast %168 : vector<4x16x128xf32> to vector<1x4x16x128xf32>
    tpu.vector_store %arg13[%c0_116, %c0_117, %c0_118, %c0_119], %171 {strides = array<i32>} : memref<1x4x16x128xf32, #tpu.memory_space<vmem>>, vector<1x4x16x128xf32>,
    %cst_120 = arith.constant dense<0.000000e+00> : vector<128xf32>
    %172 = vector.multi_reduction <add>, %167, %cst_120 [0] : vector<64x128xf32> to vector<128xf32>
    %173 = vector.shape_cast %172 : vector<128xf32> to vector<1x128xf32>
    %174 = arith.mulf %167, %167 : vector<64x128xf32>
    %cst_121 = arith.constant dense<0.000000e+00> : vector<128xf32>
    %175 = vector.multi_reduction <add>, %174, %cst_121 [0] : vector<64x128xf32> to vector<128xf32>
    %176 = vector.shape_cast %175 : vector<128xf32> to vector<1x128xf32>
    %177 = tpu.concatenate %173, %176 in 0 : vector<1x128xf32>, vector<1x128xf32> -> vector<2x128xf32>
    %c0_122 = arith.constant 0 : index
    %c0_123 = arith.constant 0 : index
    %c0_124 = arith.constant 0 : index
    %c0_125 = arith.constant 0 : index
    %178 = vector.load %arg14[%c0_122, %c0_123, %c0_124, %c0_125] : memref<1x1x2x128xf32, #tpu.memory_space<vmem>>, vector<1x1x2x128xf32>
    %179 = vector.shape_cast %178 : vector<1x1x2x128xf32> to vector<2x128xf32>
    %180 = vector.shape_cast %177 : vector<2x128xf32> to vector<1x1x2x128xf32>
    tpu.vector_store %arg14[%c0_122, %c0_123, %c0_124, %c0_125], %180 {strides = array<i32>} : memref<1x1x2x128xf32, #tpu.memory_space<vmem>>, vector<1x1x2x128xf32>,
    return
  }
  func.func @transform_0(%arg0: i32, %arg1: i32) -> (i32, i32, i32, i32) {
    %c0_i32 = arith.constant 0 : i32
    %c0_i32_0 = arith.constant 0 : i32
    %c0_i32_1 = arith.constant 0 : i32
    return %arg0, %arg1, %c0_i32, %c0_i32_0 : i32, i32, i32, i32
  }
  func.func @transform_1(%arg0: i32, %arg1: i32) -> (i32, i32, i32, i32, i32) {
    %c0_i32 = arith.constant 0 : i32
    %c0_i32_0 = arith.constant 0 : i32
    %c0_i32_1 = arith.constant 0 : i32
    %c0_i32_2 = arith.constant 0 : i32
    return %arg0, %arg1, %c0_i32, %c0_i32_0, %c0_i32_1 : i32, i32, i32, i32, i32
  }
  func.func @transform_2(%arg0: i32, %arg1: i32) -> (i32, i32, i32, i32) {
    %c0_i32 = arith.constant 0 : i32
    %c0_i32_0 = arith.constant 0 : i32
    %c0_i32_1 = arith.constant 0 : i32
    return %arg0, %arg1, %c0_i32, %c0_i32_0 : i32, i32, i32, i32
  }
  func.func @transform_3(%arg0: i32, %arg1: i32) -> (i32, i32, i32, i32, i32) {
    %c0_i32 = arith.constant 0 : i32
    %c0_i32_0 = arith.constant 0 : i32
    %c0_i32_1 = arith.constant 0 : i32
    %c0_i32_2 = arith.constant 0 : i32
    return %arg0, %arg1, %c0_i32, %c0_i32_0, %c0_i32_1 : i32, i32, i32, i32, i32
  }
  func.func @transform_4(%arg0: i32, %arg1: i32) -> (i32, i32, i32, i32) {
    %c0_i32 = arith.constant 0 : i32
    %c0_i32_0 = arith.constant 0 : i32
    %c0_i32_1 = arith.constant 0 : i32
    return %arg0, %arg1, %c0_i32, %c0_i32_0 : i32, i32, i32, i32
  }
  func.func @transform_5(%arg0: i32, %arg1: i32) -> (i32, i32, i32, i32, i32) {
    %c0_i32 = arith.constant 0 : i32
    %c0_i32_0 = arith.constant 0 : i32
    %c0_i32_1 = arith.constant 0 : i32
    %c0_i32_2 = arith.constant 0 : i32
    return %arg0, %arg1, %c0_i32, %c0_i32_0, %c0_i32_1 : i32, i32, i32, i32, i32
  }
  func.func @transform_6(%arg0: i32, %arg1: i32) -> (i32, i32) {
    %c0_i32 = arith.constant 0 : i32
    %c0_i32_0 = arith.constant 0 : i32
    %c0_i32_1 = arith.constant 0 : i32
    return %c0_i32, %c0_i32_0 : i32, i32
  }
  func.func @transform_7(%arg0: i32, %arg1: i32) -> (i32, i32) {
    %c0_i32 = arith.constant 0 : i32
    %c0_i32_0 = arith.constant 0 : i32
    %c0_i32_1 = arith.constant 0 : i32
    return %c0_i32, %c0_i32_0 : i32, i32
  }
  func.func @transform_8(%arg0: i32, %arg1: i32) -> (i32, i32, i32) {
    %c0_i32 = arith.constant 0 : i32
    %c0_i32_0 = arith.constant 0 : i32
    %c0_i32_1 = arith.constant 0 : i32
    %c0_i32_2 = arith.constant 0 : i32
    return %c0_i32, %c0_i32_0, %c0_i32_1 : i32, i32, i32
  }
  func.func @transform_9(%arg0: i32, %arg1: i32) -> (i32, i32, i32) {
    %c0_i32 = arith.constant 0 : i32
    %c0_i32_0 = arith.constant 0 : i32
    %c0_i32_1 = arith.constant 0 : i32
    %c0_i32_2 = arith.constant 0 : i32
    return %c0_i32, %c0_i32_0, %c0_i32_1 : i32, i32, i32
  }
  func.func @transform_10(%arg0: i32, %arg1: i32) -> (i32, i32) {
    %c0_i32 = arith.constant 0 : i32
    %c0_i32_0 = arith.constant 0 : i32
    %c0_i32_1 = arith.constant 0 : i32
    return %c0_i32, %c0_i32_0 : i32, i32
  }
  func.func @transform_11(%arg0: i32, %arg1: i32) -> (i32, i32, i32, i32) {
    %c0_i32 = arith.constant 0 : i32
    %c0_i32_0 = arith.constant 0 : i32
    %c0_i32_1 = arith.constant 0 : i32
    return %arg0, %arg1, %c0_i32, %c0_i32_0 : i32, i32, i32, i32
  }
  func.func @transform_12(%arg0: i32, %arg1: i32) -> (i32, i32, i32, i32) {
    %c0_i32 = arith.constant 0 : i32
    %c0_i32_0 = arith.constant 0 : i32
    %c0_i32_1 = arith.constant 0 : i32
    return %arg0, %arg1, %c0_i32, %c0_i32_0 : i32, i32, i32, i32
  }
}

module attributes {stable_mosaic.version = 11 : i64} {
  func.func @_bn_act_drop_kernel(%arg0: i32, %arg1: i32, %arg2: memref<1x4x16x128xf32, #tpu.memory_space<vmem>>, %arg3: memref<1x4x16x128xbf16, #tpu.memory_space<vmem>>, %arg4: memref<1x128xf32, #tpu.memory_space<vmem>>, %arg5: memref<1x128xf32, #tpu.memory_space<vmem>>, %arg6: memref<1x4x16x128xf32, #tpu.memory_space<vmem>>) attributes {dimension_semantics = [#tpu.dimension_semantics<parallel>, #tpu.dimension_semantics<parallel>], iteration_bounds = array<i64: 2, 4>, scalar_prefetch = 0 : i64, scratch_operands = 0 : i64, tpu.core_type = #tpu.core_type<tc>, window_params = [{transform_indices = @transform_0, window_bounds = array<i64: 1, 4, 16, 128>}, {transform_indices = @transform_1, window_bounds = array<i64: 1, 4, 16, 128>}, {pipeline_mode = #tpu.pipeline_mode<synchronous>, transform_indices = @transform_2, window_bounds = array<i64: 1, 128>}, {pipeline_mode = #tpu.pipeline_mode<synchronous>, transform_indices = @transform_3, window_bounds = array<i64: 1, 128>}, {transform_indices = @transform_4, window_bounds = array<i64: 1, 4, 16, 128>}]} {
    %c0 = arith.constant 0 : index
    %c0_0 = arith.constant 0 : index
    %0 = vector.load %arg4[%c0, %c0_0] : memref<1x128xf32, #tpu.memory_space<vmem>>, vector<1x128xf32>
    %1 = vector.shape_cast %0 : vector<1x128xf32> to vector<1x1x128xf32>
    %c0_1 = arith.constant 0 : index
    %c0_2 = arith.constant 0 : index
    %2 = vector.load %arg5[%c0_1, %c0_2] : memref<1x128xf32, #tpu.memory_space<vmem>>, vector<1x128xf32>
    %3 = vector.shape_cast %2 : vector<1x128xf32> to vector<1x1x128xf32>
    %c0_3 = arith.constant 0 : index
    %c0_4 = arith.constant 0 : index
    %c0_5 = arith.constant 0 : index
    %c0_6 = arith.constant 0 : index
    %4 = vector.load %arg2[%c0_3, %c0_4, %c0_5, %c0_6] : memref<1x4x16x128xf32, #tpu.memory_space<vmem>>, vector<1x4x16x128xf32>
    %5 = vector.shape_cast %4 : vector<1x4x16x128xf32> to vector<4x16x128xf32>
    %6 = vector.broadcast %1 : vector<1x1x128xf32> to vector<4x16x128xf32>
    %7 = arith.mulf %5, %6 : vector<4x16x128xf32>
    %8 = vector.broadcast %3 : vector<1x1x128xf32> to vector<4x16x128xf32>
    %9 = arith.addf %7, %8 : vector<4x16x128xf32>
    %cst = arith.constant 2.000000e-01 : f32
    %10 = vector.broadcast %cst : f32 to vector<4x16x128xf32>
    %11 = arith.mulf %10, %9 : vector<4x16x128xf32>
    %12 = arith.maximumf %9, %11 : vector<4x16x128xf32>
    %c0_7 = arith.constant 0 : index
    %c0_8 = arith.constant 0 : index
    %c0_9 = arith.constant 0 : index
    %c0_10 = arith.constant 0 : index
    %13 = vector.load %arg3[%c0_7, %c0_8, %c0_9, %c0_10] : memref<1x4x16x128xbf16, #tpu.memory_space<vmem>>, vector<1x4x16x128xbf16>
    %14 = vector.shape_cast %13 : vector<1x4x16x128xbf16> to vector<4x16x128xbf16>
    %15 = arith.extf %14 : vector<4x16x128xbf16> to vector<4x16x128xf32>
    %16 = arith.mulf %12, %15 : vector<4x16x128xf32>
    %c0_11 = arith.constant 0 : index
    %c0_12 = arith.constant 0 : index
    %c0_13 = arith.constant 0 : index
    %c0_14 = arith.constant 0 : index
    %17 = vector.load %arg6[%c0_11, %c0_12, %c0_13, %c0_14] : memref<1x4x16x128xf32, #tpu.memory_space<vmem>>, vector<1x4x16x128xf32>
    %18 = vector.shape_cast %17 : vector<1x4x16x128xf32> to vector<4x16x128xf32>
    %19 = vector.shape_cast %16 : vector<4x16x128xf32> to vector<1x4x16x128xf32>
    tpu.vector_store %arg6[%c0_11, %c0_12, %c0_13, %c0_14], %19 {strides = array<i32>} : memref<1x4x16x128xf32, #tpu.memory_space<vmem>>, vector<1x4x16x128xf32>,
    return
  }
  func.func @transform_0(%arg0: i32, %arg1: i32) -> (i32, i32, i32, i32) {
    %c0_i32 = arith.constant 0 : i32
    %c0_i32_0 = arith.constant 0 : i32
    %c0_i32_1 = arith.constant 0 : i32
    return %arg0, %arg1, %c0_i32, %c0_i32_0 : i32, i32, i32, i32
  }
  func.func @transform_1(%arg0: i32, %arg1: i32) -> (i32, i32, i32, i32) {
    %c0_i32 = arith.constant 0 : i32
    %c0_i32_0 = arith.constant 0 : i32
    %c0_i32_1 = arith.constant 0 : i32
    return %arg0, %arg1, %c0_i32, %c0_i32_0 : i32, i32, i32, i32
  }
  func.func @transform_2(%arg0: i32, %arg1: i32) -> (i32, i32) {
    %c0_i32 = arith.constant 0 : i32
    %c0_i32_0 = arith.constant 0 : i32
    %c0_i32_1 = arith.constant 0 : i32
    return %c0_i32, %c0_i32_0 : i32, i32
  }
  func.func @transform_3(%arg0: i32, %arg1: i32) -> (i32, i32) {
    %c0_i32 = arith.constant 0 : i32
    %c0_i32_0 = arith.constant 0 : i32
    %c0_i32_1 = arith.constant 0 : i32
    return %c0_i32, %c0_i32_0 : i32, i32
  }
  func.func @transform_4(%arg0: i32, %arg1: i32) -> (i32, i32, i32, i32) {
    %c0_i32 = arith.constant 0 : i32
    %c0_i32_0 = arith.constant 0 : i32
    %c0_i32_1 = arith.constant 0 : i32
    return %arg0, %arg1, %c0_i32, %c0_i32_0 : i32, i32, i32, i32
  }
}

module attributes {stable_mosaic.version = 11 : i64} {
  func.func @_conv2_2_kernel(%arg0: i32, %arg1: i32, %arg2: memref<1x4x16x128xf32, #tpu.memory_space<vmem>>, %arg3: memref<1x1x2x16x128xf32, #tpu.memory_space<vmem>>, %arg4: memref<1x128xf32, #tpu.memory_space<vmem>>, %arg5: memref<1x128xf32, #tpu.memory_space<vmem>>, %arg6: memref<9x128x128xbf16, #tpu.memory_space<vmem>>, %arg7: memref<1x128xf32, #tpu.memory_space<vmem>>, %arg8: memref<1x4x16x128xf32, #tpu.memory_space<vmem>>, %arg9: memref<1x1x2x128xf32, #tpu.memory_space<vmem>>) attributes {dimension_semantics = [#tpu.dimension_semantics<parallel>, #tpu.dimension_semantics<parallel>], iteration_bounds = array<i64: 2, 4>, scalar_prefetch = 0 : i64, scratch_operands = 0 : i64, tpu.core_type = #tpu.core_type<tc>, window_params = [{transform_indices = @transform_0, window_bounds = array<i64: 1, 4, 16, 128>}, {transform_indices = @transform_1, window_bounds = array<i64: 1, 1, 2, 16, 128>}, {pipeline_mode = #tpu.pipeline_mode<synchronous>, transform_indices = @transform_2, window_bounds = array<i64: 1, 128>}, {pipeline_mode = #tpu.pipeline_mode<synchronous>, transform_indices = @transform_3, window_bounds = array<i64: 1, 128>}, {pipeline_mode = #tpu.pipeline_mode<synchronous>, transform_indices = @transform_4, window_bounds = array<i64: 9, 128, 128>}, {pipeline_mode = #tpu.pipeline_mode<synchronous>, transform_indices = @transform_5, window_bounds = array<i64: 1, 128>}, {transform_indices = @transform_6, window_bounds = array<i64: 1, 4, 16, 128>}, {transform_indices = @transform_7, window_bounds = array<i64: 1, 1, 2, 128>}]} {
    %c0 = arith.constant 0 : index
    %c0_0 = arith.constant 0 : index
    %0 = vector.load %arg4[%c0, %c0_0] : memref<1x128xf32, #tpu.memory_space<vmem>>, vector<1x128xf32>
    %1 = vector.shape_cast %0 : vector<1x128xf32> to vector<1x1x128xf32>
    %c0_1 = arith.constant 0 : index
    %c0_2 = arith.constant 0 : index
    %2 = vector.load %arg5[%c0_1, %c0_2] : memref<1x128xf32, #tpu.memory_space<vmem>>, vector<1x128xf32>
    %3 = vector.shape_cast %2 : vector<1x128xf32> to vector<1x1x128xf32>
    %c0_3 = arith.constant 0 : index
    %c0_4 = arith.constant 0 : index
    %c0_5 = arith.constant 0 : index
    %c0_6 = arith.constant 0 : index
    %c0_7 = arith.constant 0 : index
    %4 = vector.load %arg3[%c0_3, %c0_4, %c0_5, %c0_6, %c0_7] : memref<1x1x2x16x128xf32, #tpu.memory_space<vmem>>, vector<1x1x1x16x128xf32>
    %5 = vector.shape_cast %4 : vector<1x1x1x16x128xf32> to vector<1x16x128xf32>
    %c0_8 = arith.constant 0 : index
    %c0_9 = arith.constant 0 : index
    %c0_10 = arith.constant 0 : index
    %c0_11 = arith.constant 0 : index
    %6 = vector.load %arg2[%c0_8, %c0_9, %c0_10, %c0_11] : memref<1x4x16x128xf32, #tpu.memory_space<vmem>>, vector<1x4x16x128xf32>
    %7 = vector.shape_cast %6 : vector<1x4x16x128xf32> to vector<4x16x128xf32>
    %c0_12 = arith.constant 0 : index
    %c0_13 = arith.constant 0 : index
    %c1 = arith.constant 1 : index
    %c0_14 = arith.constant 0 : index
    %c0_15 = arith.constant 0 : index
    %8 = vector.load %arg3[%c0_12, %c0_13, %c1, %c0_14, %c0_15] : memref<1x1x2x16x128xf32, #tpu.memory_space<vmem>>, vector<1x1x1x16x128xf32>
    %9 = vector.shape_cast %8 : vector<1x1x1x16x128xf32> to vector<1x16x128xf32>
    %10 = tpu.concatenate %5, %7, %9 in 0 : vector<1x16x128xf32>, vector<4x16x128xf32>, vector<1x16x128xf32> -> vector<6x16x128xf32>
    %11 = vector.broadcast %1 : vector<1x1x128xf32> to vector<6x16x128xf32>
    %12 = arith.mulf %10, %11 : vector<6x16x128xf32>
    %13 = vector.broadcast %3 : vector<1x1x128xf32> to vector<6x16x128xf32>
    %14 = arith.addf %12, %13 : vector<6x16x128xf32>
    %cst = arith.constant 2.000000e-01 : f32
    %15 = vector.broadcast %cst : f32 to vector<6x16x128xf32>
    %16 = arith.mulf %15, %14 : vector<6x16x128xf32>
    %17 = arith.maximumf %14, %16 : vector<6x16x128xf32>
    %18 = tpu.iota {dimensions = array<i32: 0>} : vector<6x1x1xi32>
    %c0_i32 = arith.constant 0 : i32
    %19 = vector.broadcast %c0_i32 : i32 to vector<6x1x1xi32>
    %20 = arith.cmpi ne, %18, %19 : vector<6x1x1xi32>
    %c0_i32_16 = arith.constant 0 : i32
    %21 = arith.cmpi sgt, %arg1, %c0_i32_16 : i32
    %22 = vector.broadcast %21 : i1 to vector<6x1x1xi1>
    %23 = arith.ori %20, %22 : vector<6x1x1xi1>
    %c5_i32 = arith.constant 5 : i32
    %24 = vector.broadcast %c5_i32 : i32 to vector<6x1x1xi32>
    %25 = arith.cmpi ne, %18, %24 : vector<6x1x1xi32>
    %c3_i32 = arith.constant 3 : i32
    %26 = arith.cmpi slt, %arg1, %c3_i32 : i32
    %27 = vector.broadcast %26 : i1 to vector<6x1x1xi1>
    %28 = arith.ori %25, %27 : vector<6x1x1xi1>
    %29 = arith.andi %23, %28 : vector<6x1x1xi1>
    %cst_17 = arith.constant 0.000000e+00 : f32
    %30 = vector.shape_cast %29 : vector<6x1x1xi1> to vector<6x1x1xi1>
    %31 = vector.broadcast %30 : vector<6x1x1xi1> to vector<6x16x128xi1>
    %32 = vector.broadcast %cst_17 : f32 to vector<6x16x128xf32>
    %33 = arith.select %31, %17, %32 : vector<6x16x128xi1>, vector<6x16x128xf32>
    %34 = arith.truncf %33 : vector<6x16x128xf32> to vector<6x16x128xbf16>
    %cst_18 = arith.constant 0.000000e+00 : bf16
    %35 = vector.broadcast %cst_18 : bf16 to vector<6x1x128xbf16>
    %36 = tpu.concatenate %35, %34, %35 in 1 : vector<6x1x128xbf16>, vector<6x16x128xbf16>, vector<6x1x128xbf16> -> vector<6x18x128xbf16>
    %cst_19 = arith.constant 0.000000e+00 : f32
    %37 = vector.broadcast %cst_19 : f32 to vector<64x128xf32>
    %38 = vector.extract_strided_slice %36 {offsets = [0, 0, 0], sizes = [4, 16, 128], strides = [1, 1, 1]} : vector<6x18x128xbf16> to vector<4x16x128xbf16>
    %39 = vector.shape_cast %38 : vector<4x16x128xbf16> to vector<64x128xbf16>
    %c0_20 = arith.constant 0 : index
    %c0_21 = arith.constant 0 : index
    %c0_22 = arith.constant 0 : index
    %40 = vector.load %arg6[%c0_20, %c0_21, %c0_22] : memref<9x128x128xbf16, #tpu.memory_space<vmem>>, vector<1x128x128xbf16>
    %41 = vector.shape_cast %40 : vector<1x128x128xbf16> to vector<128x128xbf16>
    %cst_23 = arith.constant dense<0.000000e+00> : vector<64x128xf32>
    %42 = tpu.matmul %39, %41, %cst_23 {dimension_numbers = #tpu.dot_dimension_numbers<[1], [0], [0], [1], [0, 0, 1, 1], [], []>} : vector<64x128xbf16>, vector<128x128xbf16>, vector<64x128xf32> -> vector<64x128xf32>
    %43 = arith.addf %37, %42 : vector<64x128xf32>
    %44 = vector.extract_strided_slice %36 {offsets = [0, 1, 0], sizes = [4, 16, 128], strides = [1, 1, 1]} : vector<6x18x128xbf16> to vector<4x16x128xbf16>
    %45 = vector.shape_cast %44 : vector<4x16x128xbf16> to vector<64x128xbf16>
    %c1_24 = arith.constant 1 : index
    %c0_25 = arith.constant 0 : index
    %c0_26 = arith.constant 0 : index
    %46 = vector.load %arg6[%c1_24, %c0_25, %c0_26] : memref<9x128x128xbf16, #tpu.memory_space<vmem>>, vector<1x128x128xbf16>
    %47 = vector.shape_cast %46 : vector<1x128x128xbf16> to vector<128x128xbf16>
    %cst_27 = arith.constant dense<0.000000e+00> : vector<64x128xf32>
    %48 = tpu.matmul %45, %47, %cst_27 {dimension_numbers = #tpu.dot_dimension_numbers<[1], [0], [0], [1], [0, 0, 1, 1], [], []>} : vector<64x128xbf16>, vector<128x128xbf16>, vector<64x128xf32> -> vector<64x128xf32>
    %49 = arith.addf %43, %48 : vector<64x128xf32>
    %50 = vector.extract_strided_slice %36 {offsets = [0, 2, 0], sizes = [4, 16, 128], strides = [1, 1, 1]} : vector<6x18x128xbf16> to vector<4x16x128xbf16>
    %51 = vector.shape_cast %50 : vector<4x16x128xbf16> to vector<64x128xbf16>
    %c2 = arith.constant 2 : index
    %c0_28 = arith.constant 0 : index
    %c0_29 = arith.constant 0 : index
    %52 = vector.load %arg6[%c2, %c0_28, %c0_29] : memref<9x128x128xbf16, #tpu.memory_space<vmem>>, vector<1x128x128xbf16>
    %53 = vector.shape_cast %52 : vector<1x128x128xbf16> to vector<128x128xbf16>
    %cst_30 = arith.constant dense<0.000000e+00> : vector<64x128xf32>
    %54 = tpu.matmul %51, %53, %cst_30 {dimension_numbers = #tpu.dot_dimension_numbers<[1], [0], [0], [1], [0, 0, 1, 1], [], []>} : vector<64x128xbf16>, vector<128x128xbf16>, vector<64x128xf32> -> vector<64x128xf32>
    %55 = arith.addf %49, %54 : vector<64x128xf32>
    %56 = vector.extract_strided_slice %36 {offsets = [1, 0, 0], sizes = [4, 16, 128], strides = [1, 1, 1]} : vector<6x18x128xbf16> to vector<4x16x128xbf16>
    %57 = vector.shape_cast %56 : vector<4x16x128xbf16> to vector<64x128xbf16>
    %c3 = arith.constant 3 : index
    %c0_31 = arith.constant 0 : index
    %c0_32 = arith.constant 0 : index
    %58 = vector.load %arg6[%c3, %c0_31, %c0_32] : memref<9x128x128xbf16, #tpu.memory_space<vmem>>, vector<1x128x128xbf16>
    %59 = vector.shape_cast %58 : vector<1x128x128xbf16> to vector<128x128xbf16>
    %cst_33 = arith.constant dense<0.000000e+00> : vector<64x128xf32>
    %60 = tpu.matmul %57, %59, %cst_33 {dimension_numbers = #tpu.dot_dimension_numbers<[1], [0], [0], [1], [0, 0, 1, 1], [], []>} : vector<64x128xbf16>, vector<128x128xbf16>, vector<64x128xf32> -> vector<64x128xf32>
    %61 = arith.addf %55, %60 : vector<64x128xf32>
    %62 = vector.extract_strided_slice %36 {offsets = [1, 1, 0], sizes = [4, 16, 128], strides = [1, 1, 1]} : vector<6x18x128xbf16> to vector<4x16x128xbf16>
    %63 = vector.shape_cast %62 : vector<4x16x128xbf16> to vector<64x128xbf16>
    %c4 = arith.constant 4 : index
    %c0_34 = arith.constant 0 : index
    %c0_35 = arith.constant 0 : index
    %64 = vector.load %arg6[%c4, %c0_34, %c0_35] : memref<9x128x128xbf16, #tpu.memory_space<vmem>>, vector<1x128x128xbf16>
    %65 = vector.shape_cast %64 : vector<1x128x128xbf16> to vector<128x128xbf16>
    %cst_36 = arith.constant dense<0.000000e+00> : vector<64x128xf32>
    %66 = tpu.matmul %63, %65, %cst_36 {dimension_numbers = #tpu.dot_dimension_numbers<[1], [0], [0], [1], [0, 0, 1, 1], [], []>} : vector<64x128xbf16>, vector<128x128xbf16>, vector<64x128xf32> -> vector<64x128xf32>
    %67 = arith.addf %61, %66 : vector<64x128xf32>
    %68 = vector.extract_strided_slice %36 {offsets = [1, 2, 0], sizes = [4, 16, 128], strides = [1, 1, 1]} : vector<6x18x128xbf16> to vector<4x16x128xbf16>
    %69 = vector.shape_cast %68 : vector<4x16x128xbf16> to vector<64x128xbf16>
    %c5 = arith.constant 5 : index
    %c0_37 = arith.constant 0 : index
    %c0_38 = arith.constant 0 : index
    %70 = vector.load %arg6[%c5, %c0_37, %c0_38] : memref<9x128x128xbf16, #tpu.memory_space<vmem>>, vector<1x128x128xbf16>
    %71 = vector.shape_cast %70 : vector<1x128x128xbf16> to vector<128x128xbf16>
    %cst_39 = arith.constant dense<0.000000e+00> : vector<64x128xf32>
    %72 = tpu.matmul %69, %71, %cst_39 {dimension_numbers = #tpu.dot_dimension_numbers<[1], [0], [0], [1], [0, 0, 1, 1], [], []>} : vector<64x128xbf16>, vector<128x128xbf16>, vector<64x128xf32> -> vector<64x128xf32>
    %73 = arith.addf %67, %72 : vector<64x128xf32>
    %74 = vector.extract_strided_slice %36 {offsets = [2, 0, 0], sizes = [4, 16, 128], strides = [1, 1, 1]} : vector<6x18x128xbf16> to vector<4x16x128xbf16>
    %75 = vector.shape_cast %74 : vector<4x16x128xbf16> to vector<64x128xbf16>
    %c6 = arith.constant 6 : index
    %c0_40 = arith.constant 0 : index
    %c0_41 = arith.constant 0 : index
    %76 = vector.load %arg6[%c6, %c0_40, %c0_41] : memref<9x128x128xbf16, #tpu.memory_space<vmem>>, vector<1x128x128xbf16>
    %77 = vector.shape_cast %76 : vector<1x128x128xbf16> to vector<128x128xbf16>
    %cst_42 = arith.constant dense<0.000000e+00> : vector<64x128xf32>
    %78 = tpu.matmul %75, %77, %cst_42 {dimension_numbers = #tpu.dot_dimension_numbers<[1], [0], [0], [1], [0, 0, 1, 1], [], []>} : vector<64x128xbf16>, vector<128x128xbf16>, vector<64x128xf32> -> vector<64x128xf32>
    %79 = arith.addf %73, %78 : vector<64x128xf32>
    %80 = vector.extract_strided_slice %36 {offsets = [2, 1, 0], sizes = [4, 16, 128], strides = [1, 1, 1]} : vector<6x18x128xbf16> to vector<4x16x128xbf16>
    %81 = vector.shape_cast %80 : vector<4x16x128xbf16> to vector<64x128xbf16>
    %c7 = arith.constant 7 : index
    %c0_43 = arith.constant 0 : index
    %c0_44 = arith.constant 0 : index
    %82 = vector.load %arg6[%c7, %c0_43, %c0_44] : memref<9x128x128xbf16, #tpu.memory_space<vmem>>, vector<1x128x128xbf16>
    %83 = vector.shape_cast %82 : vector<1x128x128xbf16> to vector<128x128xbf16>
    %cst_45 = arith.constant dense<0.000000e+00> : vector<64x128xf32>
    %84 = tpu.matmul %81, %83, %cst_45 {dimension_numbers = #tpu.dot_dimension_numbers<[1], [0], [0], [1], [0, 0, 1, 1], [], []>} : vector<64x128xbf16>, vector<128x128xbf16>, vector<64x128xf32> -> vector<64x128xf32>
    %85 = arith.addf %79, %84 : vector<64x128xf32>
    %86 = vector.extract_strided_slice %36 {offsets = [2, 2, 0], sizes = [4, 16, 128], strides = [1, 1, 1]} : vector<6x18x128xbf16> to vector<4x16x128xbf16>
    %87 = vector.shape_cast %86 : vector<4x16x128xbf16> to vector<64x128xbf16>
    %c8 = arith.constant 8 : index
    %c0_46 = arith.constant 0 : index
    %c0_47 = arith.constant 0 : index
    %88 = vector.load %arg6[%c8, %c0_46, %c0_47] : memref<9x128x128xbf16, #tpu.memory_space<vmem>>, vector<1x128x128xbf16>
    %89 = vector.shape_cast %88 : vector<1x128x128xbf16> to vector<128x128xbf16>
    %cst_48 = arith.constant dense<0.000000e+00> : vector<64x128xf32>
    %90 = tpu.matmul %87, %89, %cst_48 {dimension_numbers = #tpu.dot_dimension_numbers<[1], [0], [0], [1], [0, 0, 1, 1], [], []>} : vector<64x128xbf16>, vector<128x128xbf16>, vector<64x128xf32> -> vector<64x128xf32>
    %91 = arith.addf %85, %90 : vector<64x128xf32>
    %c0_49 = arith.constant 0 : index
    %c0_50 = arith.constant 0 : index
    %92 = vector.load %arg7[%c0_49, %c0_50] : memref<1x128xf32, #tpu.memory_space<vmem>>, vector<1x128xf32>
    %93 = vector.broadcast %92 : vector<1x128xf32> to vector<64x128xf32>
    %94 = arith.addf %91, %93 : vector<64x128xf32>
    %95 = vector.shape_cast %94 : vector<64x128xf32> to vector<4x16x128xf32>
    %c0_51 = arith.constant 0 : index
    %c0_52 = arith.constant 0 : index
    %c0_53 = arith.constant 0 : index
    %c0_54 = arith.constant 0 : index
    %96 = vector.load %arg8[%c0_51, %c0_52, %c0_53, %c0_54] : memref<1x4x16x128xf32, #tpu.memory_space<vmem>>, vector<1x4x16x128xf32>
    %97 = vector.shape_cast %96 : vector<1x4x16x128xf32> to vector<4x16x128xf32>
    %98 = vector.shape_cast %95 : vector<4x16x128xf32> to vector<1x4x16x128xf32>
    tpu.vector_store %arg8[%c0_51, %c0_52, %c0_53, %c0_54], %98 {strides = array<i32>} : memref<1x4x16x128xf32, #tpu.memory_space<vmem>>, vector<1x4x16x128xf32>,
    %cst_55 = arith.constant dense<0.000000e+00> : vector<128xf32>
    %99 = vector.multi_reduction <add>, %94, %cst_55 [0] : vector<64x128xf32> to vector<128xf32>
    %100 = vector.shape_cast %99 : vector<128xf32> to vector<1x128xf32>
    %101 = arith.mulf %94, %94 : vector<64x128xf32>
    %cst_56 = arith.constant dense<0.000000e+00> : vector<128xf32>
    %102 = vector.multi_reduction <add>, %101, %cst_56 [0] : vector<64x128xf32> to vector<128xf32>
    %103 = vector.shape_cast %102 : vector<128xf32> to vector<1x128xf32>
    %104 = tpu.concatenate %100, %103 in 0 : vector<1x128xf32>, vector<1x128xf32> -> vector<2x128xf32>
    %c0_57 = arith.constant 0 : index
    %c0_58 = arith.constant 0 : index
    %c0_59 = arith.constant 0 : index
    %c0_60 = arith.constant 0 : index
    %105 = vector.load %arg9[%c0_57, %c0_58, %c0_59, %c0_60] : memref<1x1x2x128xf32, #tpu.memory_space<vmem>>, vector<1x1x2x128xf32>
    %106 = vector.shape_cast %105 : vector<1x1x2x128xf32> to vector<2x128xf32>
    %107 = vector.shape_cast %104 : vector<2x128xf32> to vector<1x1x2x128xf32>
    tpu.vector_store %arg9[%c0_57, %c0_58, %c0_59, %c0_60], %107 {strides = array<i32>} : memref<1x1x2x128xf32, #tpu.memory_space<vmem>>, vector<1x1x2x128xf32>,
    return
  }
  func.func @transform_0(%arg0: i32, %arg1: i32) -> (i32, i32, i32, i32) {
    %c0_i32 = arith.constant 0 : i32
    %c0_i32_0 = arith.constant 0 : i32
    %c0_i32_1 = arith.constant 0 : i32
    return %arg0, %arg1, %c0_i32, %c0_i32_0 : i32, i32, i32, i32
  }
  func.func @transform_1(%arg0: i32, %arg1: i32) -> (i32, i32, i32, i32, i32) {
    %c0_i32 = arith.constant 0 : i32
    %c0_i32_0 = arith.constant 0 : i32
    %c0_i32_1 = arith.constant 0 : i32
    %c0_i32_2 = arith.constant 0 : i32
    return %arg0, %arg1, %c0_i32, %c0_i32_0, %c0_i32_1 : i32, i32, i32, i32, i32
  }
  func.func @transform_2(%arg0: i32, %arg1: i32) -> (i32, i32) {
    %c0_i32 = arith.constant 0 : i32
    %c0_i32_0 = arith.constant 0 : i32
    %c0_i32_1 = arith.constant 0 : i32
    return %c0_i32, %c0_i32_0 : i32, i32
  }
  func.func @transform_3(%arg0: i32, %arg1: i32) -> (i32, i32) {
    %c0_i32 = arith.constant 0 : i32
    %c0_i32_0 = arith.constant 0 : i32
    %c0_i32_1 = arith.constant 0 : i32
    return %c0_i32, %c0_i32_0 : i32, i32
  }
  func.func @transform_4(%arg0: i32, %arg1: i32) -> (i32, i32, i32) {
    %c0_i32 = arith.constant 0 : i32
    %c0_i32_0 = arith.constant 0 : i32
    %c0_i32_1 = arith.constant 0 : i32
    %c0_i32_2 = arith.constant 0 : i32
    return %c0_i32, %c0_i32_0, %c0_i32_1 : i32, i32, i32
  }
  func.func @transform_5(%arg0: i32, %arg1: i32) -> (i32, i32) {
    %c0_i32 = arith.constant 0 : i32
    %c0_i32_0 = arith.constant 0 : i32
    %c0_i32_1 = arith.constant 0 : i32
    return %c0_i32, %c0_i32_0 : i32, i32
  }
  func.func @transform_6(%arg0: i32, %arg1: i32) -> (i32, i32, i32, i32) {
    %c0_i32 = arith.constant 0 : i32
    %c0_i32_0 = arith.constant 0 : i32
    %c0_i32_1 = arith.constant 0 : i32
    return %arg0, %arg1, %c0_i32, %c0_i32_0 : i32, i32, i32, i32
  }
  func.func @transform_7(%arg0: i32, %arg1: i32) -> (i32, i32, i32, i32) {
    %c0_i32 = arith.constant 0 : i32
    %c0_i32_0 = arith.constant 0 : i32
    %c0_i32_1 = arith.constant 0 : i32
    return %arg0, %arg1, %c0_i32, %c0_i32_0 : i32, i32, i32, i32
  }
}

</mosaic_0001>

<llo_original>
// kernel: unet_up_block.6
$region0: #{unet_up_block.6}
  #allocation0 [shape = 'u32[]', space=smem, size = 0x4, offset = 0x4, fixed_abs, tag = 'smem constant byte address 0x4 - core index']
  #allocation1 [shape = 'u32[144,128]{1,0:T(1,128)}', space=vmem, size = 0x12000, scoped, tag = 'internal scratch']
  %s0 = inlined_call_operand.vmem [shape: f32[2,8,8,128], index: 0, kind: input, shape index: {}]
  %s1 = inlined_call_operand.vmem [shape: bf16[2,128,256], index: 1, kind: input, shape index: {}]
  %s2 = inlined_call_operand.vmem [shape: f32[1,256], index: 2, kind: input, shape index: {}]
  %s3 = inlined_call_operand.vmem [shape: f32[2,8,2,8,256], index: 3, kind: output, shape index: {0}]
  %s4 = inlined_call_operand.vmem [shape: f32[2,4,2,128], index: 4, kind: output, shape index: {1}]
  %5 = xla_tuple %s3, %s4
  %s6 = sld [smem:[#allocation0]]
  $region53: #{unet_up_block.6} parent=0
    _
  %s8 = ssub.s32 1, %s6
  %s9 = scalar_select 0, %s8, %s6
  loop: start=0, step=1, limit=10
  $region2: #{unet_up_block.6} parent=0 // loop_pre_header
    _
  $region3: #{unet_up_block.6} parent=0 // loop_header
    %s11 = sphi 0, %s15
    %p12 = scmp.ge.s32.totalorder %s11, 10
    %s18 = sphi 0, %s30
    %s19 = sphi 0, %s26
    %s20 = sphi 0, %s18
    %s21 = sphi 0, %s19
    %s22 = sphi 0, %s20
    %s23 = sphi 0, %s21
    %s35 = sphi 0, %s37
    %s38 = sphi 0, %s35
    %s39 = sphi 0, %s38
    %s55 = sphi 0, %s39
    %s59 = sphi 0, %s59
    %s61 = sphi 0, %s59
    %s62 = sphi 0, %s61
    %s76 = sphi 0, %s62
    %s80 = sphi 0, %s80
    %s82 = sphi 0, %s80
    %s83 = sphi 0, %s82
    %s97 = sphi 0, %s83
    %s105 = sphi 0, %s107
    %s108 = sphi 0, %s105
    %s109 = sphi 0, %s108
    %s125 = sphi 0, %s109
    %s133 = sphi 0, %s135
    %s136 = sphi 0, %s133
    %s137 = sphi 0, %s136
    %s153 = sphi 0, %s137
  $region4: #{unet_up_block.6} parent=0 // loop_header_branch
    %14 = sbr.rel (%p12) target = $region8
  $region5: #{unet_up_block.6} parent=0 // loop_body
    %s16 = ssub.s32 %s11, 1
    %s17 = ssub.s32 %s11, 2
    %s24 = sadd.s32 1, %s19
    %p25 = scmp.ge.s32.totalorder %s24, 4
    %s26 = scalar_select %p25, 0, %s24
    %s27 = sadd.s32 1, %s18
    %s28 = scalar_select %p25, %s27, %s18
    %p29 = scmp.ge.s32.totalorder %s28, 2
    %s30 = scalar_select %p29, 0, %s28
    %s31 = ssub.s32 %s18, %s30
    %s32 = ssub.s32 %s19, %s26
    %s33 = sor.u32 %s31, %s32
    %p34 = scmp.eq.s32.totalorder %s33, 0
    %s36 = sadd.s32 %s35, 1
    %s37 = scalar_select %p34, %s35, %s36
    %p40 = pneg %p34
    %p41 = scmp.eq.s32.totalorder %s11, 7
    %p42 = por %p40, %p41
    %p43 = scmp.ne.s32.totalorder %s35, %s38
    %p44 = scmp.eq.s32.totalorder %s11, 0
    %p45 = por %p43, %p44
    %p46 = scmp.ne.s32.totalorder %s35, %s38
    %p47 = scmp.eq.s32.totalorder %s16, 7
    %p48 = por %p46, %p47
    %p49 = scmp.ne.s32.totalorder %s38, %s39
    %p50 = scmp.eq.s32.totalorder %s16, 0
    %p51 = por %p49, %p50
    %p52 = scmp.ne.s32.totalorder %s38, %s39
    %p53 = scmp.eq.s32.totalorder %s17, 7
    %p54 = por %p52, %p53
    %p56 = scmp.ne.s32.totalorder %s39, %s55
    %p57 = scmp.eq.s32.totalorder %s17, 0
    %p58 = por %p56, %p57
    %s60 = sadd.s32 %s59, 1
    %p63 = scmp.eq.s32.totalorder %s11, 7
    %p64 = scmp.ne.s32.totalorder %s59, %s61
    %p65 = scmp.eq.s32.totalorder %s11, 0
    %p66 = por %p64, %p65
    %p67 = scmp.ne.s32.totalorder %s59, %s61
    %p68 = scmp.eq.s32.totalorder %s16, 7
    %p69 = por %p67, %p68
    %p70 = scmp.ne.s32.totalorder %s61, %s62
    %p71 = scmp.eq.s32.totalorder %s16, 0
    %p72 = por %p70, %p71
    %p73 = scmp.ne.s32.totalorder %s61, %s62
    %p74 = scmp.eq.s32.totalorder %s17, 7
    %p75 = por %p73, %p74
    %p77 = scmp.ne.s32.totalorder %s62, %s76
    %p78 = scmp.eq.s32.totalorder %s17, 0
    %p79 = por %p77, %p78
    %s81 = sadd.s32 %s80, 1
    %p84 = scmp.eq.s32.totalorder %s11, 7
    %p85 = scmp.ne.s32.totalorder %s80, %s82
    %p86 = scmp.eq.s32.totalorder %s11, 0
    %p87 = por %p85, %p86
    %p88 = scmp.ne.s32.totalorder %s80, %s82
    %p89 = scmp.eq.s32.totalorder %s16, 7
    %p90 = por %p88, %p89
    %p91 = scmp.ne.s32.totalorder %s82, %s83
    %p92 = scmp.eq.s32.totalorder %s16, 0
    %p93 = por %p91, %p92
    %p94 = scmp.ne.s32.totalorder %s82, %s83
    %p95 = scmp.eq.s32.totalorder %s17, 7
    %p96 = por %p94, %p95
    %p98 = scmp.ne.s32.totalorder %s83, %s97
    %p99 = scmp.eq.s32.totalorder %s17, 0
    %p100 = por %p98, %p99
    %s101 = ssub.s32 %s18, %s30
    %s102 = ssub.s32 %s19, %s26
    %s103 = sor.u32 %s101, %s102
    %p104 = scmp.eq.s32.totalorder %s103, 0
    %s106 = sadd.s32 %s105, 1
    %s107 = scalar_select %p104, %s105, %s106
    %p110 = pneg %p104
    %p111 = scmp.eq.s32.totalorder %s11, 7
    %p112 = por %p110, %p111
    %p113 = scmp.ne.s32.totalorder %s105, %s108
    %p114 = scmp.eq.s32.totalorder %s11, 0
    %p115 = por %p113, %p114
    %p116 = scmp.ne.s32.totalorder %s105, %s108
    %p117 = scmp.eq.s32.totalorder %s16, 7
    %p118 = por %p116, %p117
    %p119 = scmp.ne.s32.totalorder %s108, %s109
    %p120 = scmp.eq.s32.totalorder %s16, 0
    %p121 = por %p119, %p120
    %p122 = scmp.ne.s32.totalorder %s108, %s109
    %p123 = scmp.eq.s32.totalorder %s17, 7
    %p124 = por %p122, %p123
    %p126 = scmp.ne.s32.totalorder %s109, %s125
    %p127 = scmp.eq.s32.totalorder %s17, 0
    %p128 = por %p126, %p127
    %s129 = ssub.s32 %s18, %s30
    %s130 = ssub.s32 %s19, %s26
    %s131 = sor.u32 %s129, %s130
    %p132 = scmp.eq.s32.totalorder %s131, 0
    %s134 = sadd.s32 %s133, 1
    %s135 = scalar_select %p132, %s133, %s134
    %p138 = pneg %p132
    %p139 = scmp.eq.s32.totalorder %s11, 7
    %p140 = por %p138, %p139
    %p141 = scmp.ne.s32.totalorder %s133, %s136
    %p142 = scmp.eq.s32.totalorder %s11, 0
    %p143 = por %p141, %p142
    %p144 = scmp.ne.s32.totalorder %s133, %s136
    %p145 = scmp.eq.s32.totalorder %s16, 7
    %p146 = por %p144, %p145
    %p147 = scmp.ne.s32.totalorder %s136, %s137
    %p148 = scmp.eq.s32.totalorder %s16, 0
    %p149 = por %p147, %p148
    %p150 = scmp.ne.s32.totalorder %s136, %s137
    %p151 = scmp.eq.s32.totalorder %s17, 7
    %p152 = por %p150, %p151
    %p154 = scmp.ne.s32.totalorder %s137, %s153
    %p155 = scmp.eq.s32.totalorder %s17, 0
    %p156 = por %p154, %p155
    %p157 = scmp.le.s32.totalorder 1, %s11
    %p158 = scmp.lt.s32.totalorder %s11, 9
    %p159 = pnand %p157, %p158
    %p160 = pneg %p159
    // Predicated region
    $region9: #{unet_up_block.6} parent=5 // pred_check
      _
    $region10: #{unet_up_block.6} parent=5 // pred_check_branch
      %162 = sbr.rel (%p159) target = $region12
    $region11: #{unet_up_block.6} parent=5 // pred_region
      %s163 = ssub.s32 %s11, 1
      // Predicated region
      $region13: #{unet_up_block.6} parent=11 // pred_check
        %p164 = pneg %p72
      $region14: #{unet_up_block.6} parent=11 // pred_check_branch
        %166 = sbr.rel (%p164) target = $region16
      $region15: #{unet_up_block.6} parent=11 // pred_region
        _
      $region16: #{unet_up_block.6} parent=11 // pred_fallthru
        _
      // Predicated region
      $region17: #{unet_up_block.6} parent=11 // pred_check
        %p167 = pneg %p93
      $region18: #{unet_up_block.6} parent=11 // pred_check_branch
        %169 = sbr.rel (%p167) target = $region20
      $region19: #{unet_up_block.6} parent=11 // pred_region
        _
      $region20: #{unet_up_block.6} parent=11 // pred_fallthru
        _
    $region12: #{unet_up_block.6} parent=5 // pred_fallthru
      _
    %p170 = scmp.lt.s32.totalorder %s11, 8
    // Predicated region
    $region21: #{unet_up_block.6} parent=5 // pred_check
      %p171 = pneg %p170
    $region22: #{unet_up_block.6} parent=5 // pred_check_branch
      %173 = sbr.rel (%p171) target = $region24
    $region23: #{unet_up_block.6} parent=5 // pred_region
      // Predicated region
      $region25: #{unet_up_block.6} parent=23 // pred_check
        %p174 = pneg %p45
      $region26: #{unet_up_block.6} parent=23 // pred_check_branch
        %176 = sbr.rel (%p174) target = $region28
      $region27: #{unet_up_block.6} parent=23 // pred_region
        %s177 = smul.u32 2, %s19
        %p178 = scmp.lt.s32.totalorder %s18, 1
        %s179 = scalar_select %p178, %s18, 1
        %p180 = scmp.lt.s32.totalorder %s177, 7
        %s181 = scalar_select %p180, %s177, 7
        %s182 = smul.addr %s179, 8
        %s183 = sadd.s32 %s181, %s182
        %s184 = smul.addr %s183, 8
        %s185 = scalar_lea.vmem %s0, %s184
        %s186 = smul.u32 2, %s19
      $region28: #{unet_up_block.6} parent=23 // pred_fallthru
        _
    $region24: #{unet_up_block.6} parent=5 // pred_fallthru
      _
    %p187 = scmp.le.s32.totalorder 1, %s11
    %p188 = scmp.lt.s32.totalorder %s11, 9
    %p189 = pnand %p187, %p188
    %p190 = pneg %p189
    // Predicated region
    $region29: #{unet_up_block.6} parent=5 // pred_check
      _
    $region30: #{unet_up_block.6} parent=5 // pred_check_branch
      %192 = sbr.rel (%p189) target = $region32
    $region31: #{unet_up_block.6} parent=5 // pred_region
      %s193 = ssub.s32 %s11, 1
      %s194 = smul.u32 2, %s21
      %p195 = scmp.lt.s32.totalorder %s20, 1
      %s196 = scalar_select %p195, %s20, 1
      %p197 = scmp.lt.s32.totalorder %s194, 7
      %s198 = scalar_select %p197, %s194, 7
      %s199 = smul.addr %s196, 8
      %s200 = sadd.s32 %s198, %s199
      %s201 = smul.addr %s200, 8
      %s202 = scalar_lea.vmem %s0, %s201
      %p203 = pneg %p51
      %p204 = pneg %p48
      %p205 = pneg %p72
      %p206 = pneg %p69
      %p207 = pneg %p93
      %p208 = pneg %p90
      %p209 = pneg %p121
      %p210 = pneg %p118
      %s211 = smul.u32 2, %s21
      %p212 = scmp.lt.s32.totalorder %s20, 1
      %s213 = scalar_select %p212, %s20, 1
      %p214 = scmp.lt.s32.totalorder %s211, 7
      %s215 = scalar_select %p214, %s211, 7
      %s216 = smul.addr %s215, 4
      %s217 = smul.addr %s213, 32
      %s218 = sadd.s32 %s216, %s217
      %s219 = smul.addr %s218, 8
      %s220 = scalar_lea.vmem %s3, %s219
      %p221 = pneg %p149
      %p222 = pneg %p146
      %p223 = scmp.lt.s32.totalorder %s20, 1
      %s224 = scalar_select %p223, %s20, 1
      %p225 = scmp.lt.s32.totalorder %s21, 3
      %s226 = scalar_select %p225, %s21, 3
      %s227 = smul.addr %s224, 4
      %s228 = sadd.s32 %s226, %s227
      %s229 = smul.addr %s228, 2
      %s230 = scalar_lea.vmem %s4, %s229
      %s231 = smul.u32 2, %s21
      %p232 = scmp.lt.s32.totalorder %s20, 1
      %s233 = scalar_select %p232, %s20, 1
      %p234 = scmp.lt.s32.totalorder %s231, 7
      %s235 = scalar_select %p234, %s231, 7
      %s236 = smul.addr %s233, 8
      %s237 = sadd.s32 %s235, %s236
      %s238 = smul.addr %s237, 8
      %s239 = scalar_lea.vmem %s0, %s238
      %s240 = smul.u32 2, %s21
      %s241 = smul.u32 2, %s21
      %p242 = scmp.lt.s32.totalorder %s20, 1
      %s243 = scalar_select %p242, %s20, 1
      %p244 = scmp.lt.s32.totalorder %s241, 7
      %s245 = scalar_select %p244, %s241, 7
      %s246 = smul.addr %s245, 4
      %s247 = smul.addr %s243, 32
      %s248 = sadd.s32 %s246, %s247
      %s249 = smul.addr %s248, 8
      %s250 = scalar_lea.vmem %s3, %s249
      %s251 = smul.u32 2, %s21
      %p252 = scmp.lt.s32.totalorder %s20, 1
      %s253 = scalar_select %p252, %s20, 1
      %p254 = scmp.lt.s32.totalorder %s21, 3
      %s255 = scalar_select %p254, %s21, 3
      %s256 = smul.addr %s253, 4
      %s257 = sadd.s32 %s255, %s256
      %s258 = smul.addr %s257, 2
      %s259 = scalar_lea.vmem %s4, %s258
      %v261 = vld [vmem:[%s239] sm:$0xff]
      %v262 = vld [vmem:[%s239 + $0x8] sm:$0xff]
      %v263 = vpack.c.bf16 %v262, %v261
      %v264 = vld [vmem:[%s2] sm:$0x3]
      %v265 = vld [vmem:[%s1] sm:$0xff]
      %v266 = vld [vmem:[%s1 + $0x8] sm:$0xff]
      %v267 = vld [vmem:[%s1 + $0x10] sm:$0xff]
      %v268 = vld [vmem:[%s1 + $0x18] sm:$0xff]
      %v269 = vld [vmem:[%s1 + $0x20] sm:$0xff]
      %v270 = vld [vmem:[%s1 + $0x28] sm:$0xff]
      %v271 = vld [vmem:[%s1 + $0x30] sm:$0xff]
      %v272 = vld [vmem:[%s1 + $0x38] sm:$0xff]
      %v273 = vld [vmem:[%s1 + $0x40] sm:$0xff]
      %v274 = vld [vmem:[%s1 + $0x48] sm:$0xff]
      %v275 = vld [vmem:[%s1 + $0x50] sm:$0xff]
      %v276 = vld [vmem:[%s1 + $0x58] sm:$0xff]
      %v277 = vld [vmem:[%s1 + $0x60] sm:$0xff]
      %v278 = vld [vmem:[%s1 + $0x68] sm:$0xff]
      %v279 = vld [vmem:[%s1 + $0x70] sm:$0xff]
      %v280 = vld [vmem:[%s1 + $0x78] sm:$0xff]
      %v282 = vlaneseq
      %v283 = vshrl.u32 %v282, 7
      %v284 = vsub.s32 0, %v283
      %v285 = vrot.slane %v264, %v284
      %v286 = vlaneseq
      %v287 = vshrl.u32 %v286, 7
      %v288 = vsub.s32 1, %v287
      %v289 = vrot.slane %v264, %v288
      %v308 = vunpack.c.l.b16 %v265
      %v309 = vunpack.c.h.b16 %v265
      %v310 = vunpack.c.l.b16 %v266
      %v311 = vunpack.c.h.b16 %v266
      %v312 = vunpack.c.l.b16 %v267
      %v313 = vunpack.c.h.b16 %v267
      %v314 = vunpack.c.l.b16 %v268
      %v315 = vunpack.c.h.b16 %v268
      %v316 = vunpack.c.l.b16 %v269
      %v317 = vunpack.c.h.b16 %v269
      %v318 = vunpack.c.l.b16 %v270
      %v319 = vunpack.c.h.b16 %v270
      %v320 = vunpack.c.l.b16 %v271
      %v321 = vunpack.c.h.b16 %v271
      %v322 = vunpack.c.l.b16 %v272
      %v323 = vunpack.c.h.b16 %v272
      %v324 = vunpack.c.l.b16 %v273
      %v325 = vunpack.c.h.b16 %v273
      %v326 = vunpack.c.l.b16 %v274
      %v327 = vunpack.c.h.b16 %v274
      %v328 = vunpack.c.l.b16 %v275
      %v329 = vunpack.c.h.b16 %v275
      %v330 = vunpack.c.l.b16 %v276
      %v331 = vunpack.c.h.b16 %v276
      %v332 = vunpack.c.l.b16 %v277
      %v333 = vunpack.c.h.b16 %v277
      %v334 = vunpack.c.l.b16 %v278
      %v335 = vunpack.c.h.b16 %v278
      %v336 = vunpack.c.l.b16 %v279
      %v337 = vunpack.c.h.b16 %v279
      %v338 = vunpack.c.l.b16 %v280
      %v339 = vunpack.c.h.b16 %v280
      %v340 = vpack.c.b16 %v310, %v308
      %v341 = vpack.c.b16 %v311, %v309
      %v342 = vpack.c.b16 %v314, %v312
      %v343 = vpack.c.b16 %v315, %v313
      %v344 = vpack.c.b16 %v318, %v316
      %v345 = vpack.c.b16 %v319, %v317
      %v346 = vpack.c.b16 %v322, %v320
      %v347 = vpack.c.b16 %v323, %v321
      %v348 = vpack.c.b16 %v326, %v324
      %v349 = vpack.c.b16 %v327, %v325
      %v350 = vpack.c.b16 %v330, %v328
      %v351 = vpack.c.b16 %v331, %v329
      %v352 = vpack.c.b16 %v334, %v332
      %v353 = vpack.c.b16 %v335, %v333
      %v354 = vpack.c.b16 %v338, %v336
      %v355 = vpack.c.b16 %v339, %v337
      %372 = vmatprep.subr.bf16.mxu0 %v341
      %373 = vmatpush1.bf16.msra.mxu0 %v340
      %374 = vmatprep.subr.bf16.mxu0 %v343
      %375 = vmatpush1.bf16.msra.mxu0 %v342
      %376 = vmatprep.subr.bf16.mxu0 %v345
      %377 = vmatpush1.bf16.msra.mxu0 %v344
      %378 = vmatprep.subr.bf16.mxu0 %v347
      %379 = vmatpush1.bf16.msra.mxu0 %v346
      %380 = vmatprep.subr.bf16.mxu0 %v349
      %381 = vmatpush1.bf16.msra.mxu0 %v348
      %382 = vmatprep.subr.bf16.mxu0 %v351
      %383 = vmatpush1.bf16.msra.mxu0 %v350
      %384 = vmatprep.subr.bf16.mxu0 %v353
      %385 = vmatpush1.bf16.msra.mxu0 %v352
      %386 = vmatprep.subr.bf16.mxu0 %v355
      %387 = vmatpush1.bf16.msra.mxu0 %v354
      %388 = vmatprep.subr.bf16.mxu0 0
      %389 = vmatpush1.bf16.msra.mxu0 0
      %390 = vmatprep.subr.bf16.mxu0 0
      %391 = vmatpush1.bf16.msra.mxu0 0
      %392 = vmatprep.subr.bf16.mxu0 0
      %393 = vmatpush1.bf16.msra.mxu0 0
      %394 = vmatprep.subr.bf16.mxu0 0
      %395 = vmatpush1.bf16.msra.mxu0 0
      %396 = vmatprep.subr.bf16.mxu0 0
      %397 = vmatpush1.bf16.msra.mxu0 0
      %398 = vmatprep.subr.bf16.mxu0 0
      %399 = vmatpush1.bf16.msra.mxu0 0
      %400 = vmatprep.subr.bf16.mxu0 0
      %401 = vmatpush1.bf16.msra.mxu0 0
      %402 = vmatprep.subr.bf16.mxu0 0
      %403 = vmatpush1.bf16.msra.mxu0 0
      %404 = vmatprep.mubr.bf16.mxu0 0
      %405 = vmatmul.mubr.bf16.gmra.mrb[0].mxu0 %v263
      %v406 = vpop.f32.mrb[0].mxu0
      %v407 = vadd.f32 %v285, %v406
      %v408 = vpop.f32.mrb[0].mxu0
      %v409 = vadd.f32 %v289, %v408
      %v410 = vpop.f32.mrb[0].mxu0
      %v411 = vadd.f32 %v285, %v410
      %v412 = vpop.f32.mrb[0].mxu0
      %v413 = vadd.f32 %v289, %v412
      %414 = vdwg.mxu0
      %v415 = vadd.f32 %v407, %v411
      %v416 = vrot.slane %v415, 4
      %v417 = vadd.f32 %v415, %v416
      %v418 = vrot.slane %v417, 2
      %v419 = vadd.f32 %v417, %v418
      %v420 = vrot.slane %v419, 1
      %v421 = vadd.f32 %v419, %v420
      %v422 = vadd.f32 %v421, 0.0
      %v423 = vadd.f32 %v409, %v413
      %v424 = vrot.slane %v423, 4
      %v425 = vadd.f32 %v423, %v424
      %v426 = vrot.slane %v425, 2
      %v427 = vadd.f32 %v425, %v426
      %v428 = vrot.slane %v427, 1
      %v429 = vadd.f32 %v427, %v428
      %v430 = vadd.f32 %v422, %v429
      %v431 = vmul.f32 %v407, %v407
      %v432 = vmul.f32 %v409, %v409
      %v433 = vmul.f32 %v411, %v411
      %v434 = vmul.f32 %v413, %v413
      %v435 = vadd.f32 %v431, %v433
      %v436 = vrot.slane %v435, 4
      %v437 = vadd.f32 %v435, %v436
      %v438 = vrot.slane %v437, 2
      %v439 = vadd.f32 %v437, %v438
      %v440 = vrot.slane %v439, 1
      %v441 = vadd.f32 %v439, %v440
      %v442 = vadd.f32 %v441, 0.0
      %v443 = vadd.f32 %v432, %v434
      %v444 = vrot.slane %v443, 4
      %v445 = vadd.f32 %v443, %v444
      %v446 = vrot.slane %v445, 2
      %v447 = vadd.f32 %v445, %v446
      %v448 = vrot.slane %v447, 1
      %v449 = vadd.f32 %v447, %v448
      %v450 = vadd.f32 %v442, %v449
      %451 = vst [vmem:[%s250] sm:$0xff] %v407
      %452 = vst [vmem:[%s250 + $0x8] sm:$0xff] %v409
      %453 = vst [vmem:[%s250 + $0x20] sm:$0xff] %v411
      %454 = vst [vmem:[%s250 + $0x28] sm:$0xff] %v413
      %s455 = scalar_lea.vmem %s1, 128
      %v456 = vld [vmem:[%s455] sm:$0xff]
      %v457 = vld [vmem:[%s455 + $0x8] sm:$0xff]
      %v458 = vld [vmem:[%s455 + $0x10] sm:$0xff]
      %v459 = vld [vmem:[%s455 + $0x18] sm:$0xff]
      %v460 = vld [vmem:[%s455 + $0x20] sm:$0xff]
      %v461 = vld [vmem:[%s455 + $0x28] sm:$0xff]
      %v462 = vld [vmem:[%s455 + $0x30] sm:$0xff]
      %v463 = vld [vmem:[%s455 + $0x38] sm:$0xff]
      %v464 = vld [vmem:[%s455 + $0x40] sm:$0xff]
      %v465 = vld [vmem:[%s455 + $0x48] sm:$0xff]
      %v466 = vld [vmem:[%s455 + $0x50] sm:$0xff]
      %v467 = vld [vmem:[%s455 + $0x58] sm:$0xff]
      %v468 = vld [vmem:[%s455 + $0x60] sm:$0xff]
      %v469 = vld [vmem:[%s455 + $0x68] sm:$0xff]
      %v470 = vld [vmem:[%s455 + $0x70] sm:$0xff]
      %v471 = vld [vmem:[%s455 + $0x78] sm:$0xff]
      %v488 = vunpack.c.l.b16 %v456
      %v489 = vunpack.c.h.b16 %v456
      %v490 = vunpack.c.l.b16 %v457
      %v491 = vunpack.c.h.b16 %v457
      %v492 = vunpack.c.l.b16 %v458
      %v493 = vunpack.c.h.b16 %v458
      %v494 = vunpack.c.l.b16 %v459
      %v495 = vunpack.c.h.b16 %v459
      %v496 = vunpack.c.l.b16 %v460
      %v497 = vunpack.c.h.b16 %v460
      %v498 = vunpack.c.l.b16 %v461
      %v499 = vunpack.c.h.b16 %v461
      %v500 = vunpack.c.l.b16 %v462
      %v501 = vunpack.c.h.b16 %v462
      %v502 = vunpack.c.l.b16 %v463
      %v503 = vunpack.c.h.b16 %v463
      %v504 = vunpack.c.l.b16 %v464
      %v505 = vunpack.c.h.b16 %v464
      %v506 = vunpack.c.l.b16 %v465
      %v507 = vunpack.c.h.b16 %v465
      %v508 = vunpack.c.l.b16 %v466
      %v509 = vunpack.c.h.b16 %v466
      %v510 = vunpack.c.l.b16 %v467
      %v511 = vunpack.c.h.b16 %v467
      %v512 = vunpack.c.l.b16 %v468
      %v513 = vunpack.c.h.b16 %v468
      %v514 = vunpack.c.l.b16 %v469
      %v515 = vunpack.c.h.b16 %v469
      %v516 = vunpack.c.l.b16 %v470
      %v517 = vunpack.c.h.b16 %v470
      %v518 = vunpack.c.l.b16 %v471
      %v519 = vunpack.c.h.b16 %v471
      %v520 = vpack.c.b16 %v490, %v488
      %v521 = vpack.c.b16 %v491, %v489
      %v522 = vpack.c.b16 %v494, %v492
      %v523 = vpack.c.b16 %v495, %v493
      %v524 = vpack.c.b16 %v498, %v496
      %v525 = vpack.c.b16 %v499, %v497
      %v526 = vpack.c.b16 %v502, %v500
      %v527 = vpack.c.b16 %v503, %v501
      %v528 = vpack.c.b16 %v506, %v504
      %v529 = vpack.c.b16 %v507, %v505
      %v530 = vpack.c.b16 %v510, %v508
      %v531 = vpack.c.b16 %v511, %v509
      %v532 = vpack.c.b16 %v514, %v512
      %v533 = vpack.c.b16 %v515, %v513
      %v534 = vpack.c.b16 %v518, %v516
      %v535 = vpack.c.b16 %v519, %v517
      %552 = vmatprep.subr.bf16.mxu0 %v521
      %553 = vmatpush1.bf16.msra.mxu0 %v520
      %554 = vmatprep.subr.bf16.mxu0 %v523
      %555 = vmatpush1.bf16.msra.mxu0 %v522
      %556 = vmatprep.subr.bf16.mxu0 %v525
      %557 = vmatpush1.bf16.msra.mxu0 %v524
      %558 = vmatprep.subr.bf16.mxu0 %v527
      %559 = vmatpush1.bf16.msra.mxu0 %v526
      %560 = vmatprep.subr.bf16.mxu0 %v529
      %561 = vmatpush1.bf16.msra.mxu0 %v528
      %562 = vmatprep.subr.bf16.mxu0 %v531
      %563 = vmatpush1.bf16.msra.mxu0 %v530
      %564 = vmatprep.subr.bf16.mxu0 %v533
      %565 = vmatpush1.bf16.msra.mxu0 %v532
      %566 = vmatprep.subr.bf16.mxu0 %v535
      %567 = vmatpush1.bf16.msra.mxu0 %v534
      %568 = vmatprep.subr.bf16.mxu0 0
      %569 = vmatpush1.bf16.msra.mxu0 0
      %570 = vmatprep.subr.bf16.mxu0 0
      %571 = vmatpush1.bf16.msra.mxu0 0
      %572 = vmatprep.subr.bf16.mxu0 0
      %573 = vmatpush1.bf16.msra.mxu0 0
      %574 = vmatprep.subr.bf16.mxu0 0
      %575 = vmatpush1.bf16.msra.mxu0 0
      %576 = vmatprep.subr.bf16.mxu0 0
      %577 = vmatpush1.bf16.msra.mxu0 0
      %578 = vmatprep.subr.bf16.mxu0 0
      %579 = vmatpush1.bf16.msra.mxu0 0
      %580 = vmatprep.subr.bf16.mxu0 0
      %581 = vmatpush1.bf16.msra.mxu0 0
      %582 = vmatprep.subr.bf16.mxu0 0
      %583 = vmatpush1.bf16.msra.mxu0 0
      %584 = vmatprep.mubr.bf16.mxu0 0
      %585 = vmatmul.mubr.bf16.gmra.mrb[0].mxu0 %v263
      %v586 = vpop.f32.mrb[0].mxu0
      %v587 = vadd.f32 %v285, %v586
      %v588 = vpop.f32.mrb[0].mxu0
      %v589 = vadd.f32 %v289, %v588
      %v590 = vpop.f32.mrb[0].mxu0
      %v591 = vadd.f32 %v285, %v590
      %v592 = vpop.f32.mrb[0].mxu0
      %v593 = vadd.f32 %v289, %v592
      %594 = vdwg.mxu0
      %v595 = vadd.f32 %v587, %v591
      %v596 = vrot.slane %v595, 4
      %v597 = vadd.f32 %v595, %v596
      %v598 = vrot.slane %v597, 2
      %v599 = vadd.f32 %v597, %v598
      %v600 = vrot.slane %v599, 1
      %v601 = vadd.f32 %v599, %v600
      %v602 = vadd.f32 %v430, %v601
      %v603 = vadd.f32 %v589, %v593
      %v604 = vrot.slane %v603, 4
      %v605 = vadd.f32 %v603, %v604
      %v606 = vrot.slane %v605, 2
      %v607 = vadd.f32 %v605, %v606
      %v608 = vrot.slane %v607, 1
      %v609 = vadd.f32 %v607, %v608
      %v610 = vadd.f32 %v602, %v609
      %v611 = vmul.f32 %v587, %v587
      %v612 = vmul.f32 %v589, %v589
      %v613 = vmul.f32 %v591, %v591
      %v614 = vmul.f32 %v593, %v593
      %v615 = vadd.f32 %v611, %v613
      %v616 = vrot.slane %v615, 4
      %v617 = vadd.f32 %v615, %v616
      %v618 = vrot.slane %v617, 2
      %v619 = vadd.f32 %v617, %v618
      %v620 = vrot.slane %v619, 1
      %v621 = vadd.f32 %v619, %v620
      %v622 = vadd.f32 %v450, %v621
      %v623 = vadd.f32 %v612, %v614
      %v624 = vrot.slane %v623, 4
      %v625 = vadd.f32 %v623, %v624
      %v626 = vrot.slane %v625, 2
      %v627 = vadd.f32 %v625, %v626
      %v628 = vrot.slane %v627, 1
      %v629 = vadd.f32 %v627, %v628
      %v630 = vadd.f32 %v622, %v629
      %s631 = scalar_lea.vmem %s250, 16
      %632 = vst [vmem:[%s631] sm:$0xff] %v587
      %633 = vst [vmem:[%s631 + $0x8] sm:$0xff] %v589
      %634 = vst [vmem:[%s631 + $0x20] sm:$0xff] %v591
      %635 = vst [vmem:[%s631 + $0x28] sm:$0xff] %v593
      %vm636 = vcmask 1040384
      %v637 = vsel %vm636, %v610, %v630
      %638 = vst [vmem:[%s259] sm:$0x3] %v637
      %s639 = smul.u32 2, %s21
      %p640 = scmp.lt.s32.totalorder %s20, 1
      %s641 = scalar_select %p640, %s20, 1
      %p642 = scmp.lt.s32.totalorder %s639, 7
      %s643 = scalar_select %p642, %s639, 7
      %s644 = smul.addr %s643, 4
      %s645 = smul.addr %s641, 32
      %s646 = sadd.s32 %s644, %s645
      %s647 = smul.addr %s646, 8
      %s648 = scalar_lea.vmem %s3, %s647
      %p649 = scmp.lt.s32.totalorder %s20, 1
      %s650 = scalar_select %p649, %s20, 1
      %p651 = scmp.lt.s32.totalorder %s21, 3
      %s652 = scalar_select %p651, %s21, 3
      %s653 = smul.addr %s650, 4
      %s654 = sadd.s32 %s652, %s653
      %s655 = smul.addr %s654, 2
      %s656 = scalar_lea.vmem %s4, %s655
      // Predicated region
      $region33: #{unet_up_block.6} parent=31 // pred_check
        %p657 = pneg %p118
      $region34: #{unet_up_block.6} parent=31 // pred_check_branch
        %659 = sbr.rel (%p657) target = $region36
      $region35: #{unet_up_block.6} parent=31 // pred_region
        %s660 = smul.u32 2, %s21
      $region36: #{unet_up_block.6} parent=31 // pred_fallthru
        _
      // Predicated region
      $region37: #{unet_up_block.6} parent=31 // pred_check
        %p661 = pneg %p146
      $region38: #{unet_up_block.6} parent=31 // pred_check_branch
        %663 = sbr.rel (%p661) target = $region40
      $region39: #{unet_up_block.6} parent=31 // pred_region
        _
      $region40: #{unet_up_block.6} parent=31 // pred_fallthru
        _
    $region32: #{unet_up_block.6} parent=5 // pred_fallthru
      _
    %p664 = scmp.le.s32.totalorder 2, %s11
    // Predicated region
    $region41: #{unet_up_block.6} parent=5 // pred_check
      %p665 = pneg %p664
    $region42: #{unet_up_block.6} parent=5 // pred_check_branch
      %667 = sbr.rel (%p665) target = $region44
    $region43: #{unet_up_block.6} parent=5 // pred_region
      %s668 = ssub.s32 %s11, 2
      // Predicated region
      $region45: #{unet_up_block.6} parent=43 // pred_check
        %p669 = pneg %p124
      $region46: #{unet_up_block.6} parent=43 // pred_check_branch
        %671 = sbr.rel (%p669) target = $region48
      $region47: #{unet_up_block.6} parent=43 // pred_region
        %s672 = smul.u32 2, %s23
        %p673 = scmp.lt.s32.totalorder %s22, 1
        %s674 = scalar_select %p673, %s22, 1
        %p675 = scmp.lt.s32.totalorder %s672, 7
        %s676 = scalar_select %p675, %s672, 7
        %s677 = smul.addr %s676, 4
        %s678 = smul.addr %s674, 32
        %s679 = sadd.s32 %s677, %s678
        %s680 = smul.addr %s679, 8
        %s681 = scalar_lea.vmem %s3, %s680
      $region48: #{unet_up_block.6} parent=43 // pred_fallthru
        _
      // Predicated region
      $region49: #{unet_up_block.6} parent=43 // pred_check
        %p682 = pneg %p152
      $region50: #{unet_up_block.6} parent=43 // pred_check_branch
        %684 = sbr.rel (%p682) target = $region52
      $region51: #{unet_up_block.6} parent=43 // pred_region
        %p685 = scmp.lt.s32.totalorder %s22, 1
        %s686 = scalar_select %p685, %s22, 1
        %p687 = scmp.lt.s32.totalorder %s23, 3
        %s688 = scalar_select %p687, %s23, 3
        %s689 = smul.addr %s686, 4
        %s690 = sadd.s32 %s688, %s689
        %s691 = smul.addr %s690, 2
        %s692 = scalar_lea.vmem %s4, %s691
      $region52: #{unet_up_block.6} parent=43 // pred_fallthru
        _
    $region44: #{unet_up_block.6} parent=5 // pred_fallthru
      _
  $region6: #{unet_up_block.6} parent=0 // loop_footer
    %s15 = sadd.s32 1, %s11
  $region7: #{unet_up_block.6} parent=0 // loop_footer_branch
    %10 = sbr.rel target = $region3
  $region8: #{unet_up_block.6} parent=0 // loop_exit
    _

// kernel: unet_up_block.9
$region0: #{unet_up_block.9}
  #allocation0 [shape = 'u32[]', space=smem, size = 0x4, offset = 0x4, fixed_abs, tag = 'smem constant byte address 0x4 - core index']
  #allocation1 [shape = 'u32[144,128]{1,0:T(1,128)}', space=vmem, size = 0x12000, scoped, tag = 'internal scratch']
  %s0 = inlined_call_operand.vmem [shape: f32[2,16,16,128], index: 0, kind: input, shape index: {}]
  %s1 = inlined_call_operand.vmem [shape: bf16[2,16,16,128], index: 1, kind: input, shape index: {}]
  %s2 = inlined_call_operand.vmem [shape: f32[1,128], index: 2, kind: input, shape index: {}]
  %s3 = inlined_call_operand.vmem [shape: f32[1,128], index: 3, kind: input, shape index: {}]
  %s4 = inlined_call_operand.vmem [shape: f32[2,16,16,128], index: 4, kind: output, shape index: {}]
  %s5 = sld [smem:[#allocation0]]
  $region49: #{unet_up_block.9} parent=0
    _
  %s7 = ssub.s32 1, %s5
  %s8 = scalar_select 0, %s7, %s5
  loop: start=0, step=1, limit=10
  $region2: #{unet_up_block.9} parent=0 // loop_pre_header
    _
  $region3: #{unet_up_block.9} parent=0 // loop_header
    %s10 = sphi 0, %s14
    %p11 = scmp.ge.s32.totalorder %s10, 10
    %s17 = sphi 0, %s29
    %s18 = sphi 0, %s25
    %s19 = sphi 0, %s17
    %s20 = sphi 0, %s18
    %s21 = sphi 0, %s19
    %s22 = sphi 0, %s20
    %s34 = sphi 0, %s36
    %s37 = sphi 0, %s34
    %s38 = sphi 0, %s37
    %s54 = sphi 0, %s38
    %s62 = sphi 0, %s64
    %s65 = sphi 0, %s62
    %s66 = sphi 0, %s65
    %s82 = sphi 0, %s66
    %s86 = sphi 0, %s86
    %s88 = sphi 0, %s86
    %s89 = sphi 0, %s88
    %s103 = sphi 0, %s89
    %s107 = sphi 0, %s107
    %s109 = sphi 0, %s107
    %s110 = sphi 0, %s109
    %s124 = sphi 0, %s110
    %s132 = sphi 0, %s134
    %s135 = sphi 0, %s132
    %s136 = sphi 0, %s135
    %s152 = sphi 0, %s136
  $region4: #{unet_up_block.9} parent=0 // loop_header_branch
    %13 = sbr.rel (%p11) target = $region8
  $region5: #{unet_up_block.9} parent=0 // loop_body
    %s15 = ssub.s32 %s10, 1
    %s16 = ssub.s32 %s10, 2
    %s23 = sadd.s32 1, %s18
    %p24 = scmp.ge.s32.totalorder %s23, 4
    %s25 = scalar_select %p24, 0, %s23
    %s26 = sadd.s32 1, %s17
    %s27 = scalar_select %p24, %s26, %s17
    %p28 = scmp.ge.s32.totalorder %s27, 2
    %s29 = scalar_select %p28, 0, %s27
    %s30 = ssub.s32 %s17, %s29
    %s31 = ssub.s32 %s18, %s25
    %s32 = sor.u32 %s30, %s31
    %p33 = scmp.eq.s32.totalorder %s32, 0
    %s35 = sadd.s32 %s34, 1
    %s36 = scalar_select %p33, %s34, %s35
    %p39 = pneg %p33
    %p40 = scmp.eq.s32.totalorder %s10, 7
    %p41 = por %p39, %p40
    %p42 = scmp.ne.s32.totalorder %s34, %s37
    %p43 = scmp.eq.s32.totalorder %s10, 0
    %p44 = por %p42, %p43
    %p45 = scmp.ne.s32.totalorder %s34, %s37
    %p46 = scmp.eq.s32.totalorder %s15, 7
    %p47 = por %p45, %p46
    %p48 = scmp.ne.s32.totalorder %s37, %s38
    %p49 = scmp.eq.s32.totalorder %s15, 0
    %p50 = por %p48, %p49
    %p51 = scmp.ne.s32.totalorder %s37, %s38
    %p52 = scmp.eq.s32.totalorder %s16, 7
    %p53 = por %p51, %p52
    %p55 = scmp.ne.s32.totalorder %s38, %s54
    %p56 = scmp.eq.s32.totalorder %s16, 0
    %p57 = por %p55, %p56
    %s58 = ssub.s32 %s17, %s29
    %s59 = ssub.s32 %s18, %s25
    %s60 = sor.u32 %s58, %s59
    %p61 = scmp.eq.s32.totalorder %s60, 0
    %s63 = sadd.s32 %s62, 1
    %s64 = scalar_select %p61, %s62, %s63
    %p67 = pneg %p61
    %p68 = scmp.eq.s32.totalorder %s10, 7
    %p69 = por %p67, %p68
    %p70 = scmp.ne.s32.totalorder %s62, %s65
    %p71 = scmp.eq.s32.totalorder %s10, 0
    %p72 = por %p70, %p71
    %p73 = scmp.ne.s32.totalorder %s62, %s65
    %p74 = scmp.eq.s32.totalorder %s15, 7
    %p75 = por %p73, %p74
    %p76 = scmp.ne.s32.totalorder %s65, %s66
    %p77 = scmp.eq.s32.totalorder %s15, 0
    %p78 = por %p76, %p77
    %p79 = scmp.ne.s32.totalorder %s65, %s66
    %p80 = scmp.eq.s32.totalorder %s16, 7
    %p81 = por %p79, %p80
    %p83 = scmp.ne.s32.totalorder %s66, %s82
    %p84 = scmp.eq.s32.totalorder %s16, 0
    %p85 = por %p83, %p84
    %s87 = sadd.s32 %s86, 1
    %p90 = scmp.eq.s32.totalorder %s10, 7
    %p91 = scmp.ne.s32.totalorder %s86, %s88
    %p92 = scmp.eq.s32.totalorder %s10, 0
    %p93 = por %p91, %p92
    %p94 = scmp.ne.s32.totalorder %s86, %s88
    %p95 = scmp.eq.s32.totalorder %s15, 7
    %p96 = por %p94, %p95
    %p97 = scmp.ne.s32.totalorder %s88, %s89
    %p98 = scmp.eq.s32.totalorder %s15, 0
    %p99 = por %p97, %p98
    %p100 = scmp.ne.s32.totalorder %s88, %s89
    %p101 = scmp.eq.s32.totalorder %s16, 7
    %p102 = por %p100, %p101
    %p104 = scmp.ne.s32.totalorder %s89, %s103
    %p105 = scmp.eq.s32.totalorder %s16, 0
    %p106 = por %p104, %p105
    %s108 = sadd.s32 %s107, 1
    %p111 = scmp.eq.s32.totalorder %s10, 7
    %p112 = scmp.ne.s32.totalorder %s107, %s109
    %p113 = scmp.eq.s32.totalorder %s10, 0
    %p114 = por %p112, %p113
    %p115 = scmp.ne.s32.totalorder %s107, %s109
    %p116 = scmp.eq.s32.totalorder %s15, 7
    %p117 = por %p115, %p116
    %p118 = scmp.ne.s32.totalorder %s109, %s110
    %p119 = scmp.eq.s32.totalorder %s15, 0
    %p120 = por %p118, %p119
    %p121 = scmp.ne.s32.totalorder %s109, %s110
    %p122 = scmp.eq.s32.totalorder %s16, 7
    %p123 = por %p121, %p122
    %p125 = scmp.ne.s32.totalorder %s110, %s124
    %p126 = scmp.eq.s32.totalorder %s16, 0
    %p127 = por %p125, %p126
    %s128 = ssub.s32 %s17, %s29
    %s129 = ssub.s32 %s18, %s25
    %s130 = sor.u32 %s128, %s129
    %p131 = scmp.eq.s32.totalorder %s130, 0
    %s133 = sadd.s32 %s132, 1
    %s134 = scalar_select %p131, %s132, %s133
    %p137 = pneg %p131
    %p138 = scmp.eq.s32.totalorder %s10, 7
    %p139 = por %p137, %p138
    %p140 = scmp.ne.s32.totalorder %s132, %s135
    %p141 = scmp.eq.s32.totalorder %s10, 0
    %p142 = por %p140, %p141
    %p143 = scmp.ne.s32.totalorder %s132, %s135
    %p144 = scmp.eq.s32.totalorder %s15, 7
    %p145 = por %p143, %p144
    %p146 = scmp.ne.s32.totalorder %s135, %s136
    %p147 = scmp.eq.s32.totalorder %s15, 0
    %p148 = por %p146, %p147
    %p149 = scmp.ne.s32.totalorder %s135, %s136
    %p150 = scmp.eq.s32.totalorder %s16, 7
    %p151 = por %p149, %p150
    %p153 = scmp.ne.s32.totalorder %s136, %s152
    %p154 = scmp.eq.s32.totalorder %s16, 0
    %p155 = por %p153, %p154
    %p156 = scmp.le.s32.totalorder 1, %s10
    %p157 = scmp.lt.s32.totalorder %s10, 9
    %p158 = pnand %p156, %p157
    %p159 = pneg %p158
    // Predicated region
    $region9: #{unet_up_block.9} parent=5 // pred_check
      _
    $region10: #{unet_up_block.9} parent=5 // pred_check_branch
      %161 = sbr.rel (%p158) target = $region12
    $region11: #{unet_up_block.9} parent=5 // pred_region
      %s162 = ssub.s32 %s10, 1
      // Predicated region
      $region13: #{unet_up_block.9} parent=11 // pred_check
        %p163 = pneg %p99
      $region14: #{unet_up_block.9} parent=11 // pred_check_branch
        %165 = sbr.rel (%p163) target = $region16
      $region15: #{unet_up_block.9} parent=11 // pred_region
        _
      $region16: #{unet_up_block.9} parent=11 // pred_fallthru
        _
      // Predicated region
      $region17: #{unet_up_block.9} parent=11 // pred_check
        %p166 = pneg %p120
      $region18: #{unet_up_block.9} parent=11 // pred_check_branch
        %168 = sbr.rel (%p166) target = $region20
      $region19: #{unet_up_block.9} parent=11 // pred_region
        _
      $region20: #{unet_up_block.9} parent=11 // pred_fallthru
        _
    $region12: #{unet_up_block.9} parent=5 // pred_fallthru
      _
    %p169 = scmp.lt.s32.totalorder %s10, 8
    // Predicated region
    $region21: #{unet_up_block.9} parent=5 // pred_check
      %p170 = pneg %p169
    $region22: #{unet_up_block.9} parent=5 // pred_check_branch
      %172 = sbr.rel (%p170) target = $region24
    $region23: #{unet_up_block.9} parent=5 // pred_region
      // Predicated region
      $region25: #{unet_up_block.9} parent=23 // pred_check
        %p173 = pneg %p44
      $region26: #{unet_up_block.9} parent=23 // pred_check_branch
        %175 = sbr.rel (%p173) target = $region28
      $region27: #{unet_up_block.9} parent=23 // pred_region
        %s176 = smul.u32 4, %s18
        %p177 = scmp.lt.s32.totalorder %s17, 1
        %s178 = scalar_select %p177, %s17, 1
        %p179 = scmp.lt.s32.totalorder %s176, 15
        %s180 = scalar_select %p179, %s176, 15
        %s181 = smul.addr %s180, 2
        %s182 = smul.addr %s178, 32
        %s183 = sadd.s32 %s181, %s182
        %s184 = smul.addr %s183, 8
        %s185 = scalar_lea.vmem %s0, %s184
        %s186 = smul.u32 4, %s18
      $region28: #{unet_up_block.9} parent=23 // pred_fallthru
        _
      // Predicated region
      $region29: #{unet_up_block.9} parent=23 // pred_check
        %p187 = pneg %p72
      $region30: #{unet_up_block.9} parent=23 // pred_check_branch
        %189 = sbr.rel (%p187) target = $region32
      $region31: #{unet_up_block.9} parent=23 // pred_region
        %s190 = smul.u32 4, %s18
        %p191 = scmp.lt.s32.totalorder %s17, 1
        %s192 = scalar_select %p191, %s17, 1
        %p193 = scmp.lt.s32.totalorder %s190, 15
        %s194 = scalar_select %p193, %s190, 15
        %s195 = smul.addr %s194, 2
        %s196 = smul.addr %s192, 32
        %s197 = sadd.s32 %s195, %s196
        %s198 = smul.addr %s197, 4
        %s199 = scalar_lea.vmem %s1, %s198
        %s200 = smul.u32 4, %s18
      $region32: #{unet_up_block.9} parent=23 // pred_fallthru
        _
    $region24: #{unet_up_block.9} parent=5 // pred_fallthru
      _
    %p201 = scmp.le.s32.totalorder 1, %s10
    %p202 = scmp.lt.s32.totalorder %s10, 9
    %p203 = pnand %p201, %p202
    %p204 = pneg %p203
    // Predicated region
    $region33: #{unet_up_block.9} parent=5 // pred_check
      _
    $region34: #{unet_up_block.9} parent=5 // pred_check_branch
      %206 = sbr.rel (%p203) target = $region36
    $region35: #{unet_up_block.9} parent=5 // pred_region
      %s207 = ssub.s32 %s10, 1
      %s208 = smul.u32 4, %s20
      %p209 = scmp.lt.s32.totalorder %s19, 1
      %s210 = scalar_select %p209, %s19, 1
      %p211 = scmp.lt.s32.totalorder %s208, 15
      %s212 = scalar_select %p211, %s208, 15
      %s213 = smul.addr %s212, 2
      %s214 = smul.addr %s210, 32
      %s215 = sadd.s32 %s213, %s214
      %s216 = smul.addr %s215, 8
      %s217 = scalar_lea.vmem %s0, %s216
      %p218 = pneg %p50
      %p219 = pneg %p47
      %s220 = smul.u32 4, %s20
      %p221 = scmp.lt.s32.totalorder %s19, 1
      %s222 = scalar_select %p221, %s19, 1
      %p223 = scmp.lt.s32.totalorder %s220, 15
      %s224 = scalar_select %p223, %s220, 15
      %s225 = smul.addr %s224, 2
      %s226 = smul.addr %s222, 32
      %s227 = sadd.s32 %s225, %s226
      %s228 = smul.addr %s227, 4
      %s229 = scalar_lea.vmem %s1, %s228
      %p230 = pneg %p78
      %p231 = pneg %p75
      %p232 = pneg %p99
      %p233 = pneg %p96
      %p234 = pneg %p120
      %p235 = pneg %p117
      %p236 = pneg %p148
      %p237 = pneg %p145
      %s238 = smul.u32 4, %s20
      %p239 = scmp.lt.s32.totalorder %s19, 1
      %s240 = scalar_select %p239, %s19, 1
      %p241 = scmp.lt.s32.totalorder %s238, 15
      %s242 = scalar_select %p241, %s238, 15
      %s243 = smul.addr %s242, 2
      %s244 = smul.addr %s240, 32
      %s245 = sadd.s32 %s243, %s244
      %s246 = smul.addr %s245, 8
      %s247 = scalar_lea.vmem %s4, %s246
      %s248 = smul.u32 4, %s20
      %p249 = scmp.lt.s32.totalorder %s19, 1
      %s250 = scalar_select %p249, %s19, 1
      %p251 = scmp.lt.s32.totalorder %s248, 15
      %s252 = scalar_select %p251, %s248, 15
      %s253 = smul.addr %s252, 2
      %s254 = smul.addr %s250, 32
      %s255 = sadd.s32 %s253, %s254
      %s256 = smul.addr %s255, 8
      %s257 = scalar_lea.vmem %s0, %s256
      %s258 = smul.u32 4, %s20
      %s259 = smul.u32 4, %s20
      %p260 = scmp.lt.s32.totalorder %s19, 1
      %s261 = scalar_select %p260, %s19, 1
      %p262 = scmp.lt.s32.totalorder %s259, 15
      %s263 = scalar_select %p262, %s259, 15
      %s264 = smul.addr %s263, 2
      %s265 = smul.addr %s261, 32
      %s266 = sadd.s32 %s264, %s265
      %s267 = smul.addr %s266, 4
      %s268 = scalar_lea.vmem %s1, %s267
      %s269 = smul.u32 4, %s20
      %s270 = smul.u32 4, %s20
      %p271 = scmp.lt.s32.totalorder %s19, 1
      %s272 = scalar_select %p271, %s19, 1
      %p273 = scmp.lt.s32.totalorder %s270, 15
      %s274 = scalar_select %p273, %s270, 15
      %s275 = smul.addr %s274, 2
      %s276 = smul.addr %s272, 32
      %s277 = sadd.s32 %s275, %s276
      %s278 = smul.addr %s277, 8
      %s279 = scalar_lea.vmem %s4, %s278
      %s280 = smul.u32 4, %s20
      %v281 = vld [vmem:[%s2] sm:$0x1]
      %v282 = vld [vmem:[%s3] sm:$0x1]
      %v283 = vld [vmem:[%s257] sm:$0xff]
      %v284 = vld [vmem:[%s257 + $0x8] sm:$0xff]
      %v285 = vld [vmem:[%s257 + $0x10] sm:$0xff]
      %v286 = vld [vmem:[%s257 + $0x18] sm:$0xff]
      %v287 = vld [vmem:[%s257 + $0x20] sm:$0xff]
      %v288 = vld [vmem:[%s257 + $0x28] sm:$0xff]
      %v289 = vld [vmem:[%s257 + $0x30] sm:$0xff]
      %v290 = vld [vmem:[%s257 + $0x38] sm:$0xff]
      %v292 = vlaneseq
      %v293 = vshrl.u32 %v292, 7
      %v294 = vsub.s32 0, %v293
      %v295 = vrot.slane %v281, %v294
      %v297 = vmul.f32 %v283, %v295
      %v298 = vmul.f32 %v284, %v295
      %v299 = vmul.f32 %v285, %v295
      %v300 = vmul.f32 %v286, %v295
      %v301 = vmul.f32 %v287, %v295
      %v302 = vmul.f32 %v288, %v295
      %v303 = vmul.f32 %v289, %v295
      %v304 = vmul.f32 %v290, %v295
      %v306 = vlaneseq
      %v307 = vshrl.u32 %v306, 7
      %v308 = vsub.s32 0, %v307
      %v309 = vrot.slane %v282, %v308
      %v311 = vadd.f32 %v297, %v309
      %v312 = vadd.f32 %v298, %v309
      %v313 = vadd.f32 %v299, %v309
      %v314 = vadd.f32 %v300, %v309
      %v315 = vadd.f32 %v301, %v309
      %v316 = vadd.f32 %v302, %v309
      %v317 = vadd.f32 %v303, %v309
      %v318 = vadd.f32 %v304, %v309
      %v319 = vmul.f32 %v311, 0.2
      %v320 = vmul.f32 %v312, 0.2
      %v321 = vmul.f32 %v313, 0.2
      %v322 = vmul.f32 %v314, 0.2
      %v323 = vmul.f32 %v315, 0.2
      %v324 = vmul.f32 %v316, 0.2
      %v325 = vmul.f32 %v317, 0.2
      %v326 = vmul.f32 %v318, 0.2
      %v327 = vmax.f32 %v311, %v319
      %v328 = vmax.f32 %v312, %v320
      %v329 = vmax.f32 %v313, %v321
      %v330 = vmax.f32 %v314, %v322
      %v331 = vmax.f32 %v315, %v323
      %v332 = vmax.f32 %v316, %v324
      %v333 = vmax.f32 %v317, %v325
      %v334 = vmax.f32 %v318, %v326
      %v335 = vld [vmem:[%s268] sm:$0xf]
      %v336 = vld [vmem:[%s268 + $0x4] sm:$0xf]
      %v337 = vld [vmem:[%s268 + $0x8] sm:$0xf]
      %v338 = vld [vmem:[%s268 + $0xc] sm:$0xf]
      %v339 = vld [vmem:[%s268 + $0x10] sm:$0xf]
      %v340 = vld [vmem:[%s268 + $0x14] sm:$0xf]
      %v341 = vld [vmem:[%s268 + $0x18] sm:$0xf]
      %v342 = vld [vmem:[%s268 + $0x1c] sm:$0xf]
      %v343 = vunpack.c.l.bf16 %v335
      %v344 = vunpack.c.l.bf16 %v336
      %v345 = vunpack.c.l.bf16 %v337
      %v346 = vunpack.c.l.bf16 %v338
      %v347 = vunpack.c.l.bf16 %v339
      %v348 = vunpack.c.l.bf16 %v340
      %v349 = vunpack.c.l.bf16 %v341
      %v350 = vunpack.c.l.bf16 %v342
      %v351 = vmul.f32 %v327, %v343
      %v352 = vmul.f32 %v328, %v344
      %v353 = vmul.f32 %v329, %v345
      %v354 = vmul.f32 %v330, %v346
      %v355 = vmul.f32 %v331, %v347
      %v356 = vmul.f32 %v332, %v348
      %v357 = vmul.f32 %v333, %v349
      %v358 = vmul.f32 %v334, %v350
      %359 = vst [vmem:[%s279] sm:$0xff] %v351
      %360 = vst [vmem:[%s279 + $0x8] sm:$0xff] %v352
      %361 = vst [vmem:[%s279 + $0x10] sm:$0xff] %v353
      %362 = vst [vmem:[%s279 + $0x18] sm:$0xff] %v354
      %363 = vst [vmem:[%s279 + $0x20] sm:$0xff] %v355
      %364 = vst [vmem:[%s279 + $0x28] sm:$0xff] %v356
      %365 = vst [vmem:[%s279 + $0x30] sm:$0xff] %v357
      %366 = vst [vmem:[%s279 + $0x38] sm:$0xff] %v358
      %s367 = smul.u32 4, %s20
      %p368 = scmp.lt.s32.totalorder %s19, 1
      %s369 = scalar_select %p368, %s19, 1
      %p370 = scmp.lt.s32.totalorder %s367, 15
      %s371 = scalar_select %p370, %s367, 15
      %s372 = smul.addr %s371, 2
      %s373 = smul.addr %s369, 32
      %s374 = sadd.s32 %s372, %s373
      %s375 = smul.addr %s374, 8
      %s376 = scalar_lea.vmem %s4, %s375
      // Predicated region
      $region37: #{unet_up_block.9} parent=35 // pred_check
        %p377 = pneg %p145
      $region38: #{unet_up_block.9} parent=35 // pred_check_branch
        %379 = sbr.rel (%p377) target = $region40
      $region39: #{unet_up_block.9} parent=35 // pred_region
        %s380 = smul.u32 4, %s20
      $region40: #{unet_up_block.9} parent=35 // pred_fallthru
        _
    $region36: #{unet_up_block.9} parent=5 // pred_fallthru
      _
    %p381 = scmp.le.s32.totalorder 2, %s10
    // Predicated region
    $region41: #{unet_up_block.9} parent=5 // pred_check
      %p382 = pneg %p381
    $region42: #{unet_up_block.9} parent=5 // pred_check_branch
      %384 = sbr.rel (%p382) target = $region44
    $region43: #{unet_up_block.9} parent=5 // pred_region
      %s385 = ssub.s32 %s10, 2
      // Predicated region
      $region45: #{unet_up_block.9} parent=43 // pred_check
        %p386 = pneg %p151
      $region46: #{unet_up_block.9} parent=43 // pred_check_branch
        %388 = sbr.rel (%p386) target = $region48
      $region47: #{unet_up_block.9} parent=43 // pred_region
        %s389 = smul.u32 4, %s22
        %p390 = scmp.lt.s32.totalorder %s21, 1
        %s391 = scalar_select %p390, %s21, 1
        %p392 = scmp.lt.s32.totalorder %s389, 15
        %s393 = scalar_select %p392, %s389, 15
        %s394 = smul.addr %s393, 2
        %s395 = smul.addr %s391, 32
        %s396 = sadd.s32 %s394, %s395
        %s397 = smul.addr %s396, 8
        %s398 = scalar_lea.vmem %s4, %s397
      $region48: #{unet_up_block.9} parent=43 // pred_fallthru
        _
    $region44: #{unet_up_block.9} parent=5 // pred_fallthru
      _
  $region6: #{unet_up_block.9} parent=0 // loop_footer
    %s14 = sadd.s32 1, %s10
  $region7: #{unet_up_block.9} parent=0 // loop_footer_branch
    %9 = sbr.rel target = $region3
  $region8: #{unet_up_block.9} parent=0 // loop_exit
    _

// kernel: unet_up_block.8
$region0: #{unet_up_block.8}
  #allocation0 [shape = 'u32[]', space=smem, size = 0x4, offset = 0x4, fixed_abs, tag = 'smem constant byte address 0x4 - core index']
  #allocation1 [shape = 'u32[144,128]{1,0:T(1,128)}', space=vmem, size = 0x12000, scoped, tag = 'internal scratch']
  %s0 = inlined_call_operand.vmem [shape: f32[2,16,16,128], index: 0, kind: input, shape index: {}]
  %s1 = inlined_call_operand.vmem [shape: f32[2,4,2,16,128], index: 1, kind: input, shape index: {}]
  %s2 = inlined_call_operand.vmem [shape: f32[1,128], index: 2, kind: input, shape index: {}]
  %s3 = inlined_call_operand.vmem [shape: f32[1,128], index: 3, kind: input, shape index: {}]
  %s4 = inlined_call_operand.vmem [shape: bf16[9,128,128], index: 4, kind: input, shape index: {}]
  %s5 = inlined_call_operand.vmem [shape: f32[1,128], index: 5, kind: input, shape index: {}]
  %s6 = inlined_call_operand.vmem [shape: f32[2,16,16,128], index: 6, kind: output, shape index: {0}]
  %s7 = inlined_call_operand.vmem [shape: f32[2,4,2,128], index: 7, kind: output, shape index: {1}]
  %8 = xla_tuple %s6, %s7
  %s9 = sld [smem:[#allocation0]]
  $region65: #{unet_up_block.8} parent=0
    _
  %s11 = ssub.s32 1, %s9
  %s12 = scalar_select 0, %s11, %s9
  loop: start=0, step=1, limit=10
  $region2: #{unet_up_block.8} parent=0 // loop_pre_header
    _
  $region3: #{unet_up_block.8} parent=0 // loop_header
    %s14 = sphi 0, %s18
    %p15 = scmp.ge.s32.totalorder %s14, 10
    %s21 = sphi 0, %s33
    %s22 = sphi 0, %s29
    %s23 = sphi 0, %s21
    %s24 = sphi 0, %s22
    %s25 = sphi 0, %s23
    %s26 = sphi 0, %s24
    %s38 = sphi 0, %s40
    %s41 = sphi 0, %s38
    %s42 = sphi 0, %s41
    %s58 = sphi 0, %s42
    %s66 = sphi 0, %s68
    %s69 = sphi 0, %s66
    %s70 = sphi 0, %s69
    %s86 = sphi 0, %s70
    %s90 = sphi 0, %s90
    %s92 = sphi 0, %s90
    %s93 = sphi 0, %s92
    %s107 = sphi 0, %s93
    %s111 = sphi 0, %s111
    %s113 = sphi 0, %s111
    %s114 = sphi 0, %s113
    %s128 = sphi 0, %s114
    %s132 = sphi 0, %s132
    %s134 = sphi 0, %s132
    %s135 = sphi 0, %s134
    %s149 = sphi 0, %s135
    %s153 = sphi 0, %s153
    %s155 = sphi 0, %s153
    %s156 = sphi 0, %s155
    %s170 = sphi 0, %s156
    %s178 = sphi 0, %s180
    %s181 = sphi 0, %s178
    %s182 = sphi 0, %s181
    %s198 = sphi 0, %s182
    %s206 = sphi 0, %s208
    %s209 = sphi 0, %s206
    %s210 = sphi 0, %s209
    %s226 = sphi 0, %s210
  $region4: #{unet_up_block.8} parent=0 // loop_header_branch
    %17 = sbr.rel (%p15) target = $region8
  $region5: #{unet_up_block.8} parent=0 // loop_body
    %s19 = ssub.s32 %s14, 1
    %s20 = ssub.s32 %s14, 2
    %s27 = sadd.s32 1, %s22
    %p28 = scmp.ge.s32.totalorder %s27, 4
    %s29 = scalar_select %p28, 0, %s27
    %s30 = sadd.s32 1, %s21
    %s31 = scalar_select %p28, %s30, %s21
    %p32 = scmp.ge.s32.totalorder %s31, 2
    %s33 = scalar_select %p32, 0, %s31
    %s34 = ssub.s32 %s21, %s33
    %s35 = ssub.s32 %s22, %s29
    %s36 = sor.u32 %s34, %s35
    %p37 = scmp.eq.s32.totalorder %s36, 0
    %s39 = sadd.s32 %s38, 1
    %s40 = scalar_select %p37, %s38, %s39
    %p43 = pneg %p37
    %p44 = scmp.eq.s32.totalorder %s14, 7
    %p45 = por %p43, %p44
    %p46 = scmp.ne.s32.totalorder %s38, %s41
    %p47 = scmp.eq.s32.totalorder %s14, 0
    %p48 = por %p46, %p47
    %p49 = scmp.ne.s32.totalorder %s38, %s41
    %p50 = scmp.eq.s32.totalorder %s19, 7
    %p51 = por %p49, %p50
    %p52 = scmp.ne.s32.totalorder %s41, %s42
    %p53 = scmp.eq.s32.totalorder %s19, 0
    %p54 = por %p52, %p53
    %p55 = scmp.ne.s32.totalorder %s41, %s42
    %p56 = scmp.eq.s32.totalorder %s20, 7
    %p57 = por %p55, %p56
    %p59 = scmp.ne.s32.totalorder %s42, %s58
    %p60 = scmp.eq.s32.totalorder %s20, 0
    %p61 = por %p59, %p60
    %s62 = ssub.s32 %s21, %s33
    %s63 = ssub.s32 %s22, %s29
    %s64 = sor.u32 %s62, %s63
    %p65 = scmp.eq.s32.totalorder %s64, 0
    %s67 = sadd.s32 %s66, 1
    %s68 = scalar_select %p65, %s66, %s67
    %p71 = pneg %p65
    %p72 = scmp.eq.s32.totalorder %s14, 7
    %p73 = por %p71, %p72
    %p74 = scmp.ne.s32.totalorder %s66, %s69
    %p75 = scmp.eq.s32.totalorder %s14, 0
    %p76 = por %p74, %p75
    %p77 = scmp.ne.s32.totalorder %s66, %s69
    %p78 = scmp.eq.s32.totalorder %s19, 7
    %p79 = por %p77, %p78
    %p80 = scmp.ne.s32.totalorder %s69, %s70
    %p81 = scmp.eq.s32.totalorder %s19, 0
    %p82 = por %p80, %p81
    %p83 = scmp.ne.s32.totalorder %s69, %s70
    %p84 = scmp.eq.s32.totalorder %s20, 7
    %p85 = por %p83, %p84
    %p87 = scmp.ne.s32.totalorder %s70, %s86
    %p88 = scmp.eq.s32.totalorder %s20, 0
    %p89 = por %p87, %p88
    %s91 = sadd.s32 %s90, 1
    %p94 = scmp.eq.s32.totalorder %s14, 7
    %p95 = scmp.ne.s32.totalorder %s90, %s92
    %p96 = scmp.eq.s32.totalorder %s14, 0
    %p97 = por %p95, %p96
    %p98 = scmp.ne.s32.totalorder %s90, %s92
    %p99 = scmp.eq.s32.totalorder %s19, 7
    %p100 = por %p98, %p99
    %p101 = scmp.ne.s32.totalorder %s92, %s93
    %p102 = scmp.eq.s32.totalorder %s19, 0
    %p103 = por %p101, %p102
    %p104 = scmp.ne.s32.totalorder %s92, %s93
    %p105 = scmp.eq.s32.totalorder %s20, 7
    %p106 = por %p104, %p105
    %p108 = scmp.ne.s32.totalorder %s93, %s107
    %p109 = scmp.eq.s32.totalorder %s20, 0
    %p110 = por %p108, %p109
    %s112 = sadd.s32 %s111, 1
    %p115 = scmp.eq.s32.totalorder %s14, 7
    %p116 = scmp.ne.s32.totalorder %s111, %s113
    %p117 = scmp.eq.s32.totalorder %s14, 0
    %p118 = por %p116, %p117
    %p119 = scmp.ne.s32.totalorder %s111, %s113
    %p120 = scmp.eq.s32.totalorder %s19, 7
    %p121 = por %p119, %p120
    %p122 = scmp.ne.s32.totalorder %s113, %s114
    %p123 = scmp.eq.s32.totalorder %s19, 0
    %p124 = por %p122, %p123
    %p125 = scmp.ne.s32.totalorder %s113, %s114
    %p126 = scmp.eq.s32.totalorder %s20, 7
    %p127 = por %p125, %p126
    %p129 = scmp.ne.s32.totalorder %s114, %s128
    %p130 = scmp.eq.s32.totalorder %s20, 0
    %p131 = por %p129, %p130
    %s133 = sadd.s32 %s132, 1
    %p136 = scmp.eq.s32.totalorder %s14, 7
    %p137 = scmp.ne.s32.totalorder %s132, %s134
    %p138 = scmp.eq.s32.totalorder %s14, 0
    %p139 = por %p137, %p138
    %p140 = scmp.ne.s32.totalorder %s132, %s134
    %p141 = scmp.eq.s32.totalorder %s19, 7
    %p142 = por %p140, %p141
    %p143 = scmp.ne.s32.totalorder %s134, %s135
    %p144 = scmp.eq.s32.totalorder %s19, 0
    %p145 = por %p143, %p144
    %p146 = scmp.ne.s32.totalorder %s134, %s135
    %p147 = scmp.eq.s32.totalorder %s20, 7
    %p148 = por %p146, %p147
    %p150 = scmp.ne.s32.totalorder %s135, %s149
    %p151 = scmp.eq.s32.totalorder %s20, 0
    %p152 = por %p150, %p151
    %s154 = sadd.s32 %s153, 1
    %p157 = scmp.eq.s32.totalorder %s14, 7
    %p158 = scmp.ne.s32.totalorder %s153, %s155
    %p159 = scmp.eq.s32.totalorder %s14, 0
    %p160 = por %p158, %p159
    %p161 = scmp.ne.s32.totalorder %s153, %s155
    %p162 = scmp.eq.s32.totalorder %s19, 7
    %p163 = por %p161, %p162
    %p164 = scmp.ne.s32.totalorder %s155, %s156
    %p165 = scmp.eq.s32.totalorder %s19, 0
    %p166 = por %p164, %p165
    %p167 = scmp.ne.s32.totalorder %s155, %s156
    %p168 = scmp.eq.s32.totalorder %s20, 7
    %p169 = por %p167, %p168
    %p171 = scmp.ne.s32.totalorder %s156, %s170
    %p172 = scmp.eq.s32.totalorder %s20, 0
    %p173 = por %p171, %p172
    %s174 = ssub.s32 %s21, %s33
    %s175 = ssub.s32 %s22, %s29
    %s176 = sor.u32 %s174, %s175
    %p177 = scmp.eq.s32.totalorder %s176, 0
    %s179 = sadd.s32 %s178, 1
    %s180 = scalar_select %p177, %s178, %s179
    %p183 = pneg %p177
    %p184 = scmp.eq.s32.totalorder %s14, 7
    %p185 = por %p183, %p184
    %p186 = scmp.ne.s32.totalorder %s178, %s181
    %p187 = scmp.eq.s32.totalorder %s14, 0
    %p188 = por %p186, %p187
    %p189 = scmp.ne.s32.totalorder %s178, %s181
    %p190 = scmp.eq.s32.totalorder %s19, 7
    %p191 = por %p189, %p190
    %p192 = scmp.ne.s32.totalorder %s181, %s182
    %p193 = scmp.eq.s32.totalorder %s19, 0
    %p194 = por %p192, %p193
    %p195 = scmp.ne.s32.totalorder %s181, %s182
    %p196 = scmp.eq.s32.totalorder %s20, 7
    %p197 = por %p195, %p196
    %p199 = scmp.ne.s32.totalorder %s182, %s198
    %p200 = scmp.eq.s32.totalorder %s20, 0
    %p201 = por %p199, %p200
    %s202 = ssub.s32 %s21, %s33
    %s203 = ssub.s32 %s22, %s29
    %s204 = sor.u32 %s202, %s203
    %p205 = scmp.eq.s32.totalorder %s204, 0
    %s207 = sadd.s32 %s206, 1
    %s208 = scalar_select %p205, %s206, %s207
    %p211 = pneg %p205
    %p212 = scmp.eq.s32.totalorder %s14, 7
    %p213 = por %p211, %p212
    %p214 = scmp.ne.s32.totalorder %s206, %s209
    %p215 = scmp.eq.s32.totalorder %s14, 0
    %p216 = por %p214, %p215
    %p217 = scmp.ne.s32.totalorder %s206, %s209
    %p218 = scmp.eq.s32.totalorder %s19, 7
    %p219 = por %p217, %p218
    %p220 = scmp.ne.s32.totalorder %s209, %s210
    %p221 = scmp.eq.s32.totalorder %s19, 0
    %p222 = por %p220, %p221
    %p223 = scmp.ne.s32.totalorder %s209, %s210
    %p224 = scmp.eq.s32.totalorder %s20, 7
    %p225 = por %p223, %p224
    %p227 = scmp.ne.s32.totalorder %s210, %s226
    %p228 = scmp.eq.s32.totalorder %s20, 0
    %p229 = por %p227, %p228
    %p230 = scmp.le.s32.totalorder 1, %s14
    %p231 = scmp.lt.s32.totalorder %s14, 9
    %p232 = pnand %p230, %p231
    %p233 = pneg %p232
    // Predicated region
    $region9: #{unet_up_block.8} parent=5 // pred_check
      _
    $region10: #{unet_up_block.8} parent=5 // pred_check_branch
      %235 = sbr.rel (%p232) target = $region12
    $region11: #{unet_up_block.8} parent=5 // pred_region
      %s236 = ssub.s32 %s14, 1
      // Predicated region
      $region13: #{unet_up_block.8} parent=11 // pred_check
        %p237 = pneg %p103
      $region14: #{unet_up_block.8} parent=11 // pred_check_branch
        %239 = sbr.rel (%p237) target = $region16
      $region15: #{unet_up_block.8} parent=11 // pred_region
        _
      $region16: #{unet_up_block.8} parent=11 // pred_fallthru
        _
      // Predicated region
      $region17: #{unet_up_block.8} parent=11 // pred_check
        %p240 = pneg %p124
      $region18: #{unet_up_block.8} parent=11 // pred_check_branch
        %242 = sbr.rel (%p240) target = $region20
      $region19: #{unet_up_block.8} parent=11 // pred_region
        _
      $region20: #{unet_up_block.8} parent=11 // pred_fallthru
        _
      // Predicated region
      $region21: #{unet_up_block.8} parent=11 // pred_check
        %p243 = pneg %p145
      $region22: #{unet_up_block.8} parent=11 // pred_check_branch
        %245 = sbr.rel (%p243) target = $region24
      $region23: #{unet_up_block.8} parent=11 // pred_region
        _
      $region24: #{unet_up_block.8} parent=11 // pred_fallthru
        _
      // Predicated region
      $region25: #{unet_up_block.8} parent=11 // pred_check
        %p246 = pneg %p166
      $region26: #{unet_up_block.8} parent=11 // pred_check_branch
        %248 = sbr.rel (%p246) target = $region28
      $region27: #{unet_up_block.8} parent=11 // pred_region
        _
      $region28: #{unet_up_block.8} parent=11 // pred_fallthru
        _
    $region12: #{unet_up_block.8} parent=5 // pred_fallthru
      _
    %p249 = scmp.lt.s32.totalorder %s14, 8
    // Predicated region
    $region29: #{unet_up_block.8} parent=5 // pred_check
      %p250 = pneg %p249
    $region30: #{unet_up_block.8} parent=5 // pred_check_branch
      %252 = sbr.rel (%p250) target = $region32
    $region31: #{unet_up_block.8} parent=5 // pred_region
      // Predicated region
      $region33: #{unet_up_block.8} parent=31 // pred_check
        %p253 = pneg %p48
      $region34: #{unet_up_block.8} parent=31 // pred_check_branch
        %255 = sbr.rel (%p253) target = $region36
      $region35: #{unet_up_block.8} parent=31 // pred_region
        %s256 = smul.u32 4, %s22
        %p257 = scmp.lt.s32.totalorder %s21, 1
        %s258 = scalar_select %p257, %s21, 1
        %p259 = scmp.lt.s32.totalorder %s256, 15
        %s260 = scalar_select %p259, %s256, 15
        %s261 = smul.addr %s260, 2
        %s262 = smul.addr %s258, 32
        %s263 = sadd.s32 %s261, %s262
        %s264 = smul.addr %s263, 8
        %s265 = scalar_lea.vmem %s0, %s264
        %s266 = smul.u32 4, %s22
      $region36: #{unet_up_block.8} parent=31 // pred_fallthru
        _
      // Predicated region
      $region37: #{unet_up_block.8} parent=31 // pred_check
        %p267 = pneg %p76
      $region38: #{unet_up_block.8} parent=31 // pred_check_branch
        %269 = sbr.rel (%p267) target = $region40
      $region39: #{unet_up_block.8} parent=31 // pred_region
        %p270 = scmp.lt.s32.totalorder %s21, 1
        %s271 = scalar_select %p270, %s21, 1
        %p272 = scmp.lt.s32.totalorder %s22, 3
        %s273 = scalar_select %p272, %s22, 3
        %s274 = smul.addr %s273, 4
        %s275 = smul.addr %s271, 16
        %s276 = sadd.s32 %s274, %s275
        %s277 = smul.addr %s276, 8
        %s278 = scalar_lea.vmem %s1, %s277
      $region40: #{unet_up_block.8} parent=31 // pred_fallthru
        _
    $region32: #{unet_up_block.8} parent=5 // pred_fallthru
      _
    %p279 = scmp.le.s32.totalorder 1, %s14
    %p280 = scmp.lt.s32.totalorder %s14, 9
    %p281 = pnand %p279, %p280
    %p282 = pneg %p281
    // Predicated region
    $region41: #{unet_up_block.8} parent=5 // pred_check
      _
    $region42: #{unet_up_block.8} parent=5 // pred_check_branch
      %284 = sbr.rel (%p281) target = $region44
    $region43: #{unet_up_block.8} parent=5 // pred_region
      %s285 = ssub.s32 %s14, 1
      %s286 = smul.u32 4, %s24
      %p287 = scmp.lt.s32.totalorder %s23, 1
      %s288 = scalar_select %p287, %s23, 1
      %p289 = scmp.lt.s32.totalorder %s286, 15
      %s290 = scalar_select %p289, %s286, 15
      %s291 = smul.addr %s290, 2
      %s292 = smul.addr %s288, 32
      %s293 = sadd.s32 %s291, %s292
      %s294 = smul.addr %s293, 8
      %s295 = scalar_lea.vmem %s0, %s294
      %p296 = pneg %p54
      %p297 = pneg %p51
      %p298 = scmp.lt.s32.totalorder %s23, 1
      %s299 = scalar_select %p298, %s23, 1
      %p300 = scmp.lt.s32.totalorder %s24, 3
      %s301 = scalar_select %p300, %s24, 3
      %s302 = smul.addr %s301, 4
      %s303 = smul.addr %s299, 16
      %s304 = sadd.s32 %s302, %s303
      %s305 = smul.addr %s304, 8
      %s306 = scalar_lea.vmem %s1, %s305
      %p307 = pneg %p82
      %p308 = pneg %p79
      %p309 = pneg %p103
      %p310 = pneg %p100
      %p311 = pneg %p124
      %p312 = pneg %p121
      %p313 = pneg %p145
      %p314 = pneg %p142
      %p315 = pneg %p166
      %p316 = pneg %p163
      %p317 = pneg %p194
      %p318 = pneg %p191
      %s319 = smul.u32 4, %s24
      %p320 = scmp.lt.s32.totalorder %s23, 1
      %s321 = scalar_select %p320, %s23, 1
      %p322 = scmp.lt.s32.totalorder %s319, 15
      %s323 = scalar_select %p322, %s319, 15
      %s324 = smul.addr %s323, 2
      %s325 = smul.addr %s321, 32
      %s326 = sadd.s32 %s324, %s325
      %s327 = smul.addr %s326, 8
      %s328 = scalar_lea.vmem %s6, %s327
      %p329 = pneg %p222
      %p330 = pneg %p219
      %p331 = scmp.lt.s32.totalorder %s23, 1
      %s332 = scalar_select %p331, %s23, 1
      %p333 = scmp.lt.s32.totalorder %s24, 3
      %s334 = scalar_select %p333, %s24, 3
      %s335 = smul.addr %s332, 4
      %s336 = sadd.s32 %s334, %s335
      %s337 = smul.addr %s336, 2
      %s338 = scalar_lea.vmem %s7, %s337
      %s339 = smul.u32 4, %s24
      %p340 = scmp.lt.s32.totalorder %s23, 1
      %s341 = scalar_select %p340, %s23, 1
      %p342 = scmp.lt.s32.totalorder %s339, 15
      %s343 = scalar_select %p342, %s339, 15
      %s344 = smul.addr %s343, 2
      %s345 = smul.addr %s341, 32
      %s346 = sadd.s32 %s344, %s345
      %s347 = smul.addr %s346, 8
      %s348 = scalar_lea.vmem %s0, %s347
      %s349 = smul.u32 4, %s24
      %p350 = scmp.lt.s32.totalorder %s23, 1
      %s351 = scalar_select %p350, %s23, 1
      %p352 = scmp.lt.s32.totalorder %s24, 3
      %s353 = scalar_select %p352, %s24, 3
      %s354 = smul.addr %s353, 4
      %s355 = smul.addr %s351, 16
      %s356 = sadd.s32 %s354, %s355
      %s357 = smul.addr %s356, 8
      %s358 = scalar_lea.vmem %s1, %s357
      %s359 = smul.u32 4, %s24
      %p360 = scmp.lt.s32.totalorder %s23, 1
      %s361 = scalar_select %p360, %s23, 1
      %p362 = scmp.lt.s32.totalorder %s359, 15
      %s363 = scalar_select %p362, %s359, 15
      %s364 = smul.addr %s363, 2
      %s365 = smul.addr %s361, 32
      %s366 = sadd.s32 %s364, %s365
      %s367 = smul.addr %s366, 8
      %s368 = scalar_lea.vmem %s6, %s367
      %s369 = smul.u32 4, %s24
      %p370 = scmp.lt.s32.totalorder %s23, 1
      %s371 = scalar_select %p370, %s23, 1
      %p372 = scmp.lt.s32.totalorder %s24, 3
      %s373 = scalar_select %p372, %s24, 3
      %s374 = smul.addr %s371, 4
      %s375 = sadd.s32 %s373, %s374
      %s376 = smul.addr %s375, 2
      %s377 = scalar_lea.vmem %s7, %s376
      %v379 = vld [vmem:[%s2] sm:$0x1]
      %v380 = vld [vmem:[%s3] sm:$0x1]
      %v381 = vld [vmem:[%s358] sm:$0xff]
      %v382 = vld [vmem:[%s358 + $0x8] sm:$0xff]
      %v383 = vld [vmem:[%s348] sm:$0xff]
      %v384 = vld [vmem:[%s348 + $0x8] sm:$0xff]
      %v385 = vld [vmem:[%s348 + $0x10] sm:$0xff]
      %v386 = vld [vmem:[%s348 + $0x18] sm:$0xff]
      %v387 = vld [vmem:[%s348 + $0x20] sm:$0xff]
      %v388 = vld [vmem:[%s348 + $0x28] sm:$0xff]
      %v389 = vld [vmem:[%s348 + $0x30] sm:$0xff]
      %v390 = vld [vmem:[%s348 + $0x38] sm:$0xff]
      %s391 = scalar_lea.vmem %s358, 16
      %v392 = vld [vmem:[%s391] sm:$0xff]
      %v393 = vld [vmem:[%s391 + $0x8] sm:$0xff]
      %v395 = vlaneseq
      %v396 = vshrl.u32 %v395, 7
      %v397 = vsub.s32 0, %v396
      %v398 = vrot.slane %v379, %v397
      %v400 = vmul.f32 %v381, %v398
      %v401 = vmul.f32 %v382, %v398
      %v402 = vmul.f32 %v383, %v398
      %v403 = vmul.f32 %v384, %v398
      %v404 = vmul.f32 %v385, %v398
      %v405 = vmul.f32 %v386, %v398
      %v406 = vmul.f32 %v387, %v398
      %v407 = vmul.f32 %v388, %v398
      %v408 = vmul.f32 %v389, %v398
      %v409 = vmul.f32 %v390, %v398
      %v410 = vmul.f32 %v392, %v398
      %v411 = vmul.f32 %v393, %v398
      %v413 = vlaneseq
      %v414 = vshrl.u32 %v413, 7
      %v415 = vsub.s32 0, %v414
      %v416 = vrot.slane %v380, %v415
      %v418 = vadd.f32 %v400, %v416
      %v419 = vadd.f32 %v401, %v416
      %v420 = vadd.f32 %v402, %v416
      %v421 = vadd.f32 %v403, %v416
      %v422 = vadd.f32 %v404, %v416
      %v423 = vadd.f32 %v405, %v416
      %v424 = vadd.f32 %v406, %v416
      %v425 = vadd.f32 %v407, %v416
      %v426 = vadd.f32 %v408, %v416
      %v427 = vadd.f32 %v409, %v416
      %v428 = vadd.f32 %v410, %v416
      %v429 = vadd.f32 %v411, %v416
      %v430 = vmul.f32 %v418, 0.2
      %v431 = vmul.f32 %v419, 0.2
      %v432 = vmul.f32 %v420, 0.2
      %v433 = vmul.f32 %v421, 0.2
      %v434 = vmul.f32 %v422, 0.2
      %v435 = vmul.f32 %v423, 0.2
      %v436 = vmul.f32 %v424, 0.2
      %v437 = vmul.f32 %v425, 0.2
      %v438 = vmul.f32 %v426, 0.2
      %v439 = vmul.f32 %v427, 0.2
      %v440 = vmul.f32 %v428, 0.2
      %v441 = vmul.f32 %v429, 0.2
      %v442 = vmax.f32 %v418, %v430
      %v443 = vmax.f32 %v419, %v431
      %v444 = vmax.f32 %v420, %v432
      %v445 = vmax.f32 %v421, %v433
      %v446 = vmax.f32 %v422, %v434
      %v447 = vmax.f32 %v423, %v435
      %v448 = vmax.f32 %v424, %v436
      %v449 = vmax.f32 %v425, %v437
      %v450 = vmax.f32 %v426, %v438
      %v451 = vmax.f32 %v427, %v439
      %v452 = vmax.f32 %v428, %v440
      %v453 = vmax.f32 %v429, %v441
      %p454 = scmp.gt.s32.totalorder %s24, 0
      %s455 = scalar_select %p454, 1, 0
      %v456 = vstv %s455
      %vm457 = vcmp.eq.s32.totalorder %v456, 1
      %p458 = scmp.lt.s32.totalorder %s24, 3
      %s459 = scalar_select %p458, 1, 0
      %v460 = vstv %s459
      %vm461 = vcmp.eq.s32.totalorder %v460, 1
      %v462 = vsel %vm457, 1, 0
      %v463 = vsel %vm461, 1, 0
      %vm464 = vcmp.eq.s32.totalorder %v462, 1
      %vm465 = vcmp.eq.s32.totalorder %v463, 1
      %v466 = vsel %vm464, %v442, 0.0
      %v467 = vsel %vm464, %v443, 0.0
      %v468 = vsel 1, %v444, 0.0
      %v469 = vsel 1, %v445, 0.0
      %v470 = vsel 1, %v446, 0.0
      %v471 = vsel 1, %v447, 0.0
      %v472 = vsel 1, %v448, 0.0
      %v473 = vsel 1, %v449, 0.0
      %v474 = vsel 1, %v450, 0.0
      %v475 = vsel 1, %v451, 0.0
      %v476 = vsel %vm465, %v452, 0.0
      %v477 = vsel %vm465, %v453, 0.0
      %v478 = vpack.c.bf16 %v467, %v466
      %v479 = vpack.c.bf16 %v469, %v468
      %v480 = vpack.c.bf16 %v471, %v470
      %v481 = vpack.c.bf16 %v473, %v472
      %v482 = vpack.c.bf16 %v475, %v474
      %v483 = vpack.c.bf16 %v477, %v476
      %v485 = vshrl.u32 %v478, 16
      %v487 = vrot.slane %v485, 7
      %v488 = vshll.u32 %v478, 16
      %v490 = vor.u32 %v487, %v488
      %v492 = vshrl.u32 %v479, 16
      %v494 = vrot.slane %v492, 7
      %v495 = vshll.u32 %v479, 16
      %v497 = vor.u32 %v494, %v495
      %v499 = vshrl.u32 %v480, 16
      %v501 = vrot.slane %v499, 7
      %v502 = vshll.u32 %v480, 16
      %v504 = vor.u32 %v501, %v502
      %v506 = vshrl.u32 %v481, 16
      %v508 = vrot.slane %v506, 7
      %v509 = vshll.u32 %v481, 16
      %v511 = vor.u32 %v508, %v509
      %v513 = vshrl.u32 %v482, 16
      %v515 = vrot.slane %v513, 7
      %v516 = vshll.u32 %v482, 16
      %v518 = vor.u32 %v515, %v516
      %v520 = vshrl.u32 %v483, 16
      %v522 = vrot.slane %v520, 7
      %v523 = vshll.u32 %v483, 16
      %v525 = vor.u32 %v522, %v523
      %vm538 = vcmask 1040384
      %vm539 = vsmask.f32 256
      %vm540 = vmand %vm538, %vm539
      %v541 = vsel %vm540, 0, %v490
      %v542 = vsel %vm540, 0, %v497
      %v543 = vsel %vm540, 0, %v504
      %v544 = vsel %vm540, 0, %v511
      %v545 = vsel %vm540, 0, %v518
      %v546 = vsel %vm540, 0, %v525
      %v547 = vsel %vm540, %v487, 0
      %v548 = vsel %vm540, %v494, 0
      %v549 = vsel %vm540, %v501, 0
      %v550 = vsel %vm540, %v508, 0
      %v551 = vsel %vm540, %v515, 0
      %v552 = vsel %vm540, %v522, 0
      %v553 = vld [vmem:[%s4] sm:$0xf]
      %v554 = vld [vmem:[%s4 + $0x4] sm:$0xf]
      %v555 = vld [vmem:[%s4 + $0x8] sm:$0xf]
      %v556 = vld [vmem:[%s4 + $0xc] sm:$0xf]
      %v557 = vld [vmem:[%s4 + $0x10] sm:$0xf]
      %v558 = vld [vmem:[%s4 + $0x14] sm:$0xf]
      %v559 = vld [vmem:[%s4 + $0x18] sm:$0xf]
      %v560 = vld [vmem:[%s4 + $0x1c] sm:$0xf]
      %v561 = vld [vmem:[%s4 + $0x20] sm:$0xf]
      %v562 = vld [vmem:[%s4 + $0x24] sm:$0xf]
      %v563 = vld [vmem:[%s4 + $0x28] sm:$0xf]
      %v564 = vld [vmem:[%s4 + $0x2c] sm:$0xf]
      %v565 = vld [vmem:[%s4 + $0x30] sm:$0xf]
      %v566 = vld [vmem:[%s4 + $0x34] sm:$0xf]
      %v567 = vld [vmem:[%s4 + $0x38] sm:$0xf]
      %v568 = vld [vmem:[%s4 + $0x3c] sm:$0xf]
      %vm569 = vsmask.f32 7424
      %v571 = vshrl.u32 %v541, 16
      %v573 = vshll.u32 %v541, 16
      %v575 = vrot.slane %v573, 1
      %v576 = vor.u32 %v571, %v575
      %v578 = vshll.u32 %v547, 16
      %v580 = vrot.slane %v578, 1
      %v581 = vsel %vm569, %v576, %v580
      %v583 = vshrl.u32 %v542, 16
      %v585 = vshll.u32 %v542, 16
      %v587 = vrot.slane %v585, 1
      %v588 = vor.u32 %v583, %v587
      %v590 = vshll.u32 %v548, 16
      %v592 = vrot.slane %v590, 1
      %v593 = vsel %vm569, %v588, %v592
      %v595 = vshrl.u32 %v543, 16
      %v597 = vshll.u32 %v543, 16
      %v599 = vrot.slane %v597, 1
      %v600 = vor.u32 %v595, %v599
      %v602 = vshll.u32 %v549, 16
      %v604 = vrot.slane %v602, 1
      %v605 = vsel %vm569, %v600, %v604
      %v607 = vshrl.u32 %v544, 16
      %v609 = vshll.u32 %v544, 16
      %v611 = vrot.slane %v609, 1
      %v612 = vor.u32 %v607, %v611
      %v614 = vshll.u32 %v550, 16
      %v616 = vrot.slane %v614, 1
      %v617 = vsel %vm569, %v612, %v616
      %s622 = scalar_lea.vmem %s4, 64
      %v623 = vld [vmem:[%s622] sm:$0xf]
      %v624 = vld [vmem:[%s622 + $0x4] sm:$0xf]
      %v625 = vld [vmem:[%s622 + $0x8] sm:$0xf]
      %v626 = vld [vmem:[%s622 + $0xc] sm:$0xf]
      %v627 = vld [vmem:[%s622 + $0x10] sm:$0xf]
      %v628 = vld [vmem:[%s622 + $0x14] sm:$0xf]
      %v629 = vld [vmem:[%s622 + $0x18] sm:$0xf]
      %v630 = vld [vmem:[%s622 + $0x1c] sm:$0xf]
      %v631 = vld [vmem:[%s622 + $0x20] sm:$0xf]
      %v632 = vld [vmem:[%s622 + $0x24] sm:$0xf]
      %v633 = vld [vmem:[%s622 + $0x28] sm:$0xf]
      %v634 = vld [vmem:[%s622 + $0x2c] sm:$0xf]
      %v635 = vld [vmem:[%s622 + $0x30] sm:$0xf]
      %v636 = vld [vmem:[%s622 + $0x34] sm:$0xf]
      %v637 = vld [vmem:[%s622 + $0x38] sm:$0xf]
      %v638 = vld [vmem:[%s622 + $0x3c] sm:$0xf]
      %v655 = vunpack.c.l.b16 %v623
      %v656 = vunpack.c.l.b16 %v624
      %v657 = vunpack.c.l.b16 %v625
      %v658 = vunpack.c.l.b16 %v626
      %v659 = vunpack.c.l.b16 %v627
      %v660 = vunpack.c.l.b16 %v628
      %v661 = vunpack.c.l.b16 %v629
      %v662 = vunpack.c.l.b16 %v630
      %v663 = vunpack.c.l.b16 %v631
      %v664 = vunpack.c.l.b16 %v632
      %v665 = vunpack.c.l.b16 %v633
      %v666 = vunpack.c.l.b16 %v634
      %v667 = vunpack.c.l.b16 %v635
      %v668 = vunpack.c.l.b16 %v636
      %v669 = vunpack.c.l.b16 %v637
      %v670 = vunpack.c.l.b16 %v638
      %v671 = vpack.c.b16 %v656, %v655
      %v672 = vpack.c.b16 %v658, %v657
      %v673 = vpack.c.b16 %v660, %v659
      %v674 = vpack.c.b16 %v662, %v661
      %v675 = vpack.c.b16 %v664, %v663
      %v676 = vpack.c.b16 %v666, %v665
      %v677 = vpack.c.b16 %v668, %v667
      %v678 = vpack.c.b16 %v670, %v669
      %687 = vmatprep.subr.bf16.mxu0 0
      %688 = vmatpush1.bf16.msra.mxu0 %v671
      %689 = vmatprep.subr.bf16.mxu0 0
      %690 = vmatpush1.bf16.msra.mxu0 %v672
      %691 = vmatprep.subr.bf16.mxu0 0
      %692 = vmatpush1.bf16.msra.mxu0 %v673
      %693 = vmatprep.subr.bf16.mxu0 0
      %694 = vmatpush1.bf16.msra.mxu0 %v674
      %695 = vmatprep.subr.bf16.mxu0 0
      %696 = vmatpush1.bf16.msra.mxu0 %v675
      %697 = vmatprep.subr.bf16.mxu0 0
      %698 = vmatpush1.bf16.msra.mxu0 %v676
      %699 = vmatprep.subr.bf16.mxu0 0
      %700 = vmatpush1.bf16.msra.mxu0 %v677
      %701 = vmatprep.subr.bf16.mxu0 0
      %702 = vmatpush1.bf16.msra.mxu0 %v678
      %703 = vmatprep.subr.bf16.mxu0 0
      %704 = vmatpush1.bf16.msra.mxu0 0
      %705 = vmatprep.subr.bf16.mxu0 0
      %706 = vmatpush1.bf16.msra.mxu0 0
      %707 = vmatprep.subr.bf16.mxu0 0
      %708 = vmatpush1.bf16.msra.mxu0 0
      %709 = vmatprep.subr.bf16.mxu0 0
      %710 = vmatpush1.bf16.msra.mxu0 0
      %711 = vmatprep.subr.bf16.mxu0 0
      %712 = vmatpush1.bf16.msra.mxu0 0
      %713 = vmatprep.subr.bf16.mxu0 0
      %714 = vmatpush1.bf16.msra.mxu0 0
      %715 = vmatprep.subr.bf16.mxu0 0
      %716 = vmatpush1.bf16.msra.mxu0 0
      %717 = vmatprep.subr.bf16.mxu0 0
      %718 = vmatpush1.bf16.msra.mxu0 0
      %719 = vmatprep.mubr.bf16.mxu0 0
      %720 = vmatmul.mubr.bf16.gmra.mrb[0].mxu0 %v581
      %v721 = vpop.f32.mrb[0].mxu0
      %v722 = vadd.f32 0.0, %v721
      %v723 = vpop.f32.mrb[0].mxu0
      %v724 = vpop.f32.mrb[0].mxu0
      %v725 = vadd.f32 0.0, %v724
      %v726 = vpop.f32.mrb[0].mxu0
      %727 = vmatprep.mubr.bf16.mxu0 0
      %728 = vmatmul.mubr.bf16.gmra.mrb[0].mxu0 %v593
      %v729 = vpop.f32.mrb[0].mxu0
      %v730 = vadd.f32 0.0, %v729
      %v731 = vpop.f32.mrb[0].mxu0
      %v732 = vpop.f32.mrb[0].mxu0
      %v733 = vadd.f32 0.0, %v732
      %v734 = vpop.f32.mrb[0].mxu0
      %735 = vmatprep.mubr.bf16.mxu0 0
      %736 = vmatmul.mubr.bf16.gmra.mrb[0].mxu0 %v605
      %v737 = vpop.f32.mrb[0].mxu0
      %v738 = vadd.f32 0.0, %v737
      %v739 = vpop.f32.mrb[0].mxu0
      %v740 = vpop.f32.mrb[0].mxu0
      %v741 = vadd.f32 0.0, %v740
      %v742 = vpop.f32.mrb[0].mxu0
      %743 = vmatprep.mubr.bf16.mxu0 0
      %744 = vmatmul.mubr.bf16.gmra.mrb[0].mxu0 %v617
      %v745 = vpop.f32.mrb[0].mxu0
      %v746 = vadd.f32 0.0, %v745
      %v747 = vpop.f32.mrb[0].mxu0
      %v748 = vpop.f32.mrb[0].mxu0
      %v749 = vadd.f32 0.0, %v748
      %v750 = vpop.f32.mrb[0].mxu0
      %751 = vdwg.mxu0
      %v768 = vunpack.c.l.b16 %v553
      %v769 = vunpack.c.l.b16 %v554
      %v770 = vunpack.c.l.b16 %v555
      %v771 = vunpack.c.l.b16 %v556
      %v772 = vunpack.c.l.b16 %v557
      %v773 = vunpack.c.l.b16 %v558
      %v774 = vunpack.c.l.b16 %v559
      %v775 = vunpack.c.l.b16 %v560
      %v776 = vunpack.c.l.b16 %v561
      %v777 = vunpack.c.l.b16 %v562
      %v778 = vunpack.c.l.b16 %v563
      %v779 = vunpack.c.l.b16 %v564
      %v780 = vunpack.c.l.b16 %v565
      %v781 = vunpack.c.l.b16 %v566
      %v782 = vunpack.c.l.b16 %v567
      %v783 = vunpack.c.l.b16 %v568
      %v784 = vpack.c.b16 %v769, %v768
      %v785 = vpack.c.b16 %v771, %v770
      %v786 = vpack.c.b16 %v773, %v772
      %v787 = vpack.c.b16 %v775, %v774
      %v788 = vpack.c.b16 %v777, %v776
      %v789 = vpack.c.b16 %v779, %v778
      %v790 = vpack.c.b16 %v781, %v780
      %v791 = vpack.c.b16 %v783, %v782
      %800 = vmatprep.subr.bf16.mxu0 0
      %801 = vmatpush1.bf16.msra.mxu0 %v784
      %802 = vmatprep.subr.bf16.mxu0 0
      %803 = vmatpush1.bf16.msra.mxu0 %v785
      %804 = vmatprep.subr.bf16.mxu0 0
      %805 = vmatpush1.bf16.msra.mxu0 %v786
      %806 = vmatprep.subr.bf16.mxu0 0
      %807 = vmatpush1.bf16.msra.mxu0 %v787
      %808 = vmatprep.subr.bf16.mxu0 0
      %809 = vmatpush1.bf16.msra.mxu0 %v788
      %810 = vmatprep.subr.bf16.mxu0 0
      %811 = vmatpush1.bf16.msra.mxu0 %v789
      %812 = vmatprep.subr.bf16.mxu0 0
      %813 = vmatpush1.bf16.msra.mxu0 %v790
      %814 = vmatprep.subr.bf16.mxu0 0
      %815 = vmatpush1.bf16.msra.mxu0 %v791
      %816 = vmatprep.subr.bf16.mxu0 0
      %817 = vmatpush1.bf16.msra.mxu0 0
      %818 = vmatprep.subr.bf16.mxu0 0
      %819 = vmatpush1.bf16.msra.mxu0 0
      %820 = vmatprep.subr.bf16.mxu0 0
      %821 = vmatpush1.bf16.msra.mxu0 0
      %822 = vmatprep.subr.bf16.mxu0 0
      %823 = vmatpush1.bf16.msra.mxu0 0
      %824 = vmatprep.subr.bf16.mxu0 0
      %825 = vmatpush1.bf16.msra.mxu0 0
      %826 = vmatprep.subr.bf16.mxu0 0
      %827 = vmatpush1.bf16.msra.mxu0 0
      %828 = vmatprep.subr.bf16.mxu0 0
      %829 = vmatpush1.bf16.msra.mxu0 0
      %830 = vmatprep.subr.bf16.mxu0 0
      %831 = vmatpush1.bf16.msra.mxu0 0
      %832 = vmatprep.mubr.bf16.mxu0 0
      %833 = vmatmul.mubr.bf16.gmra.mrb[0].mxu0 %v541
      %v834 = vpop.f32.mrb[0].mxu0
      %v835 = vadd.f32 %v722, %v834
      %v836 = vpop.f32.mrb[0].mxu0
      %v837 = vpop.f32.mrb[0].mxu0
      %v838 = vadd.f32 %v725, %v837
      %v839 = vpop.f32.mrb[0].mxu0
      %840 = vmatprep.mubr.bf16.mxu0 0
      %841 = vmatmul.mubr.bf16.gmra.mrb[0].mxu0 %v542
      %v842 = vpop.f32.mrb[0].mxu0
      %v843 = vadd.f32 %v730, %v842
      %v844 = vpop.f32.mrb[0].mxu0
      %v845 = vpop.f32.mrb[0].mxu0
      %v846 = vadd.f32 %v733, %v845
      %v847 = vpop.f32.mrb[0].mxu0
      %848 = vmatprep.mubr.bf16.mxu0 0
      %849 = vmatmul.mubr.bf16.gmra.mrb[0].mxu0 %v543
      %v850 = vpop.f32.mrb[0].mxu0
      %v851 = vadd.f32 %v738, %v850
      %v852 = vpop.f32.mrb[0].mxu0
      %v853 = vpop.f32.mrb[0].mxu0
      %v854 = vadd.f32 %v741, %v853
      %v855 = vpop.f32.mrb[0].mxu0
      %856 = vmatprep.mubr.bf16.mxu0 0
      %857 = vmatmul.mubr.bf16.gmra.mrb[0].mxu0 %v544
      %v858 = vpop.f32.mrb[0].mxu0
      %v859 = vadd.f32 %v746, %v858
      %v860 = vpop.f32.mrb[0].mxu0
      %v861 = vpop.f32.mrb[0].mxu0
      %v862 = vadd.f32 %v749, %v861
      %v863 = vpop.f32.mrb[0].mxu0
      %864 = vdwg.mxu0
      %vm873 = vcmask 1046528
      %v874 = vrot.slane %v541, 1
      %v875 = vrot.slane %v547, 1
      %v876 = vsel %vm873, %v874, %v875
      %v877 = vrot.slane %v542, 1
      %v878 = vrot.slane %v548, 1
      %v879 = vsel %vm873, %v877, %v878
      %v880 = vrot.slane %v543, 1
      %v881 = vrot.slane %v549, 1
      %v882 = vsel %vm873, %v880, %v881
      %v883 = vrot.slane %v544, 1
      %v884 = vrot.slane %v550, 1
      %v885 = vsel %vm873, %v883, %v884
      %s890 = scalar_lea.vmem %s4, 128
      %v891 = vld [vmem:[%s890] sm:$0xf]
      %v892 = vld [vmem:[%s890 + $0x4] sm:$0xf]
      %v893 = vld [vmem:[%s890 + $0x8] sm:$0xf]
      %v894 = vld [vmem:[%s890 + $0xc] sm:$0xf]
      %v895 = vld [vmem:[%s890 + $0x10] sm:$0xf]
      %v896 = vld [vmem:[%s890 + $0x14] sm:$0xf]
      %v897 = vld [vmem:[%s890 + $0x18] sm:$0xf]
      %v898 = vld [vmem:[%s890 + $0x1c] sm:$0xf]
      %v899 = vld [vmem:[%s890 + $0x20] sm:$0xf]
      %v900 = vld [vmem:[%s890 + $0x24] sm:$0xf]
      %v901 = vld [vmem:[%s890 + $0x28] sm:$0xf]
      %v902 = vld [vmem:[%s890 + $0x2c] sm:$0xf]
      %v903 = vld [vmem:[%s890 + $0x30] sm:$0xf]
      %v904 = vld [vmem:[%s890 + $0x34] sm:$0xf]
      %v905 = vld [vmem:[%s890 + $0x38] sm:$0xf]
      %v906 = vld [vmem:[%s890 + $0x3c] sm:$0xf]
      %v923 = vunpack.c.l.b16 %v891
      %v924 = vunpack.c.l.b16 %v892
      %v925 = vunpack.c.l.b16 %v893
      %v926 = vunpack.c.l.b16 %v894
      %v927 = vunpack.c.l.b16 %v895
      %v928 = vunpack.c.l.b16 %v896
      %v929 = vunpack.c.l.b16 %v897
      %v930 = vunpack.c.l.b16 %v898
      %v931 = vunpack.c.l.b16 %v899
      %v932 = vunpack.c.l.b16 %v900
      %v933 = vunpack.c.l.b16 %v901
      %v934 = vunpack.c.l.b16 %v902
      %v935 = vunpack.c.l.b16 %v903
      %v936 = vunpack.c.l.b16 %v904
      %v937 = vunpack.c.l.b16 %v905
      %v938 = vunpack.c.l.b16 %v906
      %v939 = vpack.c.b16 %v924, %v923
      %v940 = vpack.c.b16 %v926, %v925
      %v941 = vpack.c.b16 %v928, %v927
      %v942 = vpack.c.b16 %v930, %v929
      %v943 = vpack.c.b16 %v932, %v931
      %v944 = vpack.c.b16 %v934, %v933
      %v945 = vpack.c.b16 %v936, %v935
      %v946 = vpack.c.b16 %v938, %v937
      %955 = vmatprep.subr.bf16.mxu0 0
      %956 = vmatpush1.bf16.msra.mxu0 %v939
      %957 = vmatprep.subr.bf16.mxu0 0
      %958 = vmatpush1.bf16.msra.mxu0 %v940
      %959 = vmatprep.subr.bf16.mxu0 0
      %960 = vmatpush1.bf16.msra.mxu0 %v941
      %961 = vmatprep.subr.bf16.mxu0 0
      %962 = vmatpush1.bf16.msra.mxu0 %v942
      %963 = vmatprep.subr.bf16.mxu0 0
      %964 = vmatpush1.bf16.msra.mxu0 %v943
      %965 = vmatprep.subr.bf16.mxu0 0
      %966 = vmatpush1.bf16.msra.mxu0 %v944
      %967 = vmatprep.subr.bf16.mxu0 0
      %968 = vmatpush1.bf16.msra.mxu0 %v945
      %969 = vmatprep.subr.bf16.mxu0 0
      %970 = vmatpush1.bf16.msra.mxu0 %v946
      %971 = vmatprep.subr.bf16.mxu0 0
      %972 = vmatpush1.bf16.msra.mxu0 0
      %973 = vmatprep.subr.bf16.mxu0 0
      %974 = vmatpush1.bf16.msra.mxu0 0
      %975 = vmatprep.subr.bf16.mxu0 0
      %976 = vmatpush1.bf16.msra.mxu0 0
      %977 = vmatprep.subr.bf16.mxu0 0
      %978 = vmatpush1.bf16.msra.mxu0 0
      %979 = vmatprep.subr.bf16.mxu0 0
      %980 = vmatpush1.bf16.msra.mxu0 0
      %981 = vmatprep.subr.bf16.mxu0 0
      %982 = vmatpush1.bf16.msra.mxu0 0
      %983 = vmatprep.subr.bf16.mxu0 0
      %984 = vmatpush1.bf16.msra.mxu0 0
      %985 = vmatprep.subr.bf16.mxu0 0
      %986 = vmatpush1.bf16.msra.mxu0 0
      %987 = vmatprep.mubr.bf16.mxu0 0
      %988 = vmatmul.mubr.bf16.gmra.mrb[0].mxu0 %v876
      %v989 = vpop.f32.mrb[0].mxu0
      %v990 = vadd.f32 0.0, %v989
      %v991 = vpop.f32.mrb[0].mxu0
      %v992 = vpop.f32.mrb[0].mxu0
      %v993 = vadd.f32 0.0, %v992
      %v994 = vpop.f32.mrb[0].mxu0
      %995 = vmatprep.mubr.bf16.mxu0 0
      %996 = vmatmul.mubr.bf16.gmra.mrb[0].mxu0 %v879
      %v997 = vpop.f32.mrb[0].mxu0
      %v998 = vadd.f32 0.0, %v997
      %v999 = vpop.f32.mrb[0].mxu0
      %v1000 = vpop.f32.mrb[0].mxu0
      %v1001 = vadd.f32 0.0, %v1000
      %v1002 = vpop.f32.mrb[0].mxu0
      %1003 = vmatprep.mubr.bf16.mxu0 0
      %1004 = vmatmul.mubr.bf16.gmra.mrb[0].mxu0 %v882
      %v1005 = vpop.f32.mrb[0].mxu0
      %v1006 = vadd.f32 0.0, %v1005
      %v1007 = vpop.f32.mrb[0].mxu0
      %v1008 = vpop.f32.mrb[0].mxu0
      %v1009 = vadd.f32 0.0, %v1008
      %v1010 = vpop.f32.mrb[0].mxu0
      %1011 = vmatprep.mubr.bf16.mxu0 0
      %1012 = vmatmul.mubr.bf16.gmra.mrb[0].mxu0 %v885
      %v1013 = vpop.f32.mrb[0].mxu0
      %v1014 = vadd.f32 0.0, %v1013
      %v1015 = vpop.f32.mrb[0].mxu0
      %v1016 = vpop.f32.mrb[0].mxu0
      %v1017 = vadd.f32 0.0, %v1016
      %v1018 = vpop.f32.mrb[0].mxu0
      %1019 = vdwg.mxu0
      %v1020 = vadd.f32 %v835, %v990
      %v1021 = vadd.f32 %v838, %v993
      %v1022 = vadd.f32 %v843, %v998
      %v1023 = vadd.f32 %v846, %v1001
      %v1024 = vadd.f32 %v851, %v1006
      %v1025 = vadd.f32 %v854, %v1009
      %v1026 = vadd.f32 %v859, %v1014
      %v1027 = vadd.f32 %v862, %v1017
      %s1028 = scalar_lea.vmem %s4, 192
      %v1029 = vld [vmem:[%s1028] sm:$0xf]
      %v1030 = vld [vmem:[%s1028 + $0x4] sm:$0xf]
      %v1031 = vld [vmem:[%s1028 + $0x8] sm:$0xf]
      %v1032 = vld [vmem:[%s1028 + $0xc] sm:$0xf]
      %v1033 = vld [vmem:[%s1028 + $0x10] sm:$0xf]
      %v1034 = vld [vmem:[%s1028 + $0x14] sm:$0xf]
      %v1035 = vld [vmem:[%s1028 + $0x18] sm:$0xf]
      %v1036 = vld [vmem:[%s1028 + $0x1c] sm:$0xf]
      %v1037 = vld [vmem:[%s1028 + $0x20] sm:$0xf]
      %v1038 = vld [vmem:[%s1028 + $0x24] sm:$0xf]
      %v1039 = vld [vmem:[%s1028 + $0x28] sm:$0xf]
      %v1040 = vld [vmem:[%s1028 + $0x2c] sm:$0xf]
      %v1041 = vld [vmem:[%s1028 + $0x30] sm:$0xf]
      %v1042 = vld [vmem:[%s1028 + $0x34] sm:$0xf]
      %v1043 = vld [vmem:[%s1028 + $0x38] sm:$0xf]
      %v1044 = vld [vmem:[%s1028 + $0x3c] sm:$0xf]
      %v1061 = vunpack.c.l.b16 %v1029
      %v1062 = vunpack.c.l.b16 %v1030
      %v1063 = vunpack.c.l.b16 %v1031
      %v1064 = vunpack.c.l.b16 %v1032
      %v1065 = vunpack.c.l.b16 %v1033
      %v1066 = vunpack.c.l.b16 %v1034
      %v1067 = vunpack.c.l.b16 %v1035
      %v1068 = vunpack.c.l.b16 %v1036
      %v1069 = vunpack.c.l.b16 %v1037
      %v1070 = vunpack.c.l.b16 %v1038
      %v1071 = vunpack.c.l.b16 %v1039
      %v1072 = vunpack.c.l.b16 %v1040
      %v1073 = vunpack.c.l.b16 %v1041
      %v1074 = vunpack.c.l.b16 %v1042
      %v1075 = vunpack.c.l.b16 %v1043
      %v1076 = vunpack.c.l.b16 %v1044
      %v1077 = vpack.c.b16 %v1062, %v1061
      %v1078 = vpack.c.b16 %v1064, %v1063
      %v1079 = vpack.c.b16 %v1066, %v1065
      %v1080 = vpack.c.b16 %v1068, %v1067
      %v1081 = vpack.c.b16 %v1070, %v1069
      %v1082 = vpack.c.b16 %v1072, %v1071
      %v1083 = vpack.c.b16 %v1074, %v1073
      %v1084 = vpack.c.b16 %v1076, %v1075
      %1093 = vmatprep.subr.bf16.mxu0 0
      %1094 = vmatpush1.bf16.msra.mxu0 %v1077
      %1095 = vmatprep.subr.bf16.mxu0 0
      %1096 = vmatpush1.bf16.msra.mxu0 %v1078
      %1097 = vmatprep.subr.bf16.mxu0 0
      %1098 = vmatpush1.bf16.msra.mxu0 %v1079
      %1099 = vmatprep.subr.bf16.mxu0 0
      %1100 = vmatpush1.bf16.msra.mxu0 %v1080
      %1101 = vmatprep.subr.bf16.mxu0 0
      %1102 = vmatpush1.bf16.msra.mxu0 %v1081
      %1103 = vmatprep.subr.bf16.mxu0 0
      %1104 = vmatpush1.bf16.msra.mxu0 %v1082
      %1105 = vmatprep.subr.bf16.mxu0 0
      %1106 = vmatpush1.bf16.msra.mxu0 %v1083
      %1107 = vmatprep.subr.bf16.mxu0 0
      %1108 = vmatpush1.bf16.msra.mxu0 %v1084
      %1109 = vmatprep.subr.bf16.mxu0 0
      %1110 = vmatpush1.bf16.msra.mxu0 0
      %1111 = vmatprep.subr.bf16.mxu0 0
      %1112 = vmatpush1.bf16.msra.mxu0 0
      %1113 = vmatprep.subr.bf16.mxu0 0
      %1114 = vmatpush1.bf16.msra.mxu0 0
      %1115 = vmatprep.subr.bf16.mxu0 0
      %1116 = vmatpush1.bf16.msra.mxu0 0
      %1117 = vmatprep.subr.bf16.mxu0 0
      %1118 = vmatpush1.bf16.msra.mxu0 0
      %1119 = vmatprep.subr.bf16.mxu0 0
      %1120 = vmatpush1.bf16.msra.mxu0 0
      %1121 = vmatprep.subr.bf16.mxu0 0
      %1122 = vmatpush1.bf16.msra.mxu0 0
      %1123 = vmatprep.subr.bf16.mxu0 0
      %1124 = vmatpush1.bf16.msra.mxu0 0
      %1125 = vmatprep.mubr.bf16.mxu0 0
      %1126 = vmatmul.mubr.bf16.gmra.mrb[0].mxu0 %v542
      %v1127 = vpop.f32.mrb[0].mxu0
      %v1128 = vadd.f32 0.0, %v1127
      %v1129 = vpop.f32.mrb[0].mxu0
      %v1130 = vpop.f32.mrb[0].mxu0
      %v1131 = vadd.f32 0.0, %v1130
      %v1132 = vpop.f32.mrb[0].mxu0
      %1133 = vmatprep.mubr.bf16.mxu0 0
      %1134 = vmatmul.mubr.bf16.gmra.mrb[0].mxu0 %v543
      %v1135 = vpop.f32.mrb[0].mxu0
      %v1136 = vadd.f32 0.0, %v1135
      %v1137 = vpop.f32.mrb[0].mxu0
      %v1138 = vpop.f32.mrb[0].mxu0
      %v1139 = vadd.f32 0.0, %v1138
      %v1140 = vpop.f32.mrb[0].mxu0
      %1141 = vmatprep.mubr.bf16.mxu0 0
      %1142 = vmatmul.mubr.bf16.gmra.mrb[0].mxu0 %v544
      %v1143 = vpop.f32.mrb[0].mxu0
      %v1144 = vadd.f32 0.0, %v1143
      %v1145 = vpop.f32.mrb[0].mxu0
      %v1146 = vpop.f32.mrb[0].mxu0
      %v1147 = vadd.f32 0.0, %v1146
      %v1148 = vpop.f32.mrb[0].mxu0
      %1149 = vmatprep.mubr.bf16.mxu0 0
      %1150 = vmatmul.mubr.bf16.gmra.mrb[0].mxu0 %v545
      %v1151 = vpop.f32.mrb[0].mxu0
      %v1152 = vadd.f32 0.0, %v1151
      %v1153 = vpop.f32.mrb[0].mxu0
      %v1154 = vpop.f32.mrb[0].mxu0
      %v1155 = vadd.f32 0.0, %v1154
      %v1156 = vpop.f32.mrb[0].mxu0
      %1157 = vdwg.mxu0
      %v1158 = vadd.f32 %v1020, %v1128
      %v1159 = vadd.f32 %v1021, %v1131
      %v1160 = vadd.f32 %v1022, %v1136
      %v1161 = vadd.f32 %v1023, %v1139
      %v1162 = vadd.f32 %v1024, %v1144
      %v1163 = vadd.f32 %v1025, %v1147
      %v1164 = vadd.f32 %v1026, %v1152
      %v1165 = vadd.f32 %v1027, %v1155
      %v1167 = vshrl.u32 %v545, 16
      %v1169 = vshll.u32 %v545, 16
      %v1171 = vrot.slane %v1169, 1
      %v1172 = vor.u32 %v1167, %v1171
      %v1174 = vshll.u32 %v551, 16
      %v1176 = vrot.slane %v1174, 1
      %v1177 = vsel %vm569, %v1172, %v1176
      %s1179 = scalar_lea.vmem %s4, 256
      %v1180 = vld [vmem:[%s1179] sm:$0xf]
      %v1181 = vld [vmem:[%s1179 + $0x4] sm:$0xf]
      %v1182 = vld [vmem:[%s1179 + $0x8] sm:$0xf]
      %v1183 = vld [vmem:[%s1179 + $0xc] sm:$0xf]
      %v1184 = vld [vmem:[%s1179 + $0x10] sm:$0xf]
      %v1185 = vld [vmem:[%s1179 + $0x14] sm:$0xf]
      %v1186 = vld [vmem:[%s1179 + $0x18] sm:$0xf]
      %v1187 = vld [vmem:[%s1179 + $0x1c] sm:$0xf]
      %v1188 = vld [vmem:[%s1179 + $0x20] sm:$0xf]
      %v1189 = vld [vmem:[%s1179 + $0x24] sm:$0xf]
      %v1190 = vld [vmem:[%s1179 + $0x28] sm:$0xf]
      %v1191 = vld [vmem:[%s1179 + $0x2c] sm:$0xf]
      %v1192 = vld [vmem:[%s1179 + $0x30] sm:$0xf]
      %v1193 = vld [vmem:[%s1179 + $0x34] sm:$0xf]
      %v1194 = vld [vmem:[%s1179 + $0x38] sm:$0xf]
      %v1195 = vld [vmem:[%s1179 + $0x3c] sm:$0xf]
      %v1212 = vunpack.c.l.b16 %v1180
      %v1213 = vunpack.c.l.b16 %v1181
      %v1214 = vunpack.c.l.b16 %v1182
      %v1215 = vunpack.c.l.b16 %v1183
      %v1216 = vunpack.c.l.b16 %v1184
      %v1217 = vunpack.c.l.b16 %v1185
      %v1218 = vunpack.c.l.b16 %v1186
      %v1219 = vunpack.c.l.b16 %v1187
      %v1220 = vunpack.c.l.b16 %v1188
      %v1221 = vunpack.c.l.b16 %v1189
      %v1222 = vunpack.c.l.b16 %v1190
      %v1223 = vunpack.c.l.b16 %v1191
      %v1224 = vunpack.c.l.b16 %v1192
      %v1225 = vunpack.c.l.b16 %v1193
      %v1226 = vunpack.c.l.b16 %v1194
      %v1227 = vunpack.c.l.b16 %v1195
      %v1228 = vpack.c.b16 %v1213, %v1212
      %v1229 = vpack.c.b16 %v1215, %v1214
      %v1230 = vpack.c.b16 %v1217, %v1216
      %v1231 = vpack.c.b16 %v1219, %v1218
      %v1232 = vpack.c.b16 %v1221, %v1220
      %v1233 = vpack.c.b16 %v1223, %v1222
      %v1234 = vpack.c.b16 %v1225, %v1224
      %v1235 = vpack.c.b16 %v1227, %v1226
      %1244 = vmatprep.subr.bf16.mxu0 0
      %1245 = vmatpush1.bf16.msra.mxu0 %v1228
      %1246 = vmatprep.subr.bf16.mxu0 0
      %1247 = vmatpush1.bf16.msra.mxu0 %v1229
      %1248 = vmatprep.subr.bf16.mxu0 0
      %1249 = vmatpush1.bf16.msra.mxu0 %v1230
      %1250 = vmatprep.subr.bf16.mxu0 0
      %1251 = vmatpush1.bf16.msra.mxu0 %v1231
      %1252 = vmatprep.subr.bf16.mxu0 0
      %1253 = vmatpush1.bf16.msra.mxu0 %v1232
      %1254 = vmatprep.subr.bf16.mxu0 0
      %1255 = vmatpush1.bf16.msra.mxu0 %v1233
      %1256 = vmatprep.subr.bf16.mxu0 0
      %1257 = vmatpush1.bf16.msra.mxu0 %v1234
      %1258 = vmatprep.subr.bf16.mxu0 0
      %1259 = vmatpush1.bf16.msra.mxu0 %v1235
      %1260 = vmatprep.subr.bf16.mxu0 0
      %1261 = vmatpush1.bf16.msra.mxu0 0
      %1262 = vmatprep.subr.bf16.mxu0 0
      %1263 = vmatpush1.bf16.msra.mxu0 0
      %1264 = vmatprep.subr.bf16.mxu0 0
      %1265 = vmatpush1.bf16.msra.mxu0 0
      %1266 = vmatprep.subr.bf16.mxu0 0
      %1267 = vmatpush1.bf16.msra.mxu0 0
      %1268 = vmatprep.subr.bf16.mxu0 0
      %1269 = vmatpush1.bf16.msra.mxu0 0
      %1270 = vmatprep.subr.bf16.mxu0 0
      %1271 = vmatpush1.bf16.msra.mxu0 0
      %1272 = vmatprep.subr.bf16.mxu0 0
      %1273 = vmatpush1.bf16.msra.mxu0 0
      %1274 = vmatprep.subr.bf16.mxu0 0
      %1275 = vmatpush1.bf16.msra.mxu0 0
      %1276 = vmatprep.mubr.bf16.mxu0 0
      %1277 = vmatmul.mubr.bf16.gmra.mrb[0].mxu0 %v593
      %v1278 = vpop.f32.mrb[0].mxu0
      %v1279 = vadd.f32 0.0, %v1278
      %v1280 = vpop.f32.mrb[0].mxu0
      %v1281 = vpop.f32.mrb[0].mxu0
      %v1282 = vadd.f32 0.0, %v1281
      %v1283 = vpop.f32.mrb[0].mxu0
      %1284 = vmatprep.mubr.bf16.mxu0 0
      %1285 = vmatmul.mubr.bf16.gmra.mrb[0].mxu0 %v605
      %v1286 = vpop.f32.mrb[0].mxu0
      %v1287 = vadd.f32 0.0, %v1286
      %v1288 = vpop.f32.mrb[0].mxu0
      %v1289 = vpop.f32.mrb[0].mxu0
      %v1290 = vadd.f32 0.0, %v1289
      %v1291 = vpop.f32.mrb[0].mxu0
      %1292 = vmatprep.mubr.bf16.mxu0 0
      %1293 = vmatmul.mubr.bf16.gmra.mrb[0].mxu0 %v617
      %v1294 = vpop.f32.mrb[0].mxu0
      %v1295 = vadd.f32 0.0, %v1294
      %v1296 = vpop.f32.mrb[0].mxu0
      %v1297 = vpop.f32.mrb[0].mxu0
      %v1298 = vadd.f32 0.0, %v1297
      %v1299 = vpop.f32.mrb[0].mxu0
      %1300 = vmatprep.mubr.bf16.mxu0 0
      %1301 = vmatmul.mubr.bf16.gmra.mrb[0].mxu0 %v1177
      %v1302 = vpop.f32.mrb[0].mxu0
      %v1303 = vadd.f32 0.0, %v1302
      %v1304 = vpop.f32.mrb[0].mxu0
      %v1305 = vpop.f32.mrb[0].mxu0
      %v1306 = vadd.f32 0.0, %v1305
      %v1307 = vpop.f32.mrb[0].mxu0
      %1308 = vdwg.mxu0
      %v1309 = vadd.f32 %v1158, %v1279
      %v1310 = vadd.f32 %v1159, %v1282
      %v1311 = vadd.f32 %v1160, %v1287
      %v1312 = vadd.f32 %v1161, %v1290
      %v1313 = vadd.f32 %v1162, %v1295
      %v1314 = vadd.f32 %v1163, %v1298
      %v1315 = vadd.f32 %v1164, %v1303
      %v1316 = vadd.f32 %v1165, %v1306
      %v1319 = vrot.slane %v545, 1
      %v1320 = vrot.slane %v551, 1
      %v1321 = vsel %vm873, %v1319, %v1320
      %s1323 = scalar_lea.vmem %s4, 320
      %v1324 = vld [vmem:[%s1323] sm:$0xf]
      %v1325 = vld [vmem:[%s1323 + $0x4] sm:$0xf]
      %v1326 = vld [vmem:[%s1323 + $0x8] sm:$0xf]
      %v1327 = vld [vmem:[%s1323 + $0xc] sm:$0xf]
      %v1328 = vld [vmem:[%s1323 + $0x10] sm:$0xf]
      %v1329 = vld [vmem:[%s1323 + $0x14] sm:$0xf]
      %v1330 = vld [vmem:[%s1323 + $0x18] sm:$0xf]
      %v1331 = vld [vmem:[%s1323 + $0x1c] sm:$0xf]
      %v1332 = vld [vmem:[%s1323 + $0x20] sm:$0xf]
      %v1333 = vld [vmem:[%s1323 + $0x24] sm:$0xf]
      %v1334 = vld [vmem:[%s1323 + $0x28] sm:$0xf]
      %v1335 = vld [vmem:[%s1323 + $0x2c] sm:$0xf]
      %v1336 = vld [vmem:[%s1323 + $0x30] sm:$0xf]
      %v1337 = vld [vmem:[%s1323 + $0x34] sm:$0xf]
      %v1338 = vld [vmem:[%s1323 + $0x38] sm:$0xf]
      %v1339 = vld [vmem:[%s1323 + $0x3c] sm:$0xf]
      %v1356 = vunpack.c.l.b16 %v1324
      %v1357 = vunpack.c.l.b16 %v1325
      %v1358 = vunpack.c.l.b16 %v1326
      %v1359 = vunpack.c.l.b16 %v1327
      %v1360 = vunpack.c.l.b16 %v1328
      %v1361 = vunpack.c.l.b16 %v1329
      %v1362 = vunpack.c.l.b16 %v1330
      %v1363 = vunpack.c.l.b16 %v1331
      %v1364 = vunpack.c.l.b16 %v1332
      %v1365 = vunpack.c.l.b16 %v1333
      %v1366 = vunpack.c.l.b16 %v1334
      %v1367 = vunpack.c.l.b16 %v1335
      %v1368 = vunpack.c.l.b16 %v1336
      %v1369 = vunpack.c.l.b16 %v1337
      %v1370 = vunpack.c.l.b16 %v1338
      %v1371 = vunpack.c.l.b16 %v1339
      %v1372 = vpack.c.b16 %v1357, %v1356
      %v1373 = vpack.c.b16 %v1359, %v1358
      %v1374 = vpack.c.b16 %v1361, %v1360
      %v1375 = vpack.c.b16 %v1363, %v1362
      %v1376 = vpack.c.b16 %v1365, %v1364
      %v1377 = vpack.c.b16 %v1367, %v1366
      %v1378 = vpack.c.b16 %v1369, %v1368
      %v1379 = vpack.c.b16 %v1371, %v1370
      %1388 = vmatprep.subr.bf16.mxu0 0
      %1389 = vmatpush1.bf16.msra.mxu0 %v1372
      %1390 = vmatprep.subr.bf16.mxu0 0
      %1391 = vmatpush1.bf16.msra.mxu0 %v1373
      %1392 = vmatprep.subr.bf16.mxu0 0
      %1393 = vmatpush1.bf16.msra.mxu0 %v1374
      %1394 = vmatprep.subr.bf16.mxu0 0
      %1395 = vmatpush1.bf16.msra.mxu0 %v1375
      %1396 = vmatprep.subr.bf16.mxu0 0
      %1397 = vmatpush1.bf16.msra.mxu0 %v1376
      %1398 = vmatprep.subr.bf16.mxu0 0
      %1399 = vmatpush1.bf16.msra.mxu0 %v1377
      %1400 = vmatprep.subr.bf16.mxu0 0
      %1401 = vmatpush1.bf16.msra.mxu0 %v1378
      %1402 = vmatprep.subr.bf16.mxu0 0
      %1403 = vmatpush1.bf16.msra.mxu0 %v1379
      %1404 = vmatprep.subr.bf16.mxu0 0
      %1405 = vmatpush1.bf16.msra.mxu0 0
      %1406 = vmatprep.subr.bf16.mxu0 0
      %1407 = vmatpush1.bf16.msra.mxu0 0
      %1408 = vmatprep.subr.bf16.mxu0 0
      %1409 = vmatpush1.bf16.msra.mxu0 0
      %1410 = vmatprep.subr.bf16.mxu0 0
      %1411 = vmatpush1.bf16.msra.mxu0 0
      %1412 = vmatprep.subr.bf16.mxu0 0
      %1413 = vmatpush1.bf16.msra.mxu0 0
      %1414 = vmatprep.subr.bf16.mxu0 0
      %1415 = vmatpush1.bf16.msra.mxu0 0
      %1416 = vmatprep.subr.bf16.mxu0 0
      %1417 = vmatpush1.bf16.msra.mxu0 0
      %1418 = vmatprep.subr.bf16.mxu0 0
      %1419 = vmatpush1.bf16.msra.mxu0 0
      %1420 = vmatprep.mubr.bf16.mxu0 0
      %1421 = vmatmul.mubr.bf16.gmra.mrb[0].mxu0 %v879
      %v1422 = vpop.f32.mrb[0].mxu0
      %v1423 = vadd.f32 0.0, %v1422
      %v1424 = vpop.f32.mrb[0].mxu0
      %v1425 = vpop.f32.mrb[0].mxu0
      %v1426 = vadd.f32 0.0, %v1425
      %v1427 = vpop.f32.mrb[0].mxu0
      %1428 = vmatprep.mubr.bf16.mxu0 0
      %1429 = vmatmul.mubr.bf16.gmra.mrb[0].mxu0 %v882
      %v1430 = vpop.f32.mrb[0].mxu0
      %v1431 = vadd.f32 0.0, %v1430
      %v1432 = vpop.f32.mrb[0].mxu0
      %v1433 = vpop.f32.mrb[0].mxu0
      %v1434 = vadd.f32 0.0, %v1433
      %v1435 = vpop.f32.mrb[0].mxu0
      %1436 = vmatprep.mubr.bf16.mxu0 0
      %1437 = vmatmul.mubr.bf16.gmra.mrb[0].mxu0 %v885
      %v1438 = vpop.f32.mrb[0].mxu0
      %v1439 = vadd.f32 0.0, %v1438
      %v1440 = vpop.f32.mrb[0].mxu0
      %v1441 = vpop.f32.mrb[0].mxu0
      %v1442 = vadd.f32 0.0, %v1441
      %v1443 = vpop.f32.mrb[0].mxu0
      %1444 = vmatprep.mubr.bf16.mxu0 0
      %1445 = vmatmul.mubr.bf16.gmra.mrb[0].mxu0 %v1321
      %v1446 = vpop.f32.mrb[0].mxu0
      %v1447 = vadd.f32 0.0, %v1446
      %v1448 = vpop.f32.mrb[0].mxu0
      %v1449 = vpop.f32.mrb[0].mxu0
      %v1450 = vadd.f32 0.0, %v1449
      %v1451 = vpop.f32.mrb[0].mxu0
      %1452 = vdwg.mxu0
      %v1453 = vadd.f32 %v1309, %v1423
      %v1454 = vadd.f32 %v1310, %v1426
      %v1455 = vadd.f32 %v1311, %v1431
      %v1456 = vadd.f32 %v1312, %v1434
      %v1457 = vadd.f32 %v1313, %v1439
      %v1458 = vadd.f32 %v1314, %v1442
      %v1459 = vadd.f32 %v1315, %v1447
      %v1460 = vadd.f32 %v1316, %v1450
      %s1461 = scalar_lea.vmem %s4, 384
      %v1462 = vld [vmem:[%s1461] sm:$0xf]
      %v1463 = vld [vmem:[%s1461 + $0x4] sm:$0xf]
      %v1464 = vld [vmem:[%s1461 + $0x8] sm:$0xf]
      %v1465 = vld [vmem:[%s1461 + $0xc] sm:$0xf]
      %v1466 = vld [vmem:[%s1461 + $0x10] sm:$0xf]
      %v1467 = vld [vmem:[%s1461 + $0x14] sm:$0xf]
      %v1468 = vld [vmem:[%s1461 + $0x18] sm:$0xf]
      %v1469 = vld [vmem:[%s1461 + $0x1c] sm:$0xf]
      %v1470 = vld [vmem:[%s1461 + $0x20] sm:$0xf]
      %v1471 = vld [vmem:[%s1461 + $0x24] sm:$0xf]
      %v1472 = vld [vmem:[%s1461 + $0x28] sm:$0xf]
      %v1473 = vld [vmem:[%s1461 + $0x2c] sm:$0xf]
      %v1474 = vld [vmem:[%s1461 + $0x30] sm:$0xf]
      %v1475 = vld [vmem:[%s1461 + $0x34] sm:$0xf]
      %v1476 = vld [vmem:[%s1461 + $0x38] sm:$0xf]
      %v1477 = vld [vmem:[%s1461 + $0x3c] sm:$0xf]
      %v1494 = vunpack.c.l.b16 %v1462
      %v1495 = vunpack.c.l.b16 %v1463
      %v1496 = vunpack.c.l.b16 %v1464
      %v1497 = vunpack.c.l.b16 %v1465
      %v1498 = vunpack.c.l.b16 %v1466
      %v1499 = vunpack.c.l.b16 %v1467
      %v1500 = vunpack.c.l.b16 %v1468
      %v1501 = vunpack.c.l.b16 %v1469
      %v1502 = vunpack.c.l.b16 %v1470
      %v1503 = vunpack.c.l.b16 %v1471
      %v1504 = vunpack.c.l.b16 %v1472
      %v1505 = vunpack.c.l.b16 %v1473
      %v1506 = vunpack.c.l.b16 %v1474
      %v1507 = vunpack.c.l.b16 %v1475
      %v1508 = vunpack.c.l.b16 %v1476
      %v1509 = vunpack.c.l.b16 %v1477
      %v1510 = vpack.c.b16 %v1495, %v1494
      %v1511 = vpack.c.b16 %v1497, %v1496
      %v1512 = vpack.c.b16 %v1499, %v1498
      %v1513 = vpack.c.b16 %v1501, %v1500
      %v1514 = vpack.c.b16 %v1503, %v1502
      %v1515 = vpack.c.b16 %v1505, %v1504
      %v1516 = vpack.c.b16 %v1507, %v1506
      %v1517 = vpack.c.b16 %v1509, %v1508
      %1526 = vmatprep.subr.bf16.mxu0 0
      %1527 = vmatpush1.bf16.msra.mxu0 %v1510
      %1528 = vmatprep.subr.bf16.mxu0 0
      %1529 = vmatpush1.bf16.msra.mxu0 %v1511
      %1530 = vmatprep.subr.bf16.mxu0 0
      %1531 = vmatpush1.bf16.msra.mxu0 %v1512
      %1532 = vmatprep.subr.bf16.mxu0 0
      %1533 = vmatpush1.bf16.msra.mxu0 %v1513
      %1534 = vmatprep.subr.bf16.mxu0 0
      %1535 = vmatpush1.bf16.msra.mxu0 %v1514
      %1536 = vmatprep.subr.bf16.mxu0 0
      %1537 = vmatpush1.bf16.msra.mxu0 %v1515
      %1538 = vmatprep.subr.bf16.mxu0 0
      %1539 = vmatpush1.bf16.msra.mxu0 %v1516
      %1540 = vmatprep.subr.bf16.mxu0 0
      %1541 = vmatpush1.bf16.msra.mxu0 %v1517
      %1542 = vmatprep.subr.bf16.mxu0 0
      %1543 = vmatpush1.bf16.msra.mxu0 0
      %1544 = vmatprep.subr.bf16.mxu0 0
      %1545 = vmatpush1.bf16.msra.mxu0 0
      %1546 = vmatprep.subr.bf16.mxu0 0
      %1547 = vmatpush1.bf16.msra.mxu0 0
      %1548 = vmatprep.subr.bf16.mxu0 0
      %1549 = vmatpush1.bf16.msra.mxu0 0
      %1550 = vmatprep.subr.bf16.mxu0 0
      %1551 = vmatpush1.bf16.msra.mxu0 0
      %1552 = vmatprep.subr.bf16.mxu0 0
      %1553 = vmatpush1.bf16.msra.mxu0 0
      %1554 = vmatprep.subr.bf16.mxu0 0
      %1555 = vmatpush1.bf16.msra.mxu0 0
      %1556 = vmatprep.subr.bf16.mxu0 0
      %1557 = vmatpush1.bf16.msra.mxu0 0
      %1558 = vmatprep.mubr.bf16.mxu0 0
      %1559 = vmatmul.mubr.bf16.gmra.mrb[0].mxu0 %v543
      %v1560 = vpop.f32.mrb[0].mxu0
      %v1561 = vadd.f32 0.0, %v1560
      %v1562 = vpop.f32.mrb[0].mxu0
      %v1563 = vpop.f32.mrb[0].mxu0
      %v1564 = vadd.f32 0.0, %v1563
      %v1565 = vpop.f32.mrb[0].mxu0
      %1566 = vmatprep.mubr.bf16.mxu0 0
      %1567 = vmatmul.mubr.bf16.gmra.mrb[0].mxu0 %v544
      %v1568 = vpop.f32.mrb[0].mxu0
      %v1569 = vadd.f32 0.0, %v1568
      %v1570 = vpop.f32.mrb[0].mxu0
      %v1571 = vpop.f32.mrb[0].mxu0
      %v1572 = vadd.f32 0.0, %v1571
      %v1573 = vpop.f32.mrb[0].mxu0
      %1574 = vmatprep.mubr.bf16.mxu0 0
      %1575 = vmatmul.mubr.bf16.gmra.mrb[0].mxu0 %v545
      %v1576 = vpop.f32.mrb[0].mxu0
      %v1577 = vadd.f32 0.0, %v1576
      %v1578 = vpop.f32.mrb[0].mxu0
      %v1579 = vpop.f32.mrb[0].mxu0
      %v1580 = vadd.f32 0.0, %v1579
      %v1581 = vpop.f32.mrb[0].mxu0
      %1582 = vmatprep.mubr.bf16.mxu0 0
      %1583 = vmatmul.mubr.bf16.gmra.mrb[0].mxu0 %v546
      %v1584 = vpop.f32.mrb[0].mxu0
      %v1585 = vadd.f32 0.0, %v1584
      %v1586 = vpop.f32.mrb[0].mxu0
      %v1587 = vpop.f32.mrb[0].mxu0
      %v1588 = vadd.f32 0.0, %v1587
      %v1589 = vpop.f32.mrb[0].mxu0
      %1590 = vdwg.mxu0
      %v1591 = vadd.f32 %v1453, %v1561
      %v1592 = vadd.f32 %v1454, %v1564
      %v1593 = vadd.f32 %v1455, %v1569
      %v1594 = vadd.f32 %v1456, %v1572
      %v1595 = vadd.f32 %v1457, %v1577
      %v1596 = vadd.f32 %v1458, %v1580
      %v1597 = vadd.f32 %v1459, %v1585
      %v1598 = vadd.f32 %v1460, %v1588
      %v1600 = vshrl.u32 %v546, 16
      %v1602 = vshll.u32 %v546, 16
      %v1604 = vrot.slane %v1602, 1
      %v1605 = vor.u32 %v1600, %v1604
      %v1607 = vshll.u32 %v552, 16
      %v1609 = vrot.slane %v1607, 1
      %v1610 = vsel %vm569, %v1605, %v1609
      %s1612 = scalar_lea.vmem %s4, 448
      %v1613 = vld [vmem:[%s1612] sm:$0xf]
      %v1614 = vld [vmem:[%s1612 + $0x4] sm:$0xf]
      %v1615 = vld [vmem:[%s1612 + $0x8] sm:$0xf]
      %v1616 = vld [vmem:[%s1612 + $0xc] sm:$0xf]
      %v1617 = vld [vmem:[%s1612 + $0x10] sm:$0xf]
      %v1618 = vld [vmem:[%s1612 + $0x14] sm:$0xf]
      %v1619 = vld [vmem:[%s1612 + $0x18] sm:$0xf]
      %v1620 = vld [vmem:[%s1612 + $0x1c] sm:$0xf]
      %v1621 = vld [vmem:[%s1612 + $0x20] sm:$0xf]
      %v1622 = vld [vmem:[%s1612 + $0x24] sm:$0xf]
      %v1623 = vld [vmem:[%s1612 + $0x28] sm:$0xf]
      %v1624 = vld [vmem:[%s1612 + $0x2c] sm:$0xf]
      %v1625 = vld [vmem:[%s1612 + $0x30] sm:$0xf]
      %v1626 = vld [vmem:[%s1612 + $0x34] sm:$0xf]
      %v1627 = vld [vmem:[%s1612 + $0x38] sm:$0xf]
      %v1628 = vld [vmem:[%s1612 + $0x3c] sm:$0xf]
      %v1645 = vunpack.c.l.b16 %v1613
      %v1646 = vunpack.c.l.b16 %v1614
      %v1647 = vunpack.c.l.b16 %v1615
      %v1648 = vunpack.c.l.b16 %v1616
      %v1649 = vunpack.c.l.b16 %v1617
      %v1650 = vunpack.c.l.b16 %v1618
      %v1651 = vunpack.c.l.b16 %v1619
      %v1652 = vunpack.c.l.b16 %v1620
      %v1653 = vunpack.c.l.b16 %v1621
      %v1654 = vunpack.c.l.b16 %v1622
      %v1655 = vunpack.c.l.b16 %v1623
      %v1656 = vunpack.c.l.b16 %v1624
      %v1657 = vunpack.c.l.b16 %v1625
      %v1658 = vunpack.c.l.b16 %v1626
      %v1659 = vunpack.c.l.b16 %v1627
      %v1660 = vunpack.c.l.b16 %v1628
      %v1661 = vpack.c.b16 %v1646, %v1645
      %v1662 = vpack.c.b16 %v1648, %v1647
      %v1663 = vpack.c.b16 %v1650, %v1649
      %v1664 = vpack.c.b16 %v1652, %v1651
      %v1665 = vpack.c.b16 %v1654, %v1653
      %v1666 = vpack.c.b16 %v1656, %v1655
      %v1667 = vpack.c.b16 %v1658, %v1657
      %v1668 = vpack.c.b16 %v1660, %v1659
      %1677 = vmatprep.subr.bf16.mxu0 0
      %1678 = vmatpush1.bf16.msra.mxu0 %v1661
      %1679 = vmatprep.subr.bf16.mxu0 0
      %1680 = vmatpush1.bf16.msra.mxu0 %v1662
      %1681 = vmatprep.subr.bf16.mxu0 0
      %1682 = vmatpush1.bf16.msra.mxu0 %v1663
      %1683 = vmatprep.subr.bf16.mxu0 0
      %1684 = vmatpush1.bf16.msra.mxu0 %v1664
      %1685 = vmatprep.subr.bf16.mxu0 0
      %1686 = vmatpush1.bf16.msra.mxu0 %v1665
      %1687 = vmatprep.subr.bf16.mxu0 0
      %1688 = vmatpush1.bf16.msra.mxu0 %v1666
      %1689 = vmatprep.subr.bf16.mxu0 0
      %1690 = vmatpush1.bf16.msra.mxu0 %v1667
      %1691 = vmatprep.subr.bf16.mxu0 0
      %1692 = vmatpush1.bf16.msra.mxu0 %v1668
      %1693 = vmatprep.subr.bf16.mxu0 0
      %1694 = vmatpush1.bf16.msra.mxu0 0
      %1695 = vmatprep.subr.bf16.mxu0 0
      %1696 = vmatpush1.bf16.msra.mxu0 0
      %1697 = vmatprep.subr.bf16.mxu0 0
      %1698 = vmatpush1.bf16.msra.mxu0 0
      %1699 = vmatprep.subr.bf16.mxu0 0
      %1700 = vmatpush1.bf16.msra.mxu0 0
      %1701 = vmatprep.subr.bf16.mxu0 0
      %1702 = vmatpush1.bf16.msra.mxu0 0
      %1703 = vmatprep.subr.bf16.mxu0 0
      %1704 = vmatpush1.bf16.msra.mxu0 0
      %1705 = vmatprep.subr.bf16.mxu0 0
      %1706 = vmatpush1.bf16.msra.mxu0 0
      %1707 = vmatprep.subr.bf16.mxu0 0
      %1708 = vmatpush1.bf16.msra.mxu0 0
      %1709 = vmatprep.mubr.bf16.mxu0 0
      %1710 = vmatmul.mubr.bf16.gmra.mrb[0].mxu0 %v605
      %v1711 = vpop.f32.mrb[0].mxu0
      %v1712 = vadd.f32 0.0, %v1711
      %v1713 = vpop.f32.mrb[0].mxu0
      %v1714 = vpop.f32.mrb[0].mxu0
      %v1715 = vadd.f32 0.0, %v1714
      %v1716 = vpop.f32.mrb[0].mxu0
      %1717 = vmatprep.mubr.bf16.mxu0 0
      %1718 = vmatmul.mubr.bf16.gmra.mrb[0].mxu0 %v617
      %v1719 = vpop.f32.mrb[0].mxu0
      %v1720 = vadd.f32 0.0, %v1719
      %v1721 = vpop.f32.mrb[0].mxu0
      %v1722 = vpop.f32.mrb[0].mxu0
      %v1723 = vadd.f32 0.0, %v1722
      %v1724 = vpop.f32.mrb[0].mxu0
      %1725 = vmatprep.mubr.bf16.mxu0 0
      %1726 = vmatmul.mubr.bf16.gmra.mrb[0].mxu0 %v1177
      %v1727 = vpop.f32.mrb[0].mxu0
      %v1728 = vadd.f32 0.0, %v1727
      %v1729 = vpop.f32.mrb[0].mxu0
      %v1730 = vpop.f32.mrb[0].mxu0
      %v1731 = vadd.f32 0.0, %v1730
      %v1732 = vpop.f32.mrb[0].mxu0
      %1733 = vmatprep.mubr.bf16.mxu0 0
      %1734 = vmatmul.mubr.bf16.gmra.mrb[0].mxu0 %v1610
      %v1735 = vpop.f32.mrb[0].mxu0
      %v1736 = vadd.f32 0.0, %v1735
      %v1737 = vpop.f32.mrb[0].mxu0
      %v1738 = vpop.f32.mrb[0].mxu0
      %v1739 = vadd.f32 0.0, %v1738
      %v1740 = vpop.f32.mrb[0].mxu0
      %1741 = vdwg.mxu0
      %v1742 = vadd.f32 %v1591, %v1712
      %v1743 = vadd.f32 %v1592, %v1715
      %v1744 = vadd.f32 %v1593, %v1720
      %v1745 = vadd.f32 %v1594, %v1723
      %v1746 = vadd.f32 %v1595, %v1728
      %v1747 = vadd.f32 %v1596, %v1731
      %v1748 = vadd.f32 %v1597, %v1736
      %v1749 = vadd.f32 %v1598, %v1739
      %v1752 = vrot.slane %v546, 1
      %v1753 = vrot.slane %v552, 1
      %v1754 = vsel %vm873, %v1752, %v1753
      %s1756 = scalar_lea.vmem %s4, 512
      %v1757 = vld [vmem:[%s1756] sm:$0xf]
      %v1758 = vld [vmem:[%s1756 + $0x4] sm:$0xf]
      %v1759 = vld [vmem:[%s1756 + $0x8] sm:$0xf]
      %v1760 = vld [vmem:[%s1756 + $0xc] sm:$0xf]
      %v1761 = vld [vmem:[%s1756 + $0x10] sm:$0xf]
      %v1762 = vld [vmem:[%s1756 + $0x14] sm:$0xf]
      %v1763 = vld [vmem:[%s1756 + $0x18] sm:$0xf]
      %v1764 = vld [vmem:[%s1756 + $0x1c] sm:$0xf]
      %v1765 = vld [vmem:[%s1756 + $0x20] sm:$0xf]
      %v1766 = vld [vmem:[%s1756 + $0x24] sm:$0xf]
      %v1767 = vld [vmem:[%s1756 + $0x28] sm:$0xf]
      %v1768 = vld [vmem:[%s1756 + $0x2c] sm:$0xf]
      %v1769 = vld [vmem:[%s1756 + $0x30] sm:$0xf]
      %v1770 = vld [vmem:[%s1756 + $0x34] sm:$0xf]
      %v1771 = vld [vmem:[%s1756 + $0x38] sm:$0xf]
      %v1772 = vld [vmem:[%s1756 + $0x3c] sm:$0xf]
      %v1789 = vunpack.c.l.b16 %v1757
      %v1790 = vunpack.c.l.b16 %v1758
      %v1791 = vunpack.c.l.b16 %v1759
      %v1792 = vunpack.c.l.b16 %v1760
      %v1793 = vunpack.c.l.b16 %v1761
      %v1794 = vunpack.c.l.b16 %v1762
      %v1795 = vunpack.c.l.b16 %v1763
      %v1796 = vunpack.c.l.b16 %v1764
      %v1797 = vunpack.c.l.b16 %v1765
      %v1798 = vunpack.c.l.b16 %v1766
      %v1799 = vunpack.c.l.b16 %v1767
      %v1800 = vunpack.c.l.b16 %v1768
      %v1801 = vunpack.c.l.b16 %v1769
      %v1802 = vunpack.c.l.b16 %v1770
      %v1803 = vunpack.c.l.b16 %v1771
      %v1804 = vunpack.c.l.b16 %v1772
      %v1805 = vpack.c.b16 %v1790, %v1789
      %v1806 = vpack.c.b16 %v1792, %v1791
      %v1807 = vpack.c.b16 %v1794, %v1793
      %v1808 = vpack.c.b16 %v1796, %v1795
      %v1809 = vpack.c.b16 %v1798, %v1797
      %v1810 = vpack.c.b16 %v1800, %v1799
      %v1811 = vpack.c.b16 %v1802, %v1801
      %v1812 = vpack.c.b16 %v1804, %v1803
      %1821 = vmatprep.subr.bf16.mxu0 0
      %1822 = vmatpush1.bf16.msra.mxu0 %v1805
      %1823 = vmatprep.subr.bf16.mxu0 0
      %1824 = vmatpush1.bf16.msra.mxu0 %v1806
      %1825 = vmatprep.subr.bf16.mxu0 0
      %1826 = vmatpush1.bf16.msra.mxu0 %v1807
      %1827 = vmatprep.subr.bf16.mxu0 0
      %1828 = vmatpush1.bf16.msra.mxu0 %v1808
      %1829 = vmatprep.subr.bf16.mxu0 0
      %1830 = vmatpush1.bf16.msra.mxu0 %v1809
      %1831 = vmatprep.subr.bf16.mxu0 0
      %1832 = vmatpush1.bf16.msra.mxu0 %v1810
      %1833 = vmatprep.subr.bf16.mxu0 0
      %1834 = vmatpush1.bf16.msra.mxu0 %v1811
      %1835 = vmatprep.subr.bf16.mxu0 0
      %1836 = vmatpush1.bf16.msra.mxu0 %v1812
      %1837 = vmatprep.subr.bf16.mxu0 0
      %1838 = vmatpush1.bf16.msra.mxu0 0
      %1839 = vmatprep.subr.bf16.mxu0 0
      %1840 = vmatpush1.bf16.msra.mxu0 0
      %1841 = vmatprep.subr.bf16.mxu0 0
      %1842 = vmatpush1.bf16.msra.mxu0 0
      %1843 = vmatprep.subr.bf16.mxu0 0
      %1844 = vmatpush1.bf16.msra.mxu0 0
      %1845 = vmatprep.subr.bf16.mxu0 0
      %1846 = vmatpush1.bf16.msra.mxu0 0
      %1847 = vmatprep.subr.bf16.mxu0 0
      %1848 = vmatpush1.bf16.msra.mxu0 0
      %1849 = vmatprep.subr.bf16.mxu0 0
      %1850 = vmatpush1.bf16.msra.mxu0 0
      %1851 = vmatprep.subr.bf16.mxu0 0
      %1852 = vmatpush1.bf16.msra.mxu0 0
      %1853 = vmatprep.mubr.bf16.mxu0 0
      %1854 = vmatmul.mubr.bf16.gmra.mrb[0].mxu0 %v882
      %v1855 = vpop.f32.mrb[0].mxu0
      %v1856 = vadd.f32 0.0, %v1855
      %v1857 = vpop.f32.mrb[0].mxu0
      %v1858 = vpop.f32.mrb[0].mxu0
      %v1859 = vadd.f32 0.0, %v1858
      %v1860 = vpop.f32.mrb[0].mxu0
      %1861 = vmatprep.mubr.bf16.mxu0 0
      %1862 = vmatmul.mubr.bf16.gmra.mrb[0].mxu0 %v885
      %v1863 = vpop.f32.mrb[0].mxu0
      %v1864 = vadd.f32 0.0, %v1863
      %v1865 = vpop.f32.mrb[0].mxu0
      %v1866 = vpop.f32.mrb[0].mxu0
      %v1867 = vadd.f32 0.0, %v1866
      %v1868 = vpop.f32.mrb[0].mxu0
      %1869 = vmatprep.mubr.bf16.mxu0 0
      %1870 = vmatmul.mubr.bf16.gmra.mrb[0].mxu0 %v1321
      %v1871 = vpop.f32.mrb[0].mxu0
      %v1872 = vadd.f32 0.0, %v1871
      %v1873 = vpop.f32.mrb[0].mxu0
      %v1874 = vpop.f32.mrb[0].mxu0
      %v1875 = vadd.f32 0.0, %v1874
      %v1876 = vpop.f32.mrb[0].mxu0
      %1877 = vmatprep.mubr.bf16.mxu0 0
      %1878 = vmatmul.mubr.bf16.gmra.mrb[0].mxu0 %v1754
      %v1879 = vpop.f32.mrb[0].mxu0
      %v1880 = vadd.f32 0.0, %v1879
      %v1881 = vpop.f32.mrb[0].mxu0
      %v1882 = vpop.f32.mrb[0].mxu0
      %v1883 = vadd.f32 0.0, %v1882
      %v1884 = vpop.f32.mrb[0].mxu0
      %1885 = vdwg.mxu0
      %v1886 = vadd.f32 %v1742, %v1856
      %v1887 = vadd.f32 %v1743, %v1859
      %v1888 = vadd.f32 %v1744, %v1864
      %v1889 = vadd.f32 %v1745, %v1867
      %v1890 = vadd.f32 %v1746, %v1872
      %v1891 = vadd.f32 %v1747, %v1875
      %v1892 = vadd.f32 %v1748, %v1880
      %v1893 = vadd.f32 %v1749, %v1883
      %v1894 = vld [vmem:[%s5] sm:$0x1]
      %v1896 = vlaneseq
      %v1897 = vshrl.u32 %v1896, 7
      %v1898 = vsub.s32 0, %v1897
      %v1899 = vrot.slane %v1894, %v1898
      %v1901 = vadd.f32 %v1886, %v1899
      %v1902 = vadd.f32 %v1887, %v1899
      %v1903 = vadd.f32 %v1888, %v1899
      %v1904 = vadd.f32 %v1889, %v1899
      %v1905 = vadd.f32 %v1890, %v1899
      %v1906 = vadd.f32 %v1891, %v1899
      %v1907 = vadd.f32 %v1892, %v1899
      %v1908 = vadd.f32 %v1893, %v1899
      %1909 = vst [vmem:[%s368] sm:$0xff] %v1901
      %1910 = vst [vmem:[%s368 + $0x8] sm:$0xff] %v1902
      %1911 = vst [vmem:[%s368 + $0x10] sm:$0xff] %v1903
      %1912 = vst [vmem:[%s368 + $0x18] sm:$0xff] %v1904
      %1913 = vst [vmem:[%s368 + $0x20] sm:$0xff] %v1905
      %1914 = vst [vmem:[%s368 + $0x28] sm:$0xff] %v1906
      %1915 = vst [vmem:[%s368 + $0x30] sm:$0xff] %v1907
      %1916 = vst [vmem:[%s368 + $0x38] sm:$0xff] %v1908
      %v1917 = vadd.f32 %v1901, %v1902
      %v1918 = vadd.f32 %v1917, %v1903
      %v1919 = vadd.f32 %v1918, %v1904
      %v1920 = vadd.f32 %v1919, %v1905
      %v1921 = vadd.f32 %v1920, %v1906
      %v1922 = vadd.f32 %v1921, %v1907
      %v1923 = vadd.f32 %v1922, %v1908
      %v1924 = vrot.slane %v1923, 4
      %v1925 = vadd.f32 %v1923, %v1924
      %v1926 = vrot.slane %v1925, 2
      %v1927 = vadd.f32 %v1925, %v1926
      %v1928 = vrot.slane %v1927, 1
      %v1929 = vadd.f32 %v1927, %v1928
      %v1930 = vmul.f32 %v1901, %v1901
      %v1931 = vmul.f32 %v1902, %v1902
      %v1932 = vmul.f32 %v1903, %v1903
      %v1933 = vmul.f32 %v1904, %v1904
      %v1934 = vmul.f32 %v1905, %v1905
      %v1935 = vmul.f32 %v1906, %v1906
      %v1936 = vmul.f32 %v1907, %v1907
      %v1937 = vmul.f32 %v1908, %v1908
      %v1938 = vadd.f32 %v1930, %v1931
      %v1939 = vadd.f32 %v1938, %v1932
      %v1940 = vadd.f32 %v1939, %v1933
      %v1941 = vadd.f32 %v1940, %v1934
      %v1942 = vadd.f32 %v1941, %v1935
      %v1943 = vadd.f32 %v1942, %v1936
      %v1944 = vadd.f32 %v1943, %v1937
      %v1945 = vrot.slane %v1944, 4
      %v1946 = vadd.f32 %v1944, %v1945
      %v1947 = vrot.slane %v1946, 2
      %v1948 = vadd.f32 %v1946, %v1947
      %v1949 = vrot.slane %v1948, 1
      %v1950 = vadd.f32 %v1948, %v1949
      %vm1951 = vcmask 1040384
      %v1952 = vsel %vm1951, %v1929, %v1950
      %1953 = vst [vmem:[%s377] sm:$0x3] %v1952
      %s1954 = smul.u32 4, %s24
      %p1955 = scmp.lt.s32.totalorder %s23, 1
      %s1956 = scalar_select %p1955, %s23, 1
      %p1957 = scmp.lt.s32.totalorder %s1954, 15
      %s1958 = scalar_select %p1957, %s1954, 15
      %s1959 = smul.addr %s1958, 2
      %s1960 = smul.addr %s1956, 32
      %s1961 = sadd.s32 %s1959, %s1960
      %s1962 = smul.addr %s1961, 8
      %s1963 = scalar_lea.vmem %s6, %s1962
      %p1964 = scmp.lt.s32.totalorder %s23, 1
      %s1965 = scalar_select %p1964, %s23, 1
      %p1966 = scmp.lt.s32.totalorder %s24, 3
      %s1967 = scalar_select %p1966, %s24, 3
      %s1968 = smul.addr %s1965, 4
      %s1969 = sadd.s32 %s1967, %s1968
      %s1970 = smul.addr %s1969, 2
      %s1971 = scalar_lea.vmem %s7, %s1970
      // Predicated region
      $region45: #{unet_up_block.8} parent=43 // pred_check
        %p1972 = pneg %p191
      $region46: #{unet_up_block.8} parent=43 // pred_check_branch
        %1974 = sbr.rel (%p1972) target = $region48
      $region47: #{unet_up_block.8} parent=43 // pred_region
        %s1975 = smul.u32 4, %s24
      $region48: #{unet_up_block.8} parent=43 // pred_fallthru
        _
      // Predicated region
      $region49: #{unet_up_block.8} parent=43 // pred_check
        %p1976 = pneg %p219
      $region50: #{unet_up_block.8} parent=43 // pred_check_branch
        %1978 = sbr.rel (%p1976) target = $region52
      $region51: #{unet_up_block.8} parent=43 // pred_region
        _
      $region52: #{unet_up_block.8} parent=43 // pred_fallthru
        _
    $region44: #{unet_up_block.8} parent=5 // pred_fallthru
      _
    %p1979 = scmp.le.s32.totalorder 2, %s14
    // Predicated region
    $region53: #{unet_up_block.8} parent=5 // pred_check
      %p1980 = pneg %p1979
    $region54: #{unet_up_block.8} parent=5 // pred_check_branch
      %1982 = sbr.rel (%p1980) target = $region56
    $region55: #{unet_up_block.8} parent=5 // pred_region
      %s1983 = ssub.s32 %s14, 2
      // Predicated region
      $region57: #{unet_up_block.8} parent=55 // pred_check
        %p1984 = pneg %p197
      $region58: #{unet_up_block.8} parent=55 // pred_check_branch
        %1986 = sbr.rel (%p1984) target = $region60
      $region59: #{unet_up_block.8} parent=55 // pred_region
        %s1987 = smul.u32 4, %s26
        %p1988 = scmp.lt.s32.totalorder %s25, 1
        %s1989 = scalar_select %p1988, %s25, 1
        %p1990 = scmp.lt.s32.totalorder %s1987, 15
        %s1991 = scalar_select %p1990, %s1987, 15
        %s1992 = smul.addr %s1991, 2
        %s1993 = smul.addr %s1989, 32
        %s1994 = sadd.s32 %s1992, %s1993
        %s1995 = smul.addr %s1994, 8
        %s1996 = scalar_lea.vmem %s6, %s1995
      $region60: #{unet_up_block.8} parent=55 // pred_fallthru
        _
      // Predicated region
      $region61: #{unet_up_block.8} parent=55 // pred_check
        %p1997 = pneg %p225
      $region62: #{unet_up_block.8} parent=55 // pred_check_branch
        %1999 = sbr.rel (%p1997) target = $region64
      $region63: #{unet_up_block.8} parent=55 // pred_region
        %p2000 = scmp.lt.s32.totalorder %s25, 1
        %s2001 = scalar_select %p2000, %s25, 1
        %p2002 = scmp.lt.s32.totalorder %s26, 3
        %s2003 = scalar_select %p2002, %s26, 3
        %s2004 = smul.addr %s2001, 4
        %s2005 = sadd.s32 %s2003, %s2004
        %s2006 = smul.addr %s2005, 2
        %s2007 = scalar_lea.vmem %s7, %s2006
      $region64: #{unet_up_block.8} parent=55 // pred_fallthru
        _
    $region56: #{unet_up_block.8} parent=5 // pred_fallthru
      _
  $region6: #{unet_up_block.8} parent=0 // loop_footer
    %s18 = sadd.s32 1, %s14
  $region7: #{unet_up_block.8} parent=0 // loop_footer_branch
    %13 = sbr.rel target = $region3
  $region8: #{unet_up_block.8} parent=0 // loop_exit
    _

// kernel: unet_up_block.7
$region0: #{unet_up_block.7}
  #allocation0 [shape = 'u32[]', space=smem, size = 0x4, offset = 0x4, fixed_abs, tag = 'smem constant byte address 0x4 - core index']
  #allocation1 [shape = 'u32[144,128]{1,0:T(1,128)}', space=vmem, size = 0x12000, scoped, tag = 'internal scratch']
  %s0 = inlined_call_operand.vmem [shape: f32[2,16,16,128], index: 0, kind: input, shape index: {}]
  %s1 = inlined_call_operand.vmem [shape: f32[2,4,2,16,128], index: 1, kind: input, shape index: {}]
  %s2 = inlined_call_operand.vmem [shape: f32[2,16,16,128], index: 2, kind: input, shape index: {}]
  %s3 = inlined_call_operand.vmem [shape: f32[2,4,2,16,128], index: 3, kind: input, shape index: {}]
  %s4 = inlined_call_operand.vmem [shape: bf16[2,16,16,128], index: 4, kind: input, shape index: {}]
  %s5 = inlined_call_operand.vmem [shape: bf16[2,4,2,16,128], index: 5, kind: input, shape index: {}]
  %s6 = inlined_call_operand.vmem [shape: f32[1,128], index: 6, kind: input, shape index: {}]
  %s7 = inlined_call_operand.vmem [shape: f32[1,128], index: 7, kind: input, shape index: {}]
  %s8 = inlined_call_operand.vmem [shape: bf16[9,128,128], index: 8, kind: input, shape index: {}]
  %s9 = inlined_call_operand.vmem [shape: bf16[9,128,128], index: 9, kind: input, shape index: {}]
  %s10 = inlined_call_operand.vmem [shape: f32[1,128], index: 10, kind: input, shape index: {}]
  %s11 = inlined_call_operand.vmem [shape: f32[2,16,16,128], index: 11, kind: output, shape index: {0}]
  %s12 = inlined_call_operand.vmem [shape: f32[2,4,2,128], index: 12, kind: output, shape index: {1}]
  %13 = xla_tuple %s11, %s12
  %s14 = sld [smem:[#allocation0]]
  $region85: #{unet_up_block.7} parent=0
    _
  %s16 = ssub.s32 1, %s14
  %s17 = scalar_select 0, %s16, %s14
  loop: start=0, step=1, limit=10
  $region2: #{unet_up_block.7} parent=0 // loop_pre_header
    _
  $region3: #{unet_up_block.7} parent=0 // loop_header
    %s19 = sphi 0, %s23
    %p20 = scmp.ge.s32.totalorder %s19, 10
    %s26 = sphi 0, %s38
    %s27 = sphi 0, %s34
    %s28 = sphi 0, %s26
    %s29 = sphi 0, %s27
    %s30 = sphi 0, %s28
    %s31 = sphi 0, %s29
    %s43 = sphi 0, %s45
    %s46 = sphi 0, %s43
    %s47 = sphi 0, %s46
    %s63 = sphi 0, %s47
    %s71 = sphi 0, %s73
    %s74 = sphi 0, %s71
    %s75 = sphi 0, %s74
    %s91 = sphi 0, %s75
    %s99 = sphi 0, %s101
    %s102 = sphi 0, %s99
    %s103 = sphi 0, %s102
    %s119 = sphi 0, %s103
    %s127 = sphi 0, %s129
    %s130 = sphi 0, %s127
    %s131 = sphi 0, %s130
    %s147 = sphi 0, %s131
    %s155 = sphi 0, %s157
    %s158 = sphi 0, %s155
    %s159 = sphi 0, %s158
    %s175 = sphi 0, %s159
    %s183 = sphi 0, %s185
    %s186 = sphi 0, %s183
    %s187 = sphi 0, %s186
    %s203 = sphi 0, %s187
    %s207 = sphi 0, %s207
    %s209 = sphi 0, %s207
    %s210 = sphi 0, %s209
    %s224 = sphi 0, %s210
    %s228 = sphi 0, %s228
    %s230 = sphi 0, %s228
    %s231 = sphi 0, %s230
    %s245 = sphi 0, %s231
    %s249 = sphi 0, %s249
    %s251 = sphi 0, %s249
    %s252 = sphi 0, %s251
    %s266 = sphi 0, %s252
    %s270 = sphi 0, %s270
    %s272 = sphi 0, %s270
    %s273 = sphi 0, %s272
    %s287 = sphi 0, %s273
    %s291 = sphi 0, %s291
    %s293 = sphi 0, %s291
    %s294 = sphi 0, %s293
    %s308 = sphi 0, %s294
    %s316 = sphi 0, %s318
    %s319 = sphi 0, %s316
    %s320 = sphi 0, %s319
    %s336 = sphi 0, %s320
    %s344 = sphi 0, %s346
    %s347 = sphi 0, %s344
    %s348 = sphi 0, %s347
    %s364 = sphi 0, %s348
  $region4: #{unet_up_block.7} parent=0 // loop_header_branch
    %22 = sbr.rel (%p20) target = $region8
  $region5: #{unet_up_block.7} parent=0 // loop_body
    %s24 = ssub.s32 %s19, 1
    %s25 = ssub.s32 %s19, 2
    %s32 = sadd.s32 1, %s27
    %p33 = scmp.ge.s32.totalorder %s32, 4
    %s34 = scalar_select %p33, 0, %s32
    %s35 = sadd.s32 1, %s26
    %s36 = scalar_select %p33, %s35, %s26
    %p37 = scmp.ge.s32.totalorder %s36, 2
    %s38 = scalar_select %p37, 0, %s36
    %s39 = ssub.s32 %s26, %s38
    %s40 = ssub.s32 %s27, %s34
    %s41 = sor.u32 %s39, %s40
    %p42 = scmp.eq.s32.totalorder %s41, 0
    %s44 = sadd.s32 %s43, 1
    %s45 = scalar_select %p42, %s43, %s44
    %p48 = pneg %p42
    %p49 = scmp.eq.s32.totalorder %s19, 7
    %p50 = por %p48, %p49
    %p51 = scmp.ne.s32.totalorder %s43, %s46
    %p52 = scmp.eq.s32.totalorder %s19, 0
    %p53 = por %p51, %p52
    %p54 = scmp.ne.s32.totalorder %s43, %s46
    %p55 = scmp.eq.s32.totalorder %s24, 7
    %p56 = por %p54, %p55
    %p57 = scmp.ne.s32.totalorder %s46, %s47
    %p58 = scmp.eq.s32.totalorder %s24, 0
    %p59 = por %p57, %p58
    %p60 = scmp.ne.s32.totalorder %s46, %s47
    %p61 = scmp.eq.s32.totalorder %s25, 7
    %p62 = por %p60, %p61
    %p64 = scmp.ne.s32.totalorder %s47, %s63
    %p65 = scmp.eq.s32.totalorder %s25, 0
    %p66 = por %p64, %p65
    %s67 = ssub.s32 %s26, %s38
    %s68 = ssub.s32 %s27, %s34
    %s69 = sor.u32 %s67, %s68
    %p70 = scmp.eq.s32.totalorder %s69, 0
    %s72 = sadd.s32 %s71, 1
    %s73 = scalar_select %p70, %s71, %s72
    %p76 = pneg %p70
    %p77 = scmp.eq.s32.totalorder %s19, 7
    %p78 = por %p76, %p77
    %p79 = scmp.ne.s32.totalorder %s71, %s74
    %p80 = scmp.eq.s32.totalorder %s19, 0
    %p81 = por %p79, %p80
    %p82 = scmp.ne.s32.totalorder %s71, %s74
    %p83 = scmp.eq.s32.totalorder %s24, 7
    %p84 = por %p82, %p83
    %p85 = scmp.ne.s32.totalorder %s74, %s75
    %p86 = scmp.eq.s32.totalorder %s24, 0
    %p87 = por %p85, %p86
    %p88 = scmp.ne.s32.totalorder %s74, %s75
    %p89 = scmp.eq.s32.totalorder %s25, 7
    %p90 = por %p88, %p89
    %p92 = scmp.ne.s32.totalorder %s75, %s91
    %p93 = scmp.eq.s32.totalorder %s25, 0
    %p94 = por %p92, %p93
    %s95 = ssub.s32 %s26, %s38
    %s96 = ssub.s32 %s27, %s34
    %s97 = sor.u32 %s95, %s96
    %p98 = scmp.eq.s32.totalorder %s97, 0
    %s100 = sadd.s32 %s99, 1
    %s101 = scalar_select %p98, %s99, %s100
    %p104 = pneg %p98
    %p105 = scmp.eq.s32.totalorder %s19, 7
    %p106 = por %p104, %p105
    %p107 = scmp.ne.s32.totalorder %s99, %s102
    %p108 = scmp.eq.s32.totalorder %s19, 0
    %p109 = por %p107, %p108
    %p110 = scmp.ne.s32.totalorder %s99, %s102
    %p111 = scmp.eq.s32.totalorder %s24, 7
    %p112 = por %p110, %p111
    %p113 = scmp.ne.s32.totalorder %s102, %s103
    %p114 = scmp.eq.s32.totalorder %s24, 0
    %p115 = por %p113, %p114
    %p116 = scmp.ne.s32.totalorder %s102, %s103
    %p117 = scmp.eq.s32.totalorder %s25, 7
    %p118 = por %p116, %p117
    %p120 = scmp.ne.s32.totalorder %s103, %s119
    %p121 = scmp.eq.s32.totalorder %s25, 0
    %p122 = por %p120, %p121
    %s123 = ssub.s32 %s26, %s38
    %s124 = ssub.s32 %s27, %s34
    %s125 = sor.u32 %s123, %s124
    %p126 = scmp.eq.s32.totalorder %s125, 0
    %s128 = sadd.s32 %s127, 1
    %s129 = scalar_select %p126, %s127, %s128
    %p132 = pneg %p126
    %p133 = scmp.eq.s32.totalorder %s19, 7
    %p134 = por %p132, %p133
    %p135 = scmp.ne.s32.totalorder %s127, %s130
    %p136 = scmp.eq.s32.totalorder %s19, 0
    %p137 = por %p135, %p136
    %p138 = scmp.ne.s32.totalorder %s127, %s130
    %p139 = scmp.eq.s32.totalorder %s24, 7
    %p140 = por %p138, %p139
    %p141 = scmp.ne.s32.totalorder %s130, %s131
    %p142 = scmp.eq.s32.totalorder %s24, 0
    %p143 = por %p141, %p142
    %p144 = scmp.ne.s32.totalorder %s130, %s131
    %p145 = scmp.eq.s32.totalorder %s25, 7
    %p146 = por %p144, %p145
    %p148 = scmp.ne.s32.totalorder %s131, %s147
    %p149 = scmp.eq.s32.totalorder %s25, 0
    %p150 = por %p148, %p149
    %s151 = ssub.s32 %s26, %s38
    %s152 = ssub.s32 %s27, %s34
    %s153 = sor.u32 %s151, %s152
    %p154 = scmp.eq.s32.totalorder %s153, 0
    %s156 = sadd.s32 %s155, 1
    %s157 = scalar_select %p154, %s155, %s156
    %p160 = pneg %p154
    %p161 = scmp.eq.s32.totalorder %s19, 7
    %p162 = por %p160, %p161
    %p163 = scmp.ne.s32.totalorder %s155, %s158
    %p164 = scmp.eq.s32.totalorder %s19, 0
    %p165 = por %p163, %p164
    %p166 = scmp.ne.s32.totalorder %s155, %s158
    %p167 = scmp.eq.s32.totalorder %s24, 7
    %p168 = por %p166, %p167
    %p169 = scmp.ne.s32.totalorder %s158, %s159
    %p170 = scmp.eq.s32.totalorder %s24, 0
    %p171 = por %p169, %p170
    %p172 = scmp.ne.s32.totalorder %s158, %s159
    %p173 = scmp.eq.s32.totalorder %s25, 7
    %p174 = por %p172, %p173
    %p176 = scmp.ne.s32.totalorder %s159, %s175
    %p177 = scmp.eq.s32.totalorder %s25, 0
    %p178 = por %p176, %p177
    %s179 = ssub.s32 %s26, %s38
    %s180 = ssub.s32 %s27, %s34
    %s181 = sor.u32 %s179, %s180
    %p182 = scmp.eq.s32.totalorder %s181, 0
    %s184 = sadd.s32 %s183, 1
    %s185 = scalar_select %p182, %s183, %s184
    %p188 = pneg %p182
    %p189 = scmp.eq.s32.totalorder %s19, 7
    %p190 = por %p188, %p189
    %p191 = scmp.ne.s32.totalorder %s183, %s186
    %p192 = scmp.eq.s32.totalorder %s19, 0
    %p193 = por %p191, %p192
    %p194 = scmp.ne.s32.totalorder %s183, %s186
    %p195 = scmp.eq.s32.totalorder %s24, 7
    %p196 = por %p194, %p195
    %p197 = scmp.ne.s32.totalorder %s186, %s187
    %p198 = scmp.eq.s32.totalorder %s24, 0
    %p199 = por %p197, %p198
    %p200 = scmp.ne.s32.totalorder %s186, %s187
    %p201 = scmp.eq.s32.totalorder %s25, 7
    %p202 = por %p200, %p201
    %p204 = scmp.ne.s32.totalorder %s187, %s203
    %p205 = scmp.eq.s32.totalorder %s25, 0
    %p206 = por %p204, %p205
    %s208 = sadd.s32 %s207, 1
    %p211 = scmp.eq.s32.totalorder %s19, 7
    %p212 = scmp.ne.s32.totalorder %s207, %s209
    %p213 = scmp.eq.s32.totalorder %s19, 0
    %p214 = por %p212, %p213
    %p215 = scmp.ne.s32.totalorder %s207, %s209
    %p216 = scmp.eq.s32.totalorder %s24, 7
    %p217 = por %p215, %p216
    %p218 = scmp.ne.s32.totalorder %s209, %s210
    %p219 = scmp.eq.s32.totalorder %s24, 0
    %p220 = por %p218, %p219
    %p221 = scmp.ne.s32.totalorder %s209, %s210
    %p222 = scmp.eq.s32.totalorder %s25, 7
    %p223 = por %p221, %p222
    %p225 = scmp.ne.s32.totalorder %s210, %s224
    %p226 = scmp.eq.s32.totalorder %s25, 0
    %p227 = por %p225, %p226
    %s229 = sadd.s32 %s228, 1
    %p232 = scmp.eq.s32.totalorder %s19, 7
    %p233 = scmp.ne.s32.totalorder %s228, %s230
    %p234 = scmp.eq.s32.totalorder %s19, 0
    %p235 = por %p233, %p234
    %p236 = scmp.ne.s32.totalorder %s228, %s230
    %p237 = scmp.eq.s32.totalorder %s24, 7
    %p238 = por %p236, %p237
    %p239 = scmp.ne.s32.totalorder %s230, %s231
    %p240 = scmp.eq.s32.totalorder %s24, 0
    %p241 = por %p239, %p240
    %p242 = scmp.ne.s32.totalorder %s230, %s231
    %p243 = scmp.eq.s32.totalorder %s25, 7
    %p244 = por %p242, %p243
    %p246 = scmp.ne.s32.totalorder %s231, %s245
    %p247 = scmp.eq.s32.totalorder %s25, 0
    %p248 = por %p246, %p247
    %s250 = sadd.s32 %s249, 1
    %p253 = scmp.eq.s32.totalorder %s19, 7
    %p254 = scmp.ne.s32.totalorder %s249, %s251
    %p255 = scmp.eq.s32.totalorder %s19, 0
    %p256 = por %p254, %p255
    %p257 = scmp.ne.s32.totalorder %s249, %s251
    %p258 = scmp.eq.s32.totalorder %s24, 7
    %p259 = por %p257, %p258
    %p260 = scmp.ne.s32.totalorder %s251, %s252
    %p261 = scmp.eq.s32.totalorder %s24, 0
    %p262 = por %p260, %p261
    %p263 = scmp.ne.s32.totalorder %s251, %s252
    %p264 = scmp.eq.s32.totalorder %s25, 7
    %p265 = por %p263, %p264
    %p267 = scmp.ne.s32.totalorder %s252, %s266
    %p268 = scmp.eq.s32.totalorder %s25, 0
    %p269 = por %p267, %p268
    %s271 = sadd.s32 %s270, 1
    %p274 = scmp.eq.s32.totalorder %s19, 7
    %p275 = scmp.ne.s32.totalorder %s270, %s272
    %p276 = scmp.eq.s32.totalorder %s19, 0
    %p277 = por %p275, %p276
    %p278 = scmp.ne.s32.totalorder %s270, %s272
    %p279 = scmp.eq.s32.totalorder %s24, 7
    %p280 = por %p278, %p279
    %p281 = scmp.ne.s32.totalorder %s272, %s273
    %p282 = scmp.eq.s32.totalorder %s24, 0
    %p283 = por %p281, %p282
    %p284 = scmp.ne.s32.totalorder %s272, %s273
    %p285 = scmp.eq.s32.totalorder %s25, 7
    %p286 = por %p284, %p285
    %p288 = scmp.ne.s32.totalorder %s273, %s287
    %p289 = scmp.eq.s32.totalorder %s25, 0
    %p290 = por %p288, %p289
    %s292 = sadd.s32 %s291, 1
    %p295 = scmp.eq.s32.totalorder %s19, 7
    %p296 = scmp.ne.s32.totalorder %s291, %s293
    %p297 = scmp.eq.s32.totalorder %s19, 0
    %p298 = por %p296, %p297
    %p299 = scmp.ne.s32.totalorder %s291, %s293
    %p300 = scmp.eq.s32.totalorder %s24, 7
    %p301 = por %p299, %p300
    %p302 = scmp.ne.s32.totalorder %s293, %s294
    %p303 = scmp.eq.s32.totalorder %s24, 0
    %p304 = por %p302, %p303
    %p305 = scmp.ne.s32.totalorder %s293, %s294
    %p306 = scmp.eq.s32.totalorder %s25, 7
    %p307 = por %p305, %p306
    %p309 = scmp.ne.s32.totalorder %s294, %s308
    %p310 = scmp.eq.s32.totalorder %s25, 0
    %p311 = por %p309, %p310
    %s312 = ssub.s32 %s26, %s38
    %s313 = ssub.s32 %s27, %s34
    %s314 = sor.u32 %s312, %s313
    %p315 = scmp.eq.s32.totalorder %s314, 0
    %s317 = sadd.s32 %s316, 1
    %s318 = scalar_select %p315, %s316, %s317
    %p321 = pneg %p315
    %p322 = scmp.eq.s32.totalorder %s19, 7
    %p323 = por %p321, %p322
    %p324 = scmp.ne.s32.totalorder %s316, %s319
    %p325 = scmp.eq.s32.totalorder %s19, 0
    %p326 = por %p324, %p325
    %p327 = scmp.ne.s32.totalorder %s316, %s319
    %p328 = scmp.eq.s32.totalorder %s24, 7
    %p329 = por %p327, %p328
    %p330 = scmp.ne.s32.totalorder %s319, %s320
    %p331 = scmp.eq.s32.totalorder %s24, 0
    %p332 = por %p330, %p331
    %p333 = scmp.ne.s32.totalorder %s319, %s320
    %p334 = scmp.eq.s32.totalorder %s25, 7
    %p335 = por %p333, %p334
    %p337 = scmp.ne.s32.totalorder %s320, %s336
    %p338 = scmp.eq.s32.totalorder %s25, 0
    %p339 = por %p337, %p338
    %s340 = ssub.s32 %s26, %s38
    %s341 = ssub.s32 %s27, %s34
    %s342 = sor.u32 %s340, %s341
    %p343 = scmp.eq.s32.totalorder %s342, 0
    %s345 = sadd.s32 %s344, 1
    %s346 = scalar_select %p343, %s344, %s345
    %p349 = pneg %p343
    %p350 = scmp.eq.s32.totalorder %s19, 7
    %p351 = por %p349, %p350
    %p352 = scmp.ne.s32.totalorder %s344, %s347
    %p353 = scmp.eq.s32.totalorder %s19, 0
    %p354 = por %p352, %p353
    %p355 = scmp.ne.s32.totalorder %s344, %s347
    %p356 = scmp.eq.s32.totalorder %s24, 7
    %p357 = por %p355, %p356
    %p358 = scmp.ne.s32.totalorder %s347, %s348
    %p359 = scmp.eq.s32.totalorder %s24, 0
    %p360 = por %p358, %p359
    %p361 = scmp.ne.s32.totalorder %s347, %s348
    %p362 = scmp.eq.s32.totalorder %s25, 7
    %p363 = por %p361, %p362
    %p365 = scmp.ne.s32.totalorder %s348, %s364
    %p366 = scmp.eq.s32.totalorder %s25, 0
    %p367 = por %p365, %p366
    %p368 = scmp.le.s32.totalorder 1, %s19
    %p369 = scmp.lt.s32.totalorder %s19, 9
    %p370 = pnand %p368, %p369
    %p371 = pneg %p370
    // Predicated region
    $region9: #{unet_up_block.7} parent=5 // pred_check
      _
    $region10: #{unet_up_block.7} parent=5 // pred_check_branch
      %373 = sbr.rel (%p370) target = $region12
    $region11: #{unet_up_block.7} parent=5 // pred_region
      %s374 = ssub.s32 %s19, 1
      // Predicated region
      $region13: #{unet_up_block.7} parent=11 // pred_check
        %p375 = pneg %p220
      $region14: #{unet_up_block.7} parent=11 // pred_check_branch
        %377 = sbr.rel (%p375) target = $region16
      $region15: #{unet_up_block.7} parent=11 // pred_region
        _
      $region16: #{unet_up_block.7} parent=11 // pred_fallthru
        _
      // Predicated region
      $region17: #{unet_up_block.7} parent=11 // pred_check
        %p378 = pneg %p241
      $region18: #{unet_up_block.7} parent=11 // pred_check_branch
        %380 = sbr.rel (%p378) target = $region20
      $region19: #{unet_up_block.7} parent=11 // pred_region
        _
      $region20: #{unet_up_block.7} parent=11 // pred_fallthru
        _
      // Predicated region
      $region21: #{unet_up_block.7} parent=11 // pred_check
        %p381 = pneg %p262
      $region22: #{unet_up_block.7} parent=11 // pred_check_branch
        %383 = sbr.rel (%p381) target = $region24
      $region23: #{unet_up_block.7} parent=11 // pred_region
        _
      $region24: #{unet_up_block.7} parent=11 // pred_fallthru
        _
      // Predicated region
      $region25: #{unet_up_block.7} parent=11 // pred_check
        %p384 = pneg %p283
      $region26: #{unet_up_block.7} parent=11 // pred_check_branch
        %386 = sbr.rel (%p384) target = $region28
      $region27: #{unet_up_block.7} parent=11 // pred_region
        _
      $region28: #{unet_up_block.7} parent=11 // pred_fallthru
        _
      // Predicated region
      $region29: #{unet_up_block.7} parent=11 // pred_check
        %p387 = pneg %p304
      $region30: #{unet_up_block.7} parent=11 // pred_check_branch
        %389 = sbr.rel (%p387) target = $region32
      $region31: #{unet_up_block.7} parent=11 // pred_region
        _
      $region32: #{unet_up_block.7} parent=11 // pred_fallthru
        _
    $region12: #{unet_up_block.7} parent=5 // pred_fallthru
      _
    %p390 = scmp.lt.s32.totalorder %s19, 8
    // Predicated region
    $region33: #{unet_up_block.7} parent=5 // pred_check
      %p391 = pneg %p390
    $region34: #{unet_up_block.7} parent=5 // pred_check_branch
      %393 = sbr.rel (%p391) target = $region36
    $region35: #{unet_up_block.7} parent=5 // pred_region
      // Predicated region
      $region37: #{unet_up_block.7} parent=35 // pred_check
        %p394 = pneg %p53
      $region38: #{unet_up_block.7} parent=35 // pred_check_branch
        %396 = sbr.rel (%p394) target = $region40
      $region39: #{unet_up_block.7} parent=35 // pred_region
        %s397 = smul.u32 4, %s27
        %p398 = scmp.lt.s32.totalorder %s26, 1
        %s399 = scalar_select %p398, %s26, 1
        %p400 = scmp.lt.s32.totalorder %s397, 15
        %s401 = scalar_select %p400, %s397, 15
        %s402 = smul.addr %s401, 2
        %s403 = smul.addr %s399, 32
        %s404 = sadd.s32 %s402, %s403
        %s405 = smul.addr %s404, 8
        %s406 = scalar_lea.vmem %s0, %s405
        %s407 = smul.u32 4, %s27
      $region40: #{unet_up_block.7} parent=35 // pred_fallthru
        _
      // Predicated region
      $region41: #{unet_up_block.7} parent=35 // pred_check
        %p408 = pneg %p81
      $region42: #{unet_up_block.7} parent=35 // pred_check_branch
        %410 = sbr.rel (%p408) target = $region44
      $region43: #{unet_up_block.7} parent=35 // pred_region
        %p411 = scmp.lt.s32.totalorder %s26, 1
        %s412 = scalar_select %p411, %s26, 1
        %p413 = scmp.lt.s32.totalorder %s27, 3
        %s414 = scalar_select %p413, %s27, 3
        %s415 = smul.addr %s414, 4
        %s416 = smul.addr %s412, 16
        %s417 = sadd.s32 %s415, %s416
        %s418 = smul.addr %s417, 8
        %s419 = scalar_lea.vmem %s1, %s418
      $region44: #{unet_up_block.7} parent=35 // pred_fallthru
        _
      // Predicated region
      $region45: #{unet_up_block.7} parent=35 // pred_check
        %p420 = pneg %p109
      $region46: #{unet_up_block.7} parent=35 // pred_check_branch
        %422 = sbr.rel (%p420) target = $region48
      $region47: #{unet_up_block.7} parent=35 // pred_region
        %s423 = smul.u32 4, %s27
        %p424 = scmp.lt.s32.totalorder %s26, 1
        %s425 = scalar_select %p424, %s26, 1
        %p426 = scmp.lt.s32.totalorder %s423, 15
        %s427 = scalar_select %p426, %s423, 15
        %s428 = smul.addr %s427, 2
        %s429 = smul.addr %s425, 32
        %s430 = sadd.s32 %s428, %s429
        %s431 = smul.addr %s430, 8
        %s432 = scalar_lea.vmem %s2, %s431
        %s433 = smul.u32 4, %s27
      $region48: #{unet_up_block.7} parent=35 // pred_fallthru
        _
      // Predicated region
      $region49: #{unet_up_block.7} parent=35 // pred_check
        %p434 = pneg %p137
      $region50: #{unet_up_block.7} parent=35 // pred_check_branch
        %436 = sbr.rel (%p434) target = $region52
      $region51: #{unet_up_block.7} parent=35 // pred_region
        %p437 = scmp.lt.s32.totalorder %s26, 1
        %s438 = scalar_select %p437, %s26, 1
        %p439 = scmp.lt.s32.totalorder %s27, 3
        %s440 = scalar_select %p439, %s27, 3
        %s441 = smul.addr %s440, 4
        %s442 = smul.addr %s438, 16
        %s443 = sadd.s32 %s441, %s442
        %s444 = smul.addr %s443, 8
        %s445 = scalar_lea.vmem %s3, %s444
      $region52: #{unet_up_block.7} parent=35 // pred_fallthru
        _
      // Predicated region
      $region53: #{unet_up_block.7} parent=35 // pred_check
        %p446 = pneg %p165
      $region54: #{unet_up_block.7} parent=35 // pred_check_branch
        %448 = sbr.rel (%p446) target = $region56
      $region55: #{unet_up_block.7} parent=35 // pred_region
        %s449 = smul.u32 4, %s27
        %p450 = scmp.lt.s32.totalorder %s26, 1
        %s451 = scalar_select %p450, %s26, 1
        %p452 = scmp.lt.s32.totalorder %s449, 15
        %s453 = scalar_select %p452, %s449, 15
        %s454 = smul.addr %s453, 2
        %s455 = smul.addr %s451, 32
        %s456 = sadd.s32 %s454, %s455
        %s457 = smul.addr %s456, 4
        %s458 = scalar_lea.vmem %s4, %s457
        %s459 = smul.u32 4, %s27
      $region56: #{unet_up_block.7} parent=35 // pred_fallthru
        _
      // Predicated region
      $region57: #{unet_up_block.7} parent=35 // pred_check
        %p460 = pneg %p193
      $region58: #{unet_up_block.7} parent=35 // pred_check_branch
        %462 = sbr.rel (%p460) target = $region60
      $region59: #{unet_up_block.7} parent=35 // pred_region
        %p463 = scmp.lt.s32.totalorder %s26, 1
        %s464 = scalar_select %p463, %s26, 1
        %p465 = scmp.lt.s32.totalorder %s27, 3
        %s466 = scalar_select %p465, %s27, 3
        %s467 = smul.addr %s466, 4
        %s468 = smul.addr %s464, 16
        %s469 = sadd.s32 %s467, %s468
        %s470 = smul.addr %s469, 4
        %s471 = scalar_lea.vmem %s5, %s470
      $region60: #{unet_up_block.7} parent=35 // pred_fallthru
        _
    $region36: #{unet_up_block.7} parent=5 // pred_fallthru
      _
    %p472 = scmp.le.s32.totalorder 1, %s19
    %p473 = scmp.lt.s32.totalorder %s19, 9
    %p474 = pnand %p472, %p473
    %p475 = pneg %p474
    // Predicated region
    $region61: #{unet_up_block.7} parent=5 // pred_check
      _
    $region62: #{unet_up_block.7} parent=5 // pred_check_branch
      %477 = sbr.rel (%p474) target = $region64
    $region63: #{unet_up_block.7} parent=5 // pred_region
      %s478 = ssub.s32 %s19, 1
      %s479 = smul.u32 4, %s29
      %p480 = scmp.lt.s32.totalorder %s28, 1
      %s481 = scalar_select %p480, %s28, 1
      %p482 = scmp.lt.s32.totalorder %s479, 15
      %s483 = scalar_select %p482, %s479, 15
      %s484 = smul.addr %s483, 2
      %s485 = smul.addr %s481, 32
      %s486 = sadd.s32 %s484, %s485
      %s487 = smul.addr %s486, 8
      %s488 = scalar_lea.vmem %s0, %s487
      %p489 = pneg %p59
      %p490 = pneg %p56
      %p491 = scmp.lt.s32.totalorder %s28, 1
      %s492 = scalar_select %p491, %s28, 1
      %p493 = scmp.lt.s32.totalorder %s29, 3
      %s494 = scalar_select %p493, %s29, 3
      %s495 = smul.addr %s494, 4
      %s496 = smul.addr %s492, 16
      %s497 = sadd.s32 %s495, %s496
      %s498 = smul.addr %s497, 8
      %s499 = scalar_lea.vmem %s1, %s498
      %p500 = pneg %p87
      %p501 = pneg %p84
      %s502 = smul.u32 4, %s29
      %p503 = scmp.lt.s32.totalorder %s28, 1
      %s504 = scalar_select %p503, %s28, 1
      %p505 = scmp.lt.s32.totalorder %s502, 15
      %s506 = scalar_select %p505, %s502, 15
      %s507 = smul.addr %s506, 2
      %s508 = smul.addr %s504, 32
      %s509 = sadd.s32 %s507, %s508
      %s510 = smul.addr %s509, 8
      %s511 = scalar_lea.vmem %s2, %s510
      %p512 = pneg %p115
      %p513 = pneg %p112
      %p514 = scmp.lt.s32.totalorder %s28, 1
      %s515 = scalar_select %p514, %s28, 1
      %p516 = scmp.lt.s32.totalorder %s29, 3
      %s517 = scalar_select %p516, %s29, 3
      %s518 = smul.addr %s517, 4
      %s519 = smul.addr %s515, 16
      %s520 = sadd.s32 %s518, %s519
      %s521 = smul.addr %s520, 8
      %s522 = scalar_lea.vmem %s3, %s521
      %p523 = pneg %p143
      %p524 = pneg %p140
      %s525 = smul.u32 4, %s29
      %p526 = scmp.lt.s32.totalorder %s28, 1
      %s527 = scalar_select %p526, %s28, 1
      %p528 = scmp.lt.s32.totalorder %s525, 15
      %s529 = scalar_select %p528, %s525, 15
      %s530 = smul.addr %s529, 2
      %s531 = smul.addr %s527, 32
      %s532 = sadd.s32 %s530, %s531
      %s533 = smul.addr %s532, 4
      %s534 = scalar_lea.vmem %s4, %s533
      %p535 = pneg %p171
      %p536 = pneg %p168
      %p537 = scmp.lt.s32.totalorder %s28, 1
      %s538 = scalar_select %p537, %s28, 1
      %p539 = scmp.lt.s32.totalorder %s29, 3
      %s540 = scalar_select %p539, %s29, 3
      %s541 = smul.addr %s540, 4
      %s542 = smul.addr %s538, 16
      %s543 = sadd.s32 %s541, %s542
      %s544 = smul.addr %s543, 4
      %s545 = scalar_lea.vmem %s5, %s544
      %p546 = pneg %p199
      %p547 = pneg %p196
      %p548 = pneg %p220
      %p549 = pneg %p217
      %p550 = pneg %p241
      %p551 = pneg %p238
      %p552 = pneg %p262
      %p553 = pneg %p259
      %p554 = pneg %p283
      %p555 = pneg %p280
      %p556 = pneg %p304
      %p557 = pneg %p301
      %p558 = pneg %p332
      %p559 = pneg %p329
      %s560 = smul.u32 4, %s29
      %p561 = scmp.lt.s32.totalorder %s28, 1
      %s562 = scalar_select %p561, %s28, 1
      %p563 = scmp.lt.s32.totalorder %s560, 15
      %s564 = scalar_select %p563, %s560, 15
      %s565 = smul.addr %s564, 2
      %s566 = smul.addr %s562, 32
      %s567 = sadd.s32 %s565, %s566
      %s568 = smul.addr %s567, 8
      %s569 = scalar_lea.vmem %s11, %s568
      %p570 = pneg %p360
      %p571 = pneg %p357
      %p572 = scmp.lt.s32.totalorder %s28, 1
      %s573 = scalar_select %p572, %s28, 1
      %p574 = scmp.lt.s32.totalorder %s29, 3
      %s575 = scalar_select %p574, %s29, 3
      %s576 = smul.addr %s573, 4
      %s577 = sadd.s32 %s575, %s576
      %s578 = smul.addr %s577, 2
      %s579 = scalar_lea.vmem %s12, %s578
      %s580 = smul.u32 4, %s29
      %p581 = scmp.lt.s32.totalorder %s28, 1
      %s582 = scalar_select %p581, %s28, 1
      %p583 = scmp.lt.s32.totalorder %s580, 15
      %s584 = scalar_select %p583, %s580, 15
      %s585 = smul.addr %s584, 2
      %s586 = smul.addr %s582, 32
      %s587 = sadd.s32 %s585, %s586
      %s588 = smul.addr %s587, 8
      %s589 = scalar_lea.vmem %s0, %s588
      %s590 = smul.u32 4, %s29
      %p591 = scmp.lt.s32.totalorder %s28, 1
      %s592 = scalar_select %p591, %s28, 1
      %p593 = scmp.lt.s32.totalorder %s29, 3
      %s594 = scalar_select %p593, %s29, 3
      %s595 = smul.addr %s594, 4
      %s596 = smul.addr %s592, 16
      %s597 = sadd.s32 %s595, %s596
      %s598 = smul.addr %s597, 8
      %s599 = scalar_lea.vmem %s1, %s598
      %s600 = smul.u32 4, %s29
      %p601 = scmp.lt.s32.totalorder %s28, 1
      %s602 = scalar_select %p601, %s28, 1
      %p603 = scmp.lt.s32.totalorder %s600, 15
      %s604 = scalar_select %p603, %s600, 15
      %s605 = smul.addr %s604, 2
      %s606 = smul.addr %s602, 32
      %s607 = sadd.s32 %s605, %s606
      %s608 = smul.addr %s607, 8
      %s609 = scalar_lea.vmem %s2, %s608
      %s610 = smul.u32 4, %s29
      %p611 = scmp.lt.s32.totalorder %s28, 1
      %s612 = scalar_select %p611, %s28, 1
      %p613 = scmp.lt.s32.totalorder %s29, 3
      %s614 = scalar_select %p613, %s29, 3
      %s615 = smul.addr %s614, 4
      %s616 = smul.addr %s612, 16
      %s617 = sadd.s32 %s615, %s616
      %s618 = smul.addr %s617, 8
      %s619 = scalar_lea.vmem %s3, %s618
      %s620 = smul.u32 4, %s29
      %p621 = scmp.lt.s32.totalorder %s28, 1
      %s622 = scalar_select %p621, %s28, 1
      %p623 = scmp.lt.s32.totalorder %s620, 15
      %s624 = scalar_select %p623, %s620, 15
      %s625 = smul.addr %s624, 2
      %s626 = smul.addr %s622, 32
      %s627 = sadd.s32 %s625, %s626
      %s628 = smul.addr %s627, 4
      %s629 = scalar_lea.vmem %s4, %s628
      %s630 = smul.u32 4, %s29
      %p631 = scmp.lt.s32.totalorder %s28, 1
      %s632 = scalar_select %p631, %s28, 1
      %p633 = scmp.lt.s32.totalorder %s29, 3
      %s634 = scalar_select %p633, %s29, 3
      %s635 = smul.addr %s634, 4
      %s636 = smul.addr %s632, 16
      %s637 = sadd.s32 %s635, %s636
      %s638 = smul.addr %s637, 4
      %s639 = scalar_lea.vmem %s5, %s638
      %s640 = smul.u32 4, %s29
      %p641 = scmp.lt.s32.totalorder %s28, 1
      %s642 = scalar_select %p641, %s28, 1
      %p643 = scmp.lt.s32.totalorder %s640, 15
      %s644 = scalar_select %p643, %s640, 15
      %s645 = smul.addr %s644, 2
      %s646 = smul.addr %s642, 32
      %s647 = sadd.s32 %s645, %s646
      %s648 = smul.addr %s647, 8
      %s649 = scalar_lea.vmem %s11, %s648
      %s650 = smul.u32 4, %s29
      %p651 = scmp.lt.s32.totalorder %s28, 1
      %s652 = scalar_select %p651, %s28, 1
      %p653 = scmp.lt.s32.totalorder %s29, 3
      %s654 = scalar_select %p653, %s29, 3
      %s655 = smul.addr %s652, 4
      %s656 = sadd.s32 %s654, %s655
      %s657 = smul.addr %s656, 2
      %s658 = scalar_lea.vmem %s12, %s657
      %v660 = vld [vmem:[%s6] sm:$0x1]
      %v661 = vld [vmem:[%s7] sm:$0x1]
      %v662 = vld [vmem:[%s599] sm:$0xff]
      %v663 = vld [vmem:[%s599 + $0x8] sm:$0xff]
      %v664 = vld [vmem:[%s589] sm:$0xff]
      %v665 = vld [vmem:[%s589 + $0x8] sm:$0xff]
      %v666 = vld [vmem:[%s589 + $0x10] sm:$0xff]
      %v667 = vld [vmem:[%s589 + $0x18] sm:$0xff]
      %v668 = vld [vmem:[%s589 + $0x20] sm:$0xff]
      %v669 = vld [vmem:[%s589 + $0x28] sm:$0xff]
      %v670 = vld [vmem:[%s589 + $0x30] sm:$0xff]
      %v671 = vld [vmem:[%s589 + $0x38] sm:$0xff]
      %s672 = scalar_lea.vmem %s599, 16
      %v673 = vld [vmem:[%s672] sm:$0xff]
      %v674 = vld [vmem:[%s672 + $0x8] sm:$0xff]
      %v676 = vlaneseq
      %v677 = vshrl.u32 %v676, 7
      %v678 = vsub.s32 0, %v677
      %v679 = vrot.slane %v660, %v678
      %v681 = vmul.f32 %v662, %v679
      %v682 = vmul.f32 %v663, %v679
      %v683 = vmul.f32 %v664, %v679
      %v684 = vmul.f32 %v665, %v679
      %v685 = vmul.f32 %v666, %v679
      %v686 = vmul.f32 %v667, %v679
      %v687 = vmul.f32 %v668, %v679
      %v688 = vmul.f32 %v669, %v679
      %v689 = vmul.f32 %v670, %v679
      %v690 = vmul.f32 %v671, %v679
      %v691 = vmul.f32 %v673, %v679
      %v692 = vmul.f32 %v674, %v679
      %v694 = vlaneseq
      %v695 = vshrl.u32 %v694, 7
      %v696 = vsub.s32 0, %v695
      %v697 = vrot.slane %v661, %v696
      %v699 = vadd.f32 %v681, %v697
      %v700 = vadd.f32 %v682, %v697
      %v701 = vadd.f32 %v683, %v697
      %v702 = vadd.f32 %v684, %v697
      %v703 = vadd.f32 %v685, %v697
      %v704 = vadd.f32 %v686, %v697
      %v705 = vadd.f32 %v687, %v697
      %v706 = vadd.f32 %v688, %v697
      %v707 = vadd.f32 %v689, %v697
      %v708 = vadd.f32 %v690, %v697
      %v709 = vadd.f32 %v691, %v697
      %v710 = vadd.f32 %v692, %v697
      %v711 = vmul.f32 %v699, 0.2
      %v712 = vmul.f32 %v700, 0.2
      %v713 = vmul.f32 %v701, 0.2
      %v714 = vmul.f32 %v702, 0.2
      %v715 = vmul.f32 %v703, 0.2
      %v716 = vmul.f32 %v704, 0.2
      %v717 = vmul.f32 %v705, 0.2
      %v718 = vmul.f32 %v706, 0.2
      %v719 = vmul.f32 %v707, 0.2
      %v720 = vmul.f32 %v708, 0.2
      %v721 = vmul.f32 %v709, 0.2
      %v722 = vmul.f32 %v710, 0.2
      %v723 = vmax.f32 %v699, %v711
      %v724 = vmax.f32 %v700, %v712
      %v725 = vmax.f32 %v701, %v713
      %v726 = vmax.f32 %v702, %v714
      %v727 = vmax.f32 %v703, %v715
      %v728 = vmax.f32 %v704, %v716
      %v729 = vmax.f32 %v705, %v717
      %v730 = vmax.f32 %v706, %v718
      %v731 = vmax.f32 %v707, %v719
      %v732 = vmax.f32 %v708, %v720
      %v733 = vmax.f32 %v709, %v721
      %v734 = vmax.f32 %v710, %v722
      %v735 = vld [vmem:[%s639] sm:$0xf]
      %v736 = vld [vmem:[%s639 + $0x4] sm:$0xf]
      %v737 = vld [vmem:[%s629] sm:$0xf]
      %v738 = vld [vmem:[%s629 + $0x4] sm:$0xf]
      %v739 = vld [vmem:[%s629 + $0x8] sm:$0xf]
      %v740 = vld [vmem:[%s629 + $0xc] sm:$0xf]
      %v741 = vld [vmem:[%s629 + $0x10] sm:$0xf]
      %v742 = vld [vmem:[%s629 + $0x14] sm:$0xf]
      %v743 = vld [vmem:[%s629 + $0x18] sm:$0xf]
      %v744 = vld [vmem:[%s629 + $0x1c] sm:$0xf]
      %s745 = scalar_lea.vmem %s639, 8
      %v746 = vld [vmem:[%s745] sm:$0xf]
      %v747 = vld [vmem:[%s745 + $0x4] sm:$0xf]
      %v748 = vunpack.c.l.bf16 %v735
      %v749 = vunpack.c.l.bf16 %v736
      %v750 = vunpack.c.l.bf16 %v737
      %v751 = vunpack.c.l.bf16 %v738
      %v752 = vunpack.c.l.bf16 %v739
      %v753 = vunpack.c.l.bf16 %v740
      %v754 = vunpack.c.l.bf16 %v741
      %v755 = vunpack.c.l.bf16 %v742
      %v756 = vunpack.c.l.bf16 %v743
      %v757 = vunpack.c.l.bf16 %v744
      %v758 = vunpack.c.l.bf16 %v746
      %v759 = vunpack.c.l.bf16 %v747
      %v760 = vmul.f32 %v723, %v748
      %v761 = vmul.f32 %v724, %v749
      %v762 = vmul.f32 %v725, %v750
      %v763 = vmul.f32 %v726, %v751
      %v764 = vmul.f32 %v727, %v752
      %v765 = vmul.f32 %v728, %v753
      %v766 = vmul.f32 %v729, %v754
      %v767 = vmul.f32 %v730, %v755
      %v768 = vmul.f32 %v731, %v756
      %v769 = vmul.f32 %v732, %v757
      %v770 = vmul.f32 %v733, %v758
      %v771 = vmul.f32 %v734, %v759
      %p772 = scmp.gt.s32.totalorder %s29, 0
      %s773 = scalar_select %p772, 1, 0
      %v774 = vstv %s773
      %vm775 = vcmp.eq.s32.totalorder %v774, 1
      %p776 = scmp.lt.s32.totalorder %s29, 3
      %s777 = scalar_select %p776, 1, 0
      %v778 = vstv %s777
      %vm779 = vcmp.eq.s32.totalorder %v778, 1
      %v780 = vsel %vm775, 1, 0
      %v781 = vsel %vm779, 1, 0
      %vm782 = vcmp.eq.s32.totalorder %v780, 1
      %vm783 = vcmp.eq.s32.totalorder %v781, 1
      %v784 = vsel %vm782, %v760, 0.0
      %v785 = vsel %vm782, %v761, 0.0
      %v786 = vsel 1, %v762, 0.0
      %v787 = vsel 1, %v763, 0.0
      %v788 = vsel 1, %v764, 0.0
      %v789 = vsel 1, %v765, 0.0
      %v790 = vsel 1, %v766, 0.0
      %v791 = vsel 1, %v767, 0.0
      %v792 = vsel 1, %v768, 0.0
      %v793 = vsel 1, %v769, 0.0
      %v794 = vsel %vm783, %v770, 0.0
      %v795 = vsel %vm783, %v771, 0.0
      %v796 = vpack.c.bf16 %v785, %v784
      %v797 = vpack.c.bf16 %v787, %v786
      %v798 = vpack.c.bf16 %v789, %v788
      %v799 = vpack.c.bf16 %v791, %v790
      %v800 = vpack.c.bf16 %v793, %v792
      %v801 = vpack.c.bf16 %v795, %v794
      %v803 = vshrl.u32 %v796, 16
      %v805 = vrot.slane %v803, 7
      %v806 = vshll.u32 %v796, 16
      %v808 = vor.u32 %v805, %v806
      %v810 = vshrl.u32 %v797, 16
      %v812 = vrot.slane %v810, 7
      %v813 = vshll.u32 %v797, 16
      %v815 = vor.u32 %v812, %v813
      %v817 = vshrl.u32 %v798, 16
      %v819 = vrot.slane %v817, 7
      %v820 = vshll.u32 %v798, 16
      %v822 = vor.u32 %v819, %v820
      %v824 = vshrl.u32 %v799, 16
      %v826 = vrot.slane %v824, 7
      %v827 = vshll.u32 %v799, 16
      %v829 = vor.u32 %v826, %v827
      %v831 = vshrl.u32 %v800, 16
      %v833 = vrot.slane %v831, 7
      %v834 = vshll.u32 %v800, 16
      %v836 = vor.u32 %v833, %v834
      %v838 = vshrl.u32 %v801, 16
      %v840 = vrot.slane %v838, 7
      %v841 = vshll.u32 %v801, 16
      %v843 = vor.u32 %v840, %v841
      %vm856 = vcmask 1040384
      %vm857 = vsmask.f32 256
      %vm858 = vmand %vm856, %vm857
      %v859 = vsel %vm858, 0, %v808
      %v860 = vsel %vm858, 0, %v815
      %v861 = vsel %vm858, 0, %v822
      %v862 = vsel %vm858, 0, %v829
      %v863 = vsel %vm858, 0, %v836
      %v864 = vsel %vm858, 0, %v843
      %v865 = vsel %vm858, %v805, 0
      %v866 = vsel %vm858, %v812, 0
      %v867 = vsel %vm858, %v819, 0
      %v868 = vsel %vm858, %v826, 0
      %v869 = vsel %vm858, %v833, 0
      %v870 = vsel %vm858, %v840, 0
      %v871 = vld [vmem:[%s619] sm:$0xff]
      %v872 = vld [vmem:[%s619 + $0x8] sm:$0xff]
      %v873 = vld [vmem:[%s609] sm:$0xff]
      %v874 = vld [vmem:[%s609 + $0x8] sm:$0xff]
      %v875 = vld [vmem:[%s609 + $0x10] sm:$0xff]
      %v876 = vld [vmem:[%s609 + $0x18] sm:$0xff]
      %v877 = vld [vmem:[%s609 + $0x20] sm:$0xff]
      %v878 = vld [vmem:[%s609 + $0x28] sm:$0xff]
      %v879 = vld [vmem:[%s609 + $0x30] sm:$0xff]
      %v880 = vld [vmem:[%s609 + $0x38] sm:$0xff]
      %s881 = scalar_lea.vmem %s619, 16
      %v882 = vld [vmem:[%s881] sm:$0xff]
      %v883 = vld [vmem:[%s881 + $0x8] sm:$0xff]
      %v884 = vpack.c.bf16 %v872, %v871
      %v885 = vpack.c.bf16 %v874, %v873
      %v886 = vpack.c.bf16 %v876, %v875
      %v887 = vpack.c.bf16 %v878, %v877
      %v888 = vpack.c.bf16 %v880, %v879
      %v889 = vpack.c.bf16 %v883, %v882
      %v891 = vshrl.u32 %v884, 16
      %v893 = vrot.slane %v891, 7
      %v894 = vshll.u32 %v884, 16
      %v896 = vor.u32 %v893, %v894
      %v898 = vshrl.u32 %v885, 16
      %v900 = vrot.slane %v898, 7
      %v901 = vshll.u32 %v885, 16
      %v903 = vor.u32 %v900, %v901
      %v905 = vshrl.u32 %v886, 16
      %v907 = vrot.slane %v905, 7
      %v908 = vshll.u32 %v886, 16
      %v910 = vor.u32 %v907, %v908
      %v912 = vshrl.u32 %v887, 16
      %v914 = vrot.slane %v912, 7
      %v915 = vshll.u32 %v887, 16
      %v917 = vor.u32 %v914, %v915
      %v919 = vshrl.u32 %v888, 16
      %v921 = vrot.slane %v919, 7
      %v922 = vshll.u32 %v888, 16
      %v924 = vor.u32 %v921, %v922
      %v926 = vshrl.u32 %v889, 16
      %v928 = vrot.slane %v926, 7
      %v929 = vshll.u32 %v889, 16
      %v931 = vor.u32 %v928, %v929
      %v944 = vsel %vm858, 0, %v896
      %v945 = vsel %vm858, 0, %v903
      %v946 = vsel %vm858, 0, %v910
      %v947 = vsel %vm858, 0, %v917
      %v948 = vsel %vm858, 0, %v924
      %v949 = vsel %vm858, 0, %v931
      %v950 = vsel %vm858, %v893, 0
      %v951 = vsel %vm858, %v900, 0
      %v952 = vsel %vm858, %v907, 0
      %v953 = vsel %vm858, %v914, 0
      %v954 = vsel %vm858, %v921, 0
      %v955 = vsel %vm858, %v928, 0
      %v956 = vld [vmem:[%s8] sm:$0xf]
      %v957 = vld [vmem:[%s8 + $0x4] sm:$0xf]
      %v958 = vld [vmem:[%s8 + $0x8] sm:$0xf]
      %v959 = vld [vmem:[%s8 + $0xc] sm:$0xf]
      %v960 = vld [vmem:[%s8 + $0x10] sm:$0xf]
      %v961 = vld [vmem:[%s8 + $0x14] sm:$0xf]
      %v962 = vld [vmem:[%s8 + $0x18] sm:$0xf]
      %v963 = vld [vmem:[%s8 + $0x1c] sm:$0xf]
      %v964 = vld [vmem:[%s8 + $0x20] sm:$0xf]
      %v965 = vld [vmem:[%s8 + $0x24] sm:$0xf]
      %v966 = vld [vmem:[%s8 + $0x28] sm:$0xf]
      %v967 = vld [vmem:[%s8 + $0x2c] sm:$0xf]
      %v968 = vld [vmem:[%s8 + $0x30] sm:$0xf]
      %v969 = vld [vmem:[%s8 + $0x34] sm:$0xf]
      %v970 = vld [vmem:[%s8 + $0x38] sm:$0xf]
      %v971 = vld [vmem:[%s8 + $0x3c] sm:$0xf]
      %vm972 = vsmask.f32 7424
      %v974 = vshrl.u32 %v859, 16
      %v976 = vshll.u32 %v859, 16
      %v978 = vrot.slane %v976, 1
      %v979 = vor.u32 %v974, %v978
      %v981 = vshll.u32 %v865, 16
      %v983 = vrot.slane %v981, 1
      %v984 = vsel %vm972, %v979, %v983
      %v986 = vshrl.u32 %v860, 16
      %v988 = vshll.u32 %v860, 16
      %v990 = vrot.slane %v988, 1
      %v991 = vor.u32 %v986, %v990
      %v993 = vshll.u32 %v866, 16
      %v995 = vrot.slane %v993, 1
      %v996 = vsel %vm972, %v991, %v995
      %v998 = vshrl.u32 %v861, 16
      %v1000 = vshll.u32 %v861, 16
      %v1002 = vrot.slane %v1000, 1
      %v1003 = vor.u32 %v998, %v1002
      %v1005 = vshll.u32 %v867, 16
      %v1007 = vrot.slane %v1005, 1
      %v1008 = vsel %vm972, %v1003, %v1007
      %v1010 = vshrl.u32 %v862, 16
      %v1012 = vshll.u32 %v862, 16
      %v1014 = vrot.slane %v1012, 1
      %v1015 = vor.u32 %v1010, %v1014
      %v1017 = vshll.u32 %v868, 16
      %v1019 = vrot.slane %v1017, 1
      %v1020 = vsel %vm972, %v1015, %v1019
      %s1025 = scalar_lea.vmem %s8, 64
      %v1026 = vld [vmem:[%s1025] sm:$0xf]
      %v1027 = vld [vmem:[%s1025 + $0x4] sm:$0xf]
      %v1028 = vld [vmem:[%s1025 + $0x8] sm:$0xf]
      %v1029 = vld [vmem:[%s1025 + $0xc] sm:$0xf]
      %v1030 = vld [vmem:[%s1025 + $0x10] sm:$0xf]
      %v1031 = vld [vmem:[%s1025 + $0x14] sm:$0xf]
      %v1032 = vld [vmem:[%s1025 + $0x18] sm:$0xf]
      %v1033 = vld [vmem:[%s1025 + $0x1c] sm:$0xf]
      %v1034 = vld [vmem:[%s1025 + $0x20] sm:$0xf]
      %v1035 = vld [vmem:[%s1025 + $0x24] sm:$0xf]
      %v1036 = vld [vmem:[%s1025 + $0x28] sm:$0xf]
      %v1037 = vld [vmem:[%s1025 + $0x2c] sm:$0xf]
      %v1038 = vld [vmem:[%s1025 + $0x30] sm:$0xf]
      %v1039 = vld [vmem:[%s1025 + $0x34] sm:$0xf]
      %v1040 = vld [vmem:[%s1025 + $0x38] sm:$0xf]
      %v1041 = vld [vmem:[%s1025 + $0x3c] sm:$0xf]
      %v1058 = vunpack.c.l.b16 %v1026
      %v1059 = vunpack.c.l.b16 %v1027
      %v1060 = vunpack.c.l.b16 %v1028
      %v1061 = vunpack.c.l.b16 %v1029
      %v1062 = vunpack.c.l.b16 %v1030
      %v1063 = vunpack.c.l.b16 %v1031
      %v1064 = vunpack.c.l.b16 %v1032
      %v1065 = vunpack.c.l.b16 %v1033
      %v1066 = vunpack.c.l.b16 %v1034
      %v1067 = vunpack.c.l.b16 %v1035
      %v1068 = vunpack.c.l.b16 %v1036
      %v1069 = vunpack.c.l.b16 %v1037
      %v1070 = vunpack.c.l.b16 %v1038
      %v1071 = vunpack.c.l.b16 %v1039
      %v1072 = vunpack.c.l.b16 %v1040
      %v1073 = vunpack.c.l.b16 %v1041
      %v1074 = vpack.c.b16 %v1059, %v1058
      %v1075 = vpack.c.b16 %v1061, %v1060
      %v1076 = vpack.c.b16 %v1063, %v1062
      %v1077 = vpack.c.b16 %v1065, %v1064
      %v1078 = vpack.c.b16 %v1067, %v1066
      %v1079 = vpack.c.b16 %v1069, %v1068
      %v1080 = vpack.c.b16 %v1071, %v1070
      %v1081 = vpack.c.b16 %v1073, %v1072
      %1090 = vmatprep.subr.bf16.mxu0 0
      %1091 = vmatpush1.bf16.msra.mxu0 %v1074
      %1092 = vmatprep.subr.bf16.mxu0 0
      %1093 = vmatpush1.bf16.msra.mxu0 %v1075
      %1094 = vmatprep.subr.bf16.mxu0 0
      %1095 = vmatpush1.bf16.msra.mxu0 %v1076
      %1096 = vmatprep.subr.bf16.mxu0 0
      %1097 = vmatpush1.bf16.msra.mxu0 %v1077
      %1098 = vmatprep.subr.bf16.mxu0 0
      %1099 = vmatpush1.bf16.msra.mxu0 %v1078
      %1100 = vmatprep.subr.bf16.mxu0 0
      %1101 = vmatpush1.bf16.msra.mxu0 %v1079
      %1102 = vmatprep.subr.bf16.mxu0 0
      %1103 = vmatpush1.bf16.msra.mxu0 %v1080
      %1104 = vmatprep.subr.bf16.mxu0 0
      %1105 = vmatpush1.bf16.msra.mxu0 %v1081
      %1106 = vmatprep.subr.bf16.mxu0 0
      %1107 = vmatpush1.bf16.msra.mxu0 0
      %1108 = vmatprep.subr.bf16.mxu0 0
      %1109 = vmatpush1.bf16.msra.mxu0 0
      %1110 = vmatprep.subr.bf16.mxu0 0
      %1111 = vmatpush1.bf16.msra.mxu0 0
      %1112 = vmatprep.subr.bf16.mxu0 0
      %1113 = vmatpush1.bf16.msra.mxu0 0
      %1114 = vmatprep.subr.bf16.mxu0 0
      %1115 = vmatpush1.bf16.msra.mxu0 0
      %1116 = vmatprep.subr.bf16.mxu0 0
      %1117 = vmatpush1.bf16.msra.mxu0 0
      %1118 = vmatprep.subr.bf16.mxu0 0
      %1119 = vmatpush1.bf16.msra.mxu0 0
      %1120 = vmatprep.subr.bf16.mxu0 0
      %1121 = vmatpush1.bf16.msra.mxu0 0
      %1122 = vmatprep.mubr.bf16.mxu0 0
      %1123 = vmatmul.mubr.bf16.gmra.mrb[0].mxu0 %v984
      %v1124 = vpop.f32.mrb[0].mxu0
      %v1125 = vadd.f32 0.0, %v1124
      %v1126 = vpop.f32.mrb[0].mxu0
      %v1127 = vpop.f32.mrb[0].mxu0
      %v1128 = vadd.f32 0.0, %v1127
      %v1129 = vpop.f32.mrb[0].mxu0
      %1130 = vmatprep.mubr.bf16.mxu0 0
      %1131 = vmatmul.mubr.bf16.gmra.mrb[0].mxu0 %v996
      %v1132 = vpop.f32.mrb[0].mxu0
      %v1133 = vadd.f32 0.0, %v1132
      %v1134 = vpop.f32.mrb[0].mxu0
      %v1135 = vpop.f32.mrb[0].mxu0
      %v1136 = vadd.f32 0.0, %v1135
      %v1137 = vpop.f32.mrb[0].mxu0
      %1138 = vmatprep.mubr.bf16.mxu0 0
      %1139 = vmatmul.mubr.bf16.gmra.mrb[0].mxu0 %v1008
      %v1140 = vpop.f32.mrb[0].mxu0
      %v1141 = vadd.f32 0.0, %v1140
      %v1142 = vpop.f32.mrb[0].mxu0
      %v1143 = vpop.f32.mrb[0].mxu0
      %v1144 = vadd.f32 0.0, %v1143
      %v1145 = vpop.f32.mrb[0].mxu0
      %1146 = vmatprep.mubr.bf16.mxu0 0
      %1147 = vmatmul.mubr.bf16.gmra.mrb[0].mxu0 %v1020
      %v1148 = vpop.f32.mrb[0].mxu0
      %v1149 = vadd.f32 0.0, %v1148
      %v1150 = vpop.f32.mrb[0].mxu0
      %v1151 = vpop.f32.mrb[0].mxu0
      %v1152 = vadd.f32 0.0, %v1151
      %v1153 = vpop.f32.mrb[0].mxu0
      %1154 = vdwg.mxu0
      %v1171 = vunpack.c.l.b16 %v956
      %v1172 = vunpack.c.l.b16 %v957
      %v1173 = vunpack.c.l.b16 %v958
      %v1174 = vunpack.c.l.b16 %v959
      %v1175 = vunpack.c.l.b16 %v960
      %v1176 = vunpack.c.l.b16 %v961
      %v1177 = vunpack.c.l.b16 %v962
      %v1178 = vunpack.c.l.b16 %v963
      %v1179 = vunpack.c.l.b16 %v964
      %v1180 = vunpack.c.l.b16 %v965
      %v1181 = vunpack.c.l.b16 %v966
      %v1182 = vunpack.c.l.b16 %v967
      %v1183 = vunpack.c.l.b16 %v968
      %v1184 = vunpack.c.l.b16 %v969
      %v1185 = vunpack.c.l.b16 %v970
      %v1186 = vunpack.c.l.b16 %v971
      %v1187 = vpack.c.b16 %v1172, %v1171
      %v1188 = vpack.c.b16 %v1174, %v1173
      %v1189 = vpack.c.b16 %v1176, %v1175
      %v1190 = vpack.c.b16 %v1178, %v1177
      %v1191 = vpack.c.b16 %v1180, %v1179
      %v1192 = vpack.c.b16 %v1182, %v1181
      %v1193 = vpack.c.b16 %v1184, %v1183
      %v1194 = vpack.c.b16 %v1186, %v1185
      %1203 = vmatprep.subr.bf16.mxu0 0
      %1204 = vmatpush1.bf16.msra.mxu0 %v1187
      %1205 = vmatprep.subr.bf16.mxu0 0
      %1206 = vmatpush1.bf16.msra.mxu0 %v1188
      %1207 = vmatprep.subr.bf16.mxu0 0
      %1208 = vmatpush1.bf16.msra.mxu0 %v1189
      %1209 = vmatprep.subr.bf16.mxu0 0
      %1210 = vmatpush1.bf16.msra.mxu0 %v1190
      %1211 = vmatprep.subr.bf16.mxu0 0
      %1212 = vmatpush1.bf16.msra.mxu0 %v1191
      %1213 = vmatprep.subr.bf16.mxu0 0
      %1214 = vmatpush1.bf16.msra.mxu0 %v1192
      %1215 = vmatprep.subr.bf16.mxu0 0
      %1216 = vmatpush1.bf16.msra.mxu0 %v1193
      %1217 = vmatprep.subr.bf16.mxu0 0
      %1218 = vmatpush1.bf16.msra.mxu0 %v1194
      %1219 = vmatprep.subr.bf16.mxu0 0
      %1220 = vmatpush1.bf16.msra.mxu0 0
      %1221 = vmatprep.subr.bf16.mxu0 0
      %1222 = vmatpush1.bf16.msra.mxu0 0
      %1223 = vmatprep.subr.bf16.mxu0 0
      %1224 = vmatpush1.bf16.msra.mxu0 0
      %1225 = vmatprep.subr.bf16.mxu0 0
      %1226 = vmatpush1.bf16.msra.mxu0 0
      %1227 = vmatprep.subr.bf16.mxu0 0
      %1228 = vmatpush1.bf16.msra.mxu0 0
      %1229 = vmatprep.subr.bf16.mxu0 0
      %1230 = vmatpush1.bf16.msra.mxu0 0
      %1231 = vmatprep.subr.bf16.mxu0 0
      %1232 = vmatpush1.bf16.msra.mxu0 0
      %1233 = vmatprep.subr.bf16.mxu0 0
      %1234 = vmatpush1.bf16.msra.mxu0 0
      %1235 = vmatprep.mubr.bf16.mxu0 0
      %1236 = vmatmul.mubr.bf16.gmra.mrb[0].mxu0 %v859
      %v1237 = vpop.f32.mrb[0].mxu0
      %v1238 = vadd.f32 %v1125, %v1237
      %v1239 = vpop.f32.mrb[0].mxu0
      %v1240 = vpop.f32.mrb[0].mxu0
      %v1241 = vadd.f32 %v1128, %v1240
      %v1242 = vpop.f32.mrb[0].mxu0
      %1243 = vmatprep.mubr.bf16.mxu0 0
      %1244 = vmatmul.mubr.bf16.gmra.mrb[0].mxu0 %v860
      %v1245 = vpop.f32.mrb[0].mxu0
      %v1246 = vadd.f32 %v1133, %v1245
      %v1247 = vpop.f32.mrb[0].mxu0
      %v1248 = vpop.f32.mrb[0].mxu0
      %v1249 = vadd.f32 %v1136, %v1248
      %v1250 = vpop.f32.mrb[0].mxu0
      %1251 = vmatprep.mubr.bf16.mxu0 0
      %1252 = vmatmul.mubr.bf16.gmra.mrb[0].mxu0 %v861
      %v1253 = vpop.f32.mrb[0].mxu0
      %v1254 = vadd.f32 %v1141, %v1253
      %v1255 = vpop.f32.mrb[0].mxu0
      %v1256 = vpop.f32.mrb[0].mxu0
      %v1257 = vadd.f32 %v1144, %v1256
      %v1258 = vpop.f32.mrb[0].mxu0
      %1259 = vmatprep.mubr.bf16.mxu0 0
      %1260 = vmatmul.mubr.bf16.gmra.mrb[0].mxu0 %v862
      %v1261 = vpop.f32.mrb[0].mxu0
      %v1262 = vadd.f32 %v1149, %v1261
      %v1263 = vpop.f32.mrb[0].mxu0
      %v1264 = vpop.f32.mrb[0].mxu0
      %v1265 = vadd.f32 %v1152, %v1264
      %v1266 = vpop.f32.mrb[0].mxu0
      %1267 = vdwg.mxu0
      %vm1276 = vcmask 1046528
      %v1277 = vrot.slane %v859, 1
      %v1278 = vrot.slane %v865, 1
      %v1279 = vsel %vm1276, %v1277, %v1278
      %v1280 = vrot.slane %v860, 1
      %v1281 = vrot.slane %v866, 1
      %v1282 = vsel %vm1276, %v1280, %v1281
      %v1283 = vrot.slane %v861, 1
      %v1284 = vrot.slane %v867, 1
      %v1285 = vsel %vm1276, %v1283, %v1284
      %v1286 = vrot.slane %v862, 1
      %v1287 = vrot.slane %v868, 1
      %v1288 = vsel %vm1276, %v1286, %v1287
      %s1293 = scalar_lea.vmem %s8, 128
      %v1294 = vld [vmem:[%s1293] sm:$0xf]
      %v1295 = vld [vmem:[%s1293 + $0x4] sm:$0xf]
      %v1296 = vld [vmem:[%s1293 + $0x8] sm:$0xf]
      %v1297 = vld [vmem:[%s1293 + $0xc] sm:$0xf]
      %v1298 = vld [vmem:[%s1293 + $0x10] sm:$0xf]
      %v1299 = vld [vmem:[%s1293 + $0x14] sm:$0xf]
      %v1300 = vld [vmem:[%s1293 + $0x18] sm:$0xf]
      %v1301 = vld [vmem:[%s1293 + $0x1c] sm:$0xf]
      %v1302 = vld [vmem:[%s1293 + $0x20] sm:$0xf]
      %v1303 = vld [vmem:[%s1293 + $0x24] sm:$0xf]
      %v1304 = vld [vmem:[%s1293 + $0x28] sm:$0xf]
      %v1305 = vld [vmem:[%s1293 + $0x2c] sm:$0xf]
      %v1306 = vld [vmem:[%s1293 + $0x30] sm:$0xf]
      %v1307 = vld [vmem:[%s1293 + $0x34] sm:$0xf]
      %v1308 = vld [vmem:[%s1293 + $0x38] sm:$0xf]
      %v1309 = vld [vmem:[%s1293 + $0x3c] sm:$0xf]
      %v1326 = vunpack.c.l.b16 %v1294
      %v1327 = vunpack.c.l.b16 %v1295
      %v1328 = vunpack.c.l.b16 %v1296
      %v1329 = vunpack.c.l.b16 %v1297
      %v1330 = vunpack.c.l.b16 %v1298
      %v1331 = vunpack.c.l.b16 %v1299
      %v1332 = vunpack.c.l.b16 %v1300
      %v1333 = vunpack.c.l.b16 %v1301
      %v1334 = vunpack.c.l.b16 %v1302
      %v1335 = vunpack.c.l.b16 %v1303
      %v1336 = vunpack.c.l.b16 %v1304
      %v1337 = vunpack.c.l.b16 %v1305
      %v1338 = vunpack.c.l.b16 %v1306
      %v1339 = vunpack.c.l.b16 %v1307
      %v1340 = vunpack.c.l.b16 %v1308
      %v1341 = vunpack.c.l.b16 %v1309
      %v1342 = vpack.c.b16 %v1327, %v1326
      %v1343 = vpack.c.b16 %v1329, %v1328
      %v1344 = vpack.c.b16 %v1331, %v1330
      %v1345 = vpack.c.b16 %v1333, %v1332
      %v1346 = vpack.c.b16 %v1335, %v1334
      %v1347 = vpack.c.b16 %v1337, %v1336
      %v1348 = vpack.c.b16 %v1339, %v1338
      %v1349 = vpack.c.b16 %v1341, %v1340
      %1358 = vmatprep.subr.bf16.mxu0 0
      %1359 = vmatpush1.bf16.msra.mxu0 %v1342
      %1360 = vmatprep.subr.bf16.mxu0 0
      %1361 = vmatpush1.bf16.msra.mxu0 %v1343
      %1362 = vmatprep.subr.bf16.mxu0 0
      %1363 = vmatpush1.bf16.msra.mxu0 %v1344
      %1364 = vmatprep.subr.bf16.mxu0 0
      %1365 = vmatpush1.bf16.msra.mxu0 %v1345
      %1366 = vmatprep.subr.bf16.mxu0 0
      %1367 = vmatpush1.bf16.msra.mxu0 %v1346
      %1368 = vmatprep.subr.bf16.mxu0 0
      %1369 = vmatpush1.bf16.msra.mxu0 %v1347
      %1370 = vmatprep.subr.bf16.mxu0 0
      %1371 = vmatpush1.bf16.msra.mxu0 %v1348
      %1372 = vmatprep.subr.bf16.mxu0 0
      %1373 = vmatpush1.bf16.msra.mxu0 %v1349
      %1374 = vmatprep.subr.bf16.mxu0 0
      %1375 = vmatpush1.bf16.msra.mxu0 0
      %1376 = vmatprep.subr.bf16.mxu0 0
      %1377 = vmatpush1.bf16.msra.mxu0 0
      %1378 = vmatprep.subr.bf16.mxu0 0
      %1379 = vmatpush1.bf16.msra.mxu0 0
      %1380 = vmatprep.subr.bf16.mxu0 0
      %1381 = vmatpush1.bf16.msra.mxu0 0
      %1382 = vmatprep.subr.bf16.mxu0 0
      %1383 = vmatpush1.bf16.msra.mxu0 0
      %1384 = vmatprep.subr.bf16.mxu0 0
      %1385 = vmatpush1.bf16.msra.mxu0 0
      %1386 = vmatprep.subr.bf16.mxu0 0
      %1387 = vmatpush1.bf16.msra.mxu0 0
      %1388 = vmatprep.subr.bf16.mxu0 0
      %1389 = vmatpush1.bf16.msra.mxu0 0
      %1390 = vmatprep.mubr.bf16.mxu0 0
      %1391 = vmatmul.mubr.bf16.gmra.mrb[0].mxu0 %v1279
      %v1392 = vpop.f32.mrb[0].mxu0
      %v1393 = vadd.f32 0.0, %v1392
      %v1394 = vpop.f32.mrb[0].mxu0
      %v1395 = vpop.f32.mrb[0].mxu0
      %v1396 = vadd.f32 0.0, %v1395
      %v1397 = vpop.f32.mrb[0].mxu0
      %1398 = vmatprep.mubr.bf16.mxu0 0
      %1399 = vmatmul.mubr.bf16.gmra.mrb[0].mxu0 %v1282
      %v1400 = vpop.f32.mrb[0].mxu0
      %v1401 = vadd.f32 0.0, %v1400
      %v1402 = vpop.f32.mrb[0].mxu0
      %v1403 = vpop.f32.mrb[0].mxu0
      %v1404 = vadd.f32 0.0, %v1403
      %v1405 = vpop.f32.mrb[0].mxu0
      %1406 = vmatprep.mubr.bf16.mxu0 0
      %1407 = vmatmul.mubr.bf16.gmra.mrb[0].mxu0 %v1285
      %v1408 = vpop.f32.mrb[0].mxu0
      %v1409 = vadd.f32 0.0, %v1408
      %v1410 = vpop.f32.mrb[0].mxu0
      %v1411 = vpop.f32.mrb[0].mxu0
      %v1412 = vadd.f32 0.0, %v1411
      %v1413 = vpop.f32.mrb[0].mxu0
      %1414 = vmatprep.mubr.bf16.mxu0 0
      %1415 = vmatmul.mubr.bf16.gmra.mrb[0].mxu0 %v1288
      %v1416 = vpop.f32.mrb[0].mxu0
      %v1417 = vadd.f32 0.0, %v1416
      %v1418 = vpop.f32.mrb[0].mxu0
      %v1419 = vpop.f32.mrb[0].mxu0
      %v1420 = vadd.f32 0.0, %v1419
      %v1421 = vpop.f32.mrb[0].mxu0
      %1422 = vdwg.mxu0
      %v1423 = vadd.f32 %v1238, %v1393
      %v1424 = vadd.f32 %v1241, %v1396
      %v1425 = vadd.f32 %v1246, %v1401
      %v1426 = vadd.f32 %v1249, %v1404
      %v1427 = vadd.f32 %v1254, %v1409
      %v1428 = vadd.f32 %v1257, %v1412
      %v1429 = vadd.f32 %v1262, %v1417
      %v1430 = vadd.f32 %v1265, %v1420
      %s1431 = scalar_lea.vmem %s8, 192
      %v1432 = vld [vmem:[%s1431] sm:$0xf]
      %v1433 = vld [vmem:[%s1431 + $0x4] sm:$0xf]
      %v1434 = vld [vmem:[%s1431 + $0x8] sm:$0xf]
      %v1435 = vld [vmem:[%s1431 + $0xc] sm:$0xf]
      %v1436 = vld [vmem:[%s1431 + $0x10] sm:$0xf]
      %v1437 = vld [vmem:[%s1431 + $0x14] sm:$0xf]
      %v1438 = vld [vmem:[%s1431 + $0x18] sm:$0xf]
      %v1439 = vld [vmem:[%s1431 + $0x1c] sm:$0xf]
      %v1440 = vld [vmem:[%s1431 + $0x20] sm:$0xf]
      %v1441 = vld [vmem:[%s1431 + $0x24] sm:$0xf]
      %v1442 = vld [vmem:[%s1431 + $0x28] sm:$0xf]
      %v1443 = vld [vmem:[%s1431 + $0x2c] sm:$0xf]
      %v1444 = vld [vmem:[%s1431 + $0x30] sm:$0xf]
      %v1445 = vld [vmem:[%s1431 + $0x34] sm:$0xf]
      %v1446 = vld [vmem:[%s1431 + $0x38] sm:$0xf]
      %v1447 = vld [vmem:[%s1431 + $0x3c] sm:$0xf]
      %v1464 = vunpack.c.l.b16 %v1432
      %v1465 = vunpack.c.l.b16 %v1433
      %v1466 = vunpack.c.l.b16 %v1434
      %v1467 = vunpack.c.l.b16 %v1435
      %v1468 = vunpack.c.l.b16 %v1436
      %v1469 = vunpack.c.l.b16 %v1437
      %v1470 = vunpack.c.l.b16 %v1438
      %v1471 = vunpack.c.l.b16 %v1439
      %v1472 = vunpack.c.l.b16 %v1440
      %v1473 = vunpack.c.l.b16 %v1441
      %v1474 = vunpack.c.l.b16 %v1442
      %v1475 = vunpack.c.l.b16 %v1443
      %v1476 = vunpack.c.l.b16 %v1444
      %v1477 = vunpack.c.l.b16 %v1445
      %v1478 = vunpack.c.l.b16 %v1446
      %v1479 = vunpack.c.l.b16 %v1447
      %v1480 = vpack.c.b16 %v1465, %v1464
      %v1481 = vpack.c.b16 %v1467, %v1466
      %v1482 = vpack.c.b16 %v1469, %v1468
      %v1483 = vpack.c.b16 %v1471, %v1470
      %v1484 = vpack.c.b16 %v1473, %v1472
      %v1485 = vpack.c.b16 %v1475, %v1474
      %v1486 = vpack.c.b16 %v1477, %v1476
      %v1487 = vpack.c.b16 %v1479, %v1478
      %1496 = vmatprep.subr.bf16.mxu0 0
      %1497 = vmatpush1.bf16.msra.mxu0 %v1480
      %1498 = vmatprep.subr.bf16.mxu0 0
      %1499 = vmatpush1.bf16.msra.mxu0 %v1481
      %1500 = vmatprep.subr.bf16.mxu0 0
      %1501 = vmatpush1.bf16.msra.mxu0 %v1482
      %1502 = vmatprep.subr.bf16.mxu0 0
      %1503 = vmatpush1.bf16.msra.mxu0 %v1483
      %1504 = vmatprep.subr.bf16.mxu0 0
      %1505 = vmatpush1.bf16.msra.mxu0 %v1484
      %1506 = vmatprep.subr.bf16.mxu0 0
      %1507 = vmatpush1.bf16.msra.mxu0 %v1485
      %1508 = vmatprep.subr.bf16.mxu0 0
      %1509 = vmatpush1.bf16.msra.mxu0 %v1486
      %1510 = vmatprep.subr.bf16.mxu0 0
      %1511 = vmatpush1.bf16.msra.mxu0 %v1487
      %1512 = vmatprep.subr.bf16.mxu0 0
      %1513 = vmatpush1.bf16.msra.mxu0 0
      %1514 = vmatprep.subr.bf16.mxu0 0
      %1515 = vmatpush1.bf16.msra.mxu0 0
      %1516 = vmatprep.subr.bf16.mxu0 0
      %1517 = vmatpush1.bf16.msra.mxu0 0
      %1518 = vmatprep.subr.bf16.mxu0 0
      %1519 = vmatpush1.bf16.msra.mxu0 0
      %1520 = vmatprep.subr.bf16.mxu0 0
      %1521 = vmatpush1.bf16.msra.mxu0 0
      %1522 = vmatprep.subr.bf16.mxu0 0
      %1523 = vmatpush1.bf16.msra.mxu0 0
      %1524 = vmatprep.subr.bf16.mxu0 0
      %1525 = vmatpush1.bf16.msra.mxu0 0
      %1526 = vmatprep.subr.bf16.mxu0 0
      %1527 = vmatpush1.bf16.msra.mxu0 0
      %1528 = vmatprep.mubr.bf16.mxu0 0
      %1529 = vmatmul.mubr.bf16.gmra.mrb[0].mxu0 %v860
      %v1530 = vpop.f32.mrb[0].mxu0
      %v1531 = vadd.f32 0.0, %v1530
      %v1532 = vpop.f32.mrb[0].mxu0
      %v1533 = vpop.f32.mrb[0].mxu0
      %v1534 = vadd.f32 0.0, %v1533
      %v1535 = vpop.f32.mrb[0].mxu0
      %1536 = vmatprep.mubr.bf16.mxu0 0
      %1537 = vmatmul.mubr.bf16.gmra.mrb[0].mxu0 %v861
      %v1538 = vpop.f32.mrb[0].mxu0
      %v1539 = vadd.f32 0.0, %v1538
      %v1540 = vpop.f32.mrb[0].mxu0
      %v1541 = vpop.f32.mrb[0].mxu0
      %v1542 = vadd.f32 0.0, %v1541
      %v1543 = vpop.f32.mrb[0].mxu0
      %1544 = vmatprep.mubr.bf16.mxu0 0
      %1545 = vmatmul.mubr.bf16.gmra.mrb[0].mxu0 %v862
      %v1546 = vpop.f32.mrb[0].mxu0
      %v1547 = vadd.f32 0.0, %v1546
      %v1548 = vpop.f32.mrb[0].mxu0
      %v1549 = vpop.f32.mrb[0].mxu0
      %v1550 = vadd.f32 0.0, %v1549
      %v1551 = vpop.f32.mrb[0].mxu0
      %1552 = vmatprep.mubr.bf16.mxu0 0
      %1553 = vmatmul.mubr.bf16.gmra.mrb[0].mxu0 %v863
      %v1554 = vpop.f32.mrb[0].mxu0
      %v1555 = vadd.f32 0.0, %v1554
      %v1556 = vpop.f32.mrb[0].mxu0
      %v1557 = vpop.f32.mrb[0].mxu0
      %v1558 = vadd.f32 0.0, %v1557
      %v1559 = vpop.f32.mrb[0].mxu0
      %1560 = vdwg.mxu0
      %v1561 = vadd.f32 %v1423, %v1531
      %v1562 = vadd.f32 %v1424, %v1534
      %v1563 = vadd.f32 %v1425, %v1539
      %v1564 = vadd.f32 %v1426, %v1542
      %v1565 = vadd.f32 %v1427, %v1547
      %v1566 = vadd.f32 %v1428, %v1550
      %v1567 = vadd.f32 %v1429, %v1555
      %v1568 = vadd.f32 %v1430, %v1558
      %v1570 = vshrl.u32 %v863, 16
      %v1572 = vshll.u32 %v863, 16
      %v1574 = vrot.slane %v1572, 1
      %v1575 = vor.u32 %v1570, %v1574
      %v1577 = vshll.u32 %v869, 16
      %v1579 = vrot.slane %v1577, 1
      %v1580 = vsel %vm972, %v1575, %v1579
      %s1582 = scalar_lea.vmem %s8, 256
      %v1583 = vld [vmem:[%s1582] sm:$0xf]
      %v1584 = vld [vmem:[%s1582 + $0x4] sm:$0xf]
      %v1585 = vld [vmem:[%s1582 + $0x8] sm:$0xf]
      %v1586 = vld [vmem:[%s1582 + $0xc] sm:$0xf]
      %v1587 = vld [vmem:[%s1582 + $0x10] sm:$0xf]
      %v1588 = vld [vmem:[%s1582 + $0x14] sm:$0xf]
      %v1589 = vld [vmem:[%s1582 + $0x18] sm:$0xf]
      %v1590 = vld [vmem:[%s1582 + $0x1c] sm:$0xf]
      %v1591 = vld [vmem:[%s1582 + $0x20] sm:$0xf]
      %v1592 = vld [vmem:[%s1582 + $0x24] sm:$0xf]
      %v1593 = vld [vmem:[%s1582 + $0x28] sm:$0xf]
      %v1594 = vld [vmem:[%s1582 + $0x2c] sm:$0xf]
      %v1595 = vld [vmem:[%s1582 + $0x30] sm:$0xf]
      %v1596 = vld [vmem:[%s1582 + $0x34] sm:$0xf]
      %v1597 = vld [vmem:[%s1582 + $0x38] sm:$0xf]
      %v1598 = vld [vmem:[%s1582 + $0x3c] sm:$0xf]
      %v1615 = vunpack.c.l.b16 %v1583
      %v1616 = vunpack.c.l.b16 %v1584
      %v1617 = vunpack.c.l.b16 %v1585
      %v1618 = vunpack.c.l.b16 %v1586
      %v1619 = vunpack.c.l.b16 %v1587
      %v1620 = vunpack.c.l.b16 %v1588
      %v1621 = vunpack.c.l.b16 %v1589
      %v1622 = vunpack.c.l.b16 %v1590
      %v1623 = vunpack.c.l.b16 %v1591
      %v1624 = vunpack.c.l.b16 %v1592
      %v1625 = vunpack.c.l.b16 %v1593
      %v1626 = vunpack.c.l.b16 %v1594
      %v1627 = vunpack.c.l.b16 %v1595
      %v1628 = vunpack.c.l.b16 %v1596
      %v1629 = vunpack.c.l.b16 %v1597
      %v1630 = vunpack.c.l.b16 %v1598
      %v1631 = vpack.c.b16 %v1616, %v1615
      %v1632 = vpack.c.b16 %v1618, %v1617
      %v1633 = vpack.c.b16 %v1620, %v1619
      %v1634 = vpack.c.b16 %v1622, %v1621
      %v1635 = vpack.c.b16 %v1624, %v1623
      %v1636 = vpack.c.b16 %v1626, %v1625
      %v1637 = vpack.c.b16 %v1628, %v1627
      %v1638 = vpack.c.b16 %v1630, %v1629
      %1647 = vmatprep.subr.bf16.mxu0 0
      %1648 = vmatpush1.bf16.msra.mxu0 %v1631
      %1649 = vmatprep.subr.bf16.mxu0 0
      %1650 = vmatpush1.bf16.msra.mxu0 %v1632
      %1651 = vmatprep.subr.bf16.mxu0 0
      %1652 = vmatpush1.bf16.msra.mxu0 %v1633
      %1653 = vmatprep.subr.bf16.mxu0 0
      %1654 = vmatpush1.bf16.msra.mxu0 %v1634
      %1655 = vmatprep.subr.bf16.mxu0 0
      %1656 = vmatpush1.bf16.msra.mxu0 %v1635
      %1657 = vmatprep.subr.bf16.mxu0 0
      %1658 = vmatpush1.bf16.msra.mxu0 %v1636
      %1659 = vmatprep.subr.bf16.mxu0 0
      %1660 = vmatpush1.bf16.msra.mxu0 %v1637
      %1661 = vmatprep.subr.bf16.mxu0 0
      %1662 = vmatpush1.bf16.msra.mxu0 %v1638
      %1663 = vmatprep.subr.bf16.mxu0 0
      %1664 = vmatpush1.bf16.msra.mxu0 0
      %1665 = vmatprep.subr.bf16.mxu0 0
      %1666 = vmatpush1.bf16.msra.mxu0 0
      %1667 = vmatprep.subr.bf16.mxu0 0
      %1668 = vmatpush1.bf16.msra.mxu0 0
      %1669 = vmatprep.subr.bf16.mxu0 0
      %1670 = vmatpush1.bf16.msra.mxu0 0
      %1671 = vmatprep.subr.bf16.mxu0 0
      %1672 = vmatpush1.bf16.msra.mxu0 0
      %1673 = vmatprep.subr.bf16.mxu0 0
      %1674 = vmatpush1.bf16.msra.mxu0 0
      %1675 = vmatprep.subr.bf16.mxu0 0
      %1676 = vmatpush1.bf16.msra.mxu0 0
      %1677 = vmatprep.subr.bf16.mxu0 0
      %1678 = vmatpush1.bf16.msra.mxu0 0
      %1679 = vmatprep.mubr.bf16.mxu0 0
      %1680 = vmatmul.mubr.bf16.gmra.mrb[0].mxu0 %v996
      %v1681 = vpop.f32.mrb[0].mxu0
      %v1682 = vadd.f32 0.0, %v1681
      %v1683 = vpop.f32.mrb[0].mxu0
      %v1684 = vpop.f32.mrb[0].mxu0
      %v1685 = vadd.f32 0.0, %v1684
      %v1686 = vpop.f32.mrb[0].mxu0
      %1687 = vmatprep.mubr.bf16.mxu0 0
      %1688 = vmatmul.mubr.bf16.gmra.mrb[0].mxu0 %v1008
      %v1689 = vpop.f32.mrb[0].mxu0
      %v1690 = vadd.f32 0.0, %v1689
      %v1691 = vpop.f32.mrb[0].mxu0
      %v1692 = vpop.f32.mrb[0].mxu0
      %v1693 = vadd.f32 0.0, %v1692
      %v1694 = vpop.f32.mrb[0].mxu0
      %1695 = vmatprep.mubr.bf16.mxu0 0
      %1696 = vmatmul.mubr.bf16.gmra.mrb[0].mxu0 %v1020
      %v1697 = vpop.f32.mrb[0].mxu0
      %v1698 = vadd.f32 0.0, %v1697
      %v1699 = vpop.f32.mrb[0].mxu0
      %v1700 = vpop.f32.mrb[0].mxu0
      %v1701 = vadd.f32 0.0, %v1700
      %v1702 = vpop.f32.mrb[0].mxu0
      %1703 = vmatprep.mubr.bf16.mxu0 0
      %1704 = vmatmul.mubr.bf16.gmra.mrb[0].mxu0 %v1580
      %v1705 = vpop.f32.mrb[0].mxu0
      %v1706 = vadd.f32 0.0, %v1705
      %v1707 = vpop.f32.mrb[0].mxu0
      %v1708 = vpop.f32.mrb[0].mxu0
      %v1709 = vadd.f32 0.0, %v1708
      %v1710 = vpop.f32.mrb[0].mxu0
      %1711 = vdwg.mxu0
      %v1712 = vadd.f32 %v1561, %v1682
      %v1713 = vadd.f32 %v1562, %v1685
      %v1714 = vadd.f32 %v1563, %v1690
      %v1715 = vadd.f32 %v1564, %v1693
      %v1716 = vadd.f32 %v1565, %v1698
      %v1717 = vadd.f32 %v1566, %v1701
      %v1718 = vadd.f32 %v1567, %v1706
      %v1719 = vadd.f32 %v1568, %v1709
      %v1722 = vrot.slane %v863, 1
      %v1723 = vrot.slane %v869, 1
      %v1724 = vsel %vm1276, %v1722, %v1723
      %s1726 = scalar_lea.vmem %s8, 320
      %v1727 = vld [vmem:[%s1726] sm:$0xf]
      %v1728 = vld [vmem:[%s1726 + $0x4] sm:$0xf]
      %v1729 = vld [vmem:[%s1726 + $0x8] sm:$0xf]
      %v1730 = vld [vmem:[%s1726 + $0xc] sm:$0xf]
      %v1731 = vld [vmem:[%s1726 + $0x10] sm:$0xf]
      %v1732 = vld [vmem:[%s1726 + $0x14] sm:$0xf]
      %v1733 = vld [vmem:[%s1726 + $0x18] sm:$0xf]
      %v1734 = vld [vmem:[%s1726 + $0x1c] sm:$0xf]
      %v1735 = vld [vmem:[%s1726 + $0x20] sm:$0xf]
      %v1736 = vld [vmem:[%s1726 + $0x24] sm:$0xf]
      %v1737 = vld [vmem:[%s1726 + $0x28] sm:$0xf]
      %v1738 = vld [vmem:[%s1726 + $0x2c] sm:$0xf]
      %v1739 = vld [vmem:[%s1726 + $0x30] sm:$0xf]
      %v1740 = vld [vmem:[%s1726 + $0x34] sm:$0xf]
      %v1741 = vld [vmem:[%s1726 + $0x38] sm:$0xf]
      %v1742 = vld [vmem:[%s1726 + $0x3c] sm:$0xf]
      %v1759 = vunpack.c.l.b16 %v1727
      %v1760 = vunpack.c.l.b16 %v1728
      %v1761 = vunpack.c.l.b16 %v1729
      %v1762 = vunpack.c.l.b16 %v1730
      %v1763 = vunpack.c.l.b16 %v1731
      %v1764 = vunpack.c.l.b16 %v1732
      %v1765 = vunpack.c.l.b16 %v1733
      %v1766 = vunpack.c.l.b16 %v1734
      %v1767 = vunpack.c.l.b16 %v1735
      %v1768 = vunpack.c.l.b16 %v1736
      %v1769 = vunpack.c.l.b16 %v1737
      %v1770 = vunpack.c.l.b16 %v1738
      %v1771 = vunpack.c.l.b16 %v1739
      %v1772 = vunpack.c.l.b16 %v1740
      %v1773 = vunpack.c.l.b16 %v1741
      %v1774 = vunpack.c.l.b16 %v1742
      %v1775 = vpack.c.b16 %v1760, %v1759
      %v1776 = vpack.c.b16 %v1762, %v1761
      %v1777 = vpack.c.b16 %v1764, %v1763
      %v1778 = vpack.c.b16 %v1766, %v1765
      %v1779 = vpack.c.b16 %v1768, %v1767
      %v1780 = vpack.c.b16 %v1770, %v1769
      %v1781 = vpack.c.b16 %v1772, %v1771
      %v1782 = vpack.c.b16 %v1774, %v1773
      %1791 = vmatprep.subr.bf16.mxu0 0
      %1792 = vmatpush1.bf16.msra.mxu0 %v1775
      %1793 = vmatprep.subr.bf16.mxu0 0
      %1794 = vmatpush1.bf16.msra.mxu0 %v1776
      %1795 = vmatprep.subr.bf16.mxu0 0
      %1796 = vmatpush1.bf16.msra.mxu0 %v1777
      %1797 = vmatprep.subr.bf16.mxu0 0
      %1798 = vmatpush1.bf16.msra.mxu0 %v1778
      %1799 = vmatprep.subr.bf16.mxu0 0
      %1800 = vmatpush1.bf16.msra.mxu0 %v1779
      %1801 = vmatprep.subr.bf16.mxu0 0
      %1802 = vmatpush1.bf16.msra.mxu0 %v1780
      %1803 = vmatprep.subr.bf16.mxu0 0
      %1804 = vmatpush1.bf16.msra.mxu0 %v1781
      %1805 = vmatprep.subr.bf16.mxu0 0
      %1806 = vmatpush1.bf16.msra.mxu0 %v1782
      %1807 = vmatprep.subr.bf16.mxu0 0
      %1808 = vmatpush1.bf16.msra.mxu0 0
      %1809 = vmatprep.subr.bf16.mxu0 0
      %1810 = vmatpush1.bf16.msra.mxu0 0
      %1811 = vmatprep.subr.bf16.mxu0 0
      %1812 = vmatpush1.bf16.msra.mxu0 0
      %1813 = vmatprep.subr.bf16.mxu0 0
      %1814 = vmatpush1.bf16.msra.mxu0 0
      %1815 = vmatprep.subr.bf16.mxu0 0
      %1816 = vmatpush1.bf16.msra.mxu0 0
      %1817 = vmatprep.subr.bf16.mxu0 0
      %1818 = vmatpush1.bf16.msra.mxu0 0
      %1819 = vmatprep.subr.bf16.mxu0 0
      %1820 = vmatpush1.bf16.msra.mxu0 0
      %1821 = vmatprep.subr.bf16.mxu0 0
      %1822 = vmatpush1.bf16.msra.mxu0 0
      %1823 = vmatprep.mubr.bf16.mxu0 0
      %1824 = vmatmul.mubr.bf16.gmra.mrb[0].mxu0 %v1282
      %v1825 = vpop.f32.mrb[0].mxu0
      %v1826 = vadd.f32 0.0, %v1825
      %v1827 = vpop.f32.mrb[0].mxu0
      %v1828 = vpop.f32.mrb[0].mxu0
      %v1829 = vadd.f32 0.0, %v1828
      %v1830 = vpop.f32.mrb[0].mxu0
      %1831 = vmatprep.mubr.bf16.mxu0 0
      %1832 = vmatmul.mubr.bf16.gmra.mrb[0].mxu0 %v1285
      %v1833 = vpop.f32.mrb[0].mxu0
      %v1834 = vadd.f32 0.0, %v1833
      %v1835 = vpop.f32.mrb[0].mxu0
      %v1836 = vpop.f32.mrb[0].mxu0
      %v1837 = vadd.f32 0.0, %v1836
      %v1838 = vpop.f32.mrb[0].mxu0
      %1839 = vmatprep.mubr.bf16.mxu0 0
      %1840 = vmatmul.mubr.bf16.gmra.mrb[0].mxu0 %v1288
      %v1841 = vpop.f32.mrb[0].mxu0
      %v1842 = vadd.f32 0.0, %v1841
      %v1843 = vpop.f32.mrb[0].mxu0
      %v1844 = vpop.f32.mrb[0].mxu0
      %v1845 = vadd.f32 0.0, %v1844
      %v1846 = vpop.f32.mrb[0].mxu0
      %1847 = vmatprep.mubr.bf16.mxu0 0
      %1848 = vmatmul.mubr.bf16.gmra.mrb[0].mxu0 %v1724
      %v1849 = vpop.f32.mrb[0].mxu0
      %v1850 = vadd.f32 0.0, %v1849
      %v1851 = vpop.f32.mrb[0].mxu0
      %v1852 = vpop.f32.mrb[0].mxu0
      %v1853 = vadd.f32 0.0, %v1852
      %v1854 = vpop.f32.mrb[0].mxu0
      %1855 = vdwg.mxu0
      %v1856 = vadd.f32 %v1712, %v1826
      %v1857 = vadd.f32 %v1713, %v1829
      %v1858 = vadd.f32 %v1714, %v1834
      %v1859 = vadd.f32 %v1715, %v1837
      %v1860 = vadd.f32 %v1716, %v1842
      %v1861 = vadd.f32 %v1717, %v1845
      %v1862 = vadd.f32 %v1718, %v1850
      %v1863 = vadd.f32 %v1719, %v1853
      %s1864 = scalar_lea.vmem %s8, 384
      %v1865 = vld [vmem:[%s1864] sm:$0xf]
      %v1866 = vld [vmem:[%s1864 + $0x4] sm:$0xf]
      %v1867 = vld [vmem:[%s1864 + $0x8] sm:$0xf]
      %v1868 = vld [vmem:[%s1864 + $0xc] sm:$0xf]
      %v1869 = vld [vmem:[%s1864 + $0x10] sm:$0xf]
      %v1870 = vld [vmem:[%s1864 + $0x14] sm:$0xf]
      %v1871 = vld [vmem:[%s1864 + $0x18] sm:$0xf]
      %v1872 = vld [vmem:[%s1864 + $0x1c] sm:$0xf]
      %v1873 = vld [vmem:[%s1864 + $0x20] sm:$0xf]
      %v1874 = vld [vmem:[%s1864 + $0x24] sm:$0xf]
      %v1875 = vld [vmem:[%s1864 + $0x28] sm:$0xf]
      %v1876 = vld [vmem:[%s1864 + $0x2c] sm:$0xf]
      %v1877 = vld [vmem:[%s1864 + $0x30] sm:$0xf]
      %v1878 = vld [vmem:[%s1864 + $0x34] sm:$0xf]
      %v1879 = vld [vmem:[%s1864 + $0x38] sm:$0xf]
      %v1880 = vld [vmem:[%s1864 + $0x3c] sm:$0xf]
      %v1897 = vunpack.c.l.b16 %v1865
      %v1898 = vunpack.c.l.b16 %v1866
      %v1899 = vunpack.c.l.b16 %v1867
      %v1900 = vunpack.c.l.b16 %v1868
      %v1901 = vunpack.c.l.b16 %v1869
      %v1902 = vunpack.c.l.b16 %v1870
      %v1903 = vunpack.c.l.b16 %v1871
      %v1904 = vunpack.c.l.b16 %v1872
      %v1905 = vunpack.c.l.b16 %v1873
      %v1906 = vunpack.c.l.b16 %v1874
      %v1907 = vunpack.c.l.b16 %v1875
      %v1908 = vunpack.c.l.b16 %v1876
      %v1909 = vunpack.c.l.b16 %v1877
      %v1910 = vunpack.c.l.b16 %v1878
      %v1911 = vunpack.c.l.b16 %v1879
      %v1912 = vunpack.c.l.b16 %v1880
      %v1913 = vpack.c.b16 %v1898, %v1897
      %v1914 = vpack.c.b16 %v1900, %v1899
      %v1915 = vpack.c.b16 %v1902, %v1901
      %v1916 = vpack.c.b16 %v1904, %v1903
      %v1917 = vpack.c.b16 %v1906, %v1905
      %v1918 = vpack.c.b16 %v1908, %v1907
      %v1919 = vpack.c.b16 %v1910, %v1909
      %v1920 = vpack.c.b16 %v1912, %v1911
      %1929 = vmatprep.subr.bf16.mxu0 0
      %1930 = vmatpush1.bf16.msra.mxu0 %v1913
      %1931 = vmatprep.subr.bf16.mxu0 0
      %1932 = vmatpush1.bf16.msra.mxu0 %v1914
      %1933 = vmatprep.subr.bf16.mxu0 0
      %1934 = vmatpush1.bf16.msra.mxu0 %v1915
      %1935 = vmatprep.subr.bf16.mxu0 0
      %1936 = vmatpush1.bf16.msra.mxu0 %v1916
      %1937 = vmatprep.subr.bf16.mxu0 0
      %1938 = vmatpush1.bf16.msra.mxu0 %v1917
      %1939 = vmatprep.subr.bf16.mxu0 0
      %1940 = vmatpush1.bf16.msra.mxu0 %v1918
      %1941 = vmatprep.subr.bf16.mxu0 0
      %1942 = vmatpush1.bf16.msra.mxu0 %v1919
      %1943 = vmatprep.subr.bf16.mxu0 0
      %1944 = vmatpush1.bf16.msra.mxu0 %v1920
      %1945 = vmatprep.subr.bf16.mxu0 0
      %1946 = vmatpush1.bf16.msra.mxu0 0
      %1947 = vmatprep.subr.bf16.mxu0 0
      %1948 = vmatpush1.bf16.msra.mxu0 0
      %1949 = vmatprep.subr.bf16.mxu0 0
      %1950 = vmatpush1.bf16.msra.mxu0 0
      %1951 = vmatprep.subr.bf16.mxu0 0
      %1952 = vmatpush1.bf16.msra.mxu0 0
      %1953 = vmatprep.subr.bf16.mxu0 0
      %1954 = vmatpush1.bf16.msra.mxu0 0
      %1955 = vmatprep.subr.bf16.mxu0 0
      %1956 = vmatpush1.bf16.msra.mxu0 0
      %1957 = vmatprep.subr.bf16.mxu0 0
      %1958 = vmatpush1.bf16.msra.mxu0 0
      %1959 = vmatprep.subr.bf16.mxu0 0
      %1960 = vmatpush1.bf16.msra.mxu0 0
      %1961 = vmatprep.mubr.bf16.mxu0 0
      %1962 = vmatmul.mubr.bf16.gmra.mrb[0].mxu0 %v861
      %v1963 = vpop.f32.mrb[0].mxu0
      %v1964 = vadd.f32 0.0, %v1963
      %v1965 = vpop.f32.mrb[0].mxu0
      %v1966 = vpop.f32.mrb[0].mxu0
      %v1967 = vadd.f32 0.0, %v1966
      %v1968 = vpop.f32.mrb[0].mxu0
      %1969 = vmatprep.mubr.bf16.mxu0 0
      %1970 = vmatmul.mubr.bf16.gmra.mrb[0].mxu0 %v862
      %v1971 = vpop.f32.mrb[0].mxu0
      %v1972 = vadd.f32 0.0, %v1971
      %v1973 = vpop.f32.mrb[0].mxu0
      %v1974 = vpop.f32.mrb[0].mxu0
      %v1975 = vadd.f32 0.0, %v1974
      %v1976 = vpop.f32.mrb[0].mxu0
      %1977 = vmatprep.mubr.bf16.mxu0 0
      %1978 = vmatmul.mubr.bf16.gmra.mrb[0].mxu0 %v863
      %v1979 = vpop.f32.mrb[0].mxu0
      %v1980 = vadd.f32 0.0, %v1979
      %v1981 = vpop.f32.mrb[0].mxu0
      %v1982 = vpop.f32.mrb[0].mxu0
      %v1983 = vadd.f32 0.0, %v1982
      %v1984 = vpop.f32.mrb[0].mxu0
      %1985 = vmatprep.mubr.bf16.mxu0 0
      %1986 = vmatmul.mubr.bf16.gmra.mrb[0].mxu0 %v864
      %v1987 = vpop.f32.mrb[0].mxu0
      %v1988 = vadd.f32 0.0, %v1987
      %v1989 = vpop.f32.mrb[0].mxu0
      %v1990 = vpop.f32.mrb[0].mxu0
      %v1991 = vadd.f32 0.0, %v1990
      %v1992 = vpop.f32.mrb[0].mxu0
      %1993 = vdwg.mxu0
      %v1994 = vadd.f32 %v1856, %v1964
      %v1995 = vadd.f32 %v1857, %v1967
      %v1996 = vadd.f32 %v1858, %v1972
      %v1997 = vadd.f32 %v1859, %v1975
      %v1998 = vadd.f32 %v1860, %v1980
      %v1999 = vadd.f32 %v1861, %v1983
      %v2000 = vadd.f32 %v1862, %v1988
      %v2001 = vadd.f32 %v1863, %v1991
      %v2003 = vshrl.u32 %v864, 16
      %v2005 = vshll.u32 %v864, 16
      %v2007 = vrot.slane %v2005, 1
      %v2008 = vor.u32 %v2003, %v2007
      %v2010 = vshll.u32 %v870, 16
      %v2012 = vrot.slane %v2010, 1
      %v2013 = vsel %vm972, %v2008, %v2012
      %s2015 = scalar_lea.vmem %s8, 448
      %v2016 = vld [vmem:[%s2015] sm:$0xf]
      %v2017 = vld [vmem:[%s2015 + $0x4] sm:$0xf]
      %v2018 = vld [vmem:[%s2015 + $0x8] sm:$0xf]
      %v2019 = vld [vmem:[%s2015 + $0xc] sm:$0xf]
      %v2020 = vld [vmem:[%s2015 + $0x10] sm:$0xf]
      %v2021 = vld [vmem:[%s2015 + $0x14] sm:$0xf]
      %v2022 = vld [vmem:[%s2015 + $0x18] sm:$0xf]
      %v2023 = vld [vmem:[%s2015 + $0x1c] sm:$0xf]
      %v2024 = vld [vmem:[%s2015 + $0x20] sm:$0xf]
      %v2025 = vld [vmem:[%s2015 + $0x24] sm:$0xf]
      %v2026 = vld [vmem:[%s2015 + $0x28] sm:$0xf]
      %v2027 = vld [vmem:[%s2015 + $0x2c] sm:$0xf]
      %v2028 = vld [vmem:[%s2015 + $0x30] sm:$0xf]
      %v2029 = vld [vmem:[%s2015 + $0x34] sm:$0xf]
      %v2030 = vld [vmem:[%s2015 + $0x38] sm:$0xf]
      %v2031 = vld [vmem:[%s2015 + $0x3c] sm:$0xf]
      %v2048 = vunpack.c.l.b16 %v2016
      %v2049 = vunpack.c.l.b16 %v2017
      %v2050 = vunpack.c.l.b16 %v2018
      %v2051 = vunpack.c.l.b16 %v2019
      %v2052 = vunpack.c.l.b16 %v2020
      %v2053 = vunpack.c.l.b16 %v2021
      %v2054 = vunpack.c.l.b16 %v2022
      %v2055 = vunpack.c.l.b16 %v2023
      %v2056 = vunpack.c.l.b16 %v2024
      %v2057 = vunpack.c.l.b16 %v2025
      %v2058 = vunpack.c.l.b16 %v2026
      %v2059 = vunpack.c.l.b16 %v2027
      %v2060 = vunpack.c.l.b16 %v2028
      %v2061 = vunpack.c.l.b16 %v2029
      %v2062 = vunpack.c.l.b16 %v2030
      %v2063 = vunpack.c.l.b16 %v2031
      %v2064 = vpack.c.b16 %v2049, %v2048
      %v2065 = vpack.c.b16 %v2051, %v2050
      %v2066 = vpack.c.b16 %v2053, %v2052
      %v2067 = vpack.c.b16 %v2055, %v2054
      %v2068 = vpack.c.b16 %v2057, %v2056
      %v2069 = vpack.c.b16 %v2059, %v2058
      %v2070 = vpack.c.b16 %v2061, %v2060
      %v2071 = vpack.c.b16 %v2063, %v2062
      %2080 = vmatprep.subr.bf16.mxu0 0
      %2081 = vmatpush1.bf16.msra.mxu0 %v2064
      %2082 = vmatprep.subr.bf16.mxu0 0
      %2083 = vmatpush1.bf16.msra.mxu0 %v2065
      %2084 = vmatprep.subr.bf16.mxu0 0
      %2085 = vmatpush1.bf16.msra.mxu0 %v2066
      %2086 = vmatprep.subr.bf16.mxu0 0
      %2087 = vmatpush1.bf16.msra.mxu0 %v2067
      %2088 = vmatprep.subr.bf16.mxu0 0
      %2089 = vmatpush1.bf16.msra.mxu0 %v2068
      %2090 = vmatprep.subr.bf16.mxu0 0
      %2091 = vmatpush1.bf16.msra.mxu0 %v2069
      %2092 = vmatprep.subr.bf16.mxu0 0
      %2093 = vmatpush1.bf16.msra.mxu0 %v2070
      %2094 = vmatprep.subr.bf16.mxu0 0
      %2095 = vmatpush1.bf16.msra.mxu0 %v2071
      %2096 = vmatprep.subr.bf16.mxu0 0
      %2097 = vmatpush1.bf16.msra.mxu0 0
      %2098 = vmatprep.subr.bf16.mxu0 0
      %2099 = vmatpush1.bf16.msra.mxu0 0
      %2100 = vmatprep.subr.bf16.mxu0 0
      %2101 = vmatpush1.bf16.msra.mxu0 0
      %2102 = vmatprep.subr.bf16.mxu0 0
      %2103 = vmatpush1.bf16.msra.mxu0 0
      %2104 = vmatprep.subr.bf16.mxu0 0
      %2105 = vmatpush1.bf16.msra.mxu0 0
      %2106 = vmatprep.subr.bf16.mxu0 0
      %2107 = vmatpush1.bf16.msra.mxu0 0
      %2108 = vmatprep.subr.bf16.mxu0 0
      %2109 = vmatpush1.bf16.msra.mxu0 0
      %2110 = vmatprep.subr.bf16.mxu0 0
      %2111 = vmatpush1.bf16.msra.mxu0 0
      %2112 = vmatprep.mubr.bf16.mxu0 0
      %2113 = vmatmul.mubr.bf16.gmra.mrb[0].mxu0 %v1008
      %v2114 = vpop.f32.mrb[0].mxu0
      %v2115 = vadd.f32 0.0, %v2114
      %v2116 = vpop.f32.mrb[0].mxu0
      %v2117 = vpop.f32.mrb[0].mxu0
      %v2118 = vadd.f32 0.0, %v2117
      %v2119 = vpop.f32.mrb[0].mxu0
      %2120 = vmatprep.mubr.bf16.mxu0 0
      %2121 = vmatmul.mubr.bf16.gmra.mrb[0].mxu0 %v1020
      %v2122 = vpop.f32.mrb[0].mxu0
      %v2123 = vadd.f32 0.0, %v2122
      %v2124 = vpop.f32.mrb[0].mxu0
      %v2125 = vpop.f32.mrb[0].mxu0
      %v2126 = vadd.f32 0.0, %v2125
      %v2127 = vpop.f32.mrb[0].mxu0
      %2128 = vmatprep.mubr.bf16.mxu0 0
      %2129 = vmatmul.mubr.bf16.gmra.mrb[0].mxu0 %v1580
      %v2130 = vpop.f32.mrb[0].mxu0
      %v2131 = vadd.f32 0.0, %v2130
      %v2132 = vpop.f32.mrb[0].mxu0
      %v2133 = vpop.f32.mrb[0].mxu0
      %v2134 = vadd.f32 0.0, %v2133
      %v2135 = vpop.f32.mrb[0].mxu0
      %2136 = vmatprep.mubr.bf16.mxu0 0
      %2137 = vmatmul.mubr.bf16.gmra.mrb[0].mxu0 %v2013
      %v2138 = vpop.f32.mrb[0].mxu0
      %v2139 = vadd.f32 0.0, %v2138
      %v2140 = vpop.f32.mrb[0].mxu0
      %v2141 = vpop.f32.mrb[0].mxu0
      %v2142 = vadd.f32 0.0, %v2141
      %v2143 = vpop.f32.mrb[0].mxu0
      %2144 = vdwg.mxu0
      %v2145 = vadd.f32 %v1994, %v2115
      %v2146 = vadd.f32 %v1995, %v2118
      %v2147 = vadd.f32 %v1996, %v2123
      %v2148 = vadd.f32 %v1997, %v2126
      %v2149 = vadd.f32 %v1998, %v2131
      %v2150 = vadd.f32 %v1999, %v2134
      %v2151 = vadd.f32 %v2000, %v2139
      %v2152 = vadd.f32 %v2001, %v2142
      %v2155 = vrot.slane %v864, 1
      %v2156 = vrot.slane %v870, 1
      %v2157 = vsel %vm1276, %v2155, %v2156
      %s2159 = scalar_lea.vmem %s8, 512
      %v2160 = vld [vmem:[%s2159] sm:$0xf]
      %v2161 = vld [vmem:[%s2159 + $0x4] sm:$0xf]
      %v2162 = vld [vmem:[%s2159 + $0x8] sm:$0xf]
      %v2163 = vld [vmem:[%s2159 + $0xc] sm:$0xf]
      %v2164 = vld [vmem:[%s2159 + $0x10] sm:$0xf]
      %v2165 = vld [vmem:[%s2159 + $0x14] sm:$0xf]
      %v2166 = vld [vmem:[%s2159 + $0x18] sm:$0xf]
      %v2167 = vld [vmem:[%s2159 + $0x1c] sm:$0xf]
      %v2168 = vld [vmem:[%s2159 + $0x20] sm:$0xf]
      %v2169 = vld [vmem:[%s2159 + $0x24] sm:$0xf]
      %v2170 = vld [vmem:[%s2159 + $0x28] sm:$0xf]
      %v2171 = vld [vmem:[%s2159 + $0x2c] sm:$0xf]
      %v2172 = vld [vmem:[%s2159 + $0x30] sm:$0xf]
      %v2173 = vld [vmem:[%s2159 + $0x34] sm:$0xf]
      %v2174 = vld [vmem:[%s2159 + $0x38] sm:$0xf]
      %v2175 = vld [vmem:[%s2159 + $0x3c] sm:$0xf]
      %v2192 = vunpack.c.l.b16 %v2160
      %v2193 = vunpack.c.l.b16 %v2161
      %v2194 = vunpack.c.l.b16 %v2162
      %v2195 = vunpack.c.l.b16 %v2163
      %v2196 = vunpack.c.l.b16 %v2164
      %v2197 = vunpack.c.l.b16 %v2165
      %v2198 = vunpack.c.l.b16 %v2166
      %v2199 = vunpack.c.l.b16 %v2167
      %v2200 = vunpack.c.l.b16 %v2168
      %v2201 = vunpack.c.l.b16 %v2169
      %v2202 = vunpack.c.l.b16 %v2170
      %v2203 = vunpack.c.l.b16 %v2171
      %v2204 = vunpack.c.l.b16 %v2172
      %v2205 = vunpack.c.l.b16 %v2173
      %v2206 = vunpack.c.l.b16 %v2174
      %v2207 = vunpack.c.l.b16 %v2175
      %v2208 = vpack.c.b16 %v2193, %v2192
      %v2209 = vpack.c.b16 %v2195, %v2194
      %v2210 = vpack.c.b16 %v2197, %v2196
      %v2211 = vpack.c.b16 %v2199, %v2198
      %v2212 = vpack.c.b16 %v2201, %v2200
      %v2213 = vpack.c.b16 %v2203, %v2202
      %v2214 = vpack.c.b16 %v2205, %v2204
      %v2215 = vpack.c.b16 %v2207, %v2206
      %2224 = vmatprep.subr.bf16.mxu0 0
      %2225 = vmatpush1.bf16.msra.mxu0 %v2208
      %2226 = vmatprep.subr.bf16.mxu0 0
      %2227 = vmatpush1.bf16.msra.mxu0 %v2209
      %2228 = vmatprep.subr.bf16.mxu0 0
      %2229 = vmatpush1.bf16.msra.mxu0 %v2210
      %2230 = vmatprep.subr.bf16.mxu0 0
      %2231 = vmatpush1.bf16.msra.mxu0 %v2211
      %2232 = vmatprep.subr.bf16.mxu0 0
      %2233 = vmatpush1.bf16.msra.mxu0 %v2212
      %2234 = vmatprep.subr.bf16.mxu0 0
      %2235 = vmatpush1.bf16.msra.mxu0 %v2213
      %2236 = vmatprep.subr.bf16.mxu0 0
      %2237 = vmatpush1.bf16.msra.mxu0 %v2214
      %2238 = vmatprep.subr.bf16.mxu0 0
      %2239 = vmatpush1.bf16.msra.mxu0 %v2215
      %2240 = vmatprep.subr.bf16.mxu0 0
      %2241 = vmatpush1.bf16.msra.mxu0 0
      %2242 = vmatprep.subr.bf16.mxu0 0
      %2243 = vmatpush1.bf16.msra.mxu0 0
      %2244 = vmatprep.subr.bf16.mxu0 0
      %2245 = vmatpush1.bf16.msra.mxu0 0
      %2246 = vmatprep.subr.bf16.mxu0 0
      %2247 = vmatpush1.bf16.msra.mxu0 0
      %2248 = vmatprep.subr.bf16.mxu0 0
      %2249 = vmatpush1.bf16.msra.mxu0 0
      %2250 = vmatprep.subr.bf16.mxu0 0
      %2251 = vmatpush1.bf16.msra.mxu0 0
      %2252 = vmatprep.subr.bf16.mxu0 0
      %2253 = vmatpush1.bf16.msra.mxu0 0
      %2254 = vmatprep.subr.bf16.mxu0 0
      %2255 = vmatpush1.bf16.msra.mxu0 0
      %2256 = vmatprep.mubr.bf16.mxu0 0
      %2257 = vmatmul.mubr.bf16.gmra.mrb[0].mxu0 %v1285
      %v2258 = vpop.f32.mrb[0].mxu0
      %v2259 = vadd.f32 0.0, %v2258
      %v2260 = vpop.f32.mrb[0].mxu0
      %v2261 = vpop.f32.mrb[0].mxu0
      %v2262 = vadd.f32 0.0, %v2261
      %v2263 = vpop.f32.mrb[0].mxu0
      %2264 = vmatprep.mubr.bf16.mxu0 0
      %2265 = vmatmul.mubr.bf16.gmra.mrb[0].mxu0 %v1288
      %v2266 = vpop.f32.mrb[0].mxu0
      %v2267 = vadd.f32 0.0, %v2266
      %v2268 = vpop.f32.mrb[0].mxu0
      %v2269 = vpop.f32.mrb[0].mxu0
      %v2270 = vadd.f32 0.0, %v2269
      %v2271 = vpop.f32.mrb[0].mxu0
      %2272 = vmatprep.mubr.bf16.mxu0 0
      %2273 = vmatmul.mubr.bf16.gmra.mrb[0].mxu0 %v1724
      %v2274 = vpop.f32.mrb[0].mxu0
      %v2275 = vadd.f32 0.0, %v2274
      %v2276 = vpop.f32.mrb[0].mxu0
      %v2277 = vpop.f32.mrb[0].mxu0
      %v2278 = vadd.f32 0.0, %v2277
      %v2279 = vpop.f32.mrb[0].mxu0
      %2280 = vmatprep.mubr.bf16.mxu0 0
      %2281 = vmatmul.mubr.bf16.gmra.mrb[0].mxu0 %v2157
      %v2282 = vpop.f32.mrb[0].mxu0
      %v2283 = vadd.f32 0.0, %v2282
      %v2284 = vpop.f32.mrb[0].mxu0
      %v2285 = vpop.f32.mrb[0].mxu0
      %v2286 = vadd.f32 0.0, %v2285
      %v2287 = vpop.f32.mrb[0].mxu0
      %2288 = vdwg.mxu0
      %v2289 = vadd.f32 %v2145, %v2259
      %v2290 = vadd.f32 %v2146, %v2262
      %v2291 = vadd.f32 %v2147, %v2267
      %v2292 = vadd.f32 %v2148, %v2270
      %v2293 = vadd.f32 %v2149, %v2275
      %v2294 = vadd.f32 %v2150, %v2278
      %v2295 = vadd.f32 %v2151, %v2283
      %v2296 = vadd.f32 %v2152, %v2286
      %v2297 = vld [vmem:[%s9] sm:$0xf]
      %v2298 = vld [vmem:[%s9 + $0x4] sm:$0xf]
      %v2299 = vld [vmem:[%s9 + $0x8] sm:$0xf]
      %v2300 = vld [vmem:[%s9 + $0xc] sm:$0xf]
      %v2301 = vld [vmem:[%s9 + $0x10] sm:$0xf]
      %v2302 = vld [vmem:[%s9 + $0x14] sm:$0xf]
      %v2303 = vld [vmem:[%s9 + $0x18] sm:$0xf]
      %v2304 = vld [vmem:[%s9 + $0x1c] sm:$0xf]
      %v2305 = vld [vmem:[%s9 + $0x20] sm:$0xf]
      %v2306 = vld [vmem:[%s9 + $0x24] sm:$0xf]
      %v2307 = vld [vmem:[%s9 + $0x28] sm:$0xf]
      %v2308 = vld [vmem:[%s9 + $0x2c] sm:$0xf]
      %v2309 = vld [vmem:[%s9 + $0x30] sm:$0xf]
      %v2310 = vld [vmem:[%s9 + $0x34] sm:$0xf]
      %v2311 = vld [vmem:[%s9 + $0x38] sm:$0xf]
      %v2312 = vld [vmem:[%s9 + $0x3c] sm:$0xf]
      %v2329 = vunpack.c.l.b16 %v2297
      %v2330 = vunpack.c.l.b16 %v2298
      %v2331 = vunpack.c.l.b16 %v2299
      %v2332 = vunpack.c.l.b16 %v2300
      %v2333 = vunpack.c.l.b16 %v2301
      %v2334 = vunpack.c.l.b16 %v2302
      %v2335 = vunpack.c.l.b16 %v2303
      %v2336 = vunpack.c.l.b16 %v2304
      %v2337 = vunpack.c.l.b16 %v2305
      %v2338 = vunpack.c.l.b16 %v2306
      %v2339 = vunpack.c.l.b16 %v2307
      %v2340 = vunpack.c.l.b16 %v2308
      %v2341 = vunpack.c.l.b16 %v2309
      %v2342 = vunpack.c.l.b16 %v2310
      %v2343 = vunpack.c.l.b16 %v2311
      %v2344 = vunpack.c.l.b16 %v2312
      %v2345 = vpack.c.b16 %v2330, %v2329
      %v2346 = vpack.c.b16 %v2332, %v2331
      %v2347 = vpack.c.b16 %v2334, %v2333
      %v2348 = vpack.c.b16 %v2336, %v2335
      %v2349 = vpack.c.b16 %v2338, %v2337
      %v2350 = vpack.c.b16 %v2340, %v2339
      %v2351 = vpack.c.b16 %v2342, %v2341
      %v2352 = vpack.c.b16 %v2344, %v2343
      %2361 = vmatprep.subr.bf16.mxu0 0
      %2362 = vmatpush1.bf16.msra.mxu0 %v2345
      %2363 = vmatprep.subr.bf16.mxu0 0
      %2364 = vmatpush1.bf16.msra.mxu0 %v2346
      %2365 = vmatprep.subr.bf16.mxu0 0
      %2366 = vmatpush1.bf16.msra.mxu0 %v2347
      %2367 = vmatprep.subr.bf16.mxu0 0
      %2368 = vmatpush1.bf16.msra.mxu0 %v2348
      %2369 = vmatprep.subr.bf16.mxu0 0
      %2370 = vmatpush1.bf16.msra.mxu0 %v2349
      %2371 = vmatprep.subr.bf16.mxu0 0
      %2372 = vmatpush1.bf16.msra.mxu0 %v2350
      %2373 = vmatprep.subr.bf16.mxu0 0
      %2374 = vmatpush1.bf16.msra.mxu0 %v2351
      %2375 = vmatprep.subr.bf16.mxu0 0
      %2376 = vmatpush1.bf16.msra.mxu0 %v2352
      %2377 = vmatprep.subr.bf16.mxu0 0
      %2378 = vmatpush1.bf16.msra.mxu0 0
      %2379 = vmatprep.subr.bf16.mxu0 0
      %2380 = vmatpush1.bf16.msra.mxu0 0
      %2381 = vmatprep.subr.bf16.mxu0 0
      %2382 = vmatpush1.bf16.msra.mxu0 0
      %2383 = vmatprep.subr.bf16.mxu0 0
      %2384 = vmatpush1.bf16.msra.mxu0 0
      %2385 = vmatprep.subr.bf16.mxu0 0
      %2386 = vmatpush1.bf16.msra.mxu0 0
      %2387 = vmatprep.subr.bf16.mxu0 0
      %2388 = vmatpush1.bf16.msra.mxu0 0
      %2389 = vmatprep.subr.bf16.mxu0 0
      %2390 = vmatpush1.bf16.msra.mxu0 0
      %2391 = vmatprep.subr.bf16.mxu0 0
      %2392 = vmatpush1.bf16.msra.mxu0 0
      %2393 = vmatprep.mubr.bf16.mxu0 0
      %2394 = vmatmul.mubr.bf16.gmra.mrb[0].mxu0 %v944
      %v2395 = vpop.f32.mrb[0].mxu0
      %v2396 = vadd.f32 0.0, %v2395
      %v2397 = vpop.f32.mrb[0].mxu0
      %v2398 = vpop.f32.mrb[0].mxu0
      %v2399 = vadd.f32 0.0, %v2398
      %v2400 = vpop.f32.mrb[0].mxu0
      %2401 = vmatprep.mubr.bf16.mxu0 0
      %2402 = vmatmul.mubr.bf16.gmra.mrb[0].mxu0 %v945
      %v2403 = vpop.f32.mrb[0].mxu0
      %v2404 = vadd.f32 0.0, %v2403
      %v2405 = vpop.f32.mrb[0].mxu0
      %v2406 = vpop.f32.mrb[0].mxu0
      %v2407 = vadd.f32 0.0, %v2406
      %v2408 = vpop.f32.mrb[0].mxu0
      %2409 = vmatprep.mubr.bf16.mxu0 0
      %2410 = vmatmul.mubr.bf16.gmra.mrb[0].mxu0 %v946
      %v2411 = vpop.f32.mrb[0].mxu0
      %v2412 = vadd.f32 0.0, %v2411
      %v2413 = vpop.f32.mrb[0].mxu0
      %v2414 = vpop.f32.mrb[0].mxu0
      %v2415 = vadd.f32 0.0, %v2414
      %v2416 = vpop.f32.mrb[0].mxu0
      %2417 = vmatprep.mubr.bf16.mxu0 0
      %2418 = vmatmul.mubr.bf16.gmra.mrb[0].mxu0 %v947
      %v2419 = vpop.f32.mrb[0].mxu0
      %v2420 = vadd.f32 0.0, %v2419
      %v2421 = vpop.f32.mrb[0].mxu0
      %v2422 = vpop.f32.mrb[0].mxu0
      %v2423 = vadd.f32 0.0, %v2422
      %v2424 = vpop.f32.mrb[0].mxu0
      %2425 = vdwg.mxu0
      %v2426 = vadd.f32 %v2289, %v2396
      %v2427 = vadd.f32 %v2290, %v2399
      %v2428 = vadd.f32 %v2291, %v2404
      %v2429 = vadd.f32 %v2292, %v2407
      %v2430 = vadd.f32 %v2293, %v2412
      %v2431 = vadd.f32 %v2294, %v2415
      %v2432 = vadd.f32 %v2295, %v2420
      %v2433 = vadd.f32 %v2296, %v2423
      %v2435 = vshrl.u32 %v944, 16
      %v2437 = vshll.u32 %v944, 16
      %v2439 = vrot.slane %v2437, 1
      %v2440 = vor.u32 %v2435, %v2439
      %v2442 = vshll.u32 %v950, 16
      %v2444 = vrot.slane %v2442, 1
      %v2445 = vsel %vm972, %v2440, %v2444
      %v2447 = vshrl.u32 %v945, 16
      %v2449 = vshll.u32 %v945, 16
      %v2451 = vrot.slane %v2449, 1
      %v2452 = vor.u32 %v2447, %v2451
      %v2454 = vshll.u32 %v951, 16
      %v2456 = vrot.slane %v2454, 1
      %v2457 = vsel %vm972, %v2452, %v2456
      %v2459 = vshrl.u32 %v946, 16
      %v2461 = vshll.u32 %v946, 16
      %v2463 = vrot.slane %v2461, 1
      %v2464 = vor.u32 %v2459, %v2463
      %v2466 = vshll.u32 %v952, 16
      %v2468 = vrot.slane %v2466, 1
      %v2469 = vsel %vm972, %v2464, %v2468
      %v2471 = vshrl.u32 %v947, 16
      %v2473 = vshll.u32 %v947, 16
      %v2475 = vrot.slane %v2473, 1
      %v2476 = vor.u32 %v2471, %v2475
      %v2478 = vshll.u32 %v953, 16
      %v2480 = vrot.slane %v2478, 1
      %v2481 = vsel %vm972, %v2476, %v2480
      %s2486 = scalar_lea.vmem %s9, 64
      %v2487 = vld [vmem:[%s2486] sm:$0xf]
      %v2488 = vld [vmem:[%s2486 + $0x4] sm:$0xf]
      %v2489 = vld [vmem:[%s2486 + $0x8] sm:$0xf]
      %v2490 = vld [vmem:[%s2486 + $0xc] sm:$0xf]
      %v2491 = vld [vmem:[%s2486 + $0x10] sm:$0xf]
      %v2492 = vld [vmem:[%s2486 + $0x14] sm:$0xf]
      %v2493 = vld [vmem:[%s2486 + $0x18] sm:$0xf]
      %v2494 = vld [vmem:[%s2486 + $0x1c] sm:$0xf]
      %v2495 = vld [vmem:[%s2486 + $0x20] sm:$0xf]
      %v2496 = vld [vmem:[%s2486 + $0x24] sm:$0xf]
      %v2497 = vld [vmem:[%s2486 + $0x28] sm:$0xf]
      %v2498 = vld [vmem:[%s2486 + $0x2c] sm:$0xf]
      %v2499 = vld [vmem:[%s2486 + $0x30] sm:$0xf]
      %v2500 = vld [vmem:[%s2486 + $0x34] sm:$0xf]
      %v2501 = vld [vmem:[%s2486 + $0x38] sm:$0xf]
      %v2502 = vld [vmem:[%s2486 + $0x3c] sm:$0xf]
      %v2519 = vunpack.c.l.b16 %v2487
      %v2520 = vunpack.c.l.b16 %v2488
      %v2521 = vunpack.c.l.b16 %v2489
      %v2522 = vunpack.c.l.b16 %v2490
      %v2523 = vunpack.c.l.b16 %v2491
      %v2524 = vunpack.c.l.b16 %v2492
      %v2525 = vunpack.c.l.b16 %v2493
      %v2526 = vunpack.c.l.b16 %v2494
      %v2527 = vunpack.c.l.b16 %v2495
      %v2528 = vunpack.c.l.b16 %v2496
      %v2529 = vunpack.c.l.b16 %v2497
      %v2530 = vunpack.c.l.b16 %v2498
      %v2531 = vunpack.c.l.b16 %v2499
      %v2532 = vunpack.c.l.b16 %v2500
      %v2533 = vunpack.c.l.b16 %v2501
      %v2534 = vunpack.c.l.b16 %v2502
      %v2535 = vpack.c.b16 %v2520, %v2519
      %v2536 = vpack.c.b16 %v2522, %v2521
      %v2537 = vpack.c.b16 %v2524, %v2523
      %v2538 = vpack.c.b16 %v2526, %v2525
      %v2539 = vpack.c.b16 %v2528, %v2527
      %v2540 = vpack.c.b16 %v2530, %v2529
      %v2541 = vpack.c.b16 %v2532, %v2531
      %v2542 = vpack.c.b16 %v2534, %v2533
      %2551 = vmatprep.subr.bf16.mxu0 0
      %2552 = vmatpush1.bf16.msra.mxu0 %v2535
      %2553 = vmatprep.subr.bf16.mxu0 0
      %2554 = vmatpush1.bf16.msra.mxu0 %v2536
      %2555 = vmatprep.subr.bf16.mxu0 0
      %2556 = vmatpush1.bf16.msra.mxu0 %v2537
      %2557 = vmatprep.subr.bf16.mxu0 0
      %2558 = vmatpush1.bf16.msra.mxu0 %v2538
      %2559 = vmatprep.subr.bf16.mxu0 0
      %2560 = vmatpush1.bf16.msra.mxu0 %v2539
      %2561 = vmatprep.subr.bf16.mxu0 0
      %2562 = vmatpush1.bf16.msra.mxu0 %v2540
      %2563 = vmatprep.subr.bf16.mxu0 0
      %2564 = vmatpush1.bf16.msra.mxu0 %v2541
      %2565 = vmatprep.subr.bf16.mxu0 0
      %2566 = vmatpush1.bf16.msra.mxu0 %v2542
      %2567 = vmatprep.subr.bf16.mxu0 0
      %2568 = vmatpush1.bf16.msra.mxu0 0
      %2569 = vmatprep.subr.bf16.mxu0 0
      %2570 = vmatpush1.bf16.msra.mxu0 0
      %2571 = vmatprep.subr.bf16.mxu0 0
      %2572 = vmatpush1.bf16.msra.mxu0 0
      %2573 = vmatprep.subr.bf16.mxu0 0
      %2574 = vmatpush1.bf16.msra.mxu0 0
      %2575 = vmatprep.subr.bf16.mxu0 0
      %2576 = vmatpush1.bf16.msra.mxu0 0
      %2577 = vmatprep.subr.bf16.mxu0 0
      %2578 = vmatpush1.bf16.msra.mxu0 0
      %2579 = vmatprep.subr.bf16.mxu0 0
      %2580 = vmatpush1.bf16.msra.mxu0 0
      %2581 = vmatprep.subr.bf16.mxu0 0
      %2582 = vmatpush1.bf16.msra.mxu0 0
      %2583 = vmatprep.mubr.bf16.mxu0 0
      %2584 = vmatmul.mubr.bf16.gmra.mrb[0].mxu0 %v2445
      %v2585 = vpop.f32.mrb[0].mxu0
      %v2586 = vadd.f32 0.0, %v2585
      %v2587 = vpop.f32.mrb[0].mxu0
      %v2588 = vpop.f32.mrb[0].mxu0
      %v2589 = vadd.f32 0.0, %v2588
      %v2590 = vpop.f32.mrb[0].mxu0
      %2591 = vmatprep.mubr.bf16.mxu0 0
      %2592 = vmatmul.mubr.bf16.gmra.mrb[0].mxu0 %v2457
      %v2593 = vpop.f32.mrb[0].mxu0
      %v2594 = vadd.f32 0.0, %v2593
      %v2595 = vpop.f32.mrb[0].mxu0
      %v2596 = vpop.f32.mrb[0].mxu0
      %v2597 = vadd.f32 0.0, %v2596
      %v2598 = vpop.f32.mrb[0].mxu0
      %2599 = vmatprep.mubr.bf16.mxu0 0
      %2600 = vmatmul.mubr.bf16.gmra.mrb[0].mxu0 %v2469
      %v2601 = vpop.f32.mrb[0].mxu0
      %v2602 = vadd.f32 0.0, %v2601
      %v2603 = vpop.f32.mrb[0].mxu0
      %v2604 = vpop.f32.mrb[0].mxu0
      %v2605 = vadd.f32 0.0, %v2604
      %v2606 = vpop.f32.mrb[0].mxu0
      %2607 = vmatprep.mubr.bf16.mxu0 0
      %2608 = vmatmul.mubr.bf16.gmra.mrb[0].mxu0 %v2481
      %v2609 = vpop.f32.mrb[0].mxu0
      %v2610 = vadd.f32 0.0, %v2609
      %v2611 = vpop.f32.mrb[0].mxu0
      %v2612 = vpop.f32.mrb[0].mxu0
      %v2613 = vadd.f32 0.0, %v2612
      %v2614 = vpop.f32.mrb[0].mxu0
      %2615 = vdwg.mxu0
      %v2616 = vadd.f32 %v2426, %v2586
      %v2617 = vadd.f32 %v2427, %v2589
      %v2618 = vadd.f32 %v2428, %v2594
      %v2619 = vadd.f32 %v2429, %v2597
      %v2620 = vadd.f32 %v2430, %v2602
      %v2621 = vadd.f32 %v2431, %v2605
      %v2622 = vadd.f32 %v2432, %v2610
      %v2623 = vadd.f32 %v2433, %v2613
      %v2632 = vrot.slane %v944, 1
      %v2633 = vrot.slane %v950, 1
      %v2634 = vsel %vm1276, %v2632, %v2633
      %v2635 = vrot.slane %v945, 1
      %v2636 = vrot.slane %v951, 1
      %v2637 = vsel %vm1276, %v2635, %v2636
      %v2638 = vrot.slane %v946, 1
      %v2639 = vrot.slane %v952, 1
      %v2640 = vsel %vm1276, %v2638, %v2639
      %v2641 = vrot.slane %v947, 1
      %v2642 = vrot.slane %v953, 1
      %v2643 = vsel %vm1276, %v2641, %v2642
      %s2648 = scalar_lea.vmem %s9, 128
      %v2649 = vld [vmem:[%s2648] sm:$0xf]
      %v2650 = vld [vmem:[%s2648 + $0x4] sm:$0xf]
      %v2651 = vld [vmem:[%s2648 + $0x8] sm:$0xf]
      %v2652 = vld [vmem:[%s2648 + $0xc] sm:$0xf]
      %v2653 = vld [vmem:[%s2648 + $0x10] sm:$0xf]
      %v2654 = vld [vmem:[%s2648 + $0x14] sm:$0xf]
      %v2655 = vld [vmem:[%s2648 + $0x18] sm:$0xf]
      %v2656 = vld [vmem:[%s2648 + $0x1c] sm:$0xf]
      %v2657 = vld [vmem:[%s2648 + $0x20] sm:$0xf]
      %v2658 = vld [vmem:[%s2648 + $0x24] sm:$0xf]
      %v2659 = vld [vmem:[%s2648 + $0x28] sm:$0xf]
      %v2660 = vld [vmem:[%s2648 + $0x2c] sm:$0xf]
      %v2661 = vld [vmem:[%s2648 + $0x30] sm:$0xf]
      %v2662 = vld [vmem:[%s2648 + $0x34] sm:$0xf]
      %v2663 = vld [vmem:[%s2648 + $0x38] sm:$0xf]
      %v2664 = vld [vmem:[%s2648 + $0x3c] sm:$0xf]
      %v2681 = vunpack.c.l.b16 %v2649
      %v2682 = vunpack.c.l.b16 %v2650
      %v2683 = vunpack.c.l.b16 %v2651
      %v2684 = vunpack.c.l.b16 %v2652
      %v2685 = vunpack.c.l.b16 %v2653
      %v2686 = vunpack.c.l.b16 %v2654
      %v2687 = vunpack.c.l.b16 %v2655
      %v2688 = vunpack.c.l.b16 %v2656
      %v2689 = vunpack.c.l.b16 %v2657
      %v2690 = vunpack.c.l.b16 %v2658
      %v2691 = vunpack.c.l.b16 %v2659
      %v2692 = vunpack.c.l.b16 %v2660
      %v2693 = vunpack.c.l.b16 %v2661
      %v2694 = vunpack.c.l.b16 %v2662
      %v2695 = vunpack.c.l.b16 %v2663
      %v2696 = vunpack.c.l.b16 %v2664
      %v2697 = vpack.c.b16 %v2682, %v2681
      %v2698 = vpack.c.b16 %v2684, %v2683
      %v2699 = vpack.c.b16 %v2686, %v2685
      %v2700 = vpack.c.b16 %v2688, %v2687
      %v2701 = vpack.c.b16 %v2690, %v2689
      %v2702 = vpack.c.b16 %v2692, %v2691
      %v2703 = vpack.c.b16 %v2694, %v2693
      %v2704 = vpack.c.b16 %v2696, %v2695
      %2713 = vmatprep.subr.bf16.mxu0 0
      %2714 = vmatpush1.bf16.msra.mxu0 %v2697
      %2715 = vmatprep.subr.bf16.mxu0 0
      %2716 = vmatpush1.bf16.msra.mxu0 %v2698
      %2717 = vmatprep.subr.bf16.mxu0 0
      %2718 = vmatpush1.bf16.msra.mxu0 %v2699
      %2719 = vmatprep.subr.bf16.mxu0 0
      %2720 = vmatpush1.bf16.msra.mxu0 %v2700
      %2721 = vmatprep.subr.bf16.mxu0 0
      %2722 = vmatpush1.bf16.msra.mxu0 %v2701
      %2723 = vmatprep.subr.bf16.mxu0 0
      %2724 = vmatpush1.bf16.msra.mxu0 %v2702
      %2725 = vmatprep.subr.bf16.mxu0 0
      %2726 = vmatpush1.bf16.msra.mxu0 %v2703
      %2727 = vmatprep.subr.bf16.mxu0 0
      %2728 = vmatpush1.bf16.msra.mxu0 %v2704
      %2729 = vmatprep.subr.bf16.mxu0 0
      %2730 = vmatpush1.bf16.msra.mxu0 0
      %2731 = vmatprep.subr.bf16.mxu0 0
      %2732 = vmatpush1.bf16.msra.mxu0 0
      %2733 = vmatprep.subr.bf16.mxu0 0
      %2734 = vmatpush1.bf16.msra.mxu0 0
      %2735 = vmatprep.subr.bf16.mxu0 0
      %2736 = vmatpush1.bf16.msra.mxu0 0
      %2737 = vmatprep.subr.bf16.mxu0 0
      %2738 = vmatpush1.bf16.msra.mxu0 0
      %2739 = vmatprep.subr.bf16.mxu0 0
      %2740 = vmatpush1.bf16.msra.mxu0 0
      %2741 = vmatprep.subr.bf16.mxu0 0
      %2742 = vmatpush1.bf16.msra.mxu0 0
      %2743 = vmatprep.subr.bf16.mxu0 0
      %2744 = vmatpush1.bf16.msra.mxu0 0
      %2745 = vmatprep.mubr.bf16.mxu0 0
      %2746 = vmatmul.mubr.bf16.gmra.mrb[0].mxu0 %v2634
      %v2747 = vpop.f32.mrb[0].mxu0
      %v2748 = vadd.f32 0.0, %v2747
      %v2749 = vpop.f32.mrb[0].mxu0
      %v2750 = vpop.f32.mrb[0].mxu0
      %v2751 = vadd.f32 0.0, %v2750
      %v2752 = vpop.f32.mrb[0].mxu0
      %2753 = vmatprep.mubr.bf16.mxu0 0
      %2754 = vmatmul.mubr.bf16.gmra.mrb[0].mxu0 %v2637
      %v2755 = vpop.f32.mrb[0].mxu0
      %v2756 = vadd.f32 0.0, %v2755
      %v2757 = vpop.f32.mrb[0].mxu0
      %v2758 = vpop.f32.mrb[0].mxu0
      %v2759 = vadd.f32 0.0, %v2758
      %v2760 = vpop.f32.mrb[0].mxu0
      %2761 = vmatprep.mubr.bf16.mxu0 0
      %2762 = vmatmul.mubr.bf16.gmra.mrb[0].mxu0 %v2640
      %v2763 = vpop.f32.mrb[0].mxu0
      %v2764 = vadd.f32 0.0, %v2763
      %v2765 = vpop.f32.mrb[0].mxu0
      %v2766 = vpop.f32.mrb[0].mxu0
      %v2767 = vadd.f32 0.0, %v2766
      %v2768 = vpop.f32.mrb[0].mxu0
      %2769 = vmatprep.mubr.bf16.mxu0 0
      %2770 = vmatmul.mubr.bf16.gmra.mrb[0].mxu0 %v2643
      %v2771 = vpop.f32.mrb[0].mxu0
      %v2772 = vadd.f32 0.0, %v2771
      %v2773 = vpop.f32.mrb[0].mxu0
      %v2774 = vpop.f32.mrb[0].mxu0
      %v2775 = vadd.f32 0.0, %v2774
      %v2776 = vpop.f32.mrb[0].mxu0
      %2777 = vdwg.mxu0
      %v2778 = vadd.f32 %v2616, %v2748
      %v2779 = vadd.f32 %v2617, %v2751
      %v2780 = vadd.f32 %v2618, %v2756
      %v2781 = vadd.f32 %v2619, %v2759
      %v2782 = vadd.f32 %v2620, %v2764
      %v2783 = vadd.f32 %v2621, %v2767
      %v2784 = vadd.f32 %v2622, %v2772
      %v2785 = vadd.f32 %v2623, %v2775
      %s2786 = scalar_lea.vmem %s9, 192
      %v2787 = vld [vmem:[%s2786] sm:$0xf]
      %v2788 = vld [vmem:[%s2786 + $0x4] sm:$0xf]
      %v2789 = vld [vmem:[%s2786 + $0x8] sm:$0xf]
      %v2790 = vld [vmem:[%s2786 + $0xc] sm:$0xf]
      %v2791 = vld [vmem:[%s2786 + $0x10] sm:$0xf]
      %v2792 = vld [vmem:[%s2786 + $0x14] sm:$0xf]
      %v2793 = vld [vmem:[%s2786 + $0x18] sm:$0xf]
      %v2794 = vld [vmem:[%s2786 + $0x1c] sm:$0xf]
      %v2795 = vld [vmem:[%s2786 + $0x20] sm:$0xf]
      %v2796 = vld [vmem:[%s2786 + $0x24] sm:$0xf]
      %v2797 = vld [vmem:[%s2786 + $0x28] sm:$0xf]
      %v2798 = vld [vmem:[%s2786 + $0x2c] sm:$0xf]
      %v2799 = vld [vmem:[%s2786 + $0x30] sm:$0xf]
      %v2800 = vld [vmem:[%s2786 + $0x34] sm:$0xf]
      %v2801 = vld [vmem:[%s2786 + $0x38] sm:$0xf]
      %v2802 = vld [vmem:[%s2786 + $0x3c] sm:$0xf]
      %v2819 = vunpack.c.l.b16 %v2787
      %v2820 = vunpack.c.l.b16 %v2788
      %v2821 = vunpack.c.l.b16 %v2789
      %v2822 = vunpack.c.l.b16 %v2790
      %v2823 = vunpack.c.l.b16 %v2791
      %v2824 = vunpack.c.l.b16 %v2792
      %v2825 = vunpack.c.l.b16 %v2793
      %v2826 = vunpack.c.l.b16 %v2794
      %v2827 = vunpack.c.l.b16 %v2795
      %v2828 = vunpack.c.l.b16 %v2796
      %v2829 = vunpack.c.l.b16 %v2797
      %v2830 = vunpack.c.l.b16 %v2798
      %v2831 = vunpack.c.l.b16 %v2799
      %v2832 = vunpack.c.l.b16 %v2800
      %v2833 = vunpack.c.l.b16 %v2801
      %v2834 = vunpack.c.l.b16 %v2802
      %v2835 = vpack.c.b16 %v2820, %v2819
      %v2836 = vpack.c.b16 %v2822, %v2821
      %v2837 = vpack.c.b16 %v2824, %v2823
      %v2838 = vpack.c.b16 %v2826, %v2825
      %v2839 = vpack.c.b16 %v2828, %v2827
      %v2840 = vpack.c.b16 %v2830, %v2829
      %v2841 = vpack.c.b16 %v2832, %v2831
      %v2842 = vpack.c.b16 %v2834, %v2833
      %2851 = vmatprep.subr.bf16.mxu0 0
      %2852 = vmatpush1.bf16.msra.mxu0 %v2835
      %2853 = vmatprep.subr.bf16.mxu0 0
      %2854 = vmatpush1.bf16.msra.mxu0 %v2836
      %2855 = vmatprep.subr.bf16.mxu0 0
      %2856 = vmatpush1.bf16.msra.mxu0 %v2837
      %2857 = vmatprep.subr.bf16.mxu0 0
      %2858 = vmatpush1.bf16.msra.mxu0 %v2838
      %2859 = vmatprep.subr.bf16.mxu0 0
      %2860 = vmatpush1.bf16.msra.mxu0 %v2839
      %2861 = vmatprep.subr.bf16.mxu0 0
      %2862 = vmatpush1.bf16.msra.mxu0 %v2840
      %2863 = vmatprep.subr.bf16.mxu0 0
      %2864 = vmatpush1.bf16.msra.mxu0 %v2841
      %2865 = vmatprep.subr.bf16.mxu0 0
      %2866 = vmatpush1.bf16.msra.mxu0 %v2842
      %2867 = vmatprep.subr.bf16.mxu0 0
      %2868 = vmatpush1.bf16.msra.mxu0 0
      %2869 = vmatprep.subr.bf16.mxu0 0
      %2870 = vmatpush1.bf16.msra.mxu0 0
      %2871 = vmatprep.subr.bf16.mxu0 0
      %2872 = vmatpush1.bf16.msra.mxu0 0
      %2873 = vmatprep.subr.bf16.mxu0 0
      %2874 = vmatpush1.bf16.msra.mxu0 0
      %2875 = vmatprep.subr.bf16.mxu0 0
      %2876 = vmatpush1.bf16.msra.mxu0 0
      %2877 = vmatprep.subr.bf16.mxu0 0
      %2878 = vmatpush1.bf16.msra.mxu0 0
      %2879 = vmatprep.subr.bf16.mxu0 0
      %2880 = vmatpush1.bf16.msra.mxu0 0
      %2881 = vmatprep.subr.bf16.mxu0 0
      %2882 = vmatpush1.bf16.msra.mxu0 0
      %2883 = vmatprep.mubr.bf16.mxu0 0
      %2884 = vmatmul.mubr.bf16.gmra.mrb[0].mxu0 %v945
      %v2885 = vpop.f32.mrb[0].mxu0
      %v2886 = vadd.f32 0.0, %v2885
      %v2887 = vpop.f32.mrb[0].mxu0
      %v2888 = vpop.f32.mrb[0].mxu0
      %v2889 = vadd.f32 0.0, %v2888
      %v2890 = vpop.f32.mrb[0].mxu0
      %2891 = vmatprep.mubr.bf16.mxu0 0
      %2892 = vmatmul.mubr.bf16.gmra.mrb[0].mxu0 %v946
      %v2893 = vpop.f32.mrb[0].mxu0
      %v2894 = vadd.f32 0.0, %v2893
      %v2895 = vpop.f32.mrb[0].mxu0
      %v2896 = vpop.f32.mrb[0].mxu0
      %v2897 = vadd.f32 0.0, %v2896
      %v2898 = vpop.f32.mrb[0].mxu0
      %2899 = vmatprep.mubr.bf16.mxu0 0
      %2900 = vmatmul.mubr.bf16.gmra.mrb[0].mxu0 %v947
      %v2901 = vpop.f32.mrb[0].mxu0
      %v2902 = vadd.f32 0.0, %v2901
      %v2903 = vpop.f32.mrb[0].mxu0
      %v2904 = vpop.f32.mrb[0].mxu0
      %v2905 = vadd.f32 0.0, %v2904
      %v2906 = vpop.f32.mrb[0].mxu0
      %2907 = vmatprep.mubr.bf16.mxu0 0
      %2908 = vmatmul.mubr.bf16.gmra.mrb[0].mxu0 %v948
      %v2909 = vpop.f32.mrb[0].mxu0
      %v2910 = vadd.f32 0.0, %v2909
      %v2911 = vpop.f32.mrb[0].mxu0
      %v2912 = vpop.f32.mrb[0].mxu0
      %v2913 = vadd.f32 0.0, %v2912
      %v2914 = vpop.f32.mrb[0].mxu0
      %2915 = vdwg.mxu0
      %v2916 = vadd.f32 %v2778, %v2886
      %v2917 = vadd.f32 %v2779, %v2889
      %v2918 = vadd.f32 %v2780, %v2894
      %v2919 = vadd.f32 %v2781, %v2897
      %v2920 = vadd.f32 %v2782, %v2902
      %v2921 = vadd.f32 %v2783, %v2905
      %v2922 = vadd.f32 %v2784, %v2910
      %v2923 = vadd.f32 %v2785, %v2913
      %v2925 = vshrl.u32 %v948, 16
      %v2927 = vshll.u32 %v948, 16
      %v2929 = vrot.slane %v2927, 1
      %v2930 = vor.u32 %v2925, %v2929
      %v2932 = vshll.u32 %v954, 16
      %v2934 = vrot.slane %v2932, 1
      %v2935 = vsel %vm972, %v2930, %v2934
      %s2937 = scalar_lea.vmem %s9, 256
      %v2938 = vld [vmem:[%s2937] sm:$0xf]
      %v2939 = vld [vmem:[%s2937 + $0x4] sm:$0xf]
      %v2940 = vld [vmem:[%s2937 + $0x8] sm:$0xf]
      %v2941 = vld [vmem:[%s2937 + $0xc] sm:$0xf]
      %v2942 = vld [vmem:[%s2937 + $0x10] sm:$0xf]
      %v2943 = vld [vmem:[%s2937 + $0x14] sm:$0xf]
      %v2944 = vld [vmem:[%s2937 + $0x18] sm:$0xf]
      %v2945 = vld [vmem:[%s2937 + $0x1c] sm:$0xf]
      %v2946 = vld [vmem:[%s2937 + $0x20] sm:$0xf]
      %v2947 = vld [vmem:[%s2937 + $0x24] sm:$0xf]
      %v2948 = vld [vmem:[%s2937 + $0x28] sm:$0xf]
      %v2949 = vld [vmem:[%s2937 + $0x2c] sm:$0xf]
      %v2950 = vld [vmem:[%s2937 + $0x30] sm:$0xf]
      %v2951 = vld [vmem:[%s2937 + $0x34] sm:$0xf]
      %v2952 = vld [vmem:[%s2937 + $0x38] sm:$0xf]
      %v2953 = vld [vmem:[%s2937 + $0x3c] sm:$0xf]
      %v2970 = vunpack.c.l.b16 %v2938
      %v2971 = vunpack.c.l.b16 %v2939
      %v2972 = vunpack.c.l.b16 %v2940
      %v2973 = vunpack.c.l.b16 %v2941
      %v2974 = vunpack.c.l.b16 %v2942
      %v2975 = vunpack.c.l.b16 %v2943
      %v2976 = vunpack.c.l.b16 %v2944
      %v2977 = vunpack.c.l.b16 %v2945
      %v2978 = vunpack.c.l.b16 %v2946
      %v2979 = vunpack.c.l.b16 %v2947
      %v2980 = vunpack.c.l.b16 %v2948
      %v2981 = vunpack.c.l.b16 %v2949
      %v2982 = vunpack.c.l.b16 %v2950
      %v2983 = vunpack.c.l.b16 %v2951
      %v2984 = vunpack.c.l.b16 %v2952
      %v2985 = vunpack.c.l.b16 %v2953
      %v2986 = vpack.c.b16 %v2971, %v2970
      %v2987 = vpack.c.b16 %v2973, %v2972
      %v2988 = vpack.c.b16 %v2975, %v2974
      %v2989 = vpack.c.b16 %v2977, %v2976
      %v2990 = vpack.c.b16 %v2979, %v2978
      %v2991 = vpack.c.b16 %v2981, %v2980
      %v2992 = vpack.c.b16 %v2983, %v2982
      %v2993 = vpack.c.b16 %v2985, %v2984
      %3002 = vmatprep.subr.bf16.mxu0 0
      %3003 = vmatpush1.bf16.msra.mxu0 %v2986
      %3004 = vmatprep.subr.bf16.mxu0 0
      %3005 = vmatpush1.bf16.msra.mxu0 %v2987
      %3006 = vmatprep.subr.bf16.mxu0 0
      %3007 = vmatpush1.bf16.msra.mxu0 %v2988
      %3008 = vmatprep.subr.bf16.mxu0 0
      %3009 = vmatpush1.bf16.msra.mxu0 %v2989
      %3010 = vmatprep.subr.bf16.mxu0 0
      %3011 = vmatpush1.bf16.msra.mxu0 %v2990
      %3012 = vmatprep.subr.bf16.mxu0 0
      %3013 = vmatpush1.bf16.msra.mxu0 %v2991
      %3014 = vmatprep.subr.bf16.mxu0 0
      %3015 = vmatpush1.bf16.msra.mxu0 %v2992
      %3016 = vmatprep.subr.bf16.mxu0 0
      %3017 = vmatpush1.bf16.msra.mxu0 %v2993
      %3018 = vmatprep.subr.bf16.mxu0 0
      %3019 = vmatpush1.bf16.msra.mxu0 0
      %3020 = vmatprep.subr.bf16.mxu0 0
      %3021 = vmatpush1.bf16.msra.mxu0 0
      %3022 = vmatprep.subr.bf16.mxu0 0
      %3023 = vmatpush1.bf16.msra.mxu0 0
      %3024 = vmatprep.subr.bf16.mxu0 0
      %3025 = vmatpush1.bf16.msra.mxu0 0
      %3026 = vmatprep.subr.bf16.mxu0 0
      %3027 = vmatpush1.bf16.msra.mxu0 0
      %3028 = vmatprep.subr.bf16.mxu0 0
      %3029 = vmatpush1.bf16.msra.mxu0 0
      %3030 = vmatprep.subr.bf16.mxu0 0
      %3031 = vmatpush1.bf16.msra.mxu0 0
      %3032 = vmatprep.subr.bf16.mxu0 0
      %3033 = vmatpush1.bf16.msra.mxu0 0
      %3034 = vmatprep.mubr.bf16.mxu0 0
      %3035 = vmatmul.mubr.bf16.gmra.mrb[0].mxu0 %v2457
      %v3036 = vpop.f32.mrb[0].mxu0
      %v3037 = vadd.f32 0.0, %v3036
      %v3038 = vpop.f32.mrb[0].mxu0
      %v3039 = vpop.f32.mrb[0].mxu0
      %v3040 = vadd.f32 0.0, %v3039
      %v3041 = vpop.f32.mrb[0].mxu0
      %3042 = vmatprep.mubr.bf16.mxu0 0
      %3043 = vmatmul.mubr.bf16.gmra.mrb[0].mxu0 %v2469
      %v3044 = vpop.f32.mrb[0].mxu0
      %v3045 = vadd.f32 0.0, %v3044
      %v3046 = vpop.f32.mrb[0].mxu0
      %v3047 = vpop.f32.mrb[0].mxu0
      %v3048 = vadd.f32 0.0, %v3047
      %v3049 = vpop.f32.mrb[0].mxu0
      %3050 = vmatprep.mubr.bf16.mxu0 0
      %3051 = vmatmul.mubr.bf16.gmra.mrb[0].mxu0 %v2481
      %v3052 = vpop.f32.mrb[0].mxu0
      %v3053 = vadd.f32 0.0, %v3052
      %v3054 = vpop.f32.mrb[0].mxu0
      %v3055 = vpop.f32.mrb[0].mxu0
      %v3056 = vadd.f32 0.0, %v3055
      %v3057 = vpop.f32.mrb[0].mxu0
      %3058 = vmatprep.mubr.bf16.mxu0 0
      %3059 = vmatmul.mubr.bf16.gmra.mrb[0].mxu0 %v2935
      %v3060 = vpop.f32.mrb[0].mxu0
      %v3061 = vadd.f32 0.0, %v3060
      %v3062 = vpop.f32.mrb[0].mxu0
      %v3063 = vpop.f32.mrb[0].mxu0
      %v3064 = vadd.f32 0.0, %v3063
      %v3065 = vpop.f32.mrb[0].mxu0
      %3066 = vdwg.mxu0
      %v3067 = vadd.f32 %v2916, %v3037
      %v3068 = vadd.f32 %v2917, %v3040
      %v3069 = vadd.f32 %v2918, %v3045
      %v3070 = vadd.f32 %v2919, %v3048
      %v3071 = vadd.f32 %v2920, %v3053
      %v3072 = vadd.f32 %v2921, %v3056
      %v3073 = vadd.f32 %v2922, %v3061
      %v3074 = vadd.f32 %v2923, %v3064
      %v3077 = vrot.slane %v948, 1
      %v3078 = vrot.slane %v954, 1
      %v3079 = vsel %vm1276, %v3077, %v3078
      %s3081 = scalar_lea.vmem %s9, 320
      %v3082 = vld [vmem:[%s3081] sm:$0xf]
      %v3083 = vld [vmem:[%s3081 + $0x4] sm:$0xf]
      %v3084 = vld [vmem:[%s3081 + $0x8] sm:$0xf]
      %v3085 = vld [vmem:[%s3081 + $0xc] sm:$0xf]
      %v3086 = vld [vmem:[%s3081 + $0x10] sm:$0xf]
      %v3087 = vld [vmem:[%s3081 + $0x14] sm:$0xf]
      %v3088 = vld [vmem:[%s3081 + $0x18] sm:$0xf]
      %v3089 = vld [vmem:[%s3081 + $0x1c] sm:$0xf]
      %v3090 = vld [vmem:[%s3081 + $0x20] sm:$0xf]
      %v3091 = vld [vmem:[%s3081 + $0x24] sm:$0xf]
      %v3092 = vld [vmem:[%s3081 + $0x28] sm:$0xf]
      %v3093 = vld [vmem:[%s3081 + $0x2c] sm:$0xf]
      %v3094 = vld [vmem:[%s3081 + $0x30] sm:$0xf]
      %v3095 = vld [vmem:[%s3081 + $0x34] sm:$0xf]
      %v3096 = vld [vmem:[%s3081 + $0x38] sm:$0xf]
      %v3097 = vld [vmem:[%s3081 + $0x3c] sm:$0xf]
      %v3114 = vunpack.c.l.b16 %v3082
      %v3115 = vunpack.c.l.b16 %v3083
      %v3116 = vunpack.c.l.b16 %v3084
      %v3117 = vunpack.c.l.b16 %v3085
      %v3118 = vunpack.c.l.b16 %v3086
      %v3119 = vunpack.c.l.b16 %v3087
      %v3120 = vunpack.c.l.b16 %v3088
      %v3121 = vunpack.c.l.b16 %v3089
      %v3122 = vunpack.c.l.b16 %v3090
      %v3123 = vunpack.c.l.b16 %v3091
      %v3124 = vunpack.c.l.b16 %v3092
      %v3125 = vunpack.c.l.b16 %v3093
      %v3126 = vunpack.c.l.b16 %v3094
      %v3127 = vunpack.c.l.b16 %v3095
      %v3128 = vunpack.c.l.b16 %v3096
      %v3129 = vunpack.c.l.b16 %v3097
      %v3130 = vpack.c.b16 %v3115, %v3114
      %v3131 = vpack.c.b16 %v3117, %v3116
      %v3132 = vpack.c.b16 %v3119, %v3118
      %v3133 = vpack.c.b16 %v3121, %v3120
      %v3134 = vpack.c.b16 %v3123, %v3122
      %v3135 = vpack.c.b16 %v3125, %v3124
      %v3136 = vpack.c.b16 %v3127, %v3126
      %v3137 = vpack.c.b16 %v3129, %v3128
      %3146 = vmatprep.subr.bf16.mxu0 0
      %3147 = vmatpush1.bf16.msra.mxu0 %v3130
      %3148 = vmatprep.subr.bf16.mxu0 0
      %3149 = vmatpush1.bf16.msra.mxu0 %v3131
      %3150 = vmatprep.subr.bf16.mxu0 0
      %3151 = vmatpush1.bf16.msra.mxu0 %v3132
      %3152 = vmatprep.subr.bf16.mxu0 0
      %3153 = vmatpush1.bf16.msra.mxu0 %v3133
      %3154 = vmatprep.subr.bf16.mxu0 0
      %3155 = vmatpush1.bf16.msra.mxu0 %v3134
      %3156 = vmatprep.subr.bf16.mxu0 0
      %3157 = vmatpush1.bf16.msra.mxu0 %v3135
      %3158 = vmatprep.subr.bf16.mxu0 0
      %3159 = vmatpush1.bf16.msra.mxu0 %v3136
      %3160 = vmatprep.subr.bf16.mxu0 0
      %3161 = vmatpush1.bf16.msra.mxu0 %v3137
      %3162 = vmatprep.subr.bf16.mxu0 0
      %3163 = vmatpush1.bf16.msra.mxu0 0
      %3164 = vmatprep.subr.bf16.mxu0 0
      %3165 = vmatpush1.bf16.msra.mxu0 0
      %3166 = vmatprep.subr.bf16.mxu0 0
      %3167 = vmatpush1.bf16.msra.mxu0 0
      %3168 = vmatprep.subr.bf16.mxu0 0
      %3169 = vmatpush1.bf16.msra.mxu0 0
      %3170 = vmatprep.subr.bf16.mxu0 0
      %3171 = vmatpush1.bf16.msra.mxu0 0
      %3172 = vmatprep.subr.bf16.mxu0 0
      %3173 = vmatpush1.bf16.msra.mxu0 0
      %3174 = vmatprep.subr.bf16.mxu0 0
      %3175 = vmatpush1.bf16.msra.mxu0 0
      %3176 = vmatprep.subr.bf16.mxu0 0
      %3177 = vmatpush1.bf16.msra.mxu0 0
      %3178 = vmatprep.mubr.bf16.mxu0 0
      %3179 = vmatmul.mubr.bf16.gmra.mrb[0].mxu0 %v2637
      %v3180 = vpop.f32.mrb[0].mxu0
      %v3181 = vadd.f32 0.0, %v3180
      %v3182 = vpop.f32.mrb[0].mxu0
      %v3183 = vpop.f32.mrb[0].mxu0
      %v3184 = vadd.f32 0.0, %v3183
      %v3185 = vpop.f32.mrb[0].mxu0
      %3186 = vmatprep.mubr.bf16.mxu0 0
      %3187 = vmatmul.mubr.bf16.gmra.mrb[0].mxu0 %v2640
      %v3188 = vpop.f32.mrb[0].mxu0
      %v3189 = vadd.f32 0.0, %v3188
      %v3190 = vpop.f32.mrb[0].mxu0
      %v3191 = vpop.f32.mrb[0].mxu0
      %v3192 = vadd.f32 0.0, %v3191
      %v3193 = vpop.f32.mrb[0].mxu0
      %3194 = vmatprep.mubr.bf16.mxu0 0
      %3195 = vmatmul.mubr.bf16.gmra.mrb[0].mxu0 %v2643
      %v3196 = vpop.f32.mrb[0].mxu0
      %v3197 = vadd.f32 0.0, %v3196
      %v3198 = vpop.f32.mrb[0].mxu0
      %v3199 = vpop.f32.mrb[0].mxu0
      %v3200 = vadd.f32 0.0, %v3199
      %v3201 = vpop.f32.mrb[0].mxu0
      %3202 = vmatprep.mubr.bf16.mxu0 0
      %3203 = vmatmul.mubr.bf16.gmra.mrb[0].mxu0 %v3079
      %v3204 = vpop.f32.mrb[0].mxu0
      %v3205 = vadd.f32 0.0, %v3204
      %v3206 = vpop.f32.mrb[0].mxu0
      %v3207 = vpop.f32.mrb[0].mxu0
      %v3208 = vadd.f32 0.0, %v3207
      %v3209 = vpop.f32.mrb[0].mxu0
      %3210 = vdwg.mxu0
      %v3211 = vadd.f32 %v3067, %v3181
      %v3212 = vadd.f32 %v3068, %v3184
      %v3213 = vadd.f32 %v3069, %v3189
      %v3214 = vadd.f32 %v3070, %v3192
      %v3215 = vadd.f32 %v3071, %v3197
      %v3216 = vadd.f32 %v3072, %v3200
      %v3217 = vadd.f32 %v3073, %v3205
      %v3218 = vadd.f32 %v3074, %v3208
      %s3219 = scalar_lea.vmem %s9, 384
      %v3220 = vld [vmem:[%s3219] sm:$0xf]
      %v3221 = vld [vmem:[%s3219 + $0x4] sm:$0xf]
      %v3222 = vld [vmem:[%s3219 + $0x8] sm:$0xf]
      %v3223 = vld [vmem:[%s3219 + $0xc] sm:$0xf]
      %v3224 = vld [vmem:[%s3219 + $0x10] sm:$0xf]
      %v3225 = vld [vmem:[%s3219 + $0x14] sm:$0xf]
      %v3226 = vld [vmem:[%s3219 + $0x18] sm:$0xf]
      %v3227 = vld [vmem:[%s3219 + $0x1c] sm:$0xf]
      %v3228 = vld [vmem:[%s3219 + $0x20] sm:$0xf]
      %v3229 = vld [vmem:[%s3219 + $0x24] sm:$0xf]
      %v3230 = vld [vmem:[%s3219 + $0x28] sm:$0xf]
      %v3231 = vld [vmem:[%s3219 + $0x2c] sm:$0xf]
      %v3232 = vld [vmem:[%s3219 + $0x30] sm:$0xf]
      %v3233 = vld [vmem:[%s3219 + $0x34] sm:$0xf]
      %v3234 = vld [vmem:[%s3219 + $0x38] sm:$0xf]
      %v3235 = vld [vmem:[%s3219 + $0x3c] sm:$0xf]
      %v3252 = vunpack.c.l.b16 %v3220
      %v3253 = vunpack.c.l.b16 %v3221
      %v3254 = vunpack.c.l.b16 %v3222
      %v3255 = vunpack.c.l.b16 %v3223
      %v3256 = vunpack.c.l.b16 %v3224
      %v3257 = vunpack.c.l.b16 %v3225
      %v3258 = vunpack.c.l.b16 %v3226
      %v3259 = vunpack.c.l.b16 %v3227
      %v3260 = vunpack.c.l.b16 %v3228
      %v3261 = vunpack.c.l.b16 %v3229
      %v3262 = vunpack.c.l.b16 %v3230
      %v3263 = vunpack.c.l.b16 %v3231
      %v3264 = vunpack.c.l.b16 %v3232
      %v3265 = vunpack.c.l.b16 %v3233
      %v3266 = vunpack.c.l.b16 %v3234
      %v3267 = vunpack.c.l.b16 %v3235
      %v3268 = vpack.c.b16 %v3253, %v3252
      %v3269 = vpack.c.b16 %v3255, %v3254
      %v3270 = vpack.c.b16 %v3257, %v3256
      %v3271 = vpack.c.b16 %v3259, %v3258
      %v3272 = vpack.c.b16 %v3261, %v3260
      %v3273 = vpack.c.b16 %v3263, %v3262
      %v3274 = vpack.c.b16 %v3265, %v3264
      %v3275 = vpack.c.b16 %v3267, %v3266
      %3284 = vmatprep.subr.bf16.mxu0 0
      %3285 = vmatpush1.bf16.msra.mxu0 %v3268
      %3286 = vmatprep.subr.bf16.mxu0 0
      %3287 = vmatpush1.bf16.msra.mxu0 %v3269
      %3288 = vmatprep.subr.bf16.mxu0 0
      %3289 = vmatpush1.bf16.msra.mxu0 %v3270
      %3290 = vmatprep.subr.bf16.mxu0 0
      %3291 = vmatpush1.bf16.msra.mxu0 %v3271
      %3292 = vmatprep.subr.bf16.mxu0 0
      %3293 = vmatpush1.bf16.msra.mxu0 %v3272
      %3294 = vmatprep.subr.bf16.mxu0 0
      %3295 = vmatpush1.bf16.msra.mxu0 %v3273
      %3296 = vmatprep.subr.bf16.mxu0 0
      %3297 = vmatpush1.bf16.msra.mxu0 %v3274
      %3298 = vmatprep.subr.bf16.mxu0 0
      %3299 = vmatpush1.bf16.msra.mxu0 %v3275
      %3300 = vmatprep.subr.bf16.mxu0 0
      %3301 = vmatpush1.bf16.msra.mxu0 0
      %3302 = vmatprep.subr.bf16.mxu0 0
      %3303 = vmatpush1.bf16.msra.mxu0 0
      %3304 = vmatprep.subr.bf16.mxu0 0
      %3305 = vmatpush1.bf16.msra.mxu0 0
      %3306 = vmatprep.subr.bf16.mxu0 0
      %3307 = vmatpush1.bf16.msra.mxu0 0
      %3308 = vmatprep.subr.bf16.mxu0 0
      %3309 = vmatpush1.bf16.msra.mxu0 0
      %3310 = vmatprep.subr.bf16.mxu0 0
      %3311 = vmatpush1.bf16.msra.mxu0 0
      %3312 = vmatprep.subr.bf16.mxu0 0
      %3313 = vmatpush1.bf16.msra.mxu0 0
      %3314 = vmatprep.subr.bf16.mxu0 0
      %3315 = vmatpush1.bf16.msra.mxu0 0
      %3316 = vmatprep.mubr.bf16.mxu0 0
      %3317 = vmatmul.mubr.bf16.gmra.mrb[0].mxu0 %v946
      %v3318 = vpop.f32.mrb[0].mxu0
      %v3319 = vadd.f32 0.0, %v3318
      %v3320 = vpop.f32.mrb[0].mxu0
      %v3321 = vpop.f32.mrb[0].mxu0
      %v3322 = vadd.f32 0.0, %v3321
      %v3323 = vpop.f32.mrb[0].mxu0
      %3324 = vmatprep.mubr.bf16.mxu0 0
      %3325 = vmatmul.mubr.bf16.gmra.mrb[0].mxu0 %v947
      %v3326 = vpop.f32.mrb[0].mxu0
      %v3327 = vadd.f32 0.0, %v3326
      %v3328 = vpop.f32.mrb[0].mxu0
      %v3329 = vpop.f32.mrb[0].mxu0
      %v3330 = vadd.f32 0.0, %v3329
      %v3331 = vpop.f32.mrb[0].mxu0
      %3332 = vmatprep.mubr.bf16.mxu0 0
      %3333 = vmatmul.mubr.bf16.gmra.mrb[0].mxu0 %v948
      %v3334 = vpop.f32.mrb[0].mxu0
      %v3335 = vadd.f32 0.0, %v3334
      %v3336 = vpop.f32.mrb[0].mxu0
      %v3337 = vpop.f32.mrb[0].mxu0
      %v3338 = vadd.f32 0.0, %v3337
      %v3339 = vpop.f32.mrb[0].mxu0
      %3340 = vmatprep.mubr.bf16.mxu0 0
      %3341 = vmatmul.mubr.bf16.gmra.mrb[0].mxu0 %v949
      %v3342 = vpop.f32.mrb[0].mxu0
      %v3343 = vadd.f32 0.0, %v3342
      %v3344 = vpop.f32.mrb[0].mxu0
      %v3345 = vpop.f32.mrb[0].mxu0
      %v3346 = vadd.f32 0.0, %v3345
      %v3347 = vpop.f32.mrb[0].mxu0
      %3348 = vdwg.mxu0
      %v3349 = vadd.f32 %v3211, %v3319
      %v3350 = vadd.f32 %v3212, %v3322
      %v3351 = vadd.f32 %v3213, %v3327
      %v3352 = vadd.f32 %v3214, %v3330
      %v3353 = vadd.f32 %v3215, %v3335
      %v3354 = vadd.f32 %v3216, %v3338
      %v3355 = vadd.f32 %v3217, %v3343
      %v3356 = vadd.f32 %v3218, %v3346
      %v3358 = vshrl.u32 %v949, 16
      %v3360 = vshll.u32 %v949, 16
      %v3362 = vrot.slane %v3360, 1
      %v3363 = vor.u32 %v3358, %v3362
      %v3365 = vshll.u32 %v955, 16
      %v3367 = vrot.slane %v3365, 1
      %v3368 = vsel %vm972, %v3363, %v3367
      %s3370 = scalar_lea.vmem %s9, 448
      %v3371 = vld [vmem:[%s3370] sm:$0xf]
      %v3372 = vld [vmem:[%s3370 + $0x4] sm:$0xf]
      %v3373 = vld [vmem:[%s3370 + $0x8] sm:$0xf]
      %v3374 = vld [vmem:[%s3370 + $0xc] sm:$0xf]
      %v3375 = vld [vmem:[%s3370 + $0x10] sm:$0xf]
      %v3376 = vld [vmem:[%s3370 + $0x14] sm:$0xf]
      %v3377 = vld [vmem:[%s3370 + $0x18] sm:$0xf]
      %v3378 = vld [vmem:[%s3370 + $0x1c] sm:$0xf]
      %v3379 = vld [vmem:[%s3370 + $0x20] sm:$0xf]
      %v3380 = vld [vmem:[%s3370 + $0x24] sm:$0xf]
      %v3381 = vld [vmem:[%s3370 + $0x28] sm:$0xf]
      %v3382 = vld [vmem:[%s3370 + $0x2c] sm:$0xf]
      %v3383 = vld [vmem:[%s3370 + $0x30] sm:$0xf]
      %v3384 = vld [vmem:[%s3370 + $0x34] sm:$0xf]
      %v3385 = vld [vmem:[%s3370 + $0x38] sm:$0xf]
      %v3386 = vld [vmem:[%s3370 + $0x3c] sm:$0xf]
      %v3403 = vunpack.c.l.b16 %v3371
      %v3404 = vunpack.c.l.b16 %v3372
      %v3405 = vunpack.c.l.b16 %v3373
      %v3406 = vunpack.c.l.b16 %v3374
      %v3407 = vunpack.c.l.b16 %v3375
      %v3408 = vunpack.c.l.b16 %v3376
      %v3409 = vunpack.c.l.b16 %v3377
      %v3410 = vunpack.c.l.b16 %v3378
      %v3411 = vunpack.c.l.b16 %v3379
      %v3412 = vunpack.c.l.b16 %v3380
      %v3413 = vunpack.c.l.b16 %v3381
      %v3414 = vunpack.c.l.b16 %v3382
      %v3415 = vunpack.c.l.b16 %v3383
      %v3416 = vunpack.c.l.b16 %v3384
      %v3417 = vunpack.c.l.b16 %v3385
      %v3418 = vunpack.c.l.b16 %v3386
      %v3419 = vpack.c.b16 %v3404, %v3403
      %v3420 = vpack.c.b16 %v3406, %v3405
      %v3421 = vpack.c.b16 %v3408, %v3407
      %v3422 = vpack.c.b16 %v3410, %v3409
      %v3423 = vpack.c.b16 %v3412, %v3411
      %v3424 = vpack.c.b16 %v3414, %v3413
      %v3425 = vpack.c.b16 %v3416, %v3415
      %v3426 = vpack.c.b16 %v3418, %v3417
      %3435 = vmatprep.subr.bf16.mxu0 0
      %3436 = vmatpush1.bf16.msra.mxu0 %v3419
      %3437 = vmatprep.subr.bf16.mxu0 0
      %3438 = vmatpush1.bf16.msra.mxu0 %v3420
      %3439 = vmatprep.subr.bf16.mxu0 0
      %3440 = vmatpush1.bf16.msra.mxu0 %v3421
      %3441 = vmatprep.subr.bf16.mxu0 0
      %3442 = vmatpush1.bf16.msra.mxu0 %v3422
      %3443 = vmatprep.subr.bf16.mxu0 0
      %3444 = vmatpush1.bf16.msra.mxu0 %v3423
      %3445 = vmatprep.subr.bf16.mxu0 0
      %3446 = vmatpush1.bf16.msra.mxu0 %v3424
      %3447 = vmatprep.subr.bf16.mxu0 0
      %3448 = vmatpush1.bf16.msra.mxu0 %v3425
      %3449 = vmatprep.subr.bf16.mxu0 0
      %3450 = vmatpush1.bf16.msra.mxu0 %v3426
      %3451 = vmatprep.subr.bf16.mxu0 0
      %3452 = vmatpush1.bf16.msra.mxu0 0
      %3453 = vmatprep.subr.bf16.mxu0 0
      %3454 = vmatpush1.bf16.msra.mxu0 0
      %3455 = vmatprep.subr.bf16.mxu0 0
      %3456 = vmatpush1.bf16.msra.mxu0 0
      %3457 = vmatprep.subr.bf16.mxu0 0
      %3458 = vmatpush1.bf16.msra.mxu0 0
      %3459 = vmatprep.subr.bf16.mxu0 0
      %3460 = vmatpush1.bf16.msra.mxu0 0
      %3461 = vmatprep.subr.bf16.mxu0 0
      %3462 = vmatpush1.bf16.msra.mxu0 0
      %3463 = vmatprep.subr.bf16.mxu0 0
      %3464 = vmatpush1.bf16.msra.mxu0 0
      %3465 = vmatprep.subr.bf16.mxu0 0
      %3466 = vmatpush1.bf16.msra.mxu0 0
      %3467 = vmatprep.mubr.bf16.mxu0 0
      %3468 = vmatmul.mubr.bf16.gmra.mrb[0].mxu0 %v2469
      %v3469 = vpop.f32.mrb[0].mxu0
      %v3470 = vadd.f32 0.0, %v3469
      %v3471 = vpop.f32.mrb[0].mxu0
      %v3472 = vpop.f32.mrb[0].mxu0
      %v3473 = vadd.f32 0.0, %v3472
      %v3474 = vpop.f32.mrb[0].mxu0
      %3475 = vmatprep.mubr.bf16.mxu0 0
      %3476 = vmatmul.mubr.bf16.gmra.mrb[0].mxu0 %v2481
      %v3477 = vpop.f32.mrb[0].mxu0
      %v3478 = vadd.f32 0.0, %v3477
      %v3479 = vpop.f32.mrb[0].mxu0
      %v3480 = vpop.f32.mrb[0].mxu0
      %v3481 = vadd.f32 0.0, %v3480
      %v3482 = vpop.f32.mrb[0].mxu0
      %3483 = vmatprep.mubr.bf16.mxu0 0
      %3484 = vmatmul.mubr.bf16.gmra.mrb[0].mxu0 %v2935
      %v3485 = vpop.f32.mrb[0].mxu0
      %v3486 = vadd.f32 0.0, %v3485
      %v3487 = vpop.f32.mrb[0].mxu0
      %v3488 = vpop.f32.mrb[0].mxu0
      %v3489 = vadd.f32 0.0, %v3488
      %v3490 = vpop.f32.mrb[0].mxu0
      %3491 = vmatprep.mubr.bf16.mxu0 0
      %3492 = vmatmul.mubr.bf16.gmra.mrb[0].mxu0 %v3368
      %v3493 = vpop.f32.mrb[0].mxu0
      %v3494 = vadd.f32 0.0, %v3493
      %v3495 = vpop.f32.mrb[0].mxu0
      %v3496 = vpop.f32.mrb[0].mxu0
      %v3497 = vadd.f32 0.0, %v3496
      %v3498 = vpop.f32.mrb[0].mxu0
      %3499 = vdwg.mxu0
      %v3500 = vadd.f32 %v3349, %v3470
      %v3501 = vadd.f32 %v3350, %v3473
      %v3502 = vadd.f32 %v3351, %v3478
      %v3503 = vadd.f32 %v3352, %v3481
      %v3504 = vadd.f32 %v3353, %v3486
      %v3505 = vadd.f32 %v3354, %v3489
      %v3506 = vadd.f32 %v3355, %v3494
      %v3507 = vadd.f32 %v3356, %v3497
      %v3510 = vrot.slane %v949, 1
      %v3511 = vrot.slane %v955, 1
      %v3512 = vsel %vm1276, %v3510, %v3511
      %s3514 = scalar_lea.vmem %s9, 512
      %v3515 = vld [vmem:[%s3514] sm:$0xf]
      %v3516 = vld [vmem:[%s3514 + $0x4] sm:$0xf]
      %v3517 = vld [vmem:[%s3514 + $0x8] sm:$0xf]
      %v3518 = vld [vmem:[%s3514 + $0xc] sm:$0xf]
      %v3519 = vld [vmem:[%s3514 + $0x10] sm:$0xf]
      %v3520 = vld [vmem:[%s3514 + $0x14] sm:$0xf]
      %v3521 = vld [vmem:[%s3514 + $0x18] sm:$0xf]
      %v3522 = vld [vmem:[%s3514 + $0x1c] sm:$0xf]
      %v3523 = vld [vmem:[%s3514 + $0x20] sm:$0xf]
      %v3524 = vld [vmem:[%s3514 + $0x24] sm:$0xf]
      %v3525 = vld [vmem:[%s3514 + $0x28] sm:$0xf]
      %v3526 = vld [vmem:[%s3514 + $0x2c] sm:$0xf]
      %v3527 = vld [vmem:[%s3514 + $0x30] sm:$0xf]
      %v3528 = vld [vmem:[%s3514 + $0x34] sm:$0xf]
      %v3529 = vld [vmem:[%s3514 + $0x38] sm:$0xf]
      %v3530 = vld [vmem:[%s3514 + $0x3c] sm:$0xf]
      %v3547 = vunpack.c.l.b16 %v3515
      %v3548 = vunpack.c.l.b16 %v3516
      %v3549 = vunpack.c.l.b16 %v3517
      %v3550 = vunpack.c.l.b16 %v3518
      %v3551 = vunpack.c.l.b16 %v3519
      %v3552 = vunpack.c.l.b16 %v3520
      %v3553 = vunpack.c.l.b16 %v3521
      %v3554 = vunpack.c.l.b16 %v3522
      %v3555 = vunpack.c.l.b16 %v3523
      %v3556 = vunpack.c.l.b16 %v3524
      %v3557 = vunpack.c.l.b16 %v3525
      %v3558 = vunpack.c.l.b16 %v3526
      %v3559 = vunpack.c.l.b16 %v3527
      %v3560 = vunpack.c.l.b16 %v3528
      %v3561 = vunpack.c.l.b16 %v3529
      %v3562 = vunpack.c.l.b16 %v3530
      %v3563 = vpack.c.b16 %v3548, %v3547
      %v3564 = vpack.c.b16 %v3550, %v3549
      %v3565 = vpack.c.b16 %v3552, %v3551
      %v3566 = vpack.c.b16 %v3554, %v3553
      %v3567 = vpack.c.b16 %v3556, %v3555
      %v3568 = vpack.c.b16 %v3558, %v3557
      %v3569 = vpack.c.b16 %v3560, %v3559
      %v3570 = vpack.c.b16 %v3562, %v3561
      %3579 = vmatprep.subr.bf16.mxu0 0
      %3580 = vmatpush1.bf16.msra.mxu0 %v3563
      %3581 = vmatprep.subr.bf16.mxu0 0
      %3582 = vmatpush1.bf16.msra.mxu0 %v3564
      %3583 = vmatprep.subr.bf16.mxu0 0
      %3584 = vmatpush1.bf16.msra.mxu0 %v3565
      %3585 = vmatprep.subr.bf16.mxu0 0
      %3586 = vmatpush1.bf16.msra.mxu0 %v3566
      %3587 = vmatprep.subr.bf16.mxu0 0
      %3588 = vmatpush1.bf16.msra.mxu0 %v3567
      %3589 = vmatprep.subr.bf16.mxu0 0
      %3590 = vmatpush1.bf16.msra.mxu0 %v3568
      %3591 = vmatprep.subr.bf16.mxu0 0
      %3592 = vmatpush1.bf16.msra.mxu0 %v3569
      %3593 = vmatprep.subr.bf16.mxu0 0
      %3594 = vmatpush1.bf16.msra.mxu0 %v3570
      %3595 = vmatprep.subr.bf16.mxu0 0
      %3596 = vmatpush1.bf16.msra.mxu0 0
      %3597 = vmatprep.subr.bf16.mxu0 0
      %3598 = vmatpush1.bf16.msra.mxu0 0
      %3599 = vmatprep.subr.bf16.mxu0 0
      %3600 = vmatpush1.bf16.msra.mxu0 0
      %3601 = vmatprep.subr.bf16.mxu0 0
      %3602 = vmatpush1.bf16.msra.mxu0 0
      %3603 = vmatprep.subr.bf16.mxu0 0
      %3604 = vmatpush1.bf16.msra.mxu0 0
      %3605 = vmatprep.subr.bf16.mxu0 0
      %3606 = vmatpush1.bf16.msra.mxu0 0
      %3607 = vmatprep.subr.bf16.mxu0 0
      %3608 = vmatpush1.bf16.msra.mxu0 0
      %3609 = vmatprep.subr.bf16.mxu0 0
      %3610 = vmatpush1.bf16.msra.mxu0 0
      %3611 = vmatprep.mubr.bf16.mxu0 0
      %3612 = vmatmul.mubr.bf16.gmra.mrb[0].mxu0 %v2640
      %v3613 = vpop.f32.mrb[0].mxu0
      %v3614 = vadd.f32 0.0, %v3613
      %v3615 = vpop.f32.mrb[0].mxu0
      %v3616 = vpop.f32.mrb[0].mxu0
      %v3617 = vadd.f32 0.0, %v3616
      %v3618 = vpop.f32.mrb[0].mxu0
      %3619 = vmatprep.mubr.bf16.mxu0 0
      %3620 = vmatmul.mubr.bf16.gmra.mrb[0].mxu0 %v2643
      %v3621 = vpop.f32.mrb[0].mxu0
      %v3622 = vadd.f32 0.0, %v3621
      %v3623 = vpop.f32.mrb[0].mxu0
      %v3624 = vpop.f32.mrb[0].mxu0
      %v3625 = vadd.f32 0.0, %v3624
      %v3626 = vpop.f32.mrb[0].mxu0
      %3627 = vmatprep.mubr.bf16.mxu0 0
      %3628 = vmatmul.mubr.bf16.gmra.mrb[0].mxu0 %v3079
      %v3629 = vpop.f32.mrb[0].mxu0
      %v3630 = vadd.f32 0.0, %v3629
      %v3631 = vpop.f32.mrb[0].mxu0
      %v3632 = vpop.f32.mrb[0].mxu0
      %v3633 = vadd.f32 0.0, %v3632
      %v3634 = vpop.f32.mrb[0].mxu0
      %3635 = vmatprep.mubr.bf16.mxu0 0
      %3636 = vmatmul.mubr.bf16.gmra.mrb[0].mxu0 %v3512
      %v3637 = vpop.f32.mrb[0].mxu0
      %v3638 = vadd.f32 0.0, %v3637
      %v3639 = vpop.f32.mrb[0].mxu0
      %v3640 = vpop.f32.mrb[0].mxu0
      %v3641 = vadd.f32 0.0, %v3640
      %v3642 = vpop.f32.mrb[0].mxu0
      %3643 = vdwg.mxu0
      %v3644 = vadd.f32 %v3500, %v3614
      %v3645 = vadd.f32 %v3501, %v3617
      %v3646 = vadd.f32 %v3502, %v3622
      %v3647 = vadd.f32 %v3503, %v3625
      %v3648 = vadd.f32 %v3504, %v3630
      %v3649 = vadd.f32 %v3505, %v3633
      %v3650 = vadd.f32 %v3506, %v3638
      %v3651 = vadd.f32 %v3507, %v3641
      %v3652 = vld [vmem:[%s10] sm:$0x1]
      %v3654 = vlaneseq
      %v3655 = vshrl.u32 %v3654, 7
      %v3656 = vsub.s32 0, %v3655
      %v3657 = vrot.slane %v3652, %v3656
      %v3659 = vadd.f32 %v3644, %v3657
      %v3660 = vadd.f32 %v3645, %v3657
      %v3661 = vadd.f32 %v3646, %v3657
      %v3662 = vadd.f32 %v3647, %v3657
      %v3663 = vadd.f32 %v3648, %v3657
      %v3664 = vadd.f32 %v3649, %v3657
      %v3665 = vadd.f32 %v3650, %v3657
      %v3666 = vadd.f32 %v3651, %v3657
      %3667 = vst [vmem:[%s649] sm:$0xff] %v3659
      %3668 = vst [vmem:[%s649 + $0x8] sm:$0xff] %v3660
      %3669 = vst [vmem:[%s649 + $0x10] sm:$0xff] %v3661
      %3670 = vst [vmem:[%s649 + $0x18] sm:$0xff] %v3662
      %3671 = vst [vmem:[%s649 + $0x20] sm:$0xff] %v3663
      %3672 = vst [vmem:[%s649 + $0x28] sm:$0xff] %v3664
      %3673 = vst [vmem:[%s649 + $0x30] sm:$0xff] %v3665
      %3674 = vst [vmem:[%s649 + $0x38] sm:$0xff] %v3666
      %v3675 = vadd.f32 %v3659, %v3660
      %v3676 = vadd.f32 %v3675, %v3661
      %v3677 = vadd.f32 %v3676, %v3662
      %v3678 = vadd.f32 %v3677, %v3663
      %v3679 = vadd.f32 %v3678, %v3664
      %v3680 = vadd.f32 %v3679, %v3665
      %v3681 = vadd.f32 %v3680, %v3666
      %v3682 = vrot.slane %v3681, 4
      %v3683 = vadd.f32 %v3681, %v3682
      %v3684 = vrot.slane %v3683, 2
      %v3685 = vadd.f32 %v3683, %v3684
      %v3686 = vrot.slane %v3685, 1
      %v3687 = vadd.f32 %v3685, %v3686
      %v3688 = vmul.f32 %v3659, %v3659
      %v3689 = vmul.f32 %v3660, %v3660
      %v3690 = vmul.f32 %v3661, %v3661
      %v3691 = vmul.f32 %v3662, %v3662
      %v3692 = vmul.f32 %v3663, %v3663
      %v3693 = vmul.f32 %v3664, %v3664
      %v3694 = vmul.f32 %v3665, %v3665
      %v3695 = vmul.f32 %v3666, %v3666
      %v3696 = vadd.f32 %v3688, %v3689
      %v3697 = vadd.f32 %v3696, %v3690
      %v3698 = vadd.f32 %v3697, %v3691
      %v3699 = vadd.f32 %v3698, %v3692
      %v3700 = vadd.f32 %v3699, %v3693
      %v3701 = vadd.f32 %v3700, %v3694
      %v3702 = vadd.f32 %v3701, %v3695
      %v3703 = vrot.slane %v3702, 4
      %v3704 = vadd.f32 %v3702, %v3703
      %v3705 = vrot.slane %v3704, 2
      %v3706 = vadd.f32 %v3704, %v3705
      %v3707 = vrot.slane %v3706, 1
      %v3708 = vadd.f32 %v3706, %v3707
      %vm3709 = vcmask 1040384
      %v3710 = vsel %vm3709, %v3687, %v3708
      %3711 = vst [vmem:[%s658] sm:$0x3] %v3710
      %s3712 = smul.u32 4, %s29
      %p3713 = scmp.lt.s32.totalorder %s28, 1
      %s3714 = scalar_select %p3713, %s28, 1
      %p3715 = scmp.lt.s32.totalorder %s3712, 15
      %s3716 = scalar_select %p3715, %s3712, 15
      %s3717 = smul.addr %s3716, 2
      %s3718 = smul.addr %s3714, 32
      %s3719 = sadd.s32 %s3717, %s3718
      %s3720 = smul.addr %s3719, 8
      %s3721 = scalar_lea.vmem %s11, %s3720
      %p3722 = scmp.lt.s32.totalorder %s28, 1
      %s3723 = scalar_select %p3722, %s28, 1
      %p3724 = scmp.lt.s32.totalorder %s29, 3
      %s3725 = scalar_select %p3724, %s29, 3
      %s3726 = smul.addr %s3723, 4
      %s3727 = sadd.s32 %s3725, %s3726
      %s3728 = smul.addr %s3727, 2
      %s3729 = scalar_lea.vmem %s12, %s3728
      // Predicated region
      $region65: #{unet_up_block.7} parent=63 // pred_check
        %p3730 = pneg %p329
      $region66: #{unet_up_block.7} parent=63 // pred_check_branch
        %3732 = sbr.rel (%p3730) target = $region68
      $region67: #{unet_up_block.7} parent=63 // pred_region
        %s3733 = smul.u32 4, %s29
      $region68: #{unet_up_block.7} parent=63 // pred_fallthru
        _
      // Predicated region
      $region69: #{unet_up_block.7} parent=63 // pred_check
        %p3734 = pneg %p357
      $region70: #{unet_up_block.7} parent=63 // pred_check_branch
        %3736 = sbr.rel (%p3734) target = $region72
      $region71: #{unet_up_block.7} parent=63 // pred_region
        _
      $region72: #{unet_up_block.7} parent=63 // pred_fallthru
        _
    $region64: #{unet_up_block.7} parent=5 // pred_fallthru
      _
    %p3737 = scmp.le.s32.totalorder 2, %s19
    // Predicated region
    $region73: #{unet_up_block.7} parent=5 // pred_check
      %p3738 = pneg %p3737
    $region74: #{unet_up_block.7} parent=5 // pred_check_branch
      %3740 = sbr.rel (%p3738) target = $region76
    $region75: #{unet_up_block.7} parent=5 // pred_region
      %s3741 = ssub.s32 %s19, 2
      // Predicated region
      $region77: #{unet_up_block.7} parent=75 // pred_check
        %p3742 = pneg %p335
      $region78: #{unet_up_block.7} parent=75 // pred_check_branch
        %3744 = sbr.rel (%p3742) target = $region80
      $region79: #{unet_up_block.7} parent=75 // pred_region
        %s3745 = smul.u32 4, %s31
        %p3746 = scmp.lt.s32.totalorder %s30, 1
        %s3747 = scalar_select %p3746, %s30, 1
        %p3748 = scmp.lt.s32.totalorder %s3745, 15
        %s3749 = scalar_select %p3748, %s3745, 15
        %s3750 = smul.addr %s3749, 2
        %s3751 = smul.addr %s3747, 32
        %s3752 = sadd.s32 %s3750, %s3751
        %s3753 = smul.addr %s3752, 8
        %s3754 = scalar_lea.vmem %s11, %s3753
      $region80: #{unet_up_block.7} parent=75 // pred_fallthru
        _
      // Predicated region
      $region81: #{unet_up_block.7} parent=75 // pred_check
        %p3755 = pneg %p363
      $region82: #{unet_up_block.7} parent=75 // pred_check_branch
        %3757 = sbr.rel (%p3755) target = $region84
      $region83: #{unet_up_block.7} parent=75 // pred_region
        %p3758 = scmp.lt.s32.totalorder %s30, 1
        %s3759 = scalar_select %p3758, %s30, 1
        %p3760 = scmp.lt.s32.totalorder %s31, 3
        %s3761 = scalar_select %p3760, %s31, 3
        %s3762 = smul.addr %s3759, 4
        %s3763 = sadd.s32 %s3761, %s3762
        %s3764 = smul.addr %s3763, 2
        %s3765 = scalar_lea.vmem %s12, %s3764
      $region84: #{unet_up_block.7} parent=75 // pred_fallthru
        _
    $region76: #{unet_up_block.7} parent=5 // pred_fallthru
      _
  $region6: #{unet_up_block.7} parent=0 // loop_footer
    %s23 = sadd.s32 1, %s19
  $region7: #{unet_up_block.7} parent=0 // loop_footer_branch
    %18 = sbr.rel target = $region3
  $region8: #{unet_up_block.7} parent=0 // loop_exit
    _

</llo_original>
